<compile_context>
chip_gen: v6e
topology: v6e:2x2x1
jax: 0.10.0
libtpu: 0.0.40
codegen_flags: <defaults>
</compile_context>

<pallas_src>
import jax
import jax.numpy as jnp
from jax import lax
from jax.experimental import pallas as pl
from jax.experimental.pallas import tpu as pltpu

EPS = 1e-5
NEG_SLOPE = 0.2


# ---------------- in-kernel building blocks ----------------

def _leaky(y):
    return jnp.where(y > 0, y, NEG_SLOPE * y)


def _im2col_3x3(xpad, out_h, out_w):
    """xpad: (N, out_h+2, out_w+2, C) -> patch matrix (N*out_h*out_w, 9*C).

    Built with 3+3 slices and two last-dim concats so only ONE patch tensor is
    materialized and the MXU sees a single K = 9*C contraction per conv.
    K ordering is (kw, kh, c); the weight matrices match it (see _w_to_mat).
    """
    n, _, _, c = xpad.shape
    rows = jnp.concatenate(
        [xpad[:, kh:kh + out_h, :, :] for kh in range(3)], axis=-1)      # (N,oh,ow+2,3C)
    patches = jnp.concatenate(
        [rows[:, :, kw:kw + out_w, :] for kw in range(3)], axis=-1)      # (N,oh,ow,9C)
    return patches.reshape(n * out_h * out_w, 9 * c)


# ---------------- fused Pallas kernel ----------------

def residual_block_kernel(xp2_ref, xcf_ref, mask_ref, w1_ref, g1_ref, be1_ref,
                          w2t_ref, g2_ref, be2_ref, o_ref):
    N, Hp4, Wp4, C = xp2_ref.shape
    H, W = Hp4 - 4, Wp4 - 4
    He, We = H + 2, W + 2
    cnt = float(N * H * W)

    xp2 = xp2_ref[...]                                        # f32, padded by 2

    # ---- conv1 on the extended (H+2)x(W+2) grid: one K=9C bf16 matmul ----
    p1 = _im2col_3x3(xp2, He, We).astype(jnp.bfloat16)        # (N*He*We, 9C)
    y1 = jnp.dot(p1, w1_ref[...], preferred_element_type=jnp.float32)

    # BN1 (training stats over the N*H*W interior samples only) + LeakyReLU.
    # `mask` zeroes the 1-px ring afterwards, so `a1` is exactly the zero-padded
    # input conv2 expects -- no pad op / halo store needed. (Conv bias dropped:
    # cancelled exactly by the mean subtraction.)
    mask = mask_ref[...]                                      # (N*He*We, 1) f32
    mean1 = jnp.sum(y1 * mask, axis=0, keepdims=True) / cnt
    xc1 = y1 - mean1
    var1 = jnp.sum(xc1 * xc1 * mask, axis=0, keepdims=True) / cnt
    a1 = xc1 * lax.rsqrt(var1 + EPS) * g1_ref[...] + be1_ref[...]
    a1 = _leaky(a1) * mask
    a1 = a1.reshape(N, He, We, C)                             # padded conv2 input

    # ---- conv2 + BN2 + residual + LeakyReLU, channels-first (lane-dense) ----
    p2 = _im2col_3x3(a1, H, W).astype(jnp.bfloat16)           # (N*H*W, 9C)
    # "q @ k^T"-form dot_general: (C, 9C) x (N*H*W, 9C) -> (C, N*H*W), so the
    # whole tail of the kernel (BN2, residual add, LeakyReLU, store) runs with a
    # 512-wide lane dimension instead of 4.
    y2 = lax.dot_general(w2t_ref[...], p2,
                         dimension_numbers=(((1,), (1,)), ((), ())),
                         preferred_element_type=jnp.float32)  # (C, N*H*W)

    mean2 = jnp.mean(y2, axis=1, keepdims=True)
    xc2 = y2 - mean2
    var2 = jnp.mean(xc2 * xc2, axis=1, keepdims=True)
    y2 = xc2 * lax.rsqrt(var2 + EPS) * g2_ref[...] + be2_ref[...]

    o_ref[...] = _leaky(y2 + xcf_ref[...])                    # residual + final act


# ---------------- wrapper ----------------

def _w_to_mat(w_hwio):
    """(3,3,Cin,Cout) HWIO -> (9*Cin, Cout) with K ordered (kw, kh, c)."""
    kh, kw, cin, cout = w_hwio.shape
    return jnp.transpose(w_hwio, (1, 0, 2, 3)).reshape(kh * kw * cin, cout)


def residual_block_forward(x_nchw, params):
    """x_nchw: (N, C, H, W) float32. Identity-shortcut config (Cin==Cout, stride=1)."""
    N, C, H, W = x_nchw.shape
    He, We = H + 2, W + 2

    # Tiny XLA glue on the (<=13 KB) input; for production shapes the API would
    # accept NHWC directly and the halo would come from the BlockSpec index_map.
    x_nhwc = jnp.transpose(x_nchw, (0, 2, 3, 1))
    xp2 = jnp.pad(x_nhwc, ((0, 0), (2, 2), (2, 2), (0, 0)))          # pad by 2
    x_cf = jnp.transpose(x_nchw, (1, 0, 2, 3)).reshape(C, N * H * W)  # residual, CF

    # Interior mask for the extended conv1 grid (1 inside HxW, 0 on the ring).
    ii = jnp.arange(He)[None, :, None]
    jj = jnp.arange(We)[None, None, :]
    interior = (ii >= 1) & (ii <= H) & (jj >= 1) & (jj <= W)
    mask = jnp.broadcast_to(interior, (N, He, We)).reshape(N * He * We, 1)
    mask = mask.astype(jnp.float32)

    # bf16 MXU operands (f32 accumulation happens inside the kernel).
    w1m = _w_to_mat(params["w1"]).astype(jnp.bfloat16)                # (9C, C)
    w2t = _w_to_mat(params["w2"]).T.astype(jnp.bfloat16)              # (C, 9C)
    g1 = params["g1"].reshape(1, C).astype(jnp.float32)
    be1 = params["be1"].reshape(1, C).astype(jnp.float32)
    g2 = params["g2"].reshape(C, 1).astype(jnp.float32)
    be2 = params["be2"].reshape(C, 1).astype(jnp.float32)

    out_cf = pl.pallas_call(
        residual_block_kernel,
        out_shape=jax.ShapeDtypeStruct((C, N * H * W), jnp.float32),
        in_specs=[pl.BlockSpec(memory_space=pltpu.MemorySpace.VMEM)] * 9,
        out_specs=pl.BlockSpec(memory_space=pltpu.MemorySpace.VMEM),
        # Toy problem uses <1 MiB; keep the scoped budget well under v7x's 64 MiB.
        compiler_params=pltpu.CompilerParams(vmem_limit_bytes=32 * 1024 * 1024),
    )(xp2, x_cf, mask, w1m, g1, be1, w2t, g2, be2)

    # Channels-first kernel output -> NCHW (free reshape + one tiny transpose).
    return jnp.transpose(out_cf.reshape(C, N, H, W), (1, 0, 2, 3))


# ---------------- pure-JAX f32 reference (for validation) ----------------

def reference(x_nchw, params):
    def conv(x, w, b):                      # w: (3,3,Cin,Cout) HWIO
        wt = jnp.transpose(w, (3, 2, 0, 1))  # -> OIHW
        y = lax.conv_general_dilated(
            x, wt, (1, 1), ((1, 1), (1, 1)),
            dimension_numbers=('NCHW', 'OIHW', 'NCHW'))
        return y + b.reshape(1, -1, 1, 1)

    def bn(y, g, be):
        mean = jnp.mean(y, axis=(0, 2, 3), keepdims=True)
        var = jnp.mean((y - mean) ** 2, axis=(0, 2, 3), keepdims=True)
        return ((y - mean) * lax.rsqrt(var + EPS)
                * g.reshape(1, -1, 1, 1) + be.reshape(1, -1, 1, 1))

    def lrelu(y):
        return jnp.where(y > 0, y, NEG_SLOPE * y)

    h = lrelu(bn(conv(x_nchw, params["w1"], params["b1"]), params["g1"], params["be1"]))
    h = bn(conv(h, params["w2"], params["b2"]), params["g2"], params["be2"])
    return lrelu(h + x_nchw)


# ---------------- main ----------------

if __name__ == "__main__":
    key = jax.random.PRNGKey(0)
    N, C, H, W = 2, 4, 16, 16           # inchannel = outchannel = 4, stride = 1
    ks = jax.random.split(key, 9)

    x = jax.random.normal(ks[0], (N, C, H, W), jnp.float32)

    params = {
        # conv weights stored HWIO: (kh, kw, Cin, Cout); biases kept only so the
        # reference can verify that training-mode BN cancels them exactly.
        "w1": 0.2 * jax.random.normal(ks[1], (3, 3, C, C), jnp.float32),
        "b1": 0.1 * jax.random.normal(ks[2], (C,), jnp.float32),
        "g1": 1.0 + 0.1 * jax.random.normal(ks[3], (C,), jnp.float32),
        "be1": 0.1 * jax.random.normal(ks[4], (C,), jnp.float32),
        "w2": 0.2 * jax.random.normal(ks[5], (3, 3, C, C), jnp.float32),
        "b2": 0.1 * jax.random.normal(ks[6], (C,), jnp.float32),
        "g2": 1.0 + 0.1 * jax.random.normal(ks[7], (C,), jnp.float32),
        "be2": 0.1 * jax.random.normal(ks[8], (C,), jnp.float32),
    }

    out = jax.block_until_ready(residual_block_forward(x, params))
    ref = jax.block_until_ready(reference(x, params))

    assert out.shape == (N, C, H, W), out.shape
    max_err = float(jnp.max(jnp.abs(out - ref)))
    # bf16 MXU operands (f32 accumulation / f32 BN stats) -> loosened tolerance.
    assert jnp.allclose(out, ref, atol=5e-2, rtol=5e-2), max_err

    print("KERNEL_OK")
</pallas_src>

<mosaic_0001>
module attributes {stable_mosaic.version = 11 : i64} {
  func.func @residual_block_kernel(%arg0: memref<2x20x20x4xf32, #tpu.memory_space<vmem>>, %arg1: memref<4x512xf32, #tpu.memory_space<vmem>>, %arg2: memref<648x1xf32, #tpu.memory_space<vmem>>, %arg3: memref<36x4xbf16, #tpu.memory_space<vmem>>, %arg4: memref<1x4xf32, #tpu.memory_space<vmem>>, %arg5: memref<1x4xf32, #tpu.memory_space<vmem>>, %arg6: memref<4x36xbf16, #tpu.memory_space<vmem>>, %arg7: memref<4x1xf32, #tpu.memory_space<vmem>>, %arg8: memref<4x1xf32, #tpu.memory_space<vmem>>, %arg9: memref<4x512xf32, #tpu.memory_space<vmem>>) attributes {dimension_semantics = [], scalar_prefetch = 0 : i64, scratch_operands = 0 : i64, tpu.core_type = #tpu.core_type<tc>} {
    %c0 = arith.constant 0 : index
    %c0_0 = arith.constant 0 : index
    %c0_1 = arith.constant 0 : index
    %c0_2 = arith.constant 0 : index
    %0 = vector.load %arg0[%c0, %c0_0, %c0_1, %c0_2] : memref<2x20x20x4xf32, #tpu.memory_space<vmem>>, vector<2x20x20x4xf32>
    %1 = vector.extract_strided_slice %0 {offsets = [0, 0, 0, 0], sizes = [2, 18, 20, 4], strides = [1, 1, 1, 1]} : vector<2x20x20x4xf32> to vector<2x18x20x4xf32>
    %2 = vector.extract_strided_slice %0 {offsets = [0, 1, 0, 0], sizes = [2, 18, 20, 4], strides = [1, 1, 1, 1]} : vector<2x20x20x4xf32> to vector<2x18x20x4xf32>
    %3 = vector.extract_strided_slice %0 {offsets = [0, 2, 0, 0], sizes = [2, 18, 20, 4], strides = [1, 1, 1, 1]} : vector<2x20x20x4xf32> to vector<2x18x20x4xf32>
    %4 = tpu.concatenate %1, %2, %3 in 3 : vector<2x18x20x4xf32>, vector<2x18x20x4xf32>, vector<2x18x20x4xf32> -> vector<2x18x20x12xf32>
    %5 = vector.extract_strided_slice %4 {offsets = [0, 0, 0, 0], sizes = [2, 18, 18, 12], strides = [1, 1, 1, 1]} : vector<2x18x20x12xf32> to vector<2x18x18x12xf32>
    %6 = vector.extract_strided_slice %4 {offsets = [0, 0, 1, 0], sizes = [2, 18, 18, 12], strides = [1, 1, 1, 1]} : vector<2x18x20x12xf32> to vector<2x18x18x12xf32>
    %7 = vector.extract_strided_slice %4 {offsets = [0, 0, 2, 0], sizes = [2, 18, 18, 12], strides = [1, 1, 1, 1]} : vector<2x18x20x12xf32> to vector<2x18x18x12xf32>
    %8 = tpu.concatenate %5, %6, %7 in 3 : vector<2x18x18x12xf32>, vector<2x18x18x12xf32>, vector<2x18x18x12xf32> -> vector<2x18x18x36xf32>
    %9 = vector.shape_cast %8 : vector<2x18x18x36xf32> to vector<648x36xf32>
    %10 = arith.truncf %9 : vector<648x36xf32> to vector<648x36xbf16>
    %c0_3 = arith.constant 0 : index
    %c0_4 = arith.constant 0 : index
    %11 = vector.load %arg3[%c0_3, %c0_4] : memref<36x4xbf16, #tpu.memory_space<vmem>>, vector<36x4xbf16>
    %cst = arith.constant dense<0.000000e+00> : vector<648x4xf32>
    %12 = tpu.matmul %10, %11, %cst {dimension_numbers = #tpu.dot_dimension_numbers<[1], [0], [0], [1], [0, 0, 1, 1], [], []>} : vector<648x36xbf16>, vector<36x4xbf16>, vector<648x4xf32> -> vector<648x4xf32>
    %c0_5 = arith.constant 0 : index
    %c0_6 = arith.constant 0 : index
    %13 = vector.load %arg2[%c0_5, %c0_6] : memref<648x1xf32, #tpu.memory_space<vmem>>, vector<648x1xf32>
    %14 = vector.broadcast %13 : vector<648x1xf32> to vector<648x4xf32>
    %15 = arith.mulf %12, %14 : vector<648x4xf32>
    %cst_7 = arith.constant dense<0.000000e+00> : vector<4xf32>
    %16 = vector.multi_reduction <add>, %15, %cst_7 [0] : vector<648x4xf32> to vector<4xf32>
    %17 = vector.shape_cast %16 : vector<4xf32> to vector<1x4xf32>
    %cst_8 = arith.constant 5.120000e+02 : f32
    %18 = vector.broadcast %cst_8 : f32 to vector<1x4xf32>
    %19 = arith.divf %17, %18 : vector<1x4xf32>
    %20 = vector.broadcast %19 : vector<1x4xf32> to vector<648x4xf32>
    %21 = arith.subf %12, %20 : vector<648x4xf32>
    %22 = arith.mulf %21, %21 : vector<648x4xf32>
    %23 = vector.broadcast %13 : vector<648x1xf32> to vector<648x4xf32>
    %24 = arith.mulf %22, %23 : vector<648x4xf32>
    %cst_9 = arith.constant dense<0.000000e+00> : vector<4xf32>
    %25 = vector.multi_reduction <add>, %24, %cst_9 [0] : vector<648x4xf32> to vector<4xf32>
    %26 = vector.shape_cast %25 : vector<4xf32> to vector<1x4xf32>
    %cst_10 = arith.constant 5.120000e+02 : f32
    %27 = vector.broadcast %cst_10 : f32 to vector<1x4xf32>
    %28 = arith.divf %26, %27 : vector<1x4xf32>
    %cst_11 = arith.constant 9.99999974E-6 : f32
    %29 = vector.broadcast %cst_11 : f32 to vector<1x4xf32>
    %30 = arith.addf %28, %29 : vector<1x4xf32>
    %31 = math.rsqrt %30 : vector<1x4xf32>
    %32 = vector.broadcast %31 : vector<1x4xf32> to vector<648x4xf32>
    %33 = arith.mulf %21, %32 : vector<648x4xf32>
    %c0_12 = arith.constant 0 : index
    %c0_13 = arith.constant 0 : index
    %34 = vector.load %arg4[%c0_12, %c0_13] : memref<1x4xf32, #tpu.memory_space<vmem>>, vector<1x4xf32>
    %35 = vector.broadcast %34 : vector<1x4xf32> to vector<648x4xf32>
    %36 = arith.mulf %33, %35 : vector<648x4xf32>
    %c0_14 = arith.constant 0 : index
    %c0_15 = arith.constant 0 : index
    %37 = vector.load %arg5[%c0_14, %c0_15] : memref<1x4xf32, #tpu.memory_space<vmem>>, vector<1x4xf32>
    %38 = vector.broadcast %37 : vector<1x4xf32> to vector<648x4xf32>
    %39 = arith.addf %36, %38 : vector<648x4xf32>
    %cst_16 = arith.constant 0.000000e+00 : f32
    %40 = vector.broadcast %cst_16 : f32 to vector<648x4xf32>
    %41 = arith.cmpf ogt, %39, %40 : vector<648x4xf32>
    %cst_17 = arith.constant 2.000000e-01 : f32
    %42 = vector.broadcast %cst_17 : f32 to vector<648x4xf32>
    %43 = arith.mulf %42, %39 : vector<648x4xf32>
    %44 = arith.select %41, %39, %43 : vector<648x4xi1>, vector<648x4xf32>
    %45 = vector.broadcast %13 : vector<648x1xf32> to vector<648x4xf32>
    %46 = arith.mulf %44, %45 : vector<648x4xf32>
    %47 = vector.shape_cast %46 : vector<648x4xf32> to vector<2x18x18x4xf32>
    %48 = vector.extract_strided_slice %47 {offsets = [0, 0, 0, 0], sizes = [2, 16, 18, 4], strides = [1, 1, 1, 1]} : vector<2x18x18x4xf32> to vector<2x16x18x4xf32>
    %49 = vector.extract_strided_slice %47 {offsets = [0, 1, 0, 0], sizes = [2, 16, 18, 4], strides = [1, 1, 1, 1]} : vector<2x18x18x4xf32> to vector<2x16x18x4xf32>
    %50 = vector.extract_strided_slice %47 {offsets = [0, 2, 0, 0], sizes = [2, 16, 18, 4], strides = [1, 1, 1, 1]} : vector<2x18x18x4xf32> to vector<2x16x18x4xf32>
    %51 = tpu.concatenate %48, %49, %50 in 3 : vector<2x16x18x4xf32>, vector<2x16x18x4xf32>, vector<2x16x18x4xf32> -> vector<2x16x18x12xf32>
    %52 = vector.extract_strided_slice %51 {offsets = [0, 0, 0, 0], sizes = [2, 16, 16, 12], strides = [1, 1, 1, 1]} : vector<2x16x18x12xf32> to vector<2x16x16x12xf32>
    %53 = vector.extract_strided_slice %51 {offsets = [0, 0, 1, 0], sizes = [2, 16, 16, 12], strides = [1, 1, 1, 1]} : vector<2x16x18x12xf32> to vector<2x16x16x12xf32>
    %54 = vector.extract_strided_slice %51 {offsets = [0, 0, 2, 0], sizes = [2, 16, 16, 12], strides = [1, 1, 1, 1]} : vector<2x16x18x12xf32> to vector<2x16x16x12xf32>
    %55 = tpu.concatenate %52, %53, %54 in 3 : vector<2x16x16x12xf32>, vector<2x16x16x12xf32>, vector<2x16x16x12xf32> -> vector<2x16x16x36xf32>
    %56 = vector.shape_cast %55 : vector<2x16x16x36xf32> to vector<512x36xf32>
    %57 = arith.truncf %56 : vector<512x36xf32> to vector<512x36xbf16>
    %c0_18 = arith.constant 0 : index
    %c0_19 = arith.constant 0 : index
    %58 = vector.load %arg6[%c0_18, %c0_19] : memref<4x36xbf16, #tpu.memory_space<vmem>>, vector<4x36xbf16>
    %cst_20 = arith.constant dense<0.000000e+00> : vector<4x512xf32>
    %59 = tpu.matmul %58, %57, %cst_20 {dimension_numbers = #tpu.dot_dimension_numbers<[1], [1], [0], [0], [0, 0, 1, 0], [], []>} : vector<4x36xbf16>, vector<512x36xbf16>, vector<4x512xf32> -> vector<4x512xf32>
    %cst_21 = arith.constant dense<0.000000e+00> : vector<4xf32>
    %60 = vector.multi_reduction <add>, %59, %cst_21 [1] : vector<4x512xf32> to vector<4xf32>
    %61 = vector.shape_cast %60 : vector<4xf32> to vector<4x1xf32>
    %cst_22 = arith.constant 5.120000e+02 : f32
    %62 = vector.broadcast %cst_22 : f32 to vector<4x1xf32>
    %63 = arith.divf %61, %62 : vector<4x1xf32>
    %64 = vector.broadcast %63 : vector<4x1xf32> to vector<4x512xf32>
    %65 = arith.subf %59, %64 : vector<4x512xf32>
    %66 = arith.mulf %65, %65 : vector<4x512xf32>
    %cst_23 = arith.constant dense<0.000000e+00> : vector<4xf32>
    %67 = vector.multi_reduction <add>, %66, %cst_23 [1] : vector<4x512xf32> to vector<4xf32>
    %68 = vector.shape_cast %67 : vector<4xf32> to vector<4x1xf32>
    %cst_24 = arith.constant 5.120000e+02 : f32
    %69 = vector.broadcast %cst_24 : f32 to vector<4x1xf32>
    %70 = arith.divf %68, %69 : vector<4x1xf32>
    %cst_25 = arith.constant 9.99999974E-6 : f32
    %71 = vector.broadcast %cst_25 : f32 to vector<4x1xf32>
    %72 = arith.addf %70, %71 : vector<4x1xf32>
    %73 = math.rsqrt %72 : vector<4x1xf32>
    %74 = vector.broadcast %73 : vector<4x1xf32> to vector<4x512xf32>
    %75 = arith.mulf %65, %74 : vector<4x512xf32>
    %c0_26 = arith.constant 0 : index
    %c0_27 = arith.constant 0 : index
    %76 = vector.load %arg7[%c0_26, %c0_27] : memref<4x1xf32, #tpu.memory_space<vmem>>, vector<4x1xf32>
    %77 = vector.broadcast %76 : vector<4x1xf32> to vector<4x512xf32>
    %78 = arith.mulf %75, %77 : vector<4x512xf32>
    %c0_28 = arith.constant 0 : index
    %c0_29 = arith.constant 0 : index
    %79 = vector.load %arg8[%c0_28, %c0_29] : memref<4x1xf32, #tpu.memory_space<vmem>>, vector<4x1xf32>
    %80 = vector.broadcast %79 : vector<4x1xf32> to vector<4x512xf32>
    %81 = arith.addf %78, %80 : vector<4x512xf32>
    %c0_30 = arith.constant 0 : index
    %c0_31 = arith.constant 0 : index
    %82 = vector.load %arg1[%c0_30, %c0_31] : memref<4x512xf32, #tpu.memory_space<vmem>>, vector<4x512xf32>
    %83 = arith.addf %81, %82 : vector<4x512xf32>
    %cst_32 = arith.constant 0.000000e+00 : f32
    %84 = vector.broadcast %cst_32 : f32 to vector<4x512xf32>
    %85 = arith.cmpf ogt, %83, %84 : vector<4x512xf32>
    %cst_33 = arith.constant 2.000000e-01 : f32
    %86 = vector.broadcast %cst_33 : f32 to vector<4x512xf32>
    %87 = arith.mulf %86, %83 : vector<4x512xf32>
    %88 = arith.select %85, %83, %87 : vector<4x512xi1>, vector<4x512xf32>
    %c0_34 = arith.constant 0 : index
    %c0_35 = arith.constant 0 : index
    %89 = vector.load %arg9[%c0_34, %c0_35] : memref<4x512xf32, #tpu.memory_space<vmem>>, vector<4x512xf32>
    tpu.vector_store %arg9[%c0_34, %c0_35], %88 {strides = array<i32>} : memref<4x512xf32, #tpu.memory_space<vmem>>, vector<4x512xf32>,
    return
  }
}

</mosaic_0001>

<llo_original>
// kernel: tpu_custom_call.1
$region0: #{tpu_custom_call.1}
  #allocation0 [shape = 'u32[]', space=smem, size = 0x4, offset = 0x4, fixed_abs, tag = 'smem constant byte address 0x4 - core index']
  #allocation1 [shape = 'u32[144,128]{1,0:T(1,128)}', space=vmem, size = 0x12000, scoped, tag = 'internal scratch']
  %s0 = inlined_call_operand.vmem [shape: f32[2,20,20,4], index: 0, kind: input, shape index: {}]
  %s1 = inlined_call_operand.vmem [shape: f32[4,512], index: 1, kind: input, shape index: {}]
  %s2 = inlined_call_operand.vmem [shape: f32[648,1], index: 2, kind: input, shape index: {}]
  %s3 = inlined_call_operand.vmem [shape: bf16[36,4], index: 3, kind: input, shape index: {}]
  %s4 = inlined_call_operand.vmem [shape: f32[1,4], index: 4, kind: input, shape index: {}]
  %s5 = inlined_call_operand.vmem [shape: f32[1,4], index: 5, kind: input, shape index: {}]
  %s6 = inlined_call_operand.vmem [shape: bf16[4,36], index: 6, kind: input, shape index: {}]
  %s7 = inlined_call_operand.vmem [shape: f32[4,1], index: 7, kind: input, shape index: {}]
  %s8 = inlined_call_operand.vmem [shape: f32[4,1], index: 8, kind: input, shape index: {}]
  %s9 = inlined_call_operand.hbm [shape: f32[4,512], index: 9, kind: output, shape index: {}]
  %s10 = sld [smem:[#allocation0]]
  $region46: #{tpu_custom_call.1} parent=0
    _
  %s12 = ssub.s32 1, %s10
  %s13 = scalar_select 0, %s12, %s10
  $region1: #{tpu_custom_call.1} parent=0
    #allocation2 [shape = 'u8[8192]{0}', space=vmem, size = 0x2000, scoped, tag = 'output window, operand 0, single buffered']
    #allocation3 [shape = 's32[1]{0}', space=sflag, size = 0x4, scoped, tag = 'scoped memory for tpu_custom_call.1']
    %14 = vsyncpa [#allocation3], 0
    // Predicated region
    $region2: #{tpu_custom_call.1} parent=1 // pred_check
      _
    $region3: #{tpu_custom_call.1} parent=1 // pred_check_branch
      %16 = sbr.rel (0) target = $region5
    $region4: #{tpu_custom_call.1} parent=1 // pred_region
      _
    $region5: #{tpu_custom_call.1} parent=1 // pred_fallthru
      _
    // Predicated region
    $region6: #{tpu_custom_call.1} parent=1 // pred_check
      _
    $region7: #{tpu_custom_call.1} parent=1 // pred_check_branch
      %18 = sbr.rel (0) target = $region9
    $region8: #{tpu_custom_call.1} parent=1 // pred_region
      _
    $region9: #{tpu_custom_call.1} parent=1 // pred_fallthru
      _
    // Predicated region
    $region10: #{tpu_custom_call.1} parent=1 // pred_check
      _
    $region11: #{tpu_custom_call.1} parent=1 // pred_check_branch
      %20 = sbr.rel (0) target = $region13
    $region12: #{tpu_custom_call.1} parent=1 // pred_region
      _
    $region13: #{tpu_custom_call.1} parent=1 // pred_fallthru
      _
    // Predicated region
    $region14: #{tpu_custom_call.1} parent=1 // pred_check
      _
    $region15: #{tpu_custom_call.1} parent=1 // pred_check_branch
      %22 = sbr.rel (0) target = $region17
    $region16: #{tpu_custom_call.1} parent=1 // pred_region
      _
    $region17: #{tpu_custom_call.1} parent=1 // pred_fallthru
      _
    // Predicated region
    $region18: #{tpu_custom_call.1} parent=1 // pred_check
      _
    $region19: #{tpu_custom_call.1} parent=1 // pred_check_branch
      %24 = sbr.rel (0) target = $region21
    $region20: #{tpu_custom_call.1} parent=1 // pred_region
      _
    $region21: #{tpu_custom_call.1} parent=1 // pred_fallthru
      _
    // Predicated region
    $region22: #{tpu_custom_call.1} parent=1 // pred_check
      _
    $region23: #{tpu_custom_call.1} parent=1 // pred_check_branch
      %26 = sbr.rel (0) target = $region25
    $region24: #{tpu_custom_call.1} parent=1 // pred_region
      _
    $region25: #{tpu_custom_call.1} parent=1 // pred_fallthru
      _
    // Predicated region
    $region26: #{tpu_custom_call.1} parent=1 // pred_check
      _
    $region27: #{tpu_custom_call.1} parent=1 // pred_check_branch
      %28 = sbr.rel (0) target = $region29
    $region28: #{tpu_custom_call.1} parent=1 // pred_region
      _
    $region29: #{tpu_custom_call.1} parent=1 // pred_fallthru
      _
    // Predicated region
    $region30: #{tpu_custom_call.1} parent=1 // pred_check
      _
    $region31: #{tpu_custom_call.1} parent=1 // pred_check_branch
      %30 = sbr.rel (0) target = $region33
    $region32: #{tpu_custom_call.1} parent=1 // pred_region
      _
    $region33: #{tpu_custom_call.1} parent=1 // pred_fallthru
      _
    // Predicated region
    $region34: #{tpu_custom_call.1} parent=1 // pred_check
      _
    $region35: #{tpu_custom_call.1} parent=1 // pred_check_branch
      %32 = sbr.rel (0) target = $region37
    $region36: #{tpu_custom_call.1} parent=1 // pred_region
      _
    $region37: #{tpu_custom_call.1} parent=1 // pred_fallthru
      _
    %v34 = vld [vmem:[%s0] sm:$0xff]
    %v35 = vld [vmem:[%s0 + $0x8] sm:$0xff]
    %v36 = vld [vmem:[%s0 + $0x10] sm:$0xf]
    %v37 = vld [vmem:[%s0 + $0x18] sm:$0xff]
    %v38 = vld [vmem:[%s0 + $0x20] sm:$0xff]
    %v39 = vld [vmem:[%s0 + $0x28] sm:$0xf]
    %v40 = vld [vmem:[%s0 + $0x30] sm:$0xff]
    %v41 = vld [vmem:[%s0 + $0x38] sm:$0xff]
    %v42 = vld [vmem:[%s0 + $0x40] sm:$0xf]
    %v43 = vld [vmem:[%s0 + $0x48] sm:$0xff]
    %v44 = vld [vmem:[%s0 + $0x50] sm:$0xff]
    %v45 = vld [vmem:[%s0 + $0x58] sm:$0xf]
    %v46 = vld [vmem:[%s0 + $0x60] sm:$0xff]
    %v47 = vld [vmem:[%s0 + $0x68] sm:$0xff]
    %v48 = vld [vmem:[%s0 + $0x70] sm:$0xf]
    %v49 = vld [vmem:[%s0 + $0x78] sm:$0xff]
    %v50 = vld [vmem:[%s0 + $0x80] sm:$0xff]
    %v51 = vld [vmem:[%s0 + $0x88] sm:$0xf]
    %v52 = vld [vmem:[%s0 + $0x90] sm:$0xff]
    %v53 = vld [vmem:[%s0 + $0x98] sm:$0xff]
    %v54 = vld [vmem:[%s0 + $0xa0] sm:$0xf]
    %v55 = vld [vmem:[%s0 + $0xa8] sm:$0xff]
    %v56 = vld [vmem:[%s0 + $0xb0] sm:$0xff]
    %v57 = vld [vmem:[%s0 + $0xb8] sm:$0xf]
    %v58 = vld [vmem:[%s0 + $0xc0] sm:$0xff]
    %v59 = vld [vmem:[%s0 + $0xc8] sm:$0xff]
    %v60 = vld [vmem:[%s0 + $0xd0] sm:$0xf]
    %v61 = vld [vmem:[%s0 + $0xd8] sm:$0xff]
    %v62 = vld [vmem:[%s0 + $0xe0] sm:$0xff]
    %v63 = vld [vmem:[%s0 + $0xe8] sm:$0xf]
    %v64 = vld [vmem:[%s0 + $0xf0] sm:$0xff]
    %v65 = vld [vmem:[%s0 + $0xf8] sm:$0xff]
    %v66 = vld [vmem:[%s0 + $0x100] sm:$0xf]
    %v67 = vld [vmem:[%s0 + $0x108] sm:$0xff]
    %v68 = vld [vmem:[%s0 + $0x110] sm:$0xff]
    %v69 = vld [vmem:[%s0 + $0x118] sm:$0xf]
    %v70 = vld [vmem:[%s0 + $0x120] sm:$0xff]
    %v71 = vld [vmem:[%s0 + $0x128] sm:$0xff]
    %v72 = vld [vmem:[%s0 + $0x130] sm:$0xf]
    %v73 = vld [vmem:[%s0 + $0x138] sm:$0xff]
    %v74 = vld [vmem:[%s0 + $0x140] sm:$0xff]
    %v75 = vld [vmem:[%s0 + $0x148] sm:$0xf]
    %v76 = vld [vmem:[%s0 + $0x150] sm:$0xff]
    %v77 = vld [vmem:[%s0 + $0x158] sm:$0xff]
    %v78 = vld [vmem:[%s0 + $0x160] sm:$0xf]
    %v79 = vld [vmem:[%s0 + $0x168] sm:$0xff]
    %v80 = vld [vmem:[%s0 + $0x170] sm:$0xff]
    %v81 = vld [vmem:[%s0 + $0x178] sm:$0xf]
    %v82 = vld [vmem:[%s0 + $0x180] sm:$0xff]
    %v83 = vld [vmem:[%s0 + $0x188] sm:$0xff]
    %v84 = vld [vmem:[%s0 + $0x190] sm:$0xf]
    %v85 = vld [vmem:[%s0 + $0x198] sm:$0xff]
    %v86 = vld [vmem:[%s0 + $0x1a0] sm:$0xff]
    %v87 = vld [vmem:[%s0 + $0x1a8] sm:$0xf]
    %v88 = vld [vmem:[%s0 + $0x1b0] sm:$0xff]
    %v89 = vld [vmem:[%s0 + $0x1b8] sm:$0xff]
    %v90 = vld [vmem:[%s0 + $0x1c0] sm:$0xf]
    %v91 = vld [vmem:[%s0 + $0x1c8] sm:$0xff]
    %v92 = vld [vmem:[%s0 + $0x1d0] sm:$0xff]
    %v93 = vld [vmem:[%s0 + $0x1d8] sm:$0xf]
    %v94 = vld [vmem:[%s0 + $0x1e0] sm:$0xff]
    %v95 = vld [vmem:[%s0 + $0x1e8] sm:$0xff]
    %v96 = vld [vmem:[%s0 + $0x1f0] sm:$0xf]
    %v97 = vld [vmem:[%s0 + $0x1f8] sm:$0xff]
    %v98 = vld [vmem:[%s0 + $0x200] sm:$0xff]
    %v99 = vld [vmem:[%s0 + $0x208] sm:$0xf]
    %v100 = vld [vmem:[%s0 + $0x210] sm:$0xff]
    %v101 = vld [vmem:[%s0 + $0x218] sm:$0xff]
    %v102 = vld [vmem:[%s0 + $0x220] sm:$0xf]
    %v103 = vld [vmem:[%s0 + $0x228] sm:$0xff]
    %v104 = vld [vmem:[%s0 + $0x230] sm:$0xff]
    %v105 = vld [vmem:[%s0 + $0x238] sm:$0xf]
    %v106 = vld [vmem:[%s0 + $0x240] sm:$0xff]
    %v107 = vld [vmem:[%s0 + $0x248] sm:$0xff]
    %v108 = vld [vmem:[%s0 + $0x250] sm:$0xf]
    %v109 = vld [vmem:[%s0 + $0x258] sm:$0xff]
    %v110 = vld [vmem:[%s0 + $0x260] sm:$0xff]
    %v111 = vld [vmem:[%s0 + $0x268] sm:$0xf]
    %v112 = vld [vmem:[%s0 + $0x270] sm:$0xff]
    %v113 = vld [vmem:[%s0 + $0x278] sm:$0xff]
    %v114 = vld [vmem:[%s0 + $0x280] sm:$0xf]
    %v115 = vld [vmem:[%s0 + $0x288] sm:$0xff]
    %v116 = vld [vmem:[%s0 + $0x290] sm:$0xff]
    %v117 = vld [vmem:[%s0 + $0x298] sm:$0xf]
    %v118 = vld [vmem:[%s0 + $0x2a0] sm:$0xff]
    %v119 = vld [vmem:[%s0 + $0x2a8] sm:$0xff]
    %v120 = vld [vmem:[%s0 + $0x2b0] sm:$0xf]
    %v121 = vld [vmem:[%s0 + $0x2b8] sm:$0xff]
    %v122 = vld [vmem:[%s0 + $0x2c0] sm:$0xff]
    %v123 = vld [vmem:[%s0 + $0x2c8] sm:$0xf]
    %v124 = vld [vmem:[%s0 + $0x2d0] sm:$0xff]
    %v125 = vld [vmem:[%s0 + $0x2d8] sm:$0xff]
    %v126 = vld [vmem:[%s0 + $0x2e0] sm:$0xf]
    %v127 = vld [vmem:[%s0 + $0x2e8] sm:$0xff]
    %v128 = vld [vmem:[%s0 + $0x2f0] sm:$0xff]
    %v129 = vld [vmem:[%s0 + $0x2f8] sm:$0xf]
    %v130 = vld [vmem:[%s0 + $0x300] sm:$0xff]
    %v131 = vld [vmem:[%s0 + $0x308] sm:$0xff]
    %v132 = vld [vmem:[%s0 + $0x310] sm:$0xf]
    %v133 = vld [vmem:[%s0 + $0x318] sm:$0xff]
    %v134 = vld [vmem:[%s0 + $0x320] sm:$0xff]
    %v135 = vld [vmem:[%s0 + $0x328] sm:$0xf]
    %v136 = vld [vmem:[%s0 + $0x330] sm:$0xff]
    %v137 = vld [vmem:[%s0 + $0x338] sm:$0xff]
    %v138 = vld [vmem:[%s0 + $0x340] sm:$0xf]
    %v139 = vld [vmem:[%s0 + $0x348] sm:$0xff]
    %v140 = vld [vmem:[%s0 + $0x350] sm:$0xff]
    %v141 = vld [vmem:[%s0 + $0x358] sm:$0xf]
    %v142 = vld [vmem:[%s0 + $0x360] sm:$0xff]
    %v143 = vld [vmem:[%s0 + $0x368] sm:$0xff]
    %v144 = vld [vmem:[%s0 + $0x370] sm:$0xf]
    %v145 = vld [vmem:[%s0 + $0x378] sm:$0xff]
    %v146 = vld [vmem:[%s0 + $0x380] sm:$0xff]
    %v147 = vld [vmem:[%s0 + $0x388] sm:$0xf]
    %v148 = vld [vmem:[%s0 + $0x390] sm:$0xff]
    %v149 = vld [vmem:[%s0 + $0x398] sm:$0xff]
    %v150 = vld [vmem:[%s0 + $0x3a0] sm:$0xf]
    %v151 = vld [vmem:[%s0 + $0x3a8] sm:$0xff]
    %v152 = vld [vmem:[%s0 + $0x3b0] sm:$0xff]
    %v153 = vld [vmem:[%s0 + $0x3b8] sm:$0xf]
    %262 = vrot.lane.b32.xlu0 %v37, 4
    %v263 = vpop.permute.xlu0 %262
    %264 = vrot.lane.b32.xlu0 %v38, 4
    %v265 = vpop.permute.xlu0 %264
    %266 = vrot.lane.b32.xlu0 %v39, 4
    %v267 = vpop.permute.xlu0 %266
    %268 = vrot.lane.b32.xlu0 %v40, 4
    %v269 = vpop.permute.xlu0 %268
    %270 = vrot.lane.b32.xlu0 %v41, 4
    %v271 = vpop.permute.xlu0 %270
    %272 = vrot.lane.b32.xlu0 %v42, 4
    %v273 = vpop.permute.xlu0 %272
    %274 = vrot.lane.b32.xlu0 %v43, 4
    %v275 = vpop.permute.xlu0 %274
    %276 = vrot.lane.b32.xlu0 %v44, 4
    %v277 = vpop.permute.xlu0 %276
    %278 = vrot.lane.b32.xlu0 %v45, 4
    %v279 = vpop.permute.xlu0 %278
    %280 = vrot.lane.b32.xlu0 %v46, 4
    %v281 = vpop.permute.xlu0 %280
    %282 = vrot.lane.b32.xlu0 %v47, 4
    %v283 = vpop.permute.xlu0 %282
    %284 = vrot.lane.b32.xlu0 %v48, 4
    %v285 = vpop.permute.xlu0 %284
    %286 = vrot.lane.b32.xlu0 %v49, 4
    %v287 = vpop.permute.xlu0 %286
    %288 = vrot.lane.b32.xlu0 %v50, 4
    %v289 = vpop.permute.xlu0 %288
    %290 = vrot.lane.b32.xlu0 %v51, 4
    %v291 = vpop.permute.xlu0 %290
    %292 = vrot.lane.b32.xlu0 %v52, 4
    %v293 = vpop.permute.xlu0 %292
    %294 = vrot.lane.b32.xlu0 %v53, 4
    %v295 = vpop.permute.xlu0 %294
    %296 = vrot.lane.b32.xlu0 %v54, 4
    %v297 = vpop.permute.xlu0 %296
    %298 = vrot.lane.b32.xlu0 %v55, 4
    %v299 = vpop.permute.xlu0 %298
    %300 = vrot.lane.b32.xlu0 %v56, 4
    %v301 = vpop.permute.xlu0 %300
    %302 = vrot.lane.b32.xlu0 %v57, 4
    %v303 = vpop.permute.xlu0 %302
    %304 = vrot.lane.b32.xlu0 %v58, 4
    %v305 = vpop.permute.xlu0 %304
    %306 = vrot.lane.b32.xlu0 %v59, 4
    %v307 = vpop.permute.xlu0 %306
    %308 = vrot.lane.b32.xlu0 %v60, 4
    %v309 = vpop.permute.xlu0 %308
    %310 = vrot.lane.b32.xlu0 %v61, 4
    %v311 = vpop.permute.xlu0 %310
    %312 = vrot.lane.b32.xlu0 %v62, 4
    %v313 = vpop.permute.xlu0 %312
    %314 = vrot.lane.b32.xlu0 %v63, 4
    %v315 = vpop.permute.xlu0 %314
    %316 = vrot.lane.b32.xlu0 %v64, 4
    %v317 = vpop.permute.xlu0 %316
    %318 = vrot.lane.b32.xlu0 %v65, 4
    %v319 = vpop.permute.xlu0 %318
    %320 = vrot.lane.b32.xlu0 %v66, 4
    %v321 = vpop.permute.xlu0 %320
    %322 = vrot.lane.b32.xlu0 %v67, 4
    %v323 = vpop.permute.xlu0 %322
    %324 = vrot.lane.b32.xlu0 %v68, 4
    %v325 = vpop.permute.xlu0 %324
    %326 = vrot.lane.b32.xlu0 %v69, 4
    %v327 = vpop.permute.xlu0 %326
    %328 = vrot.lane.b32.xlu0 %v70, 4
    %v329 = vpop.permute.xlu0 %328
    %330 = vrot.lane.b32.xlu0 %v71, 4
    %v331 = vpop.permute.xlu0 %330
    %332 = vrot.lane.b32.xlu0 %v72, 4
    %v333 = vpop.permute.xlu0 %332
    %334 = vrot.lane.b32.xlu0 %v73, 4
    %v335 = vpop.permute.xlu0 %334
    %336 = vrot.lane.b32.xlu0 %v74, 4
    %v337 = vpop.permute.xlu0 %336
    %338 = vrot.lane.b32.xlu0 %v75, 4
    %v339 = vpop.permute.xlu0 %338
    %340 = vrot.lane.b32.xlu0 %v76, 4
    %v341 = vpop.permute.xlu0 %340
    %342 = vrot.lane.b32.xlu0 %v77, 4
    %v343 = vpop.permute.xlu0 %342
    %344 = vrot.lane.b32.xlu0 %v78, 4
    %v345 = vpop.permute.xlu0 %344
    %346 = vrot.lane.b32.xlu0 %v79, 4
    %v347 = vpop.permute.xlu0 %346
    %348 = vrot.lane.b32.xlu0 %v80, 4
    %v349 = vpop.permute.xlu0 %348
    %350 = vrot.lane.b32.xlu0 %v81, 4
    %v351 = vpop.permute.xlu0 %350
    %352 = vrot.lane.b32.xlu0 %v82, 4
    %v353 = vpop.permute.xlu0 %352
    %354 = vrot.lane.b32.xlu0 %v83, 4
    %v355 = vpop.permute.xlu0 %354
    %356 = vrot.lane.b32.xlu0 %v84, 4
    %v357 = vpop.permute.xlu0 %356
    %358 = vrot.lane.b32.xlu0 %v85, 4
    %v359 = vpop.permute.xlu0 %358
    %360 = vrot.lane.b32.xlu0 %v86, 4
    %v361 = vpop.permute.xlu0 %360
    %362 = vrot.lane.b32.xlu0 %v87, 4
    %v363 = vpop.permute.xlu0 %362
    %364 = vrot.lane.b32.xlu0 %v88, 4
    %v365 = vpop.permute.xlu0 %364
    %366 = vrot.lane.b32.xlu0 %v89, 4
    %v367 = vpop.permute.xlu0 %366
    %368 = vrot.lane.b32.xlu0 %v90, 4
    %v369 = vpop.permute.xlu0 %368
    %370 = vrot.lane.b32.xlu0 %v97, 4
    %v371 = vpop.permute.xlu0 %370
    %372 = vrot.lane.b32.xlu0 %v98, 4
    %v373 = vpop.permute.xlu0 %372
    %374 = vrot.lane.b32.xlu0 %v99, 4
    %v375 = vpop.permute.xlu0 %374
    %376 = vrot.lane.b32.xlu0 %v100, 4
    %v377 = vpop.permute.xlu0 %376
    %378 = vrot.lane.b32.xlu0 %v101, 4
    %v379 = vpop.permute.xlu0 %378
    %380 = vrot.lane.b32.xlu0 %v102, 4
    %v381 = vpop.permute.xlu0 %380
    %382 = vrot.lane.b32.xlu0 %v103, 4
    %v383 = vpop.permute.xlu0 %382
    %384 = vrot.lane.b32.xlu0 %v104, 4
    %v385 = vpop.permute.xlu0 %384
    %386 = vrot.lane.b32.xlu0 %v105, 4
    %v387 = vpop.permute.xlu0 %386
    %388 = vrot.lane.b32.xlu0 %v106, 4
    %v389 = vpop.permute.xlu0 %388
    %390 = vrot.lane.b32.xlu0 %v107, 4
    %v391 = vpop.permute.xlu0 %390
    %392 = vrot.lane.b32.xlu0 %v108, 4
    %v393 = vpop.permute.xlu0 %392
    %394 = vrot.lane.b32.xlu0 %v109, 4
    %v395 = vpop.permute.xlu0 %394
    %396 = vrot.lane.b32.xlu0 %v110, 4
    %v397 = vpop.permute.xlu0 %396
    %398 = vrot.lane.b32.xlu0 %v111, 4
    %v399 = vpop.permute.xlu0 %398
    %400 = vrot.lane.b32.xlu0 %v112, 4
    %v401 = vpop.permute.xlu0 %400
    %402 = vrot.lane.b32.xlu0 %v113, 4
    %v403 = vpop.permute.xlu0 %402
    %404 = vrot.lane.b32.xlu0 %v114, 4
    %v405 = vpop.permute.xlu0 %404
    %406 = vrot.lane.b32.xlu0 %v115, 4
    %v407 = vpop.permute.xlu0 %406
    %408 = vrot.lane.b32.xlu0 %v116, 4
    %v409 = vpop.permute.xlu0 %408
    %410 = vrot.lane.b32.xlu0 %v117, 4
    %v411 = vpop.permute.xlu0 %410
    %412 = vrot.lane.b32.xlu0 %v118, 4
    %v413 = vpop.permute.xlu0 %412
    %414 = vrot.lane.b32.xlu0 %v119, 4
    %v415 = vpop.permute.xlu0 %414
    %416 = vrot.lane.b32.xlu0 %v120, 4
    %v417 = vpop.permute.xlu0 %416
    %418 = vrot.lane.b32.xlu0 %v121, 4
    %v419 = vpop.permute.xlu0 %418
    %420 = vrot.lane.b32.xlu0 %v122, 4
    %v421 = vpop.permute.xlu0 %420
    %422 = vrot.lane.b32.xlu0 %v123, 4
    %v423 = vpop.permute.xlu0 %422
    %424 = vrot.lane.b32.xlu0 %v124, 4
    %v425 = vpop.permute.xlu0 %424
    %426 = vrot.lane.b32.xlu0 %v125, 4
    %v427 = vpop.permute.xlu0 %426
    %428 = vrot.lane.b32.xlu0 %v126, 4
    %v429 = vpop.permute.xlu0 %428
    %430 = vrot.lane.b32.xlu0 %v127, 4
    %v431 = vpop.permute.xlu0 %430
    %432 = vrot.lane.b32.xlu0 %v128, 4
    %v433 = vpop.permute.xlu0 %432
    %434 = vrot.lane.b32.xlu0 %v129, 4
    %v435 = vpop.permute.xlu0 %434
    %436 = vrot.lane.b32.xlu0 %v130, 4
    %v437 = vpop.permute.xlu0 %436
    %438 = vrot.lane.b32.xlu0 %v131, 4
    %v439 = vpop.permute.xlu0 %438
    %440 = vrot.lane.b32.xlu0 %v132, 4
    %v441 = vpop.permute.xlu0 %440
    %442 = vrot.lane.b32.xlu0 %v133, 4
    %v443 = vpop.permute.xlu0 %442
    %444 = vrot.lane.b32.xlu0 %v134, 4
    %v445 = vpop.permute.xlu0 %444
    %446 = vrot.lane.b32.xlu0 %v135, 4
    %v447 = vpop.permute.xlu0 %446
    %448 = vrot.lane.b32.xlu0 %v136, 4
    %v449 = vpop.permute.xlu0 %448
    %450 = vrot.lane.b32.xlu0 %v137, 4
    %v451 = vpop.permute.xlu0 %450
    %452 = vrot.lane.b32.xlu0 %v138, 4
    %v453 = vpop.permute.xlu0 %452
    %454 = vrot.lane.b32.xlu0 %v139, 4
    %v455 = vpop.permute.xlu0 %454
    %456 = vrot.lane.b32.xlu0 %v140, 4
    %v457 = vpop.permute.xlu0 %456
    %458 = vrot.lane.b32.xlu0 %v141, 4
    %v459 = vpop.permute.xlu0 %458
    %460 = vrot.lane.b32.xlu0 %v142, 4
    %v461 = vpop.permute.xlu0 %460
    %462 = vrot.lane.b32.xlu0 %v143, 4
    %v463 = vpop.permute.xlu0 %462
    %464 = vrot.lane.b32.xlu0 %v144, 4
    %v465 = vpop.permute.xlu0 %464
    %466 = vrot.lane.b32.xlu0 %v145, 4
    %v467 = vpop.permute.xlu0 %466
    %468 = vrot.lane.b32.xlu0 %v146, 4
    %v469 = vpop.permute.xlu0 %468
    %470 = vrot.lane.b32.xlu0 %v147, 4
    %v471 = vpop.permute.xlu0 %470
    %472 = vrot.lane.b32.xlu0 %v148, 4
    %v473 = vpop.permute.xlu0 %472
    %474 = vrot.lane.b32.xlu0 %v149, 4
    %v475 = vpop.permute.xlu0 %474
    %476 = vrot.lane.b32.xlu0 %v150, 4
    %v477 = vpop.permute.xlu0 %476
    %592 = vrot.lane.b32.xlu0 %v40, 8
    %v593 = vpop.permute.xlu0 %592
    %594 = vrot.lane.b32.xlu0 %v41, 8
    %v595 = vpop.permute.xlu0 %594
    %596 = vrot.lane.b32.xlu0 %v42, 8
    %v597 = vpop.permute.xlu0 %596
    %598 = vrot.lane.b32.xlu0 %v43, 8
    %v599 = vpop.permute.xlu0 %598
    %600 = vrot.lane.b32.xlu0 %v44, 8
    %v601 = vpop.permute.xlu0 %600
    %602 = vrot.lane.b32.xlu0 %v45, 8
    %v603 = vpop.permute.xlu0 %602
    %604 = vrot.lane.b32.xlu0 %v46, 8
    %v605 = vpop.permute.xlu0 %604
    %606 = vrot.lane.b32.xlu0 %v47, 8
    %v607 = vpop.permute.xlu0 %606
    %608 = vrot.lane.b32.xlu0 %v48, 8
    %v609 = vpop.permute.xlu0 %608
    %610 = vrot.lane.b32.xlu0 %v49, 8
    %v611 = vpop.permute.xlu0 %610
    %612 = vrot.lane.b32.xlu0 %v50, 8
    %v613 = vpop.permute.xlu0 %612
    %614 = vrot.lane.b32.xlu0 %v51, 8
    %v615 = vpop.permute.xlu0 %614
    %616 = vrot.lane.b32.xlu0 %v52, 8
    %v617 = vpop.permute.xlu0 %616
    %618 = vrot.lane.b32.xlu0 %v53, 8
    %v619 = vpop.permute.xlu0 %618
    %620 = vrot.lane.b32.xlu0 %v54, 8
    %v621 = vpop.permute.xlu0 %620
    %622 = vrot.lane.b32.xlu0 %v55, 8
    %v623 = vpop.permute.xlu0 %622
    %624 = vrot.lane.b32.xlu0 %v56, 8
    %v625 = vpop.permute.xlu0 %624
    %626 = vrot.lane.b32.xlu0 %v57, 8
    %v627 = vpop.permute.xlu0 %626
    %628 = vrot.lane.b32.xlu0 %v58, 8
    %v629 = vpop.permute.xlu0 %628
    %630 = vrot.lane.b32.xlu0 %v59, 8
    %v631 = vpop.permute.xlu0 %630
    %632 = vrot.lane.b32.xlu0 %v60, 8
    %v633 = vpop.permute.xlu0 %632
    %634 = vrot.lane.b32.xlu0 %v61, 8
    %v635 = vpop.permute.xlu0 %634
    %636 = vrot.lane.b32.xlu0 %v62, 8
    %v637 = vpop.permute.xlu0 %636
    %638 = vrot.lane.b32.xlu0 %v63, 8
    %v639 = vpop.permute.xlu0 %638
    %640 = vrot.lane.b32.xlu0 %v64, 8
    %v641 = vpop.permute.xlu0 %640
    %642 = vrot.lane.b32.xlu0 %v65, 8
    %v643 = vpop.permute.xlu0 %642
    %644 = vrot.lane.b32.xlu0 %v66, 8
    %v645 = vpop.permute.xlu0 %644
    %646 = vrot.lane.b32.xlu0 %v67, 8
    %v647 = vpop.permute.xlu0 %646
    %648 = vrot.lane.b32.xlu0 %v68, 8
    %v649 = vpop.permute.xlu0 %648
    %650 = vrot.lane.b32.xlu0 %v69, 8
    %v651 = vpop.permute.xlu0 %650
    %652 = vrot.lane.b32.xlu0 %v70, 8
    %v653 = vpop.permute.xlu0 %652
    %654 = vrot.lane.b32.xlu0 %v71, 8
    %v655 = vpop.permute.xlu0 %654
    %656 = vrot.lane.b32.xlu0 %v72, 8
    %v657 = vpop.permute.xlu0 %656
    %658 = vrot.lane.b32.xlu0 %v73, 8
    %v659 = vpop.permute.xlu0 %658
    %660 = vrot.lane.b32.xlu0 %v74, 8
    %v661 = vpop.permute.xlu0 %660
    %662 = vrot.lane.b32.xlu0 %v75, 8
    %v663 = vpop.permute.xlu0 %662
    %664 = vrot.lane.b32.xlu0 %v76, 8
    %v665 = vpop.permute.xlu0 %664
    %666 = vrot.lane.b32.xlu0 %v77, 8
    %v667 = vpop.permute.xlu0 %666
    %668 = vrot.lane.b32.xlu0 %v78, 8
    %v669 = vpop.permute.xlu0 %668
    %670 = vrot.lane.b32.xlu0 %v79, 8
    %v671 = vpop.permute.xlu0 %670
    %672 = vrot.lane.b32.xlu0 %v80, 8
    %v673 = vpop.permute.xlu0 %672
    %674 = vrot.lane.b32.xlu0 %v81, 8
    %v675 = vpop.permute.xlu0 %674
    %676 = vrot.lane.b32.xlu0 %v82, 8
    %v677 = vpop.permute.xlu0 %676
    %678 = vrot.lane.b32.xlu0 %v83, 8
    %v679 = vpop.permute.xlu0 %678
    %680 = vrot.lane.b32.xlu0 %v84, 8
    %v681 = vpop.permute.xlu0 %680
    %682 = vrot.lane.b32.xlu0 %v85, 8
    %v683 = vpop.permute.xlu0 %682
    %684 = vrot.lane.b32.xlu0 %v86, 8
    %v685 = vpop.permute.xlu0 %684
    %686 = vrot.lane.b32.xlu0 %v87, 8
    %v687 = vpop.permute.xlu0 %686
    %688 = vrot.lane.b32.xlu0 %v88, 8
    %v689 = vpop.permute.xlu0 %688
    %690 = vrot.lane.b32.xlu0 %v89, 8
    %v691 = vpop.permute.xlu0 %690
    %692 = vrot.lane.b32.xlu0 %v90, 8
    %v693 = vpop.permute.xlu0 %692
    %694 = vrot.lane.b32.xlu0 %v91, 8
    %v695 = vpop.permute.xlu0 %694
    %696 = vrot.lane.b32.xlu0 %v92, 8
    %v697 = vpop.permute.xlu0 %696
    %698 = vrot.lane.b32.xlu0 %v93, 8
    %v699 = vpop.permute.xlu0 %698
    %700 = vrot.lane.b32.xlu0 %v100, 8
    %v701 = vpop.permute.xlu0 %700
    %702 = vrot.lane.b32.xlu0 %v101, 8
    %v703 = vpop.permute.xlu0 %702
    %704 = vrot.lane.b32.xlu0 %v102, 8
    %v705 = vpop.permute.xlu0 %704
    %706 = vrot.lane.b32.xlu0 %v103, 8
    %v707 = vpop.permute.xlu0 %706
    %708 = vrot.lane.b32.xlu0 %v104, 8
    %v709 = vpop.permute.xlu0 %708
    %710 = vrot.lane.b32.xlu0 %v105, 8
    %v711 = vpop.permute.xlu0 %710
    %712 = vrot.lane.b32.xlu0 %v106, 8
    %v713 = vpop.permute.xlu0 %712
    %714 = vrot.lane.b32.xlu0 %v107, 8
    %v715 = vpop.permute.xlu0 %714
    %716 = vrot.lane.b32.xlu0 %v108, 8
    %v717 = vpop.permute.xlu0 %716
    %718 = vrot.lane.b32.xlu0 %v109, 8
    %v719 = vpop.permute.xlu0 %718
    %720 = vrot.lane.b32.xlu0 %v110, 8
    %v721 = vpop.permute.xlu0 %720
    %722 = vrot.lane.b32.xlu0 %v111, 8
    %v723 = vpop.permute.xlu0 %722
    %724 = vrot.lane.b32.xlu0 %v112, 8
    %v725 = vpop.permute.xlu0 %724
    %726 = vrot.lane.b32.xlu0 %v113, 8
    %v727 = vpop.permute.xlu0 %726
    %728 = vrot.lane.b32.xlu0 %v114, 8
    %v729 = vpop.permute.xlu0 %728
    %730 = vrot.lane.b32.xlu0 %v115, 8
    %v731 = vpop.permute.xlu0 %730
    %732 = vrot.lane.b32.xlu0 %v116, 8
    %v733 = vpop.permute.xlu0 %732
    %734 = vrot.lane.b32.xlu0 %v117, 8
    %v735 = vpop.permute.xlu0 %734
    %736 = vrot.lane.b32.xlu0 %v118, 8
    %v737 = vpop.permute.xlu0 %736
    %738 = vrot.lane.b32.xlu0 %v119, 8
    %v739 = vpop.permute.xlu0 %738
    %740 = vrot.lane.b32.xlu0 %v120, 8
    %v741 = vpop.permute.xlu0 %740
    %742 = vrot.lane.b32.xlu0 %v121, 8
    %v743 = vpop.permute.xlu0 %742
    %744 = vrot.lane.b32.xlu0 %v122, 8
    %v745 = vpop.permute.xlu0 %744
    %746 = vrot.lane.b32.xlu0 %v123, 8
    %v747 = vpop.permute.xlu0 %746
    %748 = vrot.lane.b32.xlu0 %v124, 8
    %v749 = vpop.permute.xlu0 %748
    %750 = vrot.lane.b32.xlu0 %v125, 8
    %v751 = vpop.permute.xlu0 %750
    %752 = vrot.lane.b32.xlu0 %v126, 8
    %v753 = vpop.permute.xlu0 %752
    %754 = vrot.lane.b32.xlu0 %v127, 8
    %v755 = vpop.permute.xlu0 %754
    %756 = vrot.lane.b32.xlu0 %v128, 8
    %v757 = vpop.permute.xlu0 %756
    %758 = vrot.lane.b32.xlu0 %v129, 8
    %v759 = vpop.permute.xlu0 %758
    %760 = vrot.lane.b32.xlu0 %v130, 8
    %v761 = vpop.permute.xlu0 %760
    %762 = vrot.lane.b32.xlu0 %v131, 8
    %v763 = vpop.permute.xlu0 %762
    %764 = vrot.lane.b32.xlu0 %v132, 8
    %v765 = vpop.permute.xlu0 %764
    %766 = vrot.lane.b32.xlu0 %v133, 8
    %v767 = vpop.permute.xlu0 %766
    %768 = vrot.lane.b32.xlu0 %v134, 8
    %v769 = vpop.permute.xlu0 %768
    %770 = vrot.lane.b32.xlu0 %v135, 8
    %v771 = vpop.permute.xlu0 %770
    %772 = vrot.lane.b32.xlu0 %v136, 8
    %v773 = vpop.permute.xlu0 %772
    %774 = vrot.lane.b32.xlu0 %v137, 8
    %v775 = vpop.permute.xlu0 %774
    %776 = vrot.lane.b32.xlu0 %v138, 8
    %v777 = vpop.permute.xlu0 %776
    %778 = vrot.lane.b32.xlu0 %v139, 8
    %v779 = vpop.permute.xlu0 %778
    %780 = vrot.lane.b32.xlu0 %v140, 8
    %v781 = vpop.permute.xlu0 %780
    %782 = vrot.lane.b32.xlu0 %v141, 8
    %v783 = vpop.permute.xlu0 %782
    %784 = vrot.lane.b32.xlu0 %v142, 8
    %v785 = vpop.permute.xlu0 %784
    %786 = vrot.lane.b32.xlu0 %v143, 8
    %v787 = vpop.permute.xlu0 %786
    %788 = vrot.lane.b32.xlu0 %v144, 8
    %v789 = vpop.permute.xlu0 %788
    %790 = vrot.lane.b32.xlu0 %v145, 8
    %v791 = vpop.permute.xlu0 %790
    %792 = vrot.lane.b32.xlu0 %v146, 8
    %v793 = vpop.permute.xlu0 %792
    %794 = vrot.lane.b32.xlu0 %v147, 8
    %v795 = vpop.permute.xlu0 %794
    %796 = vrot.lane.b32.xlu0 %v148, 8
    %v797 = vpop.permute.xlu0 %796
    %798 = vrot.lane.b32.xlu0 %v149, 8
    %v799 = vpop.permute.xlu0 %798
    %800 = vrot.lane.b32.xlu0 %v150, 8
    %v801 = vpop.permute.xlu0 %800
    %802 = vrot.lane.b32.xlu0 %v151, 8
    %v803 = vpop.permute.xlu0 %802
    %804 = vrot.lane.b32.xlu0 %v152, 8
    %v805 = vpop.permute.xlu0 %804
    %806 = vrot.lane.b32.xlu0 %v153, 8
    %v807 = vpop.permute.xlu0 %806
    %vm916 = vcmask 31744
    %v917 = vsel %vm916, %v34, %v263
    %v918 = vsel %vm916, %v35, %v265
    %v919 = vsel %vm916, %v36, %v267
    %v920 = vsel %vm916, %v37, %v269
    %v921 = vsel %vm916, %v38, %v271
    %v922 = vsel %vm916, %v39, %v273
    %v923 = vsel %vm916, %v40, %v275
    %v924 = vsel %vm916, %v41, %v277
    %v925 = vsel %vm916, %v42, %v279
    %v926 = vsel %vm916, %v43, %v281
    %v927 = vsel %vm916, %v44, %v283
    %v928 = vsel %vm916, %v45, %v285
    %v929 = vsel %vm916, %v46, %v287
    %v930 = vsel %vm916, %v47, %v289
    %v931 = vsel %vm916, %v48, %v291
    %v932 = vsel %vm916, %v49, %v293
    %v933 = vsel %vm916, %v50, %v295
    %v934 = vsel %vm916, %v51, %v297
    %v935 = vsel %vm916, %v52, %v299
    %v936 = vsel %vm916, %v53, %v301
    %v937 = vsel %vm916, %v54, %v303
    %v938 = vsel %vm916, %v55, %v305
    %v939 = vsel %vm916, %v56, %v307
    %v940 = vsel %vm916, %v57, %v309
    %v941 = vsel %vm916, %v58, %v311
    %v942 = vsel %vm916, %v59, %v313
    %v943 = vsel %vm916, %v60, %v315
    %v944 = vsel %vm916, %v61, %v317
    %v945 = vsel %vm916, %v62, %v319
    %v946 = vsel %vm916, %v63, %v321
    %v947 = vsel %vm916, %v64, %v323
    %v948 = vsel %vm916, %v65, %v325
    %v949 = vsel %vm916, %v66, %v327
    %v950 = vsel %vm916, %v67, %v329
    %v951 = vsel %vm916, %v68, %v331
    %v952 = vsel %vm916, %v69, %v333
    %v953 = vsel %vm916, %v70, %v335
    %v954 = vsel %vm916, %v71, %v337
    %v955 = vsel %vm916, %v72, %v339
    %v956 = vsel %vm916, %v73, %v341
    %v957 = vsel %vm916, %v74, %v343
    %v958 = vsel %vm916, %v75, %v345
    %v959 = vsel %vm916, %v76, %v347
    %v960 = vsel %vm916, %v77, %v349
    %v961 = vsel %vm916, %v78, %v351
    %v962 = vsel %vm916, %v79, %v353
    %v963 = vsel %vm916, %v80, %v355
    %v964 = vsel %vm916, %v81, %v357
    %v965 = vsel %vm916, %v82, %v359
    %v966 = vsel %vm916, %v83, %v361
    %v967 = vsel %vm916, %v84, %v363
    %v968 = vsel %vm916, %v85, %v365
    %v969 = vsel %vm916, %v86, %v367
    %v970 = vsel %vm916, %v87, %v369
    %v971 = vsel %vm916, %v94, %v371
    %v972 = vsel %vm916, %v95, %v373
    %v973 = vsel %vm916, %v96, %v375
    %v974 = vsel %vm916, %v97, %v377
    %v975 = vsel %vm916, %v98, %v379
    %v976 = vsel %vm916, %v99, %v381
    %v977 = vsel %vm916, %v100, %v383
    %v978 = vsel %vm916, %v101, %v385
    %v979 = vsel %vm916, %v102, %v387
    %v980 = vsel %vm916, %v103, %v389
    %v981 = vsel %vm916, %v104, %v391
    %v982 = vsel %vm916, %v105, %v393
    %v983 = vsel %vm916, %v106, %v395
    %v984 = vsel %vm916, %v107, %v397
    %v985 = vsel %vm916, %v108, %v399
    %v986 = vsel %vm916, %v109, %v401
    %v987 = vsel %vm916, %v110, %v403
    %v988 = vsel %vm916, %v111, %v405
    %v989 = vsel %vm916, %v112, %v407
    %v990 = vsel %vm916, %v113, %v409
    %v991 = vsel %vm916, %v114, %v411
    %v992 = vsel %vm916, %v115, %v413
    %v993 = vsel %vm916, %v116, %v415
    %v994 = vsel %vm916, %v117, %v417
    %v995 = vsel %vm916, %v118, %v419
    %v996 = vsel %vm916, %v119, %v421
    %v997 = vsel %vm916, %v120, %v423
    %v998 = vsel %vm916, %v121, %v425
    %v999 = vsel %vm916, %v122, %v427
    %v1000 = vsel %vm916, %v123, %v429
    %v1001 = vsel %vm916, %v124, %v431
    %v1002 = vsel %vm916, %v125, %v433
    %v1003 = vsel %vm916, %v126, %v435
    %v1004 = vsel %vm916, %v127, %v437
    %v1005 = vsel %vm916, %v128, %v439
    %v1006 = vsel %vm916, %v129, %v441
    %v1007 = vsel %vm916, %v130, %v443
    %v1008 = vsel %vm916, %v131, %v445
    %v1009 = vsel %vm916, %v132, %v447
    %v1010 = vsel %vm916, %v133, %v449
    %v1011 = vsel %vm916, %v134, %v451
    %v1012 = vsel %vm916, %v135, %v453
    %v1013 = vsel %vm916, %v136, %v455
    %v1014 = vsel %vm916, %v137, %v457
    %v1015 = vsel %vm916, %v138, %v459
    %v1016 = vsel %vm916, %v139, %v461
    %v1017 = vsel %vm916, %v140, %v463
    %v1018 = vsel %vm916, %v141, %v465
    %v1019 = vsel %vm916, %v142, %v467
    %v1020 = vsel %vm916, %v143, %v469
    %v1021 = vsel %vm916, %v144, %v471
    %v1022 = vsel %vm916, %v145, %v473
    %v1023 = vsel %vm916, %v146, %v475
    %v1024 = vsel %vm916, %v147, %v477
    %vm1025 = vcmask 64512
    %v1026 = vsel %vm1025, %v917, %v593
    %v1027 = vsel %vm1025, %v918, %v595
    %v1028 = vsel %vm1025, %v919, %v597
    %v1029 = vsel %vm1025, %v920, %v599
    %v1030 = vsel %vm1025, %v921, %v601
    %v1031 = vsel %vm1025, %v922, %v603
    %v1032 = vsel %vm1025, %v923, %v605
    %v1033 = vsel %vm1025, %v924, %v607
    %v1034 = vsel %vm1025, %v925, %v609
    %v1035 = vsel %vm1025, %v926, %v611
    %v1036 = vsel %vm1025, %v927, %v613
    %v1037 = vsel %vm1025, %v928, %v615
    %v1038 = vsel %vm1025, %v929, %v617
    %v1039 = vsel %vm1025, %v930, %v619
    %v1040 = vsel %vm1025, %v931, %v621
    %v1041 = vsel %vm1025, %v932, %v623
    %v1042 = vsel %vm1025, %v933, %v625
    %v1043 = vsel %vm1025, %v934, %v627
    %v1044 = vsel %vm1025, %v935, %v629
    %v1045 = vsel %vm1025, %v936, %v631
    %v1046 = vsel %vm1025, %v937, %v633
    %v1047 = vsel %vm1025, %v938, %v635
    %v1048 = vsel %vm1025, %v939, %v637
    %v1049 = vsel %vm1025, %v940, %v639
    %v1050 = vsel %vm1025, %v941, %v641
    %v1051 = vsel %vm1025, %v942, %v643
    %v1052 = vsel %vm1025, %v943, %v645
    %v1053 = vsel %vm1025, %v944, %v647
    %v1054 = vsel %vm1025, %v945, %v649
    %v1055 = vsel %vm1025, %v946, %v651
    %v1056 = vsel %vm1025, %v947, %v653
    %v1057 = vsel %vm1025, %v948, %v655
    %v1058 = vsel %vm1025, %v949, %v657
    %v1059 = vsel %vm1025, %v950, %v659
    %v1060 = vsel %vm1025, %v951, %v661
    %v1061 = vsel %vm1025, %v952, %v663
    %v1062 = vsel %vm1025, %v953, %v665
    %v1063 = vsel %vm1025, %v954, %v667
    %v1064 = vsel %vm1025, %v955, %v669
    %v1065 = vsel %vm1025, %v956, %v671
    %v1066 = vsel %vm1025, %v957, %v673
    %v1067 = vsel %vm1025, %v958, %v675
    %v1068 = vsel %vm1025, %v959, %v677
    %v1069 = vsel %vm1025, %v960, %v679
    %v1070 = vsel %vm1025, %v961, %v681
    %v1071 = vsel %vm1025, %v962, %v683
    %v1072 = vsel %vm1025, %v963, %v685
    %v1073 = vsel %vm1025, %v964, %v687
    %v1074 = vsel %vm1025, %v965, %v689
    %v1075 = vsel %vm1025, %v966, %v691
    %v1076 = vsel %vm1025, %v967, %v693
    %v1077 = vsel %vm1025, %v968, %v695
    %v1078 = vsel %vm1025, %v969, %v697
    %v1079 = vsel %vm1025, %v970, %v699
    %v1080 = vsel %vm1025, %v971, %v701
    %v1081 = vsel %vm1025, %v972, %v703
    %v1082 = vsel %vm1025, %v973, %v705
    %v1083 = vsel %vm1025, %v974, %v707
    %v1084 = vsel %vm1025, %v975, %v709
    %v1085 = vsel %vm1025, %v976, %v711
    %v1086 = vsel %vm1025, %v977, %v713
    %v1087 = vsel %vm1025, %v978, %v715
    %v1088 = vsel %vm1025, %v979, %v717
    %v1089 = vsel %vm1025, %v980, %v719
    %v1090 = vsel %vm1025, %v981, %v721
    %v1091 = vsel %vm1025, %v982, %v723
    %v1092 = vsel %vm1025, %v983, %v725
    %v1093 = vsel %vm1025, %v984, %v727
    %v1094 = vsel %vm1025, %v985, %v729
    %v1095 = vsel %vm1025, %v986, %v731
    %v1096 = vsel %vm1025, %v987, %v733
    %v1097 = vsel %vm1025, %v988, %v735
    %v1098 = vsel %vm1025, %v989, %v737
    %v1099 = vsel %vm1025, %v990, %v739
    %v1100 = vsel %vm1025, %v991, %v741
    %v1101 = vsel %vm1025, %v992, %v743
    %v1102 = vsel %vm1025, %v993, %v745
    %v1103 = vsel %vm1025, %v994, %v747
    %v1104 = vsel %vm1025, %v995, %v749
    %v1105 = vsel %vm1025, %v996, %v751
    %v1106 = vsel %vm1025, %v997, %v753
    %v1107 = vsel %vm1025, %v998, %v755
    %v1108 = vsel %vm1025, %v999, %v757
    %v1109 = vsel %vm1025, %v1000, %v759
    %v1110 = vsel %vm1025, %v1001, %v761
    %v1111 = vsel %vm1025, %v1002, %v763
    %v1112 = vsel %vm1025, %v1003, %v765
    %v1113 = vsel %vm1025, %v1004, %v767
    %v1114 = vsel %vm1025, %v1005, %v769
    %v1115 = vsel %vm1025, %v1006, %v771
    %v1116 = vsel %vm1025, %v1007, %v773
    %v1117 = vsel %vm1025, %v1008, %v775
    %v1118 = vsel %vm1025, %v1009, %v777
    %v1119 = vsel %vm1025, %v1010, %v779
    %v1120 = vsel %vm1025, %v1011, %v781
    %v1121 = vsel %vm1025, %v1012, %v783
    %v1122 = vsel %vm1025, %v1013, %v785
    %v1123 = vsel %vm1025, %v1014, %v787
    %v1124 = vsel %vm1025, %v1015, %v789
    %v1125 = vsel %vm1025, %v1016, %v791
    %v1126 = vsel %vm1025, %v1017, %v793
    %v1127 = vsel %vm1025, %v1018, %v795
    %v1128 = vsel %vm1025, %v1019, %v797
    %v1129 = vsel %vm1025, %v1020, %v799
    %v1130 = vsel %vm1025, %v1021, %v801
    %v1131 = vsel %vm1025, %v1022, %v803
    %v1132 = vsel %vm1025, %v1023, %v805
    %v1133 = vsel %vm1025, %v1024, %v807
    %vm1242 = vcmask 1046528
    %v1243 = vrot.slane %v1026, 1
    %v1244 = vrot.slane %v1027, 1
    %v1245 = vsel %vm1242, %v1243, %v1244
    %v1246 = vrot.slane %v1028, 1
    %v1247 = vsel %vm1242, %v1244, %v1246
    %v1248 = vrot.slane %v1029, 1
    %v1249 = vrot.slane %v1030, 1
    %v1250 = vsel %vm1242, %v1248, %v1249
    %v1251 = vrot.slane %v1031, 1
    %v1252 = vsel %vm1242, %v1249, %v1251
    %v1253 = vrot.slane %v1032, 1
    %v1254 = vrot.slane %v1033, 1
    %v1255 = vsel %vm1242, %v1253, %v1254
    %v1256 = vrot.slane %v1034, 1
    %v1257 = vsel %vm1242, %v1254, %v1256
    %v1258 = vrot.slane %v1035, 1
    %v1259 = vrot.slane %v1036, 1
    %v1260 = vsel %vm1242, %v1258, %v1259
    %v1261 = vrot.slane %v1037, 1
    %v1262 = vsel %vm1242, %v1259, %v1261
    %v1263 = vrot.slane %v1038, 1
    %v1264 = vrot.slane %v1039, 1
    %v1265 = vsel %vm1242, %v1263, %v1264
    %v1266 = vrot.slane %v1040, 1
    %v1267 = vsel %vm1242, %v1264, %v1266
    %v1268 = vrot.slane %v1041, 1
    %v1269 = vrot.slane %v1042, 1
    %v1270 = vsel %vm1242, %v1268, %v1269
    %v1271 = vrot.slane %v1043, 1
    %v1272 = vsel %vm1242, %v1269, %v1271
    %v1273 = vrot.slane %v1044, 1
    %v1274 = vrot.slane %v1045, 1
    %v1275 = vsel %vm1242, %v1273, %v1274
    %v1276 = vrot.slane %v1046, 1
    %v1277 = vsel %vm1242, %v1274, %v1276
    %v1278 = vrot.slane %v1047, 1
    %v1279 = vrot.slane %v1048, 1
    %v1280 = vsel %vm1242, %v1278, %v1279
    %v1281 = vrot.slane %v1049, 1
    %v1282 = vsel %vm1242, %v1279, %v1281
    %v1283 = vrot.slane %v1050, 1
    %v1284 = vrot.slane %v1051, 1
    %v1285 = vsel %vm1242, %v1283, %v1284
    %v1286 = vrot.slane %v1052, 1
    %v1287 = vsel %vm1242, %v1284, %v1286
    %v1288 = vrot.slane %v1053, 1
    %v1289 = vrot.slane %v1054, 1
    %v1290 = vsel %vm1242, %v1288, %v1289
    %v1291 = vrot.slane %v1055, 1
    %v1292 = vsel %vm1242, %v1289, %v1291
    %v1293 = vrot.slane %v1056, 1
    %v1294 = vrot.slane %v1057, 1
    %v1295 = vsel %vm1242, %v1293, %v1294
    %v1296 = vrot.slane %v1058, 1
    %v1297 = vsel %vm1242, %v1294, %v1296
    %v1298 = vrot.slane %v1059, 1
    %v1299 = vrot.slane %v1060, 1
    %v1300 = vsel %vm1242, %v1298, %v1299
    %v1301 = vrot.slane %v1061, 1
    %v1302 = vsel %vm1242, %v1299, %v1301
    %v1303 = vrot.slane %v1062, 1
    %v1304 = vrot.slane %v1063, 1
    %v1305 = vsel %vm1242, %v1303, %v1304
    %v1306 = vrot.slane %v1064, 1
    %v1307 = vsel %vm1242, %v1304, %v1306
    %v1308 = vrot.slane %v1065, 1
    %v1309 = vrot.slane %v1066, 1
    %v1310 = vsel %vm1242, %v1308, %v1309
    %v1311 = vrot.slane %v1067, 1
    %v1312 = vsel %vm1242, %v1309, %v1311
    %v1313 = vrot.slane %v1068, 1
    %v1314 = vrot.slane %v1069, 1
    %v1315 = vsel %vm1242, %v1313, %v1314
    %v1316 = vrot.slane %v1070, 1
    %v1317 = vsel %vm1242, %v1314, %v1316
    %v1318 = vrot.slane %v1071, 1
    %v1319 = vrot.slane %v1072, 1
    %v1320 = vsel %vm1242, %v1318, %v1319
    %v1321 = vrot.slane %v1073, 1
    %v1322 = vsel %vm1242, %v1319, %v1321
    %v1323 = vrot.slane %v1074, 1
    %v1324 = vrot.slane %v1075, 1
    %v1325 = vsel %vm1242, %v1323, %v1324
    %v1326 = vrot.slane %v1076, 1
    %v1327 = vsel %vm1242, %v1324, %v1326
    %v1328 = vrot.slane %v1077, 1
    %v1329 = vrot.slane %v1078, 1
    %v1330 = vsel %vm1242, %v1328, %v1329
    %v1331 = vrot.slane %v1079, 1
    %v1332 = vsel %vm1242, %v1329, %v1331
    %v1333 = vrot.slane %v1080, 1
    %v1334 = vrot.slane %v1081, 1
    %v1335 = vsel %vm1242, %v1333, %v1334
    %v1336 = vrot.slane %v1082, 1
    %v1337 = vsel %vm1242, %v1334, %v1336
    %v1338 = vrot.slane %v1083, 1
    %v1339 = vrot.slane %v1084, 1
    %v1340 = vsel %vm1242, %v1338, %v1339
    %v1341 = vrot.slane %v1085, 1
    %v1342 = vsel %vm1242, %v1339, %v1341
    %v1343 = vrot.slane %v1086, 1
    %v1344 = vrot.slane %v1087, 1
    %v1345 = vsel %vm1242, %v1343, %v1344
    %v1346 = vrot.slane %v1088, 1
    %v1347 = vsel %vm1242, %v1344, %v1346
    %v1348 = vrot.slane %v1089, 1
    %v1349 = vrot.slane %v1090, 1
    %v1350 = vsel %vm1242, %v1348, %v1349
    %v1351 = vrot.slane %v1091, 1
    %v1352 = vsel %vm1242, %v1349, %v1351
    %v1353 = vrot.slane %v1092, 1
    %v1354 = vrot.slane %v1093, 1
    %v1355 = vsel %vm1242, %v1353, %v1354
    %v1356 = vrot.slane %v1094, 1
    %v1357 = vsel %vm1242, %v1354, %v1356
    %v1358 = vrot.slane %v1095, 1
    %v1359 = vrot.slane %v1096, 1
    %v1360 = vsel %vm1242, %v1358, %v1359
    %v1361 = vrot.slane %v1097, 1
    %v1362 = vsel %vm1242, %v1359, %v1361
    %v1363 = vrot.slane %v1098, 1
    %v1364 = vrot.slane %v1099, 1
    %v1365 = vsel %vm1242, %v1363, %v1364
    %v1366 = vrot.slane %v1100, 1
    %v1367 = vsel %vm1242, %v1364, %v1366
    %v1368 = vrot.slane %v1101, 1
    %v1369 = vrot.slane %v1102, 1
    %v1370 = vsel %vm1242, %v1368, %v1369
    %v1371 = vrot.slane %v1103, 1
    %v1372 = vsel %vm1242, %v1369, %v1371
    %v1373 = vrot.slane %v1104, 1
    %v1374 = vrot.slane %v1105, 1
    %v1375 = vsel %vm1242, %v1373, %v1374
    %v1376 = vrot.slane %v1106, 1
    %v1377 = vsel %vm1242, %v1374, %v1376
    %v1378 = vrot.slane %v1107, 1
    %v1379 = vrot.slane %v1108, 1
    %v1380 = vsel %vm1242, %v1378, %v1379
    %v1381 = vrot.slane %v1109, 1
    %v1382 = vsel %vm1242, %v1379, %v1381
    %v1383 = vrot.slane %v1110, 1
    %v1384 = vrot.slane %v1111, 1
    %v1385 = vsel %vm1242, %v1383, %v1384
    %v1386 = vrot.slane %v1112, 1
    %v1387 = vsel %vm1242, %v1384, %v1386
    %v1388 = vrot.slane %v1113, 1
    %v1389 = vrot.slane %v1114, 1
    %v1390 = vsel %vm1242, %v1388, %v1389
    %v1391 = vrot.slane %v1115, 1
    %v1392 = vsel %vm1242, %v1389, %v1391
    %v1393 = vrot.slane %v1116, 1
    %v1394 = vrot.slane %v1117, 1
    %v1395 = vsel %vm1242, %v1393, %v1394
    %v1396 = vrot.slane %v1118, 1
    %v1397 = vsel %vm1242, %v1394, %v1396
    %v1398 = vrot.slane %v1119, 1
    %v1399 = vrot.slane %v1120, 1
    %v1400 = vsel %vm1242, %v1398, %v1399
    %v1401 = vrot.slane %v1121, 1
    %v1402 = vsel %vm1242, %v1399, %v1401
    %v1403 = vrot.slane %v1122, 1
    %v1404 = vrot.slane %v1123, 1
    %v1405 = vsel %vm1242, %v1403, %v1404
    %v1406 = vrot.slane %v1124, 1
    %v1407 = vsel %vm1242, %v1404, %v1406
    %v1408 = vrot.slane %v1125, 1
    %v1409 = vrot.slane %v1126, 1
    %v1410 = vsel %vm1242, %v1408, %v1409
    %v1411 = vrot.slane %v1127, 1
    %v1412 = vsel %vm1242, %v1409, %v1411
    %v1413 = vrot.slane %v1128, 1
    %v1414 = vrot.slane %v1129, 1
    %v1415 = vsel %vm1242, %v1413, %v1414
    %v1416 = vrot.slane %v1130, 1
    %v1417 = vsel %vm1242, %v1414, %v1416
    %v1418 = vrot.slane %v1131, 1
    %v1419 = vrot.slane %v1132, 1
    %v1420 = vsel %vm1242, %v1418, %v1419
    %v1421 = vrot.slane %v1133, 1
    %v1422 = vsel %vm1242, %v1419, %v1421
    %1423 = vrot.lane.b32.xlu0 %v1245, 12
    %v1424 = vpop.permute.xlu0 %1423
    %1425 = vrot.lane.b32.xlu0 %v1247, 12
    %v1426 = vpop.permute.xlu0 %1425
    %1427 = vrot.lane.b32.xlu0 %v1246, 12
    %v1428 = vpop.permute.xlu0 %1427
    %1429 = vrot.lane.b32.xlu0 %v1250, 12
    %v1430 = vpop.permute.xlu0 %1429
    %1431 = vrot.lane.b32.xlu0 %v1252, 12
    %v1432 = vpop.permute.xlu0 %1431
    %1433 = vrot.lane.b32.xlu0 %v1251, 12
    %v1434 = vpop.permute.xlu0 %1433
    %1435 = vrot.lane.b32.xlu0 %v1255, 12
    %v1436 = vpop.permute.xlu0 %1435
    %1437 = vrot.lane.b32.xlu0 %v1257, 12
    %v1438 = vpop.permute.xlu0 %1437
    %1439 = vrot.lane.b32.xlu0 %v1256, 12
    %v1440 = vpop.permute.xlu0 %1439
    %1441 = vrot.lane.b32.xlu0 %v1260, 12
    %v1442 = vpop.permute.xlu0 %1441
    %1443 = vrot.lane.b32.xlu0 %v1262, 12
    %v1444 = vpop.permute.xlu0 %1443
    %1445 = vrot.lane.b32.xlu0 %v1261, 12
    %v1446 = vpop.permute.xlu0 %1445
    %1447 = vrot.lane.b32.xlu0 %v1265, 12
    %v1448 = vpop.permute.xlu0 %1447
    %1449 = vrot.lane.b32.xlu0 %v1267, 12
    %v1450 = vpop.permute.xlu0 %1449
    %1451 = vrot.lane.b32.xlu0 %v1266, 12
    %v1452 = vpop.permute.xlu0 %1451
    %1453 = vrot.lane.b32.xlu0 %v1270, 12
    %v1454 = vpop.permute.xlu0 %1453
    %1455 = vrot.lane.b32.xlu0 %v1272, 12
    %v1456 = vpop.permute.xlu0 %1455
    %1457 = vrot.lane.b32.xlu0 %v1271, 12
    %v1458 = vpop.permute.xlu0 %1457
    %1459 = vrot.lane.b32.xlu0 %v1275, 12
    %v1460 = vpop.permute.xlu0 %1459
    %1461 = vrot.lane.b32.xlu0 %v1277, 12
    %v1462 = vpop.permute.xlu0 %1461
    %1463 = vrot.lane.b32.xlu0 %v1276, 12
    %v1464 = vpop.permute.xlu0 %1463
    %1465 = vrot.lane.b32.xlu0 %v1280, 12
    %v1466 = vpop.permute.xlu0 %1465
    %1467 = vrot.lane.b32.xlu0 %v1282, 12
    %v1468 = vpop.permute.xlu0 %1467
    %1469 = vrot.lane.b32.xlu0 %v1281, 12
    %v1470 = vpop.permute.xlu0 %1469
    %1471 = vrot.lane.b32.xlu0 %v1285, 12
    %v1472 = vpop.permute.xlu0 %1471
    %1473 = vrot.lane.b32.xlu0 %v1287, 12
    %v1474 = vpop.permute.xlu0 %1473
    %1475 = vrot.lane.b32.xlu0 %v1286, 12
    %v1476 = vpop.permute.xlu0 %1475
    %1477 = vrot.lane.b32.xlu0 %v1290, 12
    %v1478 = vpop.permute.xlu0 %1477
    %1479 = vrot.lane.b32.xlu0 %v1292, 12
    %v1480 = vpop.permute.xlu0 %1479
    %1481 = vrot.lane.b32.xlu0 %v1291, 12
    %v1482 = vpop.permute.xlu0 %1481
    %1483 = vrot.lane.b32.xlu0 %v1295, 12
    %v1484 = vpop.permute.xlu0 %1483
    %1485 = vrot.lane.b32.xlu0 %v1297, 12
    %v1486 = vpop.permute.xlu0 %1485
    %1487 = vrot.lane.b32.xlu0 %v1296, 12
    %v1488 = vpop.permute.xlu0 %1487
    %1489 = vrot.lane.b32.xlu0 %v1300, 12
    %v1490 = vpop.permute.xlu0 %1489
    %1491 = vrot.lane.b32.xlu0 %v1302, 12
    %v1492 = vpop.permute.xlu0 %1491
    %1493 = vrot.lane.b32.xlu0 %v1301, 12
    %v1494 = vpop.permute.xlu0 %1493
    %1495 = vrot.lane.b32.xlu0 %v1305, 12
    %v1496 = vpop.permute.xlu0 %1495
    %1497 = vrot.lane.b32.xlu0 %v1307, 12
    %v1498 = vpop.permute.xlu0 %1497
    %1499 = vrot.lane.b32.xlu0 %v1306, 12
    %v1500 = vpop.permute.xlu0 %1499
    %1501 = vrot.lane.b32.xlu0 %v1310, 12
    %v1502 = vpop.permute.xlu0 %1501
    %1503 = vrot.lane.b32.xlu0 %v1312, 12
    %v1504 = vpop.permute.xlu0 %1503
    %1505 = vrot.lane.b32.xlu0 %v1311, 12
    %v1506 = vpop.permute.xlu0 %1505
    %1507 = vrot.lane.b32.xlu0 %v1315, 12
    %v1508 = vpop.permute.xlu0 %1507
    %1509 = vrot.lane.b32.xlu0 %v1317, 12
    %v1510 = vpop.permute.xlu0 %1509
    %1511 = vrot.lane.b32.xlu0 %v1316, 12
    %v1512 = vpop.permute.xlu0 %1511
    %1513 = vrot.lane.b32.xlu0 %v1320, 12
    %v1514 = vpop.permute.xlu0 %1513
    %1515 = vrot.lane.b32.xlu0 %v1322, 12
    %v1516 = vpop.permute.xlu0 %1515
    %1517 = vrot.lane.b32.xlu0 %v1321, 12
    %v1518 = vpop.permute.xlu0 %1517
    %1519 = vrot.lane.b32.xlu0 %v1325, 12
    %v1520 = vpop.permute.xlu0 %1519
    %1521 = vrot.lane.b32.xlu0 %v1327, 12
    %v1522 = vpop.permute.xlu0 %1521
    %1523 = vrot.lane.b32.xlu0 %v1326, 12
    %v1524 = vpop.permute.xlu0 %1523
    %1525 = vrot.lane.b32.xlu0 %v1330, 12
    %v1526 = vpop.permute.xlu0 %1525
    %1527 = vrot.lane.b32.xlu0 %v1332, 12
    %v1528 = vpop.permute.xlu0 %1527
    %1529 = vrot.lane.b32.xlu0 %v1331, 12
    %v1530 = vpop.permute.xlu0 %1529
    %1531 = vrot.lane.b32.xlu0 %v1335, 12
    %v1532 = vpop.permute.xlu0 %1531
    %1533 = vrot.lane.b32.xlu0 %v1337, 12
    %v1534 = vpop.permute.xlu0 %1533
    %1535 = vrot.lane.b32.xlu0 %v1336, 12
    %v1536 = vpop.permute.xlu0 %1535
    %1537 = vrot.lane.b32.xlu0 %v1340, 12
    %v1538 = vpop.permute.xlu0 %1537
    %1539 = vrot.lane.b32.xlu0 %v1342, 12
    %v1540 = vpop.permute.xlu0 %1539
    %1541 = vrot.lane.b32.xlu0 %v1341, 12
    %v1542 = vpop.permute.xlu0 %1541
    %1543 = vrot.lane.b32.xlu0 %v1345, 12
    %v1544 = vpop.permute.xlu0 %1543
    %1545 = vrot.lane.b32.xlu0 %v1347, 12
    %v1546 = vpop.permute.xlu0 %1545
    %1547 = vrot.lane.b32.xlu0 %v1346, 12
    %v1548 = vpop.permute.xlu0 %1547
    %1549 = vrot.lane.b32.xlu0 %v1350, 12
    %v1550 = vpop.permute.xlu0 %1549
    %1551 = vrot.lane.b32.xlu0 %v1352, 12
    %v1552 = vpop.permute.xlu0 %1551
    %1553 = vrot.lane.b32.xlu0 %v1351, 12
    %v1554 = vpop.permute.xlu0 %1553
    %1555 = vrot.lane.b32.xlu0 %v1355, 12
    %v1556 = vpop.permute.xlu0 %1555
    %1557 = vrot.lane.b32.xlu0 %v1357, 12
    %v1558 = vpop.permute.xlu0 %1557
    %1559 = vrot.lane.b32.xlu0 %v1356, 12
    %v1560 = vpop.permute.xlu0 %1559
    %1561 = vrot.lane.b32.xlu0 %v1360, 12
    %v1562 = vpop.permute.xlu0 %1561
    %1563 = vrot.lane.b32.xlu0 %v1362, 12
    %v1564 = vpop.permute.xlu0 %1563
    %1565 = vrot.lane.b32.xlu0 %v1361, 12
    %v1566 = vpop.permute.xlu0 %1565
    %1567 = vrot.lane.b32.xlu0 %v1365, 12
    %v1568 = vpop.permute.xlu0 %1567
    %1569 = vrot.lane.b32.xlu0 %v1367, 12
    %v1570 = vpop.permute.xlu0 %1569
    %1571 = vrot.lane.b32.xlu0 %v1366, 12
    %v1572 = vpop.permute.xlu0 %1571
    %1573 = vrot.lane.b32.xlu0 %v1370, 12
    %v1574 = vpop.permute.xlu0 %1573
    %1575 = vrot.lane.b32.xlu0 %v1372, 12
    %v1576 = vpop.permute.xlu0 %1575
    %1577 = vrot.lane.b32.xlu0 %v1371, 12
    %v1578 = vpop.permute.xlu0 %1577
    %1579 = vrot.lane.b32.xlu0 %v1375, 12
    %v1580 = vpop.permute.xlu0 %1579
    %1581 = vrot.lane.b32.xlu0 %v1377, 12
    %v1582 = vpop.permute.xlu0 %1581
    %1583 = vrot.lane.b32.xlu0 %v1376, 12
    %v1584 = vpop.permute.xlu0 %1583
    %1585 = vrot.lane.b32.xlu0 %v1380, 12
    %v1586 = vpop.permute.xlu0 %1585
    %1587 = vrot.lane.b32.xlu0 %v1382, 12
    %v1588 = vpop.permute.xlu0 %1587
    %1589 = vrot.lane.b32.xlu0 %v1381, 12
    %v1590 = vpop.permute.xlu0 %1589
    %1591 = vrot.lane.b32.xlu0 %v1385, 12
    %v1592 = vpop.permute.xlu0 %1591
    %1593 = vrot.lane.b32.xlu0 %v1387, 12
    %v1594 = vpop.permute.xlu0 %1593
    %1595 = vrot.lane.b32.xlu0 %v1386, 12
    %v1596 = vpop.permute.xlu0 %1595
    %1597 = vrot.lane.b32.xlu0 %v1390, 12
    %v1598 = vpop.permute.xlu0 %1597
    %1599 = vrot.lane.b32.xlu0 %v1392, 12
    %v1600 = vpop.permute.xlu0 %1599
    %1601 = vrot.lane.b32.xlu0 %v1391, 12
    %v1602 = vpop.permute.xlu0 %1601
    %1603 = vrot.lane.b32.xlu0 %v1395, 12
    %v1604 = vpop.permute.xlu0 %1603
    %1605 = vrot.lane.b32.xlu0 %v1397, 12
    %v1606 = vpop.permute.xlu0 %1605
    %1607 = vrot.lane.b32.xlu0 %v1396, 12
    %v1608 = vpop.permute.xlu0 %1607
    %1609 = vrot.lane.b32.xlu0 %v1400, 12
    %v1610 = vpop.permute.xlu0 %1609
    %1611 = vrot.lane.b32.xlu0 %v1402, 12
    %v1612 = vpop.permute.xlu0 %1611
    %1613 = vrot.lane.b32.xlu0 %v1401, 12
    %v1614 = vpop.permute.xlu0 %1613
    %1615 = vrot.lane.b32.xlu0 %v1405, 12
    %v1616 = vpop.permute.xlu0 %1615
    %1617 = vrot.lane.b32.xlu0 %v1407, 12
    %v1618 = vpop.permute.xlu0 %1617
    %1619 = vrot.lane.b32.xlu0 %v1406, 12
    %v1620 = vpop.permute.xlu0 %1619
    %1621 = vrot.lane.b32.xlu0 %v1410, 12
    %v1622 = vpop.permute.xlu0 %1621
    %1623 = vrot.lane.b32.xlu0 %v1412, 12
    %v1624 = vpop.permute.xlu0 %1623
    %1625 = vrot.lane.b32.xlu0 %v1411, 12
    %v1626 = vpop.permute.xlu0 %1625
    %1627 = vrot.lane.b32.xlu0 %v1415, 12
    %v1628 = vpop.permute.xlu0 %1627
    %1629 = vrot.lane.b32.xlu0 %v1417, 12
    %v1630 = vpop.permute.xlu0 %1629
    %1631 = vrot.lane.b32.xlu0 %v1416, 12
    %v1632 = vpop.permute.xlu0 %1631
    %1633 = vrot.lane.b32.xlu0 %v1420, 12
    %v1634 = vpop.permute.xlu0 %1633
    %1635 = vrot.lane.b32.xlu0 %v1422, 12
    %v1636 = vpop.permute.xlu0 %1635
    %1637 = vrot.lane.b32.xlu0 %v1421, 12
    %v1638 = vpop.permute.xlu0 %1637
    %vm1747 = vcmask 1045504
    %v1748 = vrot.slane %v1026, 2
    %v1749 = vrot.slane %v1027, 2
    %v1750 = vsel %vm1747, %v1748, %v1749
    %v1751 = vrot.slane %v1028, 2
    %v1752 = vsel %vm1747, %v1749, %v1751
    %v1753 = vrot.slane %v1029, 2
    %v1754 = vrot.slane %v1030, 2
    %v1755 = vsel %vm1747, %v1753, %v1754
    %v1756 = vrot.slane %v1031, 2
    %v1757 = vsel %vm1747, %v1754, %v1756
    %v1758 = vrot.slane %v1032, 2
    %v1759 = vrot.slane %v1033, 2
    %v1760 = vsel %vm1747, %v1758, %v1759
    %v1761 = vrot.slane %v1034, 2
    %v1762 = vsel %vm1747, %v1759, %v1761
    %v1763 = vrot.slane %v1035, 2
    %v1764 = vrot.slane %v1036, 2
    %v1765 = vsel %vm1747, %v1763, %v1764
    %v1766 = vrot.slane %v1037, 2
    %v1767 = vsel %vm1747, %v1764, %v1766
    %v1768 = vrot.slane %v1038, 2
    %v1769 = vrot.slane %v1039, 2
    %v1770 = vsel %vm1747, %v1768, %v1769
    %v1771 = vrot.slane %v1040, 2
    %v1772 = vsel %vm1747, %v1769, %v1771
    %v1773 = vrot.slane %v1041, 2
    %v1774 = vrot.slane %v1042, 2
    %v1775 = vsel %vm1747, %v1773, %v1774
    %v1776 = vrot.slane %v1043, 2
    %v1777 = vsel %vm1747, %v1774, %v1776
    %v1778 = vrot.slane %v1044, 2
    %v1779 = vrot.slane %v1045, 2
    %v1780 = vsel %vm1747, %v1778, %v1779
    %v1781 = vrot.slane %v1046, 2
    %v1782 = vsel %vm1747, %v1779, %v1781
    %v1783 = vrot.slane %v1047, 2
    %v1784 = vrot.slane %v1048, 2
    %v1785 = vsel %vm1747, %v1783, %v1784
    %v1786 = vrot.slane %v1049, 2
    %v1787 = vsel %vm1747, %v1784, %v1786
    %v1788 = vrot.slane %v1050, 2
    %v1789 = vrot.slane %v1051, 2
    %v1790 = vsel %vm1747, %v1788, %v1789
    %v1791 = vrot.slane %v1052, 2
    %v1792 = vsel %vm1747, %v1789, %v1791
    %v1793 = vrot.slane %v1053, 2
    %v1794 = vrot.slane %v1054, 2
    %v1795 = vsel %vm1747, %v1793, %v1794
    %v1796 = vrot.slane %v1055, 2
    %v1797 = vsel %vm1747, %v1794, %v1796
    %v1798 = vrot.slane %v1056, 2
    %v1799 = vrot.slane %v1057, 2
    %v1800 = vsel %vm1747, %v1798, %v1799
    %v1801 = vrot.slane %v1058, 2
    %v1802 = vsel %vm1747, %v1799, %v1801
    %v1803 = vrot.slane %v1059, 2
    %v1804 = vrot.slane %v1060, 2
    %v1805 = vsel %vm1747, %v1803, %v1804
    %v1806 = vrot.slane %v1061, 2
    %v1807 = vsel %vm1747, %v1804, %v1806
    %v1808 = vrot.slane %v1062, 2
    %v1809 = vrot.slane %v1063, 2
    %v1810 = vsel %vm1747, %v1808, %v1809
    %v1811 = vrot.slane %v1064, 2
    %v1812 = vsel %vm1747, %v1809, %v1811
    %v1813 = vrot.slane %v1065, 2
    %v1814 = vrot.slane %v1066, 2
    %v1815 = vsel %vm1747, %v1813, %v1814
    %v1816 = vrot.slane %v1067, 2
    %v1817 = vsel %vm1747, %v1814, %v1816
    %v1818 = vrot.slane %v1068, 2
    %v1819 = vrot.slane %v1069, 2
    %v1820 = vsel %vm1747, %v1818, %v1819
    %v1821 = vrot.slane %v1070, 2
    %v1822 = vsel %vm1747, %v1819, %v1821
    %v1823 = vrot.slane %v1071, 2
    %v1824 = vrot.slane %v1072, 2
    %v1825 = vsel %vm1747, %v1823, %v1824
    %v1826 = vrot.slane %v1073, 2
    %v1827 = vsel %vm1747, %v1824, %v1826
    %v1828 = vrot.slane %v1074, 2
    %v1829 = vrot.slane %v1075, 2
    %v1830 = vsel %vm1747, %v1828, %v1829
    %v1831 = vrot.slane %v1076, 2
    %v1832 = vsel %vm1747, %v1829, %v1831
    %v1833 = vrot.slane %v1077, 2
    %v1834 = vrot.slane %v1078, 2
    %v1835 = vsel %vm1747, %v1833, %v1834
    %v1836 = vrot.slane %v1079, 2
    %v1837 = vsel %vm1747, %v1834, %v1836
    %v1838 = vrot.slane %v1080, 2
    %v1839 = vrot.slane %v1081, 2
    %v1840 = vsel %vm1747, %v1838, %v1839
    %v1841 = vrot.slane %v1082, 2
    %v1842 = vsel %vm1747, %v1839, %v1841
    %v1843 = vrot.slane %v1083, 2
    %v1844 = vrot.slane %v1084, 2
    %v1845 = vsel %vm1747, %v1843, %v1844
    %v1846 = vrot.slane %v1085, 2
    %v1847 = vsel %vm1747, %v1844, %v1846
    %v1848 = vrot.slane %v1086, 2
    %v1849 = vrot.slane %v1087, 2
    %v1850 = vsel %vm1747, %v1848, %v1849
    %v1851 = vrot.slane %v1088, 2
    %v1852 = vsel %vm1747, %v1849, %v1851
    %v1853 = vrot.slane %v1089, 2
    %v1854 = vrot.slane %v1090, 2
    %v1855 = vsel %vm1747, %v1853, %v1854
    %v1856 = vrot.slane %v1091, 2
    %v1857 = vsel %vm1747, %v1854, %v1856
    %v1858 = vrot.slane %v1092, 2
    %v1859 = vrot.slane %v1093, 2
    %v1860 = vsel %vm1747, %v1858, %v1859
    %v1861 = vrot.slane %v1094, 2
    %v1862 = vsel %vm1747, %v1859, %v1861
    %v1863 = vrot.slane %v1095, 2
    %v1864 = vrot.slane %v1096, 2
    %v1865 = vsel %vm1747, %v1863, %v1864
    %v1866 = vrot.slane %v1097, 2
    %v1867 = vsel %vm1747, %v1864, %v1866
    %v1868 = vrot.slane %v1098, 2
    %v1869 = vrot.slane %v1099, 2
    %v1870 = vsel %vm1747, %v1868, %v1869
    %v1871 = vrot.slane %v1100, 2
    %v1872 = vsel %vm1747, %v1869, %v1871
    %v1873 = vrot.slane %v1101, 2
    %v1874 = vrot.slane %v1102, 2
    %v1875 = vsel %vm1747, %v1873, %v1874
    %v1876 = vrot.slane %v1103, 2
    %v1877 = vsel %vm1747, %v1874, %v1876
    %v1878 = vrot.slane %v1104, 2
    %v1879 = vrot.slane %v1105, 2
    %v1880 = vsel %vm1747, %v1878, %v1879
    %v1881 = vrot.slane %v1106, 2
    %v1882 = vsel %vm1747, %v1879, %v1881
    %v1883 = vrot.slane %v1107, 2
    %v1884 = vrot.slane %v1108, 2
    %v1885 = vsel %vm1747, %v1883, %v1884
    %v1886 = vrot.slane %v1109, 2
    %v1887 = vsel %vm1747, %v1884, %v1886
    %v1888 = vrot.slane %v1110, 2
    %v1889 = vrot.slane %v1111, 2
    %v1890 = vsel %vm1747, %v1888, %v1889
    %v1891 = vrot.slane %v1112, 2
    %v1892 = vsel %vm1747, %v1889, %v1891
    %v1893 = vrot.slane %v1113, 2
    %v1894 = vrot.slane %v1114, 2
    %v1895 = vsel %vm1747, %v1893, %v1894
    %v1896 = vrot.slane %v1115, 2
    %v1897 = vsel %vm1747, %v1894, %v1896
    %v1898 = vrot.slane %v1116, 2
    %v1899 = vrot.slane %v1117, 2
    %v1900 = vsel %vm1747, %v1898, %v1899
    %v1901 = vrot.slane %v1118, 2
    %v1902 = vsel %vm1747, %v1899, %v1901
    %v1903 = vrot.slane %v1119, 2
    %v1904 = vrot.slane %v1120, 2
    %v1905 = vsel %vm1747, %v1903, %v1904
    %v1906 = vrot.slane %v1121, 2
    %v1907 = vsel %vm1747, %v1904, %v1906
    %v1908 = vrot.slane %v1122, 2
    %v1909 = vrot.slane %v1123, 2
    %v1910 = vsel %vm1747, %v1908, %v1909
    %v1911 = vrot.slane %v1124, 2
    %v1912 = vsel %vm1747, %v1909, %v1911
    %v1913 = vrot.slane %v1125, 2
    %v1914 = vrot.slane %v1126, 2
    %v1915 = vsel %vm1747, %v1913, %v1914
    %v1916 = vrot.slane %v1127, 2
    %v1917 = vsel %vm1747, %v1914, %v1916
    %v1918 = vrot.slane %v1128, 2
    %v1919 = vrot.slane %v1129, 2
    %v1920 = vsel %vm1747, %v1918, %v1919
    %v1921 = vrot.slane %v1130, 2
    %v1922 = vsel %vm1747, %v1919, %v1921
    %v1923 = vrot.slane %v1131, 2
    %v1924 = vrot.slane %v1132, 2
    %v1925 = vsel %vm1747, %v1923, %v1924
    %v1926 = vrot.slane %v1133, 2
    %v1927 = vsel %vm1747, %v1924, %v1926
    %1928 = vrot.lane.b32.xlu0 %v1750, 24
    %v1929 = vpop.permute.xlu0 %1928
    %1930 = vrot.lane.b32.xlu0 %v1752, 24
    %v1931 = vpop.permute.xlu0 %1930
    %1932 = vrot.lane.b32.xlu0 %v1751, 24
    %v1933 = vpop.permute.xlu0 %1932
    %1934 = vrot.lane.b32.xlu0 %v1755, 24
    %v1935 = vpop.permute.xlu0 %1934
    %1936 = vrot.lane.b32.xlu0 %v1757, 24
    %v1937 = vpop.permute.xlu0 %1936
    %1938 = vrot.lane.b32.xlu0 %v1756, 24
    %v1939 = vpop.permute.xlu0 %1938
    %1940 = vrot.lane.b32.xlu0 %v1760, 24
    %v1941 = vpop.permute.xlu0 %1940
    %1942 = vrot.lane.b32.xlu0 %v1762, 24
    %v1943 = vpop.permute.xlu0 %1942
    %1944 = vrot.lane.b32.xlu0 %v1761, 24
    %v1945 = vpop.permute.xlu0 %1944
    %1946 = vrot.lane.b32.xlu0 %v1765, 24
    %v1947 = vpop.permute.xlu0 %1946
    %1948 = vrot.lane.b32.xlu0 %v1767, 24
    %v1949 = vpop.permute.xlu0 %1948
    %1950 = vrot.lane.b32.xlu0 %v1766, 24
    %v1951 = vpop.permute.xlu0 %1950
    %1952 = vrot.lane.b32.xlu0 %v1770, 24
    %v1953 = vpop.permute.xlu0 %1952
    %1954 = vrot.lane.b32.xlu0 %v1772, 24
    %v1955 = vpop.permute.xlu0 %1954
    %1956 = vrot.lane.b32.xlu0 %v1771, 24
    %v1957 = vpop.permute.xlu0 %1956
    %1958 = vrot.lane.b32.xlu0 %v1775, 24
    %v1959 = vpop.permute.xlu0 %1958
    %1960 = vrot.lane.b32.xlu0 %v1777, 24
    %v1961 = vpop.permute.xlu0 %1960
    %1962 = vrot.lane.b32.xlu0 %v1776, 24
    %v1963 = vpop.permute.xlu0 %1962
    %1964 = vrot.lane.b32.xlu0 %v1780, 24
    %v1965 = vpop.permute.xlu0 %1964
    %1966 = vrot.lane.b32.xlu0 %v1782, 24
    %v1967 = vpop.permute.xlu0 %1966
    %1968 = vrot.lane.b32.xlu0 %v1781, 24
    %v1969 = vpop.permute.xlu0 %1968
    %1970 = vrot.lane.b32.xlu0 %v1785, 24
    %v1971 = vpop.permute.xlu0 %1970
    %1972 = vrot.lane.b32.xlu0 %v1787, 24
    %v1973 = vpop.permute.xlu0 %1972
    %1974 = vrot.lane.b32.xlu0 %v1786, 24
    %v1975 = vpop.permute.xlu0 %1974
    %1976 = vrot.lane.b32.xlu0 %v1790, 24
    %v1977 = vpop.permute.xlu0 %1976
    %1978 = vrot.lane.b32.xlu0 %v1792, 24
    %v1979 = vpop.permute.xlu0 %1978
    %1980 = vrot.lane.b32.xlu0 %v1791, 24
    %v1981 = vpop.permute.xlu0 %1980
    %1982 = vrot.lane.b32.xlu0 %v1795, 24
    %v1983 = vpop.permute.xlu0 %1982
    %1984 = vrot.lane.b32.xlu0 %v1797, 24
    %v1985 = vpop.permute.xlu0 %1984
    %1986 = vrot.lane.b32.xlu0 %v1796, 24
    %v1987 = vpop.permute.xlu0 %1986
    %1988 = vrot.lane.b32.xlu0 %v1800, 24
    %v1989 = vpop.permute.xlu0 %1988
    %1990 = vrot.lane.b32.xlu0 %v1802, 24
    %v1991 = vpop.permute.xlu0 %1990
    %1992 = vrot.lane.b32.xlu0 %v1801, 24
    %v1993 = vpop.permute.xlu0 %1992
    %1994 = vrot.lane.b32.xlu0 %v1805, 24
    %v1995 = vpop.permute.xlu0 %1994
    %1996 = vrot.lane.b32.xlu0 %v1807, 24
    %v1997 = vpop.permute.xlu0 %1996
    %1998 = vrot.lane.b32.xlu0 %v1806, 24
    %v1999 = vpop.permute.xlu0 %1998
    %2000 = vrot.lane.b32.xlu0 %v1810, 24
    %v2001 = vpop.permute.xlu0 %2000
    %2002 = vrot.lane.b32.xlu0 %v1812, 24
    %v2003 = vpop.permute.xlu0 %2002
    %2004 = vrot.lane.b32.xlu0 %v1811, 24
    %v2005 = vpop.permute.xlu0 %2004
    %2006 = vrot.lane.b32.xlu0 %v1815, 24
    %v2007 = vpop.permute.xlu0 %2006
    %2008 = vrot.lane.b32.xlu0 %v1817, 24
    %v2009 = vpop.permute.xlu0 %2008
    %2010 = vrot.lane.b32.xlu0 %v1816, 24
    %v2011 = vpop.permute.xlu0 %2010
    %2012 = vrot.lane.b32.xlu0 %v1820, 24
    %v2013 = vpop.permute.xlu0 %2012
    %2014 = vrot.lane.b32.xlu0 %v1822, 24
    %v2015 = vpop.permute.xlu0 %2014
    %2016 = vrot.lane.b32.xlu0 %v1821, 24
    %v2017 = vpop.permute.xlu0 %2016
    %2018 = vrot.lane.b32.xlu0 %v1825, 24
    %v2019 = vpop.permute.xlu0 %2018
    %2020 = vrot.lane.b32.xlu0 %v1827, 24
    %v2021 = vpop.permute.xlu0 %2020
    %2022 = vrot.lane.b32.xlu0 %v1826, 24
    %v2023 = vpop.permute.xlu0 %2022
    %2024 = vrot.lane.b32.xlu0 %v1830, 24
    %v2025 = vpop.permute.xlu0 %2024
    %2026 = vrot.lane.b32.xlu0 %v1832, 24
    %v2027 = vpop.permute.xlu0 %2026
    %2028 = vrot.lane.b32.xlu0 %v1831, 24
    %v2029 = vpop.permute.xlu0 %2028
    %2030 = vrot.lane.b32.xlu0 %v1835, 24
    %v2031 = vpop.permute.xlu0 %2030
    %2032 = vrot.lane.b32.xlu0 %v1837, 24
    %v2033 = vpop.permute.xlu0 %2032
    %2034 = vrot.lane.b32.xlu0 %v1836, 24
    %v2035 = vpop.permute.xlu0 %2034
    %2036 = vrot.lane.b32.xlu0 %v1840, 24
    %v2037 = vpop.permute.xlu0 %2036
    %2038 = vrot.lane.b32.xlu0 %v1842, 24
    %v2039 = vpop.permute.xlu0 %2038
    %2040 = vrot.lane.b32.xlu0 %v1841, 24
    %v2041 = vpop.permute.xlu0 %2040
    %2042 = vrot.lane.b32.xlu0 %v1845, 24
    %v2043 = vpop.permute.xlu0 %2042
    %2044 = vrot.lane.b32.xlu0 %v1847, 24
    %v2045 = vpop.permute.xlu0 %2044
    %2046 = vrot.lane.b32.xlu0 %v1846, 24
    %v2047 = vpop.permute.xlu0 %2046
    %2048 = vrot.lane.b32.xlu0 %v1850, 24
    %v2049 = vpop.permute.xlu0 %2048
    %2050 = vrot.lane.b32.xlu0 %v1852, 24
    %v2051 = vpop.permute.xlu0 %2050
    %2052 = vrot.lane.b32.xlu0 %v1851, 24
    %v2053 = vpop.permute.xlu0 %2052
    %2054 = vrot.lane.b32.xlu0 %v1855, 24
    %v2055 = vpop.permute.xlu0 %2054
    %2056 = vrot.lane.b32.xlu0 %v1857, 24
    %v2057 = vpop.permute.xlu0 %2056
    %2058 = vrot.lane.b32.xlu0 %v1856, 24
    %v2059 = vpop.permute.xlu0 %2058
    %2060 = vrot.lane.b32.xlu0 %v1860, 24
    %v2061 = vpop.permute.xlu0 %2060
    %2062 = vrot.lane.b32.xlu0 %v1862, 24
    %v2063 = vpop.permute.xlu0 %2062
    %2064 = vrot.lane.b32.xlu0 %v1861, 24
    %v2065 = vpop.permute.xlu0 %2064
    %2066 = vrot.lane.b32.xlu0 %v1865, 24
    %v2067 = vpop.permute.xlu0 %2066
    %2068 = vrot.lane.b32.xlu0 %v1867, 24
    %v2069 = vpop.permute.xlu0 %2068
    %2070 = vrot.lane.b32.xlu0 %v1866, 24
    %v2071 = vpop.permute.xlu0 %2070
    %2072 = vrot.lane.b32.xlu0 %v1870, 24
    %v2073 = vpop.permute.xlu0 %2072
    %2074 = vrot.lane.b32.xlu0 %v1872, 24
    %v2075 = vpop.permute.xlu0 %2074
    %2076 = vrot.lane.b32.xlu0 %v1871, 24
    %v2077 = vpop.permute.xlu0 %2076
    %2078 = vrot.lane.b32.xlu0 %v1875, 24
    %v2079 = vpop.permute.xlu0 %2078
    %2080 = vrot.lane.b32.xlu0 %v1877, 24
    %v2081 = vpop.permute.xlu0 %2080
    %2082 = vrot.lane.b32.xlu0 %v1876, 24
    %v2083 = vpop.permute.xlu0 %2082
    %2084 = vrot.lane.b32.xlu0 %v1880, 24
    %v2085 = vpop.permute.xlu0 %2084
    %2086 = vrot.lane.b32.xlu0 %v1882, 24
    %v2087 = vpop.permute.xlu0 %2086
    %2088 = vrot.lane.b32.xlu0 %v1881, 24
    %v2089 = vpop.permute.xlu0 %2088
    %2090 = vrot.lane.b32.xlu0 %v1885, 24
    %v2091 = vpop.permute.xlu0 %2090
    %2092 = vrot.lane.b32.xlu0 %v1887, 24
    %v2093 = vpop.permute.xlu0 %2092
    %2094 = vrot.lane.b32.xlu0 %v1886, 24
    %v2095 = vpop.permute.xlu0 %2094
    %2096 = vrot.lane.b32.xlu0 %v1890, 24
    %v2097 = vpop.permute.xlu0 %2096
    %2098 = vrot.lane.b32.xlu0 %v1892, 24
    %v2099 = vpop.permute.xlu0 %2098
    %2100 = vrot.lane.b32.xlu0 %v1891, 24
    %v2101 = vpop.permute.xlu0 %2100
    %2102 = vrot.lane.b32.xlu0 %v1895, 24
    %v2103 = vpop.permute.xlu0 %2102
    %2104 = vrot.lane.b32.xlu0 %v1897, 24
    %v2105 = vpop.permute.xlu0 %2104
    %2106 = vrot.lane.b32.xlu0 %v1896, 24
    %v2107 = vpop.permute.xlu0 %2106
    %2108 = vrot.lane.b32.xlu0 %v1900, 24
    %v2109 = vpop.permute.xlu0 %2108
    %2110 = vrot.lane.b32.xlu0 %v1902, 24
    %v2111 = vpop.permute.xlu0 %2110
    %2112 = vrot.lane.b32.xlu0 %v1901, 24
    %v2113 = vpop.permute.xlu0 %2112
    %2114 = vrot.lane.b32.xlu0 %v1905, 24
    %v2115 = vpop.permute.xlu0 %2114
    %2116 = vrot.lane.b32.xlu0 %v1907, 24
    %v2117 = vpop.permute.xlu0 %2116
    %2118 = vrot.lane.b32.xlu0 %v1906, 24
    %v2119 = vpop.permute.xlu0 %2118
    %2120 = vrot.lane.b32.xlu0 %v1910, 24
    %v2121 = vpop.permute.xlu0 %2120
    %2122 = vrot.lane.b32.xlu0 %v1912, 24
    %v2123 = vpop.permute.xlu0 %2122
    %2124 = vrot.lane.b32.xlu0 %v1911, 24
    %v2125 = vpop.permute.xlu0 %2124
    %2126 = vrot.lane.b32.xlu0 %v1915, 24
    %v2127 = vpop.permute.xlu0 %2126
    %2128 = vrot.lane.b32.xlu0 %v1917, 24
    %v2129 = vpop.permute.xlu0 %2128
    %2130 = vrot.lane.b32.xlu0 %v1916, 24
    %v2131 = vpop.permute.xlu0 %2130
    %2132 = vrot.lane.b32.xlu0 %v1920, 24
    %v2133 = vpop.permute.xlu0 %2132
    %2134 = vrot.lane.b32.xlu0 %v1922, 24
    %v2135 = vpop.permute.xlu0 %2134
    %2136 = vrot.lane.b32.xlu0 %v1921, 24
    %v2137 = vpop.permute.xlu0 %2136
    %2138 = vrot.lane.b32.xlu0 %v1925, 24
    %v2139 = vpop.permute.xlu0 %2138
    %2140 = vrot.lane.b32.xlu0 %v1927, 24
    %v2141 = vpop.permute.xlu0 %2140
    %2142 = vrot.lane.b32.xlu0 %v1926, 24
    %v2143 = vpop.permute.xlu0 %2142
    %vm2252 = vcmask 97280
    %v2253 = vsel %vm2252, %v1026, %v1424
    %v2254 = vsel %vm2252, %v1027, %v1426
    %v2255 = vsel %vm2252, %v1028, %v1428
    %v2256 = vsel %vm2252, %v1029, %v1430
    %v2257 = vsel %vm2252, %v1030, %v1432
    %v2258 = vsel %vm2252, %v1031, %v1434
    %v2259 = vsel %vm2252, %v1032, %v1436
    %v2260 = vsel %vm2252, %v1033, %v1438
    %v2261 = vsel %vm2252, %v1034, %v1440
    %v2262 = vsel %vm2252, %v1035, %v1442
    %v2263 = vsel %vm2252, %v1036, %v1444
    %v2264 = vsel %vm2252, %v1037, %v1446
    %v2265 = vsel %vm2252, %v1038, %v1448
    %v2266 = vsel %vm2252, %v1039, %v1450
    %v2267 = vsel %vm2252, %v1040, %v1452
    %v2268 = vsel %vm2252, %v1041, %v1454
    %v2269 = vsel %vm2252, %v1042, %v1456
    %v2270 = vsel %vm2252, %v1043, %v1458
    %v2271 = vsel %vm2252, %v1044, %v1460
    %v2272 = vsel %vm2252, %v1045, %v1462
    %v2273 = vsel %vm2252, %v1046, %v1464
    %v2274 = vsel %vm2252, %v1047, %v1466
    %v2275 = vsel %vm2252, %v1048, %v1468
    %v2276 = vsel %vm2252, %v1049, %v1470
    %v2277 = vsel %vm2252, %v1050, %v1472
    %v2278 = vsel %vm2252, %v1051, %v1474
    %v2279 = vsel %vm2252, %v1052, %v1476
    %v2280 = vsel %vm2252, %v1053, %v1478
    %v2281 = vsel %vm2252, %v1054, %v1480
    %v2282 = vsel %vm2252, %v1055, %v1482
    %v2283 = vsel %vm2252, %v1056, %v1484
    %v2284 = vsel %vm2252, %v1057, %v1486
    %v2285 = vsel %vm2252, %v1058, %v1488
    %v2286 = vsel %vm2252, %v1059, %v1490
    %v2287 = vsel %vm2252, %v1060, %v1492
    %v2288 = vsel %vm2252, %v1061, %v1494
    %v2289 = vsel %vm2252, %v1062, %v1496
    %v2290 = vsel %vm2252, %v1063, %v1498
    %v2291 = vsel %vm2252, %v1064, %v1500
    %v2292 = vsel %vm2252, %v1065, %v1502
    %v2293 = vsel %vm2252, %v1066, %v1504
    %v2294 = vsel %vm2252, %v1067, %v1506
    %v2295 = vsel %vm2252, %v1068, %v1508
    %v2296 = vsel %vm2252, %v1069, %v1510
    %v2297 = vsel %vm2252, %v1070, %v1512
    %v2298 = vsel %vm2252, %v1071, %v1514
    %v2299 = vsel %vm2252, %v1072, %v1516
    %v2300 = vsel %vm2252, %v1073, %v1518
    %v2301 = vsel %vm2252, %v1074, %v1520
    %v2302 = vsel %vm2252, %v1075, %v1522
    %v2303 = vsel %vm2252, %v1076, %v1524
    %v2304 = vsel %vm2252, %v1077, %v1526
    %v2305 = vsel %vm2252, %v1078, %v1528
    %v2306 = vsel %vm2252, %v1079, %v1530
    %v2307 = vsel %vm2252, %v1080, %v1532
    %v2308 = vsel %vm2252, %v1081, %v1534
    %v2309 = vsel %vm2252, %v1082, %v1536
    %v2310 = vsel %vm2252, %v1083, %v1538
    %v2311 = vsel %vm2252, %v1084, %v1540
    %v2312 = vsel %vm2252, %v1085, %v1542
    %v2313 = vsel %vm2252, %v1086, %v1544
    %v2314 = vsel %vm2252, %v1087, %v1546
    %v2315 = vsel %vm2252, %v1088, %v1548
    %v2316 = vsel %vm2252, %v1089, %v1550
    %v2317 = vsel %vm2252, %v1090, %v1552
    %v2318 = vsel %vm2252, %v1091, %v1554
    %v2319 = vsel %vm2252, %v1092, %v1556
    %v2320 = vsel %vm2252, %v1093, %v1558
    %v2321 = vsel %vm2252, %v1094, %v1560
    %v2322 = vsel %vm2252, %v1095, %v1562
    %v2323 = vsel %vm2252, %v1096, %v1564
    %v2324 = vsel %vm2252, %v1097, %v1566
    %v2325 = vsel %vm2252, %v1098, %v1568
    %v2326 = vsel %vm2252, %v1099, %v1570
    %v2327 = vsel %vm2252, %v1100, %v1572
    %v2328 = vsel %vm2252, %v1101, %v1574
    %v2329 = vsel %vm2252, %v1102, %v1576
    %v2330 = vsel %vm2252, %v1103, %v1578
    %v2331 = vsel %vm2252, %v1104, %v1580
    %v2332 = vsel %vm2252, %v1105, %v1582
    %v2333 = vsel %vm2252, %v1106, %v1584
    %v2334 = vsel %vm2252, %v1107, %v1586
    %v2335 = vsel %vm2252, %v1108, %v1588
    %v2336 = vsel %vm2252, %v1109, %v1590
    %v2337 = vsel %vm2252, %v1110, %v1592
    %v2338 = vsel %vm2252, %v1111, %v1594
    %v2339 = vsel %vm2252, %v1112, %v1596
    %v2340 = vsel %vm2252, %v1113, %v1598
    %v2341 = vsel %vm2252, %v1114, %v1600
    %v2342 = vsel %vm2252, %v1115, %v1602
    %v2343 = vsel %vm2252, %v1116, %v1604
    %v2344 = vsel %vm2252, %v1117, %v1606
    %v2345 = vsel %vm2252, %v1118, %v1608
    %v2346 = vsel %vm2252, %v1119, %v1610
    %v2347 = vsel %vm2252, %v1120, %v1612
    %v2348 = vsel %vm2252, %v1121, %v1614
    %v2349 = vsel %vm2252, %v1122, %v1616
    %v2350 = vsel %vm2252, %v1123, %v1618
    %v2351 = vsel %vm2252, %v1124, %v1620
    %v2352 = vsel %vm2252, %v1125, %v1622
    %v2353 = vsel %vm2252, %v1126, %v1624
    %v2354 = vsel %vm2252, %v1127, %v1626
    %v2355 = vsel %vm2252, %v1128, %v1628
    %v2356 = vsel %vm2252, %v1129, %v1630
    %v2357 = vsel %vm2252, %v1130, %v1632
    %v2358 = vsel %vm2252, %v1131, %v1634
    %v2359 = vsel %vm2252, %v1132, %v1636
    %v2360 = vsel %vm2252, %v1133, %v1638
    %vm2361 = vcmask 195584
    %v2362 = vsel %vm2361, %v2253, %v1929
    %v2363 = vsel %vm2361, %v2254, %v1931
    %v2364 = vsel %vm2361, %v2255, %v1933
    %v2365 = vsel %vm2361, %v2256, %v1935
    %v2366 = vsel %vm2361, %v2257, %v1937
    %v2367 = vsel %vm2361, %v2258, %v1939
    %v2368 = vsel %vm2361, %v2259, %v1941
    %v2369 = vsel %vm2361, %v2260, %v1943
    %v2370 = vsel %vm2361, %v2261, %v1945
    %v2371 = vsel %vm2361, %v2262, %v1947
    %v2372 = vsel %vm2361, %v2263, %v1949
    %v2373 = vsel %vm2361, %v2264, %v1951
    %v2374 = vsel %vm2361, %v2265, %v1953
    %v2375 = vsel %vm2361, %v2266, %v1955
    %v2376 = vsel %vm2361, %v2267, %v1957
    %v2377 = vsel %vm2361, %v2268, %v1959
    %v2378 = vsel %vm2361, %v2269, %v1961
    %v2379 = vsel %vm2361, %v2270, %v1963
    %v2380 = vsel %vm2361, %v2271, %v1965
    %v2381 = vsel %vm2361, %v2272, %v1967
    %v2382 = vsel %vm2361, %v2273, %v1969
    %v2383 = vsel %vm2361, %v2274, %v1971
    %v2384 = vsel %vm2361, %v2275, %v1973
    %v2385 = vsel %vm2361, %v2276, %v1975
    %v2386 = vsel %vm2361, %v2277, %v1977
    %v2387 = vsel %vm2361, %v2278, %v1979
    %v2388 = vsel %vm2361, %v2279, %v1981
    %v2389 = vsel %vm2361, %v2280, %v1983
    %v2390 = vsel %vm2361, %v2281, %v1985
    %v2391 = vsel %vm2361, %v2282, %v1987
    %v2392 = vsel %vm2361, %v2283, %v1989
    %v2393 = vsel %vm2361, %v2284, %v1991
    %v2394 = vsel %vm2361, %v2285, %v1993
    %v2395 = vsel %vm2361, %v2286, %v1995
    %v2396 = vsel %vm2361, %v2287, %v1997
    %v2397 = vsel %vm2361, %v2288, %v1999
    %v2398 = vsel %vm2361, %v2289, %v2001
    %v2399 = vsel %vm2361, %v2290, %v2003
    %v2400 = vsel %vm2361, %v2291, %v2005
    %v2401 = vsel %vm2361, %v2292, %v2007
    %v2402 = vsel %vm2361, %v2293, %v2009
    %v2403 = vsel %vm2361, %v2294, %v2011
    %v2404 = vsel %vm2361, %v2295, %v2013
    %v2405 = vsel %vm2361, %v2296, %v2015
    %v2406 = vsel %vm2361, %v2297, %v2017
    %v2407 = vsel %vm2361, %v2298, %v2019
    %v2408 = vsel %vm2361, %v2299, %v2021
    %v2409 = vsel %vm2361, %v2300, %v2023
    %v2410 = vsel %vm2361, %v2301, %v2025
    %v2411 = vsel %vm2361, %v2302, %v2027
    %v2412 = vsel %vm2361, %v2303, %v2029
    %v2413 = vsel %vm2361, %v2304, %v2031
    %v2414 = vsel %vm2361, %v2305, %v2033
    %v2415 = vsel %vm2361, %v2306, %v2035
    %v2416 = vsel %vm2361, %v2307, %v2037
    %v2417 = vsel %vm2361, %v2308, %v2039
    %v2418 = vsel %vm2361, %v2309, %v2041
    %v2419 = vsel %vm2361, %v2310, %v2043
    %v2420 = vsel %vm2361, %v2311, %v2045
    %v2421 = vsel %vm2361, %v2312, %v2047
    %v2422 = vsel %vm2361, %v2313, %v2049
    %v2423 = vsel %vm2361, %v2314, %v2051
    %v2424 = vsel %vm2361, %v2315, %v2053
    %v2425 = vsel %vm2361, %v2316, %v2055
    %v2426 = vsel %vm2361, %v2317, %v2057
    %v2427 = vsel %vm2361, %v2318, %v2059
    %v2428 = vsel %vm2361, %v2319, %v2061
    %v2429 = vsel %vm2361, %v2320, %v2063
    %v2430 = vsel %vm2361, %v2321, %v2065
    %v2431 = vsel %vm2361, %v2322, %v2067
    %v2432 = vsel %vm2361, %v2323, %v2069
    %v2433 = vsel %vm2361, %v2324, %v2071
    %v2434 = vsel %vm2361, %v2325, %v2073
    %v2435 = vsel %vm2361, %v2326, %v2075
    %v2436 = vsel %vm2361, %v2327, %v2077
    %v2437 = vsel %vm2361, %v2328, %v2079
    %v2438 = vsel %vm2361, %v2329, %v2081
    %v2439 = vsel %vm2361, %v2330, %v2083
    %v2440 = vsel %vm2361, %v2331, %v2085
    %v2441 = vsel %vm2361, %v2332, %v2087
    %v2442 = vsel %vm2361, %v2333, %v2089
    %v2443 = vsel %vm2361, %v2334, %v2091
    %v2444 = vsel %vm2361, %v2335, %v2093
    %v2445 = vsel %vm2361, %v2336, %v2095
    %v2446 = vsel %vm2361, %v2337, %v2097
    %v2447 = vsel %vm2361, %v2338, %v2099
    %v2448 = vsel %vm2361, %v2339, %v2101
    %v2449 = vsel %vm2361, %v2340, %v2103
    %v2450 = vsel %vm2361, %v2341, %v2105
    %v2451 = vsel %vm2361, %v2342, %v2107
    %v2452 = vsel %vm2361, %v2343, %v2109
    %v2453 = vsel %vm2361, %v2344, %v2111
    %v2454 = vsel %vm2361, %v2345, %v2113
    %v2455 = vsel %vm2361, %v2346, %v2115
    %v2456 = vsel %vm2361, %v2347, %v2117
    %v2457 = vsel %vm2361, %v2348, %v2119
    %v2458 = vsel %vm2361, %v2349, %v2121
    %v2459 = vsel %vm2361, %v2350, %v2123
    %v2460 = vsel %vm2361, %v2351, %v2125
    %v2461 = vsel %vm2361, %v2352, %v2127
    %v2462 = vsel %vm2361, %v2353, %v2129
    %v2463 = vsel %vm2361, %v2354, %v2131
    %v2464 = vsel %vm2361, %v2355, %v2133
    %v2465 = vsel %vm2361, %v2356, %v2135
    %v2466 = vsel %vm2361, %v2357, %v2137
    %v2467 = vsel %vm2361, %v2358, %v2139
    %v2468 = vsel %vm2361, %v2359, %v2141
    %v2469 = vsel %vm2361, %v2360, %v2143
    %v2578 = vcombine.high %v2362, %v2362
    %v2580 = vunpack.c.l.s4 1983009808
    %v2581 = vunpack.c.0.s8 %v2580
    %v2582 = vlaneseq
    %v2583 = vshrl.u32 %v2582, 7
    %v2584 = vsub.s32 %v2581, %v2583
    %v2585 = vrot.slane %v2362, %v2584
    %v2587 = vunpack.c.l.s4 1983009808
    %v2588 = vunpack.c.0.s8 %v2587
    %v2589 = vlaneseq
    %v2590 = vshrl.u32 %v2589, 7
    %v2591 = vsub.s32 %v2588, %v2590
    %v2592 = vrot.slane %v2578, %v2591
    %v2593 = vcombine.high %v2585, %v2585
    %v2594 = vcombine.high %v2592, %v2592
    %v2595 = vcombine.high %v2363, %v2363
    %v2597 = vunpack.c.l.s4 1983009808
    %v2598 = vunpack.c.0.s8 %v2597
    %v2599 = vlaneseq
    %v2600 = vshrl.u32 %v2599, 7
    %v2601 = vsub.s32 %v2598, %v2600
    %v2602 = vrot.slane %v2363, %v2601
    %v2604 = vunpack.c.l.s4 1983009808
    %v2605 = vunpack.c.0.s8 %v2604
    %v2606 = vlaneseq
    %v2607 = vshrl.u32 %v2606, 7
    %v2608 = vsub.s32 %v2605, %v2607
    %v2609 = vrot.slane %v2595, %v2608
    %v2610 = vcombine.high %v2602, %v2602
    %v2611 = vcombine.high %v2609, %v2609
    %v2613 = vunpack.c.l.s4 1983009808
    %v2614 = vunpack.c.0.s8 %v2613
    %v2615 = vlaneseq
    %v2616 = vshrl.u32 %v2615, 7
    %v2617 = vsub.s32 %v2614, %v2616
    %v2618 = vrot.slane %v2364, %v2617
    %v2619 = vcombine.high %v2365, %v2365
    %v2621 = vunpack.c.l.s4 1983009808
    %v2622 = vunpack.c.0.s8 %v2621
    %v2623 = vlaneseq
    %v2624 = vshrl.u32 %v2623, 7
    %v2625 = vsub.s32 %v2622, %v2624
    %v2626 = vrot.slane %v2365, %v2625
    %v2628 = vunpack.c.l.s4 1983009808
    %v2629 = vunpack.c.0.s8 %v2628
    %v2630 = vlaneseq
    %v2631 = vshrl.u32 %v2630, 7
    %v2632 = vsub.s32 %v2629, %v2631
    %v2633 = vrot.slane %v2619, %v2632
    %v2634 = vcombine.high %v2626, %v2626
    %v2635 = vcombine.high %v2633, %v2633
    %v2636 = vcombine.high %v2366, %v2366
    %v2638 = vunpack.c.l.s4 1983009808
    %v2639 = vunpack.c.0.s8 %v2638
    %v2640 = vlaneseq
    %v2641 = vshrl.u32 %v2640, 7
    %v2642 = vsub.s32 %v2639, %v2641
    %v2643 = vrot.slane %v2366, %v2642
    %v2645 = vunpack.c.l.s4 1983009808
    %v2646 = vunpack.c.0.s8 %v2645
    %v2647 = vlaneseq
    %v2648 = vshrl.u32 %v2647, 7
    %v2649 = vsub.s32 %v2646, %v2648
    %v2650 = vrot.slane %v2636, %v2649
    %v2651 = vcombine.high %v2643, %v2643
    %v2652 = vcombine.high %v2650, %v2650
    %v2654 = vunpack.c.l.s4 1983009808
    %v2655 = vunpack.c.0.s8 %v2654
    %v2656 = vlaneseq
    %v2657 = vshrl.u32 %v2656, 7
    %v2658 = vsub.s32 %v2655, %v2657
    %v2659 = vrot.slane %v2367, %v2658
    %v2660 = vcombine.high %v2368, %v2368
    %v2662 = vunpack.c.l.s4 1983009808
    %v2663 = vunpack.c.0.s8 %v2662
    %v2664 = vlaneseq
    %v2665 = vshrl.u32 %v2664, 7
    %v2666 = vsub.s32 %v2663, %v2665
    %v2667 = vrot.slane %v2368, %v2666
    %v2669 = vunpack.c.l.s4 1983009808
    %v2670 = vunpack.c.0.s8 %v2669
    %v2671 = vlaneseq
    %v2672 = vshrl.u32 %v2671, 7
    %v2673 = vsub.s32 %v2670, %v2672
    %v2674 = vrot.slane %v2660, %v2673
    %v2675 = vcombine.high %v2667, %v2667
    %v2676 = vcombine.high %v2674, %v2674
    %v2677 = vcombine.high %v2369, %v2369
    %v2679 = vunpack.c.l.s4 1983009808
    %v2680 = vunpack.c.0.s8 %v2679
    %v2681 = vlaneseq
    %v2682 = vshrl.u32 %v2681, 7
    %v2683 = vsub.s32 %v2680, %v2682
    %v2684 = vrot.slane %v2369, %v2683
    %v2686 = vunpack.c.l.s4 1983009808
    %v2687 = vunpack.c.0.s8 %v2686
    %v2688 = vlaneseq
    %v2689 = vshrl.u32 %v2688, 7
    %v2690 = vsub.s32 %v2687, %v2689
    %v2691 = vrot.slane %v2677, %v2690
    %v2692 = vcombine.high %v2684, %v2684
    %v2693 = vcombine.high %v2691, %v2691
    %v2695 = vunpack.c.l.s4 1983009808
    %v2696 = vunpack.c.0.s8 %v2695
    %v2697 = vlaneseq
    %v2698 = vshrl.u32 %v2697, 7
    %v2699 = vsub.s32 %v2696, %v2698
    %v2700 = vrot.slane %v2370, %v2699
    %v2701 = vcombine.high %v2371, %v2371
    %v2703 = vunpack.c.l.s4 1983009808
    %v2704 = vunpack.c.0.s8 %v2703
    %v2705 = vlaneseq
    %v2706 = vshrl.u32 %v2705, 7
    %v2707 = vsub.s32 %v2704, %v2706
    %v2708 = vrot.slane %v2371, %v2707
    %v2710 = vunpack.c.l.s4 1983009808
    %v2711 = vunpack.c.0.s8 %v2710
    %v2712 = vlaneseq
    %v2713 = vshrl.u32 %v2712, 7
    %v2714 = vsub.s32 %v2711, %v2713
    %v2715 = vrot.slane %v2701, %v2714
    %v2716 = vcombine.high %v2708, %v2708
    %v2717 = vcombine.high %v2715, %v2715
    %v2718 = vcombine.high %v2372, %v2372
    %v2720 = vunpack.c.l.s4 1983009808
    %v2721 = vunpack.c.0.s8 %v2720
    %v2722 = vlaneseq
    %v2723 = vshrl.u32 %v2722, 7
    %v2724 = vsub.s32 %v2721, %v2723
    %v2725 = vrot.slane %v2372, %v2724
    %v2727 = vunpack.c.l.s4 1983009808
    %v2728 = vunpack.c.0.s8 %v2727
    %v2729 = vlaneseq
    %v2730 = vshrl.u32 %v2729, 7
    %v2731 = vsub.s32 %v2728, %v2730
    %v2732 = vrot.slane %v2718, %v2731
    %v2733 = vcombine.high %v2725, %v2725
    %v2734 = vcombine.high %v2732, %v2732
    %v2736 = vunpack.c.l.s4 1983009808
    %v2737 = vunpack.c.0.s8 %v2736
    %v2738 = vlaneseq
    %v2739 = vshrl.u32 %v2738, 7
    %v2740 = vsub.s32 %v2737, %v2739
    %v2741 = vrot.slane %v2373, %v2740
    %v2742 = vcombine.high %v2374, %v2374
    %v2744 = vunpack.c.l.s4 1983009808
    %v2745 = vunpack.c.0.s8 %v2744
    %v2746 = vlaneseq
    %v2747 = vshrl.u32 %v2746, 7
    %v2748 = vsub.s32 %v2745, %v2747
    %v2749 = vrot.slane %v2374, %v2748
    %v2751 = vunpack.c.l.s4 1983009808
    %v2752 = vunpack.c.0.s8 %v2751
    %v2753 = vlaneseq
    %v2754 = vshrl.u32 %v2753, 7
    %v2755 = vsub.s32 %v2752, %v2754
    %v2756 = vrot.slane %v2742, %v2755
    %v2757 = vcombine.high %v2749, %v2749
    %v2758 = vcombine.high %v2756, %v2756
    %v2759 = vcombine.high %v2375, %v2375
    %v2761 = vunpack.c.l.s4 1983009808
    %v2762 = vunpack.c.0.s8 %v2761
    %v2763 = vlaneseq
    %v2764 = vshrl.u32 %v2763, 7
    %v2765 = vsub.s32 %v2762, %v2764
    %v2766 = vrot.slane %v2375, %v2765
    %v2768 = vunpack.c.l.s4 1983009808
    %v2769 = vunpack.c.0.s8 %v2768
    %v2770 = vlaneseq
    %v2771 = vshrl.u32 %v2770, 7
    %v2772 = vsub.s32 %v2769, %v2771
    %v2773 = vrot.slane %v2759, %v2772
    %v2774 = vcombine.high %v2766, %v2766
    %v2775 = vcombine.high %v2773, %v2773
    %v2777 = vunpack.c.l.s4 1983009808
    %v2778 = vunpack.c.0.s8 %v2777
    %v2779 = vlaneseq
    %v2780 = vshrl.u32 %v2779, 7
    %v2781 = vsub.s32 %v2778, %v2780
    %v2782 = vrot.slane %v2376, %v2781
    %v2783 = vcombine.high %v2377, %v2377
    %v2785 = vunpack.c.l.s4 1983009808
    %v2786 = vunpack.c.0.s8 %v2785
    %v2787 = vlaneseq
    %v2788 = vshrl.u32 %v2787, 7
    %v2789 = vsub.s32 %v2786, %v2788
    %v2790 = vrot.slane %v2377, %v2789
    %v2792 = vunpack.c.l.s4 1983009808
    %v2793 = vunpack.c.0.s8 %v2792
    %v2794 = vlaneseq
    %v2795 = vshrl.u32 %v2794, 7
    %v2796 = vsub.s32 %v2793, %v2795
    %v2797 = vrot.slane %v2783, %v2796
    %v2798 = vcombine.high %v2790, %v2790
    %v2799 = vcombine.high %v2797, %v2797
    %v2800 = vcombine.high %v2378, %v2378
    %v2802 = vunpack.c.l.s4 1983009808
    %v2803 = vunpack.c.0.s8 %v2802
    %v2804 = vlaneseq
    %v2805 = vshrl.u32 %v2804, 7
    %v2806 = vsub.s32 %v2803, %v2805
    %v2807 = vrot.slane %v2378, %v2806
    %v2809 = vunpack.c.l.s4 1983009808
    %v2810 = vunpack.c.0.s8 %v2809
    %v2811 = vlaneseq
    %v2812 = vshrl.u32 %v2811, 7
    %v2813 = vsub.s32 %v2810, %v2812
    %v2814 = vrot.slane %v2800, %v2813
    %v2815 = vcombine.high %v2807, %v2807
    %v2816 = vcombine.high %v2814, %v2814
    %v2818 = vunpack.c.l.s4 1983009808
    %v2819 = vunpack.c.0.s8 %v2818
    %v2820 = vlaneseq
    %v2821 = vshrl.u32 %v2820, 7
    %v2822 = vsub.s32 %v2819, %v2821
    %v2823 = vrot.slane %v2379, %v2822
    %v2824 = vcombine.high %v2380, %v2380
    %v2826 = vunpack.c.l.s4 1983009808
    %v2827 = vunpack.c.0.s8 %v2826
    %v2828 = vlaneseq
    %v2829 = vshrl.u32 %v2828, 7
    %v2830 = vsub.s32 %v2827, %v2829
    %v2831 = vrot.slane %v2380, %v2830
    %v2833 = vunpack.c.l.s4 1983009808
    %v2834 = vunpack.c.0.s8 %v2833
    %v2835 = vlaneseq
    %v2836 = vshrl.u32 %v2835, 7
    %v2837 = vsub.s32 %v2834, %v2836
    %v2838 = vrot.slane %v2824, %v2837
    %v2839 = vcombine.high %v2831, %v2831
    %v2840 = vcombine.high %v2838, %v2838
    %v2841 = vcombine.high %v2381, %v2381
    %v2843 = vunpack.c.l.s4 1983009808
    %v2844 = vunpack.c.0.s8 %v2843
    %v2845 = vlaneseq
    %v2846 = vshrl.u32 %v2845, 7
    %v2847 = vsub.s32 %v2844, %v2846
    %v2848 = vrot.slane %v2381, %v2847
    %v2850 = vunpack.c.l.s4 1983009808
    %v2851 = vunpack.c.0.s8 %v2850
    %v2852 = vlaneseq
    %v2853 = vshrl.u32 %v2852, 7
    %v2854 = vsub.s32 %v2851, %v2853
    %v2855 = vrot.slane %v2841, %v2854
    %v2856 = vcombine.high %v2848, %v2848
    %v2857 = vcombine.high %v2855, %v2855
    %v2859 = vunpack.c.l.s4 1983009808
    %v2860 = vunpack.c.0.s8 %v2859
    %v2861 = vlaneseq
    %v2862 = vshrl.u32 %v2861, 7
    %v2863 = vsub.s32 %v2860, %v2862
    %v2864 = vrot.slane %v2382, %v2863
    %v2865 = vcombine.high %v2383, %v2383
    %v2867 = vunpack.c.l.s4 1983009808
    %v2868 = vunpack.c.0.s8 %v2867
    %v2869 = vlaneseq
    %v2870 = vshrl.u32 %v2869, 7
    %v2871 = vsub.s32 %v2868, %v2870
    %v2872 = vrot.slane %v2383, %v2871
    %v2874 = vunpack.c.l.s4 1983009808
    %v2875 = vunpack.c.0.s8 %v2874
    %v2876 = vlaneseq
    %v2877 = vshrl.u32 %v2876, 7
    %v2878 = vsub.s32 %v2875, %v2877
    %v2879 = vrot.slane %v2865, %v2878
    %v2880 = vcombine.high %v2872, %v2872
    %v2881 = vcombine.high %v2879, %v2879
    %v2882 = vcombine.high %v2384, %v2384
    %v2884 = vunpack.c.l.s4 1983009808
    %v2885 = vunpack.c.0.s8 %v2884
    %v2886 = vlaneseq
    %v2887 = vshrl.u32 %v2886, 7
    %v2888 = vsub.s32 %v2885, %v2887
    %v2889 = vrot.slane %v2384, %v2888
    %v2891 = vunpack.c.l.s4 1983009808
    %v2892 = vunpack.c.0.s8 %v2891
    %v2893 = vlaneseq
    %v2894 = vshrl.u32 %v2893, 7
    %v2895 = vsub.s32 %v2892, %v2894
    %v2896 = vrot.slane %v2882, %v2895
    %v2897 = vcombine.high %v2889, %v2889
    %v2898 = vcombine.high %v2896, %v2896
    %v2900 = vunpack.c.l.s4 1983009808
    %v2901 = vunpack.c.0.s8 %v2900
    %v2902 = vlaneseq
    %v2903 = vshrl.u32 %v2902, 7
    %v2904 = vsub.s32 %v2901, %v2903
    %v2905 = vrot.slane %v2385, %v2904
    %v2906 = vcombine.high %v2386, %v2386
    %v2908 = vunpack.c.l.s4 1983009808
    %v2909 = vunpack.c.0.s8 %v2908
    %v2910 = vlaneseq
    %v2911 = vshrl.u32 %v2910, 7
    %v2912 = vsub.s32 %v2909, %v2911
    %v2913 = vrot.slane %v2386, %v2912
    %v2915 = vunpack.c.l.s4 1983009808
    %v2916 = vunpack.c.0.s8 %v2915
    %v2917 = vlaneseq
    %v2918 = vshrl.u32 %v2917, 7
    %v2919 = vsub.s32 %v2916, %v2918
    %v2920 = vrot.slane %v2906, %v2919
    %v2921 = vcombine.high %v2913, %v2913
    %v2922 = vcombine.high %v2920, %v2920
    %v2923 = vcombine.high %v2387, %v2387
    %v2925 = vunpack.c.l.s4 1983009808
    %v2926 = vunpack.c.0.s8 %v2925
    %v2927 = vlaneseq
    %v2928 = vshrl.u32 %v2927, 7
    %v2929 = vsub.s32 %v2926, %v2928
    %v2930 = vrot.slane %v2387, %v2929
    %v2932 = vunpack.c.l.s4 1983009808
    %v2933 = vunpack.c.0.s8 %v2932
    %v2934 = vlaneseq
    %v2935 = vshrl.u32 %v2934, 7
    %v2936 = vsub.s32 %v2933, %v2935
    %v2937 = vrot.slane %v2923, %v2936
    %v2938 = vcombine.high %v2930, %v2930
    %v2939 = vcombine.high %v2937, %v2937
    %v2941 = vunpack.c.l.s4 1983009808
    %v2942 = vunpack.c.0.s8 %v2941
    %v2943 = vlaneseq
    %v2944 = vshrl.u32 %v2943, 7
    %v2945 = vsub.s32 %v2942, %v2944
    %v2946 = vrot.slane %v2388, %v2945
    %v2947 = vcombine.high %v2389, %v2389
    %v2949 = vunpack.c.l.s4 1983009808
    %v2950 = vunpack.c.0.s8 %v2949
    %v2951 = vlaneseq
    %v2952 = vshrl.u32 %v2951, 7
    %v2953 = vsub.s32 %v2950, %v2952
    %v2954 = vrot.slane %v2389, %v2953
    %v2956 = vunpack.c.l.s4 1983009808
    %v2957 = vunpack.c.0.s8 %v2956
    %v2958 = vlaneseq
    %v2959 = vshrl.u32 %v2958, 7
    %v2960 = vsub.s32 %v2957, %v2959
    %v2961 = vrot.slane %v2947, %v2960
    %v2962 = vcombine.high %v2954, %v2954
    %v2963 = vcombine.high %v2961, %v2961
    %v2964 = vcombine.high %v2390, %v2390
    %v2966 = vunpack.c.l.s4 1983009808
    %v2967 = vunpack.c.0.s8 %v2966
    %v2968 = vlaneseq
    %v2969 = vshrl.u32 %v2968, 7
    %v2970 = vsub.s32 %v2967, %v2969
    %v2971 = vrot.slane %v2390, %v2970
    %v2973 = vunpack.c.l.s4 1983009808
    %v2974 = vunpack.c.0.s8 %v2973
    %v2975 = vlaneseq
    %v2976 = vshrl.u32 %v2975, 7
    %v2977 = vsub.s32 %v2974, %v2976
    %v2978 = vrot.slane %v2964, %v2977
    %v2979 = vcombine.high %v2971, %v2971
    %v2980 = vcombine.high %v2978, %v2978
    %v2982 = vunpack.c.l.s4 1983009808
    %v2983 = vunpack.c.0.s8 %v2982
    %v2984 = vlaneseq
    %v2985 = vshrl.u32 %v2984, 7
    %v2986 = vsub.s32 %v2983, %v2985
    %v2987 = vrot.slane %v2391, %v2986
    %v2988 = vcombine.high %v2392, %v2392
    %v2990 = vunpack.c.l.s4 1983009808
    %v2991 = vunpack.c.0.s8 %v2990
    %v2992 = vlaneseq
    %v2993 = vshrl.u32 %v2992, 7
    %v2994 = vsub.s32 %v2991, %v2993
    %v2995 = vrot.slane %v2392, %v2994
    %v2997 = vunpack.c.l.s4 1983009808
    %v2998 = vunpack.c.0.s8 %v2997
    %v2999 = vlaneseq
    %v3000 = vshrl.u32 %v2999, 7
    %v3001 = vsub.s32 %v2998, %v3000
    %v3002 = vrot.slane %v2988, %v3001
    %v3003 = vcombine.high %v2995, %v2995
    %v3004 = vcombine.high %v3002, %v3002
    %v3005 = vcombine.high %v2393, %v2393
    %v3007 = vunpack.c.l.s4 1983009808
    %v3008 = vunpack.c.0.s8 %v3007
    %v3009 = vlaneseq
    %v3010 = vshrl.u32 %v3009, 7
    %v3011 = vsub.s32 %v3008, %v3010
    %v3012 = vrot.slane %v2393, %v3011
    %v3014 = vunpack.c.l.s4 1983009808
    %v3015 = vunpack.c.0.s8 %v3014
    %v3016 = vlaneseq
    %v3017 = vshrl.u32 %v3016, 7
    %v3018 = vsub.s32 %v3015, %v3017
    %v3019 = vrot.slane %v3005, %v3018
    %v3020 = vcombine.high %v3012, %v3012
    %v3021 = vcombine.high %v3019, %v3019
    %v3023 = vunpack.c.l.s4 1983009808
    %v3024 = vunpack.c.0.s8 %v3023
    %v3025 = vlaneseq
    %v3026 = vshrl.u32 %v3025, 7
    %v3027 = vsub.s32 %v3024, %v3026
    %v3028 = vrot.slane %v2394, %v3027
    %v3029 = vcombine.high %v2395, %v2395
    %v3031 = vunpack.c.l.s4 1983009808
    %v3032 = vunpack.c.0.s8 %v3031
    %v3033 = vlaneseq
    %v3034 = vshrl.u32 %v3033, 7
    %v3035 = vsub.s32 %v3032, %v3034
    %v3036 = vrot.slane %v2395, %v3035
    %v3038 = vunpack.c.l.s4 1983009808
    %v3039 = vunpack.c.0.s8 %v3038
    %v3040 = vlaneseq
    %v3041 = vshrl.u32 %v3040, 7
    %v3042 = vsub.s32 %v3039, %v3041
    %v3043 = vrot.slane %v3029, %v3042
    %v3044 = vcombine.high %v3036, %v3036
    %v3045 = vcombine.high %v3043, %v3043
    %v3046 = vcombine.high %v2396, %v2396
    %v3048 = vunpack.c.l.s4 1983009808
    %v3049 = vunpack.c.0.s8 %v3048
    %v3050 = vlaneseq
    %v3051 = vshrl.u32 %v3050, 7
    %v3052 = vsub.s32 %v3049, %v3051
    %v3053 = vrot.slane %v2396, %v3052
    %v3055 = vunpack.c.l.s4 1983009808
    %v3056 = vunpack.c.0.s8 %v3055
    %v3057 = vlaneseq
    %v3058 = vshrl.u32 %v3057, 7
    %v3059 = vsub.s32 %v3056, %v3058
    %v3060 = vrot.slane %v3046, %v3059
    %v3061 = vcombine.high %v3053, %v3053
    %v3062 = vcombine.high %v3060, %v3060
    %v3064 = vunpack.c.l.s4 1983009808
    %v3065 = vunpack.c.0.s8 %v3064
    %v3066 = vlaneseq
    %v3067 = vshrl.u32 %v3066, 7
    %v3068 = vsub.s32 %v3065, %v3067
    %v3069 = vrot.slane %v2397, %v3068
    %v3070 = vcombine.high %v2398, %v2398
    %v3072 = vunpack.c.l.s4 1983009808
    %v3073 = vunpack.c.0.s8 %v3072
    %v3074 = vlaneseq
    %v3075 = vshrl.u32 %v3074, 7
    %v3076 = vsub.s32 %v3073, %v3075
    %v3077 = vrot.slane %v2398, %v3076
    %v3079 = vunpack.c.l.s4 1983009808
    %v3080 = vunpack.c.0.s8 %v3079
    %v3081 = vlaneseq
    %v3082 = vshrl.u32 %v3081, 7
    %v3083 = vsub.s32 %v3080, %v3082
    %v3084 = vrot.slane %v3070, %v3083
    %v3085 = vcombine.high %v3077, %v3077
    %v3086 = vcombine.high %v3084, %v3084
    %v3087 = vcombine.high %v2399, %v2399
    %v3089 = vunpack.c.l.s4 1983009808
    %v3090 = vunpack.c.0.s8 %v3089
    %v3091 = vlaneseq
    %v3092 = vshrl.u32 %v3091, 7
    %v3093 = vsub.s32 %v3090, %v3092
    %v3094 = vrot.slane %v2399, %v3093
    %v3096 = vunpack.c.l.s4 1983009808
    %v3097 = vunpack.c.0.s8 %v3096
    %v3098 = vlaneseq
    %v3099 = vshrl.u32 %v3098, 7
    %v3100 = vsub.s32 %v3097, %v3099
    %v3101 = vrot.slane %v3087, %v3100
    %v3102 = vcombine.high %v3094, %v3094
    %v3103 = vcombine.high %v3101, %v3101
    %v3105 = vunpack.c.l.s4 1983009808
    %v3106 = vunpack.c.0.s8 %v3105
    %v3107 = vlaneseq
    %v3108 = vshrl.u32 %v3107, 7
    %v3109 = vsub.s32 %v3106, %v3108
    %v3110 = vrot.slane %v2400, %v3109
    %v3111 = vcombine.high %v2401, %v2401
    %v3113 = vunpack.c.l.s4 1983009808
    %v3114 = vunpack.c.0.s8 %v3113
    %v3115 = vlaneseq
    %v3116 = vshrl.u32 %v3115, 7
    %v3117 = vsub.s32 %v3114, %v3116
    %v3118 = vrot.slane %v2401, %v3117
    %v3120 = vunpack.c.l.s4 1983009808
    %v3121 = vunpack.c.0.s8 %v3120
    %v3122 = vlaneseq
    %v3123 = vshrl.u32 %v3122, 7
    %v3124 = vsub.s32 %v3121, %v3123
    %v3125 = vrot.slane %v3111, %v3124
    %v3126 = vcombine.high %v3118, %v3118
    %v3127 = vcombine.high %v3125, %v3125
    %v3128 = vcombine.high %v2402, %v2402
    %v3130 = vunpack.c.l.s4 1983009808
    %v3131 = vunpack.c.0.s8 %v3130
    %v3132 = vlaneseq
    %v3133 = vshrl.u32 %v3132, 7
    %v3134 = vsub.s32 %v3131, %v3133
    %v3135 = vrot.slane %v2402, %v3134
    %v3137 = vunpack.c.l.s4 1983009808
    %v3138 = vunpack.c.0.s8 %v3137
    %v3139 = vlaneseq
    %v3140 = vshrl.u32 %v3139, 7
    %v3141 = vsub.s32 %v3138, %v3140
    %v3142 = vrot.slane %v3128, %v3141
    %v3143 = vcombine.high %v3135, %v3135
    %v3144 = vcombine.high %v3142, %v3142
    %v3146 = vunpack.c.l.s4 1983009808
    %v3147 = vunpack.c.0.s8 %v3146
    %v3148 = vlaneseq
    %v3149 = vshrl.u32 %v3148, 7
    %v3150 = vsub.s32 %v3147, %v3149
    %v3151 = vrot.slane %v2403, %v3150
    %v3152 = vcombine.high %v2404, %v2404
    %v3154 = vunpack.c.l.s4 1983009808
    %v3155 = vunpack.c.0.s8 %v3154
    %v3156 = vlaneseq
    %v3157 = vshrl.u32 %v3156, 7
    %v3158 = vsub.s32 %v3155, %v3157
    %v3159 = vrot.slane %v2404, %v3158
    %v3161 = vunpack.c.l.s4 1983009808
    %v3162 = vunpack.c.0.s8 %v3161
    %v3163 = vlaneseq
    %v3164 = vshrl.u32 %v3163, 7
    %v3165 = vsub.s32 %v3162, %v3164
    %v3166 = vrot.slane %v3152, %v3165
    %v3167 = vcombine.high %v3159, %v3159
    %v3168 = vcombine.high %v3166, %v3166
    %v3169 = vcombine.high %v2405, %v2405
    %v3171 = vunpack.c.l.s4 1983009808
    %v3172 = vunpack.c.0.s8 %v3171
    %v3173 = vlaneseq
    %v3174 = vshrl.u32 %v3173, 7
    %v3175 = vsub.s32 %v3172, %v3174
    %v3176 = vrot.slane %v2405, %v3175
    %v3178 = vunpack.c.l.s4 1983009808
    %v3179 = vunpack.c.0.s8 %v3178
    %v3180 = vlaneseq
    %v3181 = vshrl.u32 %v3180, 7
    %v3182 = vsub.s32 %v3179, %v3181
    %v3183 = vrot.slane %v3169, %v3182
    %v3184 = vcombine.high %v3176, %v3176
    %v3185 = vcombine.high %v3183, %v3183
    %v3187 = vunpack.c.l.s4 1983009808
    %v3188 = vunpack.c.0.s8 %v3187
    %v3189 = vlaneseq
    %v3190 = vshrl.u32 %v3189, 7
    %v3191 = vsub.s32 %v3188, %v3190
    %v3192 = vrot.slane %v2406, %v3191
    %v3193 = vcombine.high %v2407, %v2407
    %v3195 = vunpack.c.l.s4 1983009808
    %v3196 = vunpack.c.0.s8 %v3195
    %v3197 = vlaneseq
    %v3198 = vshrl.u32 %v3197, 7
    %v3199 = vsub.s32 %v3196, %v3198
    %v3200 = vrot.slane %v2407, %v3199
    %v3202 = vunpack.c.l.s4 1983009808
    %v3203 = vunpack.c.0.s8 %v3202
    %v3204 = vlaneseq
    %v3205 = vshrl.u32 %v3204, 7
    %v3206 = vsub.s32 %v3203, %v3205
    %v3207 = vrot.slane %v3193, %v3206
    %v3208 = vcombine.high %v3200, %v3200
    %v3209 = vcombine.high %v3207, %v3207
    %v3210 = vcombine.high %v2408, %v2408
    %v3212 = vunpack.c.l.s4 1983009808
    %v3213 = vunpack.c.0.s8 %v3212
    %v3214 = vlaneseq
    %v3215 = vshrl.u32 %v3214, 7
    %v3216 = vsub.s32 %v3213, %v3215
    %v3217 = vrot.slane %v2408, %v3216
    %v3219 = vunpack.c.l.s4 1983009808
    %v3220 = vunpack.c.0.s8 %v3219
    %v3221 = vlaneseq
    %v3222 = vshrl.u32 %v3221, 7
    %v3223 = vsub.s32 %v3220, %v3222
    %v3224 = vrot.slane %v3210, %v3223
    %v3225 = vcombine.high %v3217, %v3217
    %v3226 = vcombine.high %v3224, %v3224
    %v3228 = vunpack.c.l.s4 1983009808
    %v3229 = vunpack.c.0.s8 %v3228
    %v3230 = vlaneseq
    %v3231 = vshrl.u32 %v3230, 7
    %v3232 = vsub.s32 %v3229, %v3231
    %v3233 = vrot.slane %v2409, %v3232
    %v3234 = vcombine.high %v2410, %v2410
    %v3236 = vunpack.c.l.s4 1983009808
    %v3237 = vunpack.c.0.s8 %v3236
    %v3238 = vlaneseq
    %v3239 = vshrl.u32 %v3238, 7
    %v3240 = vsub.s32 %v3237, %v3239
    %v3241 = vrot.slane %v2410, %v3240
    %v3243 = vunpack.c.l.s4 1983009808
    %v3244 = vunpack.c.0.s8 %v3243
    %v3245 = vlaneseq
    %v3246 = vshrl.u32 %v3245, 7
    %v3247 = vsub.s32 %v3244, %v3246
    %v3248 = vrot.slane %v3234, %v3247
    %v3249 = vcombine.high %v3241, %v3241
    %v3250 = vcombine.high %v3248, %v3248
    %v3251 = vcombine.high %v2411, %v2411
    %v3253 = vunpack.c.l.s4 1983009808
    %v3254 = vunpack.c.0.s8 %v3253
    %v3255 = vlaneseq
    %v3256 = vshrl.u32 %v3255, 7
    %v3257 = vsub.s32 %v3254, %v3256
    %v3258 = vrot.slane %v2411, %v3257
    %v3260 = vunpack.c.l.s4 1983009808
    %v3261 = vunpack.c.0.s8 %v3260
    %v3262 = vlaneseq
    %v3263 = vshrl.u32 %v3262, 7
    %v3264 = vsub.s32 %v3261, %v3263
    %v3265 = vrot.slane %v3251, %v3264
    %v3266 = vcombine.high %v3258, %v3258
    %v3267 = vcombine.high %v3265, %v3265
    %v3269 = vunpack.c.l.s4 1983009808
    %v3270 = vunpack.c.0.s8 %v3269
    %v3271 = vlaneseq
    %v3272 = vshrl.u32 %v3271, 7
    %v3273 = vsub.s32 %v3270, %v3272
    %v3274 = vrot.slane %v2412, %v3273
    %v3275 = vcombine.high %v2413, %v2413
    %v3277 = vunpack.c.l.s4 1983009808
    %v3278 = vunpack.c.0.s8 %v3277
    %v3279 = vlaneseq
    %v3280 = vshrl.u32 %v3279, 7
    %v3281 = vsub.s32 %v3278, %v3280
    %v3282 = vrot.slane %v2413, %v3281
    %v3284 = vunpack.c.l.s4 1983009808
    %v3285 = vunpack.c.0.s8 %v3284
    %v3286 = vlaneseq
    %v3287 = vshrl.u32 %v3286, 7
    %v3288 = vsub.s32 %v3285, %v3287
    %v3289 = vrot.slane %v3275, %v3288
    %v3290 = vcombine.high %v3282, %v3282
    %v3291 = vcombine.high %v3289, %v3289
    %v3292 = vcombine.high %v2414, %v2414
    %v3294 = vunpack.c.l.s4 1983009808
    %v3295 = vunpack.c.0.s8 %v3294
    %v3296 = vlaneseq
    %v3297 = vshrl.u32 %v3296, 7
    %v3298 = vsub.s32 %v3295, %v3297
    %v3299 = vrot.slane %v2414, %v3298
    %v3301 = vunpack.c.l.s4 1983009808
    %v3302 = vunpack.c.0.s8 %v3301
    %v3303 = vlaneseq
    %v3304 = vshrl.u32 %v3303, 7
    %v3305 = vsub.s32 %v3302, %v3304
    %v3306 = vrot.slane %v3292, %v3305
    %v3307 = vcombine.high %v3299, %v3299
    %v3308 = vcombine.high %v3306, %v3306
    %v3310 = vunpack.c.l.s4 1983009808
    %v3311 = vunpack.c.0.s8 %v3310
    %v3312 = vlaneseq
    %v3313 = vshrl.u32 %v3312, 7
    %v3314 = vsub.s32 %v3311, %v3313
    %v3315 = vrot.slane %v2415, %v3314
    %v3316 = vcombine.high %v2416, %v2416
    %v3318 = vunpack.c.l.s4 1983009808
    %v3319 = vunpack.c.0.s8 %v3318
    %v3320 = vlaneseq
    %v3321 = vshrl.u32 %v3320, 7
    %v3322 = vsub.s32 %v3319, %v3321
    %v3323 = vrot.slane %v2416, %v3322
    %v3325 = vunpack.c.l.s4 1983009808
    %v3326 = vunpack.c.0.s8 %v3325
    %v3327 = vlaneseq
    %v3328 = vshrl.u32 %v3327, 7
    %v3329 = vsub.s32 %v3326, %v3328
    %v3330 = vrot.slane %v3316, %v3329
    %v3331 = vcombine.high %v3323, %v3323
    %v3332 = vcombine.high %v3330, %v3330
    %v3333 = vcombine.high %v2417, %v2417
    %v3335 = vunpack.c.l.s4 1983009808
    %v3336 = vunpack.c.0.s8 %v3335
    %v3337 = vlaneseq
    %v3338 = vshrl.u32 %v3337, 7
    %v3339 = vsub.s32 %v3336, %v3338
    %v3340 = vrot.slane %v2417, %v3339
    %v3342 = vunpack.c.l.s4 1983009808
    %v3343 = vunpack.c.0.s8 %v3342
    %v3344 = vlaneseq
    %v3345 = vshrl.u32 %v3344, 7
    %v3346 = vsub.s32 %v3343, %v3345
    %v3347 = vrot.slane %v3333, %v3346
    %v3348 = vcombine.high %v3340, %v3340
    %v3349 = vcombine.high %v3347, %v3347
    %v3351 = vunpack.c.l.s4 1983009808
    %v3352 = vunpack.c.0.s8 %v3351
    %v3353 = vlaneseq
    %v3354 = vshrl.u32 %v3353, 7
    %v3355 = vsub.s32 %v3352, %v3354
    %v3356 = vrot.slane %v2418, %v3355
    %v3357 = vcombine.high %v2419, %v2419
    %v3359 = vunpack.c.l.s4 1983009808
    %v3360 = vunpack.c.0.s8 %v3359
    %v3361 = vlaneseq
    %v3362 = vshrl.u32 %v3361, 7
    %v3363 = vsub.s32 %v3360, %v3362
    %v3364 = vrot.slane %v2419, %v3363
    %v3366 = vunpack.c.l.s4 1983009808
    %v3367 = vunpack.c.0.s8 %v3366
    %v3368 = vlaneseq
    %v3369 = vshrl.u32 %v3368, 7
    %v3370 = vsub.s32 %v3367, %v3369
    %v3371 = vrot.slane %v3357, %v3370
    %v3372 = vcombine.high %v3364, %v3364
    %v3373 = vcombine.high %v3371, %v3371
    %v3374 = vcombine.high %v2420, %v2420
    %v3376 = vunpack.c.l.s4 1983009808
    %v3377 = vunpack.c.0.s8 %v3376
    %v3378 = vlaneseq
    %v3379 = vshrl.u32 %v3378, 7
    %v3380 = vsub.s32 %v3377, %v3379
    %v3381 = vrot.slane %v2420, %v3380
    %v3383 = vunpack.c.l.s4 1983009808
    %v3384 = vunpack.c.0.s8 %v3383
    %v3385 = vlaneseq
    %v3386 = vshrl.u32 %v3385, 7
    %v3387 = vsub.s32 %v3384, %v3386
    %v3388 = vrot.slane %v3374, %v3387
    %v3389 = vcombine.high %v3381, %v3381
    %v3390 = vcombine.high %v3388, %v3388
    %v3392 = vunpack.c.l.s4 1983009808
    %v3393 = vunpack.c.0.s8 %v3392
    %v3394 = vlaneseq
    %v3395 = vshrl.u32 %v3394, 7
    %v3396 = vsub.s32 %v3393, %v3395
    %v3397 = vrot.slane %v2421, %v3396
    %v3398 = vcombine.high %v2422, %v2422
    %v3400 = vunpack.c.l.s4 1983009808
    %v3401 = vunpack.c.0.s8 %v3400
    %v3402 = vlaneseq
    %v3403 = vshrl.u32 %v3402, 7
    %v3404 = vsub.s32 %v3401, %v3403
    %v3405 = vrot.slane %v2422, %v3404
    %v3407 = vunpack.c.l.s4 1983009808
    %v3408 = vunpack.c.0.s8 %v3407
    %v3409 = vlaneseq
    %v3410 = vshrl.u32 %v3409, 7
    %v3411 = vsub.s32 %v3408, %v3410
    %v3412 = vrot.slane %v3398, %v3411
    %v3413 = vcombine.high %v3405, %v3405
    %v3414 = vcombine.high %v3412, %v3412
    %v3415 = vcombine.high %v2423, %v2423
    %v3417 = vunpack.c.l.s4 1983009808
    %v3418 = vunpack.c.0.s8 %v3417
    %v3419 = vlaneseq
    %v3420 = vshrl.u32 %v3419, 7
    %v3421 = vsub.s32 %v3418, %v3420
    %v3422 = vrot.slane %v2423, %v3421
    %v3424 = vunpack.c.l.s4 1983009808
    %v3425 = vunpack.c.0.s8 %v3424
    %v3426 = vlaneseq
    %v3427 = vshrl.u32 %v3426, 7
    %v3428 = vsub.s32 %v3425, %v3427
    %v3429 = vrot.slane %v3415, %v3428
    %v3430 = vcombine.high %v3422, %v3422
    %v3431 = vcombine.high %v3429, %v3429
    %v3433 = vunpack.c.l.s4 1983009808
    %v3434 = vunpack.c.0.s8 %v3433
    %v3435 = vlaneseq
    %v3436 = vshrl.u32 %v3435, 7
    %v3437 = vsub.s32 %v3434, %v3436
    %v3438 = vrot.slane %v2424, %v3437
    %v3439 = vcombine.high %v2425, %v2425
    %v3441 = vunpack.c.l.s4 1983009808
    %v3442 = vunpack.c.0.s8 %v3441
    %v3443 = vlaneseq
    %v3444 = vshrl.u32 %v3443, 7
    %v3445 = vsub.s32 %v3442, %v3444
    %v3446 = vrot.slane %v2425, %v3445
    %v3448 = vunpack.c.l.s4 1983009808
    %v3449 = vunpack.c.0.s8 %v3448
    %v3450 = vlaneseq
    %v3451 = vshrl.u32 %v3450, 7
    %v3452 = vsub.s32 %v3449, %v3451
    %v3453 = vrot.slane %v3439, %v3452
    %v3454 = vcombine.high %v3446, %v3446
    %v3455 = vcombine.high %v3453, %v3453
    %v3456 = vcombine.high %v2426, %v2426
    %v3458 = vunpack.c.l.s4 1983009808
    %v3459 = vunpack.c.0.s8 %v3458
    %v3460 = vlaneseq
    %v3461 = vshrl.u32 %v3460, 7
    %v3462 = vsub.s32 %v3459, %v3461
    %v3463 = vrot.slane %v2426, %v3462
    %v3465 = vunpack.c.l.s4 1983009808
    %v3466 = vunpack.c.0.s8 %v3465
    %v3467 = vlaneseq
    %v3468 = vshrl.u32 %v3467, 7
    %v3469 = vsub.s32 %v3466, %v3468
    %v3470 = vrot.slane %v3456, %v3469
    %v3471 = vcombine.high %v3463, %v3463
    %v3472 = vcombine.high %v3470, %v3470
    %v3474 = vunpack.c.l.s4 1983009808
    %v3475 = vunpack.c.0.s8 %v3474
    %v3476 = vlaneseq
    %v3477 = vshrl.u32 %v3476, 7
    %v3478 = vsub.s32 %v3475, %v3477
    %v3479 = vrot.slane %v2427, %v3478
    %v3480 = vcombine.high %v2428, %v2428
    %v3482 = vunpack.c.l.s4 1983009808
    %v3483 = vunpack.c.0.s8 %v3482
    %v3484 = vlaneseq
    %v3485 = vshrl.u32 %v3484, 7
    %v3486 = vsub.s32 %v3483, %v3485
    %v3487 = vrot.slane %v2428, %v3486
    %v3489 = vunpack.c.l.s4 1983009808
    %v3490 = vunpack.c.0.s8 %v3489
    %v3491 = vlaneseq
    %v3492 = vshrl.u32 %v3491, 7
    %v3493 = vsub.s32 %v3490, %v3492
    %v3494 = vrot.slane %v3480, %v3493
    %v3495 = vcombine.high %v3487, %v3487
    %v3496 = vcombine.high %v3494, %v3494
    %v3497 = vcombine.high %v2429, %v2429
    %v3499 = vunpack.c.l.s4 1983009808
    %v3500 = vunpack.c.0.s8 %v3499
    %v3501 = vlaneseq
    %v3502 = vshrl.u32 %v3501, 7
    %v3503 = vsub.s32 %v3500, %v3502
    %v3504 = vrot.slane %v2429, %v3503
    %v3506 = vunpack.c.l.s4 1983009808
    %v3507 = vunpack.c.0.s8 %v3506
    %v3508 = vlaneseq
    %v3509 = vshrl.u32 %v3508, 7
    %v3510 = vsub.s32 %v3507, %v3509
    %v3511 = vrot.slane %v3497, %v3510
    %v3512 = vcombine.high %v3504, %v3504
    %v3513 = vcombine.high %v3511, %v3511
    %v3515 = vunpack.c.l.s4 1983009808
    %v3516 = vunpack.c.0.s8 %v3515
    %v3517 = vlaneseq
    %v3518 = vshrl.u32 %v3517, 7
    %v3519 = vsub.s32 %v3516, %v3518
    %v3520 = vrot.slane %v2430, %v3519
    %v3521 = vcombine.high %v2431, %v2431
    %v3523 = vunpack.c.l.s4 1983009808
    %v3524 = vunpack.c.0.s8 %v3523
    %v3525 = vlaneseq
    %v3526 = vshrl.u32 %v3525, 7
    %v3527 = vsub.s32 %v3524, %v3526
    %v3528 = vrot.slane %v2431, %v3527
    %v3530 = vunpack.c.l.s4 1983009808
    %v3531 = vunpack.c.0.s8 %v3530
    %v3532 = vlaneseq
    %v3533 = vshrl.u32 %v3532, 7
    %v3534 = vsub.s32 %v3531, %v3533
    %v3535 = vrot.slane %v3521, %v3534
    %v3536 = vcombine.high %v3528, %v3528
    %v3537 = vcombine.high %v3535, %v3535
    %v3538 = vcombine.high %v2432, %v2432
    %v3540 = vunpack.c.l.s4 1983009808
    %v3541 = vunpack.c.0.s8 %v3540
    %v3542 = vlaneseq
    %v3543 = vshrl.u32 %v3542, 7
    %v3544 = vsub.s32 %v3541, %v3543
    %v3545 = vrot.slane %v2432, %v3544
    %v3547 = vunpack.c.l.s4 1983009808
    %v3548 = vunpack.c.0.s8 %v3547
    %v3549 = vlaneseq
    %v3550 = vshrl.u32 %v3549, 7
    %v3551 = vsub.s32 %v3548, %v3550
    %v3552 = vrot.slane %v3538, %v3551
    %v3553 = vcombine.high %v3545, %v3545
    %v3554 = vcombine.high %v3552, %v3552
    %v3556 = vunpack.c.l.s4 1983009808
    %v3557 = vunpack.c.0.s8 %v3556
    %v3558 = vlaneseq
    %v3559 = vshrl.u32 %v3558, 7
    %v3560 = vsub.s32 %v3557, %v3559
    %v3561 = vrot.slane %v2433, %v3560
    %v3562 = vcombine.high %v2434, %v2434
    %v3564 = vunpack.c.l.s4 1983009808
    %v3565 = vunpack.c.0.s8 %v3564
    %v3566 = vlaneseq
    %v3567 = vshrl.u32 %v3566, 7
    %v3568 = vsub.s32 %v3565, %v3567
    %v3569 = vrot.slane %v2434, %v3568
    %v3571 = vunpack.c.l.s4 1983009808
    %v3572 = vunpack.c.0.s8 %v3571
    %v3573 = vlaneseq
    %v3574 = vshrl.u32 %v3573, 7
    %v3575 = vsub.s32 %v3572, %v3574
    %v3576 = vrot.slane %v3562, %v3575
    %v3577 = vcombine.high %v3569, %v3569
    %v3578 = vcombine.high %v3576, %v3576
    %v3579 = vcombine.high %v2435, %v2435
    %v3581 = vunpack.c.l.s4 1983009808
    %v3582 = vunpack.c.0.s8 %v3581
    %v3583 = vlaneseq
    %v3584 = vshrl.u32 %v3583, 7
    %v3585 = vsub.s32 %v3582, %v3584
    %v3586 = vrot.slane %v2435, %v3585
    %v3588 = vunpack.c.l.s4 1983009808
    %v3589 = vunpack.c.0.s8 %v3588
    %v3590 = vlaneseq
    %v3591 = vshrl.u32 %v3590, 7
    %v3592 = vsub.s32 %v3589, %v3591
    %v3593 = vrot.slane %v3579, %v3592
    %v3594 = vcombine.high %v3586, %v3586
    %v3595 = vcombine.high %v3593, %v3593
    %v3597 = vunpack.c.l.s4 1983009808
    %v3598 = vunpack.c.0.s8 %v3597
    %v3599 = vlaneseq
    %v3600 = vshrl.u32 %v3599, 7
    %v3601 = vsub.s32 %v3598, %v3600
    %v3602 = vrot.slane %v2436, %v3601
    %v3603 = vcombine.high %v2437, %v2437
    %v3605 = vunpack.c.l.s4 1983009808
    %v3606 = vunpack.c.0.s8 %v3605
    %v3607 = vlaneseq
    %v3608 = vshrl.u32 %v3607, 7
    %v3609 = vsub.s32 %v3606, %v3608
    %v3610 = vrot.slane %v2437, %v3609
    %v3612 = vunpack.c.l.s4 1983009808
    %v3613 = vunpack.c.0.s8 %v3612
    %v3614 = vlaneseq
    %v3615 = vshrl.u32 %v3614, 7
    %v3616 = vsub.s32 %v3613, %v3615
    %v3617 = vrot.slane %v3603, %v3616
    %v3618 = vcombine.high %v3610, %v3610
    %v3619 = vcombine.high %v3617, %v3617
    %v3620 = vcombine.high %v2438, %v2438
    %v3622 = vunpack.c.l.s4 1983009808
    %v3623 = vunpack.c.0.s8 %v3622
    %v3624 = vlaneseq
    %v3625 = vshrl.u32 %v3624, 7
    %v3626 = vsub.s32 %v3623, %v3625
    %v3627 = vrot.slane %v2438, %v3626
    %v3629 = vunpack.c.l.s4 1983009808
    %v3630 = vunpack.c.0.s8 %v3629
    %v3631 = vlaneseq
    %v3632 = vshrl.u32 %v3631, 7
    %v3633 = vsub.s32 %v3630, %v3632
    %v3634 = vrot.slane %v3620, %v3633
    %v3635 = vcombine.high %v3627, %v3627
    %v3636 = vcombine.high %v3634, %v3634
    %v3638 = vunpack.c.l.s4 1983009808
    %v3639 = vunpack.c.0.s8 %v3638
    %v3640 = vlaneseq
    %v3641 = vshrl.u32 %v3640, 7
    %v3642 = vsub.s32 %v3639, %v3641
    %v3643 = vrot.slane %v2439, %v3642
    %v3644 = vcombine.high %v2440, %v2440
    %v3646 = vunpack.c.l.s4 1983009808
    %v3647 = vunpack.c.0.s8 %v3646
    %v3648 = vlaneseq
    %v3649 = vshrl.u32 %v3648, 7
    %v3650 = vsub.s32 %v3647, %v3649
    %v3651 = vrot.slane %v2440, %v3650
    %v3653 = vunpack.c.l.s4 1983009808
    %v3654 = vunpack.c.0.s8 %v3653
    %v3655 = vlaneseq
    %v3656 = vshrl.u32 %v3655, 7
    %v3657 = vsub.s32 %v3654, %v3656
    %v3658 = vrot.slane %v3644, %v3657
    %v3659 = vcombine.high %v3651, %v3651
    %v3660 = vcombine.high %v3658, %v3658
    %v3661 = vcombine.high %v2441, %v2441
    %v3663 = vunpack.c.l.s4 1983009808
    %v3664 = vunpack.c.0.s8 %v3663
    %v3665 = vlaneseq
    %v3666 = vshrl.u32 %v3665, 7
    %v3667 = vsub.s32 %v3664, %v3666
    %v3668 = vrot.slane %v2441, %v3667
    %v3670 = vunpack.c.l.s4 1983009808
    %v3671 = vunpack.c.0.s8 %v3670
    %v3672 = vlaneseq
    %v3673 = vshrl.u32 %v3672, 7
    %v3674 = vsub.s32 %v3671, %v3673
    %v3675 = vrot.slane %v3661, %v3674
    %v3676 = vcombine.high %v3668, %v3668
    %v3677 = vcombine.high %v3675, %v3675
    %v3679 = vunpack.c.l.s4 1983009808
    %v3680 = vunpack.c.0.s8 %v3679
    %v3681 = vlaneseq
    %v3682 = vshrl.u32 %v3681, 7
    %v3683 = vsub.s32 %v3680, %v3682
    %v3684 = vrot.slane %v2442, %v3683
    %v3685 = vcombine.high %v2443, %v2443
    %v3687 = vunpack.c.l.s4 1983009808
    %v3688 = vunpack.c.0.s8 %v3687
    %v3689 = vlaneseq
    %v3690 = vshrl.u32 %v3689, 7
    %v3691 = vsub.s32 %v3688, %v3690
    %v3692 = vrot.slane %v2443, %v3691
    %v3694 = vunpack.c.l.s4 1983009808
    %v3695 = vunpack.c.0.s8 %v3694
    %v3696 = vlaneseq
    %v3697 = vshrl.u32 %v3696, 7
    %v3698 = vsub.s32 %v3695, %v3697
    %v3699 = vrot.slane %v3685, %v3698
    %v3700 = vcombine.high %v3692, %v3692
    %v3701 = vcombine.high %v3699, %v3699
    %v3702 = vcombine.high %v2444, %v2444
    %v3704 = vunpack.c.l.s4 1983009808
    %v3705 = vunpack.c.0.s8 %v3704
    %v3706 = vlaneseq
    %v3707 = vshrl.u32 %v3706, 7
    %v3708 = vsub.s32 %v3705, %v3707
    %v3709 = vrot.slane %v2444, %v3708
    %v3711 = vunpack.c.l.s4 1983009808
    %v3712 = vunpack.c.0.s8 %v3711
    %v3713 = vlaneseq
    %v3714 = vshrl.u32 %v3713, 7
    %v3715 = vsub.s32 %v3712, %v3714
    %v3716 = vrot.slane %v3702, %v3715
    %v3717 = vcombine.high %v3709, %v3709
    %v3718 = vcombine.high %v3716, %v3716
    %v3720 = vunpack.c.l.s4 1983009808
    %v3721 = vunpack.c.0.s8 %v3720
    %v3722 = vlaneseq
    %v3723 = vshrl.u32 %v3722, 7
    %v3724 = vsub.s32 %v3721, %v3723
    %v3725 = vrot.slane %v2445, %v3724
    %v3726 = vcombine.high %v2446, %v2446
    %v3728 = vunpack.c.l.s4 1983009808
    %v3729 = vunpack.c.0.s8 %v3728
    %v3730 = vlaneseq
    %v3731 = vshrl.u32 %v3730, 7
    %v3732 = vsub.s32 %v3729, %v3731
    %v3733 = vrot.slane %v2446, %v3732
    %v3735 = vunpack.c.l.s4 1983009808
    %v3736 = vunpack.c.0.s8 %v3735
    %v3737 = vlaneseq
    %v3738 = vshrl.u32 %v3737, 7
    %v3739 = vsub.s32 %v3736, %v3738
    %v3740 = vrot.slane %v3726, %v3739
    %v3741 = vcombine.high %v3733, %v3733
    %v3742 = vcombine.high %v3740, %v3740
    %v3743 = vcombine.high %v2447, %v2447
    %v3745 = vunpack.c.l.s4 1983009808
    %v3746 = vunpack.c.0.s8 %v3745
    %v3747 = vlaneseq
    %v3748 = vshrl.u32 %v3747, 7
    %v3749 = vsub.s32 %v3746, %v3748
    %v3750 = vrot.slane %v2447, %v3749
    %v3752 = vunpack.c.l.s4 1983009808
    %v3753 = vunpack.c.0.s8 %v3752
    %v3754 = vlaneseq
    %v3755 = vshrl.u32 %v3754, 7
    %v3756 = vsub.s32 %v3753, %v3755
    %v3757 = vrot.slane %v3743, %v3756
    %v3758 = vcombine.high %v3750, %v3750
    %v3759 = vcombine.high %v3757, %v3757
    %v3761 = vunpack.c.l.s4 1983009808
    %v3762 = vunpack.c.0.s8 %v3761
    %v3763 = vlaneseq
    %v3764 = vshrl.u32 %v3763, 7
    %v3765 = vsub.s32 %v3762, %v3764
    %v3766 = vrot.slane %v2448, %v3765
    %v3767 = vcombine.high %v2449, %v2449
    %v3769 = vunpack.c.l.s4 1983009808
    %v3770 = vunpack.c.0.s8 %v3769
    %v3771 = vlaneseq
    %v3772 = vshrl.u32 %v3771, 7
    %v3773 = vsub.s32 %v3770, %v3772
    %v3774 = vrot.slane %v2449, %v3773
    %v3776 = vunpack.c.l.s4 1983009808
    %v3777 = vunpack.c.0.s8 %v3776
    %v3778 = vlaneseq
    %v3779 = vshrl.u32 %v3778, 7
    %v3780 = vsub.s32 %v3777, %v3779
    %v3781 = vrot.slane %v3767, %v3780
    %v3782 = vcombine.high %v3774, %v3774
    %v3783 = vcombine.high %v3781, %v3781
    %v3784 = vcombine.high %v2450, %v2450
    %v3786 = vunpack.c.l.s4 1983009808
    %v3787 = vunpack.c.0.s8 %v3786
    %v3788 = vlaneseq
    %v3789 = vshrl.u32 %v3788, 7
    %v3790 = vsub.s32 %v3787, %v3789
    %v3791 = vrot.slane %v2450, %v3790
    %v3793 = vunpack.c.l.s4 1983009808
    %v3794 = vunpack.c.0.s8 %v3793
    %v3795 = vlaneseq
    %v3796 = vshrl.u32 %v3795, 7
    %v3797 = vsub.s32 %v3794, %v3796
    %v3798 = vrot.slane %v3784, %v3797
    %v3799 = vcombine.high %v3791, %v3791
    %v3800 = vcombine.high %v3798, %v3798
    %v3802 = vunpack.c.l.s4 1983009808
    %v3803 = vunpack.c.0.s8 %v3802
    %v3804 = vlaneseq
    %v3805 = vshrl.u32 %v3804, 7
    %v3806 = vsub.s32 %v3803, %v3805
    %v3807 = vrot.slane %v2451, %v3806
    %v3808 = vcombine.high %v2452, %v2452
    %v3810 = vunpack.c.l.s4 1983009808
    %v3811 = vunpack.c.0.s8 %v3810
    %v3812 = vlaneseq
    %v3813 = vshrl.u32 %v3812, 7
    %v3814 = vsub.s32 %v3811, %v3813
    %v3815 = vrot.slane %v2452, %v3814
    %v3817 = vunpack.c.l.s4 1983009808
    %v3818 = vunpack.c.0.s8 %v3817
    %v3819 = vlaneseq
    %v3820 = vshrl.u32 %v3819, 7
    %v3821 = vsub.s32 %v3818, %v3820
    %v3822 = vrot.slane %v3808, %v3821
    %v3823 = vcombine.high %v3815, %v3815
    %v3824 = vcombine.high %v3822, %v3822
    %v3825 = vcombine.high %v2453, %v2453
    %v3827 = vunpack.c.l.s4 1983009808
    %v3828 = vunpack.c.0.s8 %v3827
    %v3829 = vlaneseq
    %v3830 = vshrl.u32 %v3829, 7
    %v3831 = vsub.s32 %v3828, %v3830
    %v3832 = vrot.slane %v2453, %v3831
    %v3834 = vunpack.c.l.s4 1983009808
    %v3835 = vunpack.c.0.s8 %v3834
    %v3836 = vlaneseq
    %v3837 = vshrl.u32 %v3836, 7
    %v3838 = vsub.s32 %v3835, %v3837
    %v3839 = vrot.slane %v3825, %v3838
    %v3840 = vcombine.high %v3832, %v3832
    %v3841 = vcombine.high %v3839, %v3839
    %v3843 = vunpack.c.l.s4 1983009808
    %v3844 = vunpack.c.0.s8 %v3843
    %v3845 = vlaneseq
    %v3846 = vshrl.u32 %v3845, 7
    %v3847 = vsub.s32 %v3844, %v3846
    %v3848 = vrot.slane %v2454, %v3847
    %v3849 = vcombine.high %v2455, %v2455
    %v3851 = vunpack.c.l.s4 1983009808
    %v3852 = vunpack.c.0.s8 %v3851
    %v3853 = vlaneseq
    %v3854 = vshrl.u32 %v3853, 7
    %v3855 = vsub.s32 %v3852, %v3854
    %v3856 = vrot.slane %v2455, %v3855
    %v3858 = vunpack.c.l.s4 1983009808
    %v3859 = vunpack.c.0.s8 %v3858
    %v3860 = vlaneseq
    %v3861 = vshrl.u32 %v3860, 7
    %v3862 = vsub.s32 %v3859, %v3861
    %v3863 = vrot.slane %v3849, %v3862
    %v3864 = vcombine.high %v3856, %v3856
    %v3865 = vcombine.high %v3863, %v3863
    %v3866 = vcombine.high %v2456, %v2456
    %v3868 = vunpack.c.l.s4 1983009808
    %v3869 = vunpack.c.0.s8 %v3868
    %v3870 = vlaneseq
    %v3871 = vshrl.u32 %v3870, 7
    %v3872 = vsub.s32 %v3869, %v3871
    %v3873 = vrot.slane %v2456, %v3872
    %v3875 = vunpack.c.l.s4 1983009808
    %v3876 = vunpack.c.0.s8 %v3875
    %v3877 = vlaneseq
    %v3878 = vshrl.u32 %v3877, 7
    %v3879 = vsub.s32 %v3876, %v3878
    %v3880 = vrot.slane %v3866, %v3879
    %v3881 = vcombine.high %v3873, %v3873
    %v3882 = vcombine.high %v3880, %v3880
    %v3884 = vunpack.c.l.s4 1983009808
    %v3885 = vunpack.c.0.s8 %v3884
    %v3886 = vlaneseq
    %v3887 = vshrl.u32 %v3886, 7
    %v3888 = vsub.s32 %v3885, %v3887
    %v3889 = vrot.slane %v2457, %v3888
    %v3890 = vcombine.high %v2458, %v2458
    %v3892 = vunpack.c.l.s4 1983009808
    %v3893 = vunpack.c.0.s8 %v3892
    %v3894 = vlaneseq
    %v3895 = vshrl.u32 %v3894, 7
    %v3896 = vsub.s32 %v3893, %v3895
    %v3897 = vrot.slane %v2458, %v3896
    %v3899 = vunpack.c.l.s4 1983009808
    %v3900 = vunpack.c.0.s8 %v3899
    %v3901 = vlaneseq
    %v3902 = vshrl.u32 %v3901, 7
    %v3903 = vsub.s32 %v3900, %v3902
    %v3904 = vrot.slane %v3890, %v3903
    %v3905 = vcombine.high %v3897, %v3897
    %v3906 = vcombine.high %v3904, %v3904
    %v3907 = vcombine.high %v2459, %v2459
    %v3909 = vunpack.c.l.s4 1983009808
    %v3910 = vunpack.c.0.s8 %v3909
    %v3911 = vlaneseq
    %v3912 = vshrl.u32 %v3911, 7
    %v3913 = vsub.s32 %v3910, %v3912
    %v3914 = vrot.slane %v2459, %v3913
    %v3916 = vunpack.c.l.s4 1983009808
    %v3917 = vunpack.c.0.s8 %v3916
    %v3918 = vlaneseq
    %v3919 = vshrl.u32 %v3918, 7
    %v3920 = vsub.s32 %v3917, %v3919
    %v3921 = vrot.slane %v3907, %v3920
    %v3922 = vcombine.high %v3914, %v3914
    %v3923 = vcombine.high %v3921, %v3921
    %v3925 = vunpack.c.l.s4 1983009808
    %v3926 = vunpack.c.0.s8 %v3925
    %v3927 = vlaneseq
    %v3928 = vshrl.u32 %v3927, 7
    %v3929 = vsub.s32 %v3926, %v3928
    %v3930 = vrot.slane %v2460, %v3929
    %v3931 = vcombine.high %v2461, %v2461
    %v3933 = vunpack.c.l.s4 1983009808
    %v3934 = vunpack.c.0.s8 %v3933
    %v3935 = vlaneseq
    %v3936 = vshrl.u32 %v3935, 7
    %v3937 = vsub.s32 %v3934, %v3936
    %v3938 = vrot.slane %v2461, %v3937
    %v3940 = vunpack.c.l.s4 1983009808
    %v3941 = vunpack.c.0.s8 %v3940
    %v3942 = vlaneseq
    %v3943 = vshrl.u32 %v3942, 7
    %v3944 = vsub.s32 %v3941, %v3943
    %v3945 = vrot.slane %v3931, %v3944
    %v3946 = vcombine.high %v3938, %v3938
    %v3947 = vcombine.high %v3945, %v3945
    %v3948 = vcombine.high %v2462, %v2462
    %v3950 = vunpack.c.l.s4 1983009808
    %v3951 = vunpack.c.0.s8 %v3950
    %v3952 = vlaneseq
    %v3953 = vshrl.u32 %v3952, 7
    %v3954 = vsub.s32 %v3951, %v3953
    %v3955 = vrot.slane %v2462, %v3954
    %v3957 = vunpack.c.l.s4 1983009808
    %v3958 = vunpack.c.0.s8 %v3957
    %v3959 = vlaneseq
    %v3960 = vshrl.u32 %v3959, 7
    %v3961 = vsub.s32 %v3958, %v3960
    %v3962 = vrot.slane %v3948, %v3961
    %v3963 = vcombine.high %v3955, %v3955
    %v3964 = vcombine.high %v3962, %v3962
    %v3966 = vunpack.c.l.s4 1983009808
    %v3967 = vunpack.c.0.s8 %v3966
    %v3968 = vlaneseq
    %v3969 = vshrl.u32 %v3968, 7
    %v3970 = vsub.s32 %v3967, %v3969
    %v3971 = vrot.slane %v2463, %v3970
    %v3972 = vcombine.high %v2464, %v2464
    %v3974 = vunpack.c.l.s4 1983009808
    %v3975 = vunpack.c.0.s8 %v3974
    %v3976 = vlaneseq
    %v3977 = vshrl.u32 %v3976, 7
    %v3978 = vsub.s32 %v3975, %v3977
    %v3979 = vrot.slane %v2464, %v3978
    %v3981 = vunpack.c.l.s4 1983009808
    %v3982 = vunpack.c.0.s8 %v3981
    %v3983 = vlaneseq
    %v3984 = vshrl.u32 %v3983, 7
    %v3985 = vsub.s32 %v3982, %v3984
    %v3986 = vrot.slane %v3972, %v3985
    %v3987 = vcombine.high %v3979, %v3979
    %v3988 = vcombine.high %v3986, %v3986
    %v3989 = vcombine.high %v2465, %v2465
    %v3991 = vunpack.c.l.s4 1983009808
    %v3992 = vunpack.c.0.s8 %v3991
    %v3993 = vlaneseq
    %v3994 = vshrl.u32 %v3993, 7
    %v3995 = vsub.s32 %v3992, %v3994
    %v3996 = vrot.slane %v2465, %v3995
    %v3998 = vunpack.c.l.s4 1983009808
    %v3999 = vunpack.c.0.s8 %v3998
    %v4000 = vlaneseq
    %v4001 = vshrl.u32 %v4000, 7
    %v4002 = vsub.s32 %v3999, %v4001
    %v4003 = vrot.slane %v3989, %v4002
    %v4004 = vcombine.high %v3996, %v3996
    %v4005 = vcombine.high %v4003, %v4003
    %v4007 = vunpack.c.l.s4 1983009808
    %v4008 = vunpack.c.0.s8 %v4007
    %v4009 = vlaneseq
    %v4010 = vshrl.u32 %v4009, 7
    %v4011 = vsub.s32 %v4008, %v4010
    %v4012 = vrot.slane %v2466, %v4011
    %v4013 = vcombine.high %v2467, %v2467
    %v4015 = vunpack.c.l.s4 1983009808
    %v4016 = vunpack.c.0.s8 %v4015
    %v4017 = vlaneseq
    %v4018 = vshrl.u32 %v4017, 7
    %v4019 = vsub.s32 %v4016, %v4018
    %v4020 = vrot.slane %v2467, %v4019
    %v4022 = vunpack.c.l.s4 1983009808
    %v4023 = vunpack.c.0.s8 %v4022
    %v4024 = vlaneseq
    %v4025 = vshrl.u32 %v4024, 7
    %v4026 = vsub.s32 %v4023, %v4025
    %v4027 = vrot.slane %v4013, %v4026
    %v4028 = vcombine.high %v4020, %v4020
    %v4029 = vcombine.high %v4027, %v4027
    %v4030 = vcombine.high %v2468, %v2468
    %v4032 = vunpack.c.l.s4 1983009808
    %v4033 = vunpack.c.0.s8 %v4032
    %v4034 = vlaneseq
    %v4035 = vshrl.u32 %v4034, 7
    %v4036 = vsub.s32 %v4033, %v4035
    %v4037 = vrot.slane %v2468, %v4036
    %v4039 = vunpack.c.l.s4 1983009808
    %v4040 = vunpack.c.0.s8 %v4039
    %v4041 = vlaneseq
    %v4042 = vshrl.u32 %v4041, 7
    %v4043 = vsub.s32 %v4040, %v4042
    %v4044 = vrot.slane %v4030, %v4043
    %v4045 = vcombine.high %v4037, %v4037
    %v4046 = vcombine.high %v4044, %v4044
    %v4048 = vunpack.c.l.s4 1983009808
    %v4049 = vunpack.c.0.s8 %v4048
    %v4050 = vlaneseq
    %v4051 = vshrl.u32 %v4050, 7
    %v4052 = vsub.s32 %v4049, %v4051
    %v4053 = vrot.slane %v2469, %v4052
    %v4054 = vcombine.low %v2585, %v2593
    %v4055 = vcombine.low %v2592, %v2594
    %v4057 = vunpack.c.l.s4 1983009808
    %v4058 = vunpack.c.0.s8 %v4057
    %v4059 = vlaneseq
    %v4060 = vshrl.u32 %v4059, 7
    %v4061 = vsub.s32 %v4058, %v4060
    %v4062 = vrot.slane %v4054, %v4061
    %v4064 = vunpack.c.l.s4 1983009808
    %v4065 = vunpack.c.0.s8 %v4064
    %v4066 = vlaneseq
    %v4067 = vshrl.u32 %v4066, 7
    %v4068 = vsub.s32 %v4065, %v4067
    %v4069 = vrot.slane %v4055, %v4068
    %v4070 = vcombine.low %v4062, %v4069
    %v4071 = vcombine.low %v2602, %v2610
    %v4072 = vcombine.low %v2609, %v2611
    %v4074 = vunpack.c.l.s4 1983009808
    %v4075 = vunpack.c.0.s8 %v4074
    %v4076 = vlaneseq
    %v4077 = vshrl.u32 %v4076, 7
    %v4078 = vsub.s32 %v4075, %v4077
    %v4079 = vrot.slane %v4071, %v4078
    %v4081 = vunpack.c.l.s4 1983009808
    %v4082 = vunpack.c.0.s8 %v4081
    %v4083 = vlaneseq
    %v4084 = vshrl.u32 %v4083, 7
    %v4085 = vsub.s32 %v4082, %v4084
    %v4086 = vrot.slane %v4072, %v4085
    %v4087 = vcombine.low %v4079, %v4086
    %v4088 = vcombine.low %v2618, %v2626
    %v4089 = vcombine.low %v2634, %v2633
    %v4091 = vunpack.c.l.s4 1983009808
    %v4092 = vunpack.c.0.s8 %v4091
    %v4093 = vlaneseq
    %v4094 = vshrl.u32 %v4093, 7
    %v4095 = vsub.s32 %v4092, %v4094
    %v4096 = vrot.slane %v4088, %v4095
    %v4098 = vunpack.c.l.s4 1983009808
    %v4099 = vunpack.c.0.s8 %v4098
    %v4100 = vlaneseq
    %v4101 = vshrl.u32 %v4100, 7
    %v4102 = vsub.s32 %v4099, %v4101
    %v4103 = vrot.slane %v4089, %v4102
    %v4104 = vcombine.low %v4096, %v4103
    %v4105 = vcombine.low %v2635, %v2643
    %v4106 = vcombine.low %v2651, %v2650
    %v4108 = vunpack.c.l.s4 1983009808
    %v4109 = vunpack.c.0.s8 %v4108
    %v4110 = vlaneseq
    %v4111 = vshrl.u32 %v4110, 7
    %v4112 = vsub.s32 %v4109, %v4111
    %v4113 = vrot.slane %v4105, %v4112
    %v4115 = vunpack.c.l.s4 1983009808
    %v4116 = vunpack.c.0.s8 %v4115
    %v4117 = vlaneseq
    %v4118 = vshrl.u32 %v4117, 7
    %v4119 = vsub.s32 %v4116, %v4118
    %v4120 = vrot.slane %v4106, %v4119
    %v4121 = vcombine.low %v4113, %v4120
    %v4122 = vcombine.low %v2652, %v2659
    %v4123 = vcombine.low %v2667, %v2675
    %v4125 = vunpack.c.l.s4 1983009808
    %v4126 = vunpack.c.0.s8 %v4125
    %v4127 = vlaneseq
    %v4128 = vshrl.u32 %v4127, 7
    %v4129 = vsub.s32 %v4126, %v4128
    %v4130 = vrot.slane %v4122, %v4129
    %v4132 = vunpack.c.l.s4 1983009808
    %v4133 = vunpack.c.0.s8 %v4132
    %v4134 = vlaneseq
    %v4135 = vshrl.u32 %v4134, 7
    %v4136 = vsub.s32 %v4133, %v4135
    %v4137 = vrot.slane %v4123, %v4136
    %v4138 = vcombine.low %v4130, %v4137
    %v4139 = vcombine.low %v2674, %v2676
    %v4140 = vcombine.low %v2684, %v2692
    %v4142 = vunpack.c.l.s4 1983009808
    %v4143 = vunpack.c.0.s8 %v4142
    %v4144 = vlaneseq
    %v4145 = vshrl.u32 %v4144, 7
    %v4146 = vsub.s32 %v4143, %v4145
    %v4147 = vrot.slane %v4139, %v4146
    %v4149 = vunpack.c.l.s4 1983009808
    %v4150 = vunpack.c.0.s8 %v4149
    %v4151 = vlaneseq
    %v4152 = vshrl.u32 %v4151, 7
    %v4153 = vsub.s32 %v4150, %v4152
    %v4154 = vrot.slane %v4140, %v4153
    %v4155 = vcombine.low %v4147, %v4154
    %v4156 = vcombine.low %v2691, %v2693
    %v4157 = vcombine.low %v2700, %v2708
    %v4159 = vunpack.c.l.s4 1983009808
    %v4160 = vunpack.c.0.s8 %v4159
    %v4161 = vlaneseq
    %v4162 = vshrl.u32 %v4161, 7
    %v4163 = vsub.s32 %v4160, %v4162
    %v4164 = vrot.slane %v4156, %v4163
    %v4166 = vunpack.c.l.s4 1983009808
    %v4167 = vunpack.c.0.s8 %v4166
    %v4168 = vlaneseq
    %v4169 = vshrl.u32 %v4168, 7
    %v4170 = vsub.s32 %v4167, %v4169
    %v4171 = vrot.slane %v4157, %v4170
    %v4172 = vcombine.low %v4164, %v4171
    %v4173 = vcombine.low %v2716, %v2715
    %v4174 = vcombine.low %v2717, %v2725
    %v4176 = vunpack.c.l.s4 1983009808
    %v4177 = vunpack.c.0.s8 %v4176
    %v4178 = vlaneseq
    %v4179 = vshrl.u32 %v4178, 7
    %v4180 = vsub.s32 %v4177, %v4179
    %v4181 = vrot.slane %v4173, %v4180
    %v4183 = vunpack.c.l.s4 1983009808
    %v4184 = vunpack.c.0.s8 %v4183
    %v4185 = vlaneseq
    %v4186 = vshrl.u32 %v4185, 7
    %v4187 = vsub.s32 %v4184, %v4186
    %v4188 = vrot.slane %v4174, %v4187
    %v4189 = vcombine.low %v4181, %v4188
    %v4190 = vcombine.low %v2733, %v2732
    %v4191 = vcombine.low %v2734, %v2741
    %v4193 = vunpack.c.l.s4 1983009808
    %v4194 = vunpack.c.0.s8 %v4193
    %v4195 = vlaneseq
    %v4196 = vshrl.u32 %v4195, 7
    %v4197 = vsub.s32 %v4194, %v4196
    %v4198 = vrot.slane %v4190, %v4197
    %v4200 = vunpack.c.l.s4 1983009808
    %v4201 = vunpack.c.0.s8 %v4200
    %v4202 = vlaneseq
    %v4203 = vshrl.u32 %v4202, 7
    %v4204 = vsub.s32 %v4201, %v4203
    %v4205 = vrot.slane %v4191, %v4204
    %v4206 = vcombine.low %v4198, %v4205
    %v4207 = vcombine.low %v2749, %v2757
    %v4208 = vcombine.low %v2756, %v2758
    %v4210 = vunpack.c.l.s4 1983009808
    %v4211 = vunpack.c.0.s8 %v4210
    %v4212 = vlaneseq
    %v4213 = vshrl.u32 %v4212, 7
    %v4214 = vsub.s32 %v4211, %v4213
    %v4215 = vrot.slane %v4207, %v4214
    %v4217 = vunpack.c.l.s4 1983009808
    %v4218 = vunpack.c.0.s8 %v4217
    %v4219 = vlaneseq
    %v4220 = vshrl.u32 %v4219, 7
    %v4221 = vsub.s32 %v4218, %v4220
    %v4222 = vrot.slane %v4208, %v4221
    %v4223 = vcombine.low %v4215, %v4222
    %v4224 = vcombine.low %v2766, %v2774
    %v4225 = vcombine.low %v2773, %v2775
    %v4227 = vunpack.c.l.s4 1983009808
    %v4228 = vunpack.c.0.s8 %v4227
    %v4229 = vlaneseq
    %v4230 = vshrl.u32 %v4229, 7
    %v4231 = vsub.s32 %v4228, %v4230
    %v4232 = vrot.slane %v4224, %v4231
    %v4234 = vunpack.c.l.s4 1983009808
    %v4235 = vunpack.c.0.s8 %v4234
    %v4236 = vlaneseq
    %v4237 = vshrl.u32 %v4236, 7
    %v4238 = vsub.s32 %v4235, %v4237
    %v4239 = vrot.slane %v4225, %v4238
    %v4240 = vcombine.low %v4232, %v4239
    %v4241 = vcombine.low %v2782, %v2790
    %v4242 = vcombine.low %v2798, %v2797
    %v4244 = vunpack.c.l.s4 1983009808
    %v4245 = vunpack.c.0.s8 %v4244
    %v4246 = vlaneseq
    %v4247 = vshrl.u32 %v4246, 7
    %v4248 = vsub.s32 %v4245, %v4247
    %v4249 = vrot.slane %v4241, %v4248
    %v4251 = vunpack.c.l.s4 1983009808
    %v4252 = vunpack.c.0.s8 %v4251
    %v4253 = vlaneseq
    %v4254 = vshrl.u32 %v4253, 7
    %v4255 = vsub.s32 %v4252, %v4254
    %v4256 = vrot.slane %v4242, %v4255
    %v4257 = vcombine.low %v4249, %v4256
    %v4258 = vcombine.low %v2799, %v2807
    %v4259 = vcombine.low %v2815, %v2814
    %v4261 = vunpack.c.l.s4 1983009808
    %v4262 = vunpack.c.0.s8 %v4261
    %v4263 = vlaneseq
    %v4264 = vshrl.u32 %v4263, 7
    %v4265 = vsub.s32 %v4262, %v4264
    %v4266 = vrot.slane %v4258, %v4265
    %v4268 = vunpack.c.l.s4 1983009808
    %v4269 = vunpack.c.0.s8 %v4268
    %v4270 = vlaneseq
    %v4271 = vshrl.u32 %v4270, 7
    %v4272 = vsub.s32 %v4269, %v4271
    %v4273 = vrot.slane %v4259, %v4272
    %v4274 = vcombine.low %v4266, %v4273
    %v4275 = vcombine.low %v2816, %v2823
    %v4276 = vcombine.low %v2831, %v2839
    %v4278 = vunpack.c.l.s4 1983009808
    %v4279 = vunpack.c.0.s8 %v4278
    %v4280 = vlaneseq
    %v4281 = vshrl.u32 %v4280, 7
    %v4282 = vsub.s32 %v4279, %v4281
    %v4283 = vrot.slane %v4275, %v4282
    %v4285 = vunpack.c.l.s4 1983009808
    %v4286 = vunpack.c.0.s8 %v4285
    %v4287 = vlaneseq
    %v4288 = vshrl.u32 %v4287, 7
    %v4289 = vsub.s32 %v4286, %v4288
    %v4290 = vrot.slane %v4276, %v4289
    %v4291 = vcombine.low %v4283, %v4290
    %v4292 = vcombine.low %v2838, %v2840
    %v4293 = vcombine.low %v2848, %v2856
    %v4295 = vunpack.c.l.s4 1983009808
    %v4296 = vunpack.c.0.s8 %v4295
    %v4297 = vlaneseq
    %v4298 = vshrl.u32 %v4297, 7
    %v4299 = vsub.s32 %v4296, %v4298
    %v4300 = vrot.slane %v4292, %v4299
    %v4302 = vunpack.c.l.s4 1983009808
    %v4303 = vunpack.c.0.s8 %v4302
    %v4304 = vlaneseq
    %v4305 = vshrl.u32 %v4304, 7
    %v4306 = vsub.s32 %v4303, %v4305
    %v4307 = vrot.slane %v4293, %v4306
    %v4308 = vcombine.low %v4300, %v4307
    %v4309 = vcombine.low %v2855, %v2857
    %v4310 = vcombine.low %v2864, %v2872
    %v4312 = vunpack.c.l.s4 1983009808
    %v4313 = vunpack.c.0.s8 %v4312
    %v4314 = vlaneseq
    %v4315 = vshrl.u32 %v4314, 7
    %v4316 = vsub.s32 %v4313, %v4315
    %v4317 = vrot.slane %v4309, %v4316
    %v4319 = vunpack.c.l.s4 1983009808
    %v4320 = vunpack.c.0.s8 %v4319
    %v4321 = vlaneseq
    %v4322 = vshrl.u32 %v4321, 7
    %v4323 = vsub.s32 %v4320, %v4322
    %v4324 = vrot.slane %v4310, %v4323
    %v4325 = vcombine.low %v4317, %v4324
    %v4326 = vcombine.low %v2880, %v2879
    %v4327 = vcombine.low %v2881, %v2889
    %v4329 = vunpack.c.l.s4 1983009808
    %v4330 = vunpack.c.0.s8 %v4329
    %v4331 = vlaneseq
    %v4332 = vshrl.u32 %v4331, 7
    %v4333 = vsub.s32 %v4330, %v4332
    %v4334 = vrot.slane %v4326, %v4333
    %v4336 = vunpack.c.l.s4 1983009808
    %v4337 = vunpack.c.0.s8 %v4336
    %v4338 = vlaneseq
    %v4339 = vshrl.u32 %v4338, 7
    %v4340 = vsub.s32 %v4337, %v4339
    %v4341 = vrot.slane %v4327, %v4340
    %v4342 = vcombine.low %v4334, %v4341
    %v4343 = vcombine.low %v2897, %v2896
    %v4344 = vcombine.low %v2898, %v2905
    %v4346 = vunpack.c.l.s4 1983009808
    %v4347 = vunpack.c.0.s8 %v4346
    %v4348 = vlaneseq
    %v4349 = vshrl.u32 %v4348, 7
    %v4350 = vsub.s32 %v4347, %v4349
    %v4351 = vrot.slane %v4343, %v4350
    %v4353 = vunpack.c.l.s4 1983009808
    %v4354 = vunpack.c.0.s8 %v4353
    %v4355 = vlaneseq
    %v4356 = vshrl.u32 %v4355, 7
    %v4357 = vsub.s32 %v4354, %v4356
    %v4358 = vrot.slane %v4344, %v4357
    %v4359 = vcombine.low %v4351, %v4358
    %v4360 = vcombine.low %v2913, %v2921
    %v4361 = vcombine.low %v2920, %v2922
    %v4363 = vunpack.c.l.s4 1983009808
    %v4364 = vunpack.c.0.s8 %v4363
    %v4365 = vlaneseq
    %v4366 = vshrl.u32 %v4365, 7
    %v4367 = vsub.s32 %v4364, %v4366
    %v4368 = vrot.slane %v4360, %v4367
    %v4370 = vunpack.c.l.s4 1983009808
    %v4371 = vunpack.c.0.s8 %v4370
    %v4372 = vlaneseq
    %v4373 = vshrl.u32 %v4372, 7
    %v4374 = vsub.s32 %v4371, %v4373
    %v4375 = vrot.slane %v4361, %v4374
    %v4376 = vcombine.low %v4368, %v4375
    %v4377 = vcombine.low %v2930, %v2938
    %v4378 = vcombine.low %v2937, %v2939
    %v4380 = vunpack.c.l.s4 1983009808
    %v4381 = vunpack.c.0.s8 %v4380
    %v4382 = vlaneseq
    %v4383 = vshrl.u32 %v4382, 7
    %v4384 = vsub.s32 %v4381, %v4383
    %v4385 = vrot.slane %v4377, %v4384
    %v4387 = vunpack.c.l.s4 1983009808
    %v4388 = vunpack.c.0.s8 %v4387
    %v4389 = vlaneseq
    %v4390 = vshrl.u32 %v4389, 7
    %v4391 = vsub.s32 %v4388, %v4390
    %v4392 = vrot.slane %v4378, %v4391
    %v4393 = vcombine.low %v4385, %v4392
    %v4394 = vcombine.low %v2946, %v2954
    %v4395 = vcombine.low %v2962, %v2961
    %v4397 = vunpack.c.l.s4 1983009808
    %v4398 = vunpack.c.0.s8 %v4397
    %v4399 = vlaneseq
    %v4400 = vshrl.u32 %v4399, 7
    %v4401 = vsub.s32 %v4398, %v4400
    %v4402 = vrot.slane %v4394, %v4401
    %v4404 = vunpack.c.l.s4 1983009808
    %v4405 = vunpack.c.0.s8 %v4404
    %v4406 = vlaneseq
    %v4407 = vshrl.u32 %v4406, 7
    %v4408 = vsub.s32 %v4405, %v4407
    %v4409 = vrot.slane %v4395, %v4408
    %v4410 = vcombine.low %v4402, %v4409
    %v4411 = vcombine.low %v2963, %v2971
    %v4412 = vcombine.low %v2979, %v2978
    %v4414 = vunpack.c.l.s4 1983009808
    %v4415 = vunpack.c.0.s8 %v4414
    %v4416 = vlaneseq
    %v4417 = vshrl.u32 %v4416, 7
    %v4418 = vsub.s32 %v4415, %v4417
    %v4419 = vrot.slane %v4411, %v4418
    %v4421 = vunpack.c.l.s4 1983009808
    %v4422 = vunpack.c.0.s8 %v4421
    %v4423 = vlaneseq
    %v4424 = vshrl.u32 %v4423, 7
    %v4425 = vsub.s32 %v4422, %v4424
    %v4426 = vrot.slane %v4412, %v4425
    %v4427 = vcombine.low %v4419, %v4426
    %v4428 = vcombine.low %v2980, %v2987
    %v4429 = vcombine.low %v2995, %v3003
    %v4431 = vunpack.c.l.s4 1983009808
    %v4432 = vunpack.c.0.s8 %v4431
    %v4433 = vlaneseq
    %v4434 = vshrl.u32 %v4433, 7
    %v4435 = vsub.s32 %v4432, %v4434
    %v4436 = vrot.slane %v4428, %v4435
    %v4438 = vunpack.c.l.s4 1983009808
    %v4439 = vunpack.c.0.s8 %v4438
    %v4440 = vlaneseq
    %v4441 = vshrl.u32 %v4440, 7
    %v4442 = vsub.s32 %v4439, %v4441
    %v4443 = vrot.slane %v4429, %v4442
    %v4444 = vcombine.low %v4436, %v4443
    %v4445 = vcombine.low %v3002, %v3004
    %v4446 = vcombine.low %v3012, %v3020
    %v4448 = vunpack.c.l.s4 1983009808
    %v4449 = vunpack.c.0.s8 %v4448
    %v4450 = vlaneseq
    %v4451 = vshrl.u32 %v4450, 7
    %v4452 = vsub.s32 %v4449, %v4451
    %v4453 = vrot.slane %v4445, %v4452
    %v4455 = vunpack.c.l.s4 1983009808
    %v4456 = vunpack.c.0.s8 %v4455
    %v4457 = vlaneseq
    %v4458 = vshrl.u32 %v4457, 7
    %v4459 = vsub.s32 %v4456, %v4458
    %v4460 = vrot.slane %v4446, %v4459
    %v4461 = vcombine.low %v4453, %v4460
    %v4462 = vcombine.low %v3019, %v3021
    %v4463 = vcombine.low %v3028, %v3036
    %v4465 = vunpack.c.l.s4 1983009808
    %v4466 = vunpack.c.0.s8 %v4465
    %v4467 = vlaneseq
    %v4468 = vshrl.u32 %v4467, 7
    %v4469 = vsub.s32 %v4466, %v4468
    %v4470 = vrot.slane %v4462, %v4469
    %v4472 = vunpack.c.l.s4 1983009808
    %v4473 = vunpack.c.0.s8 %v4472
    %v4474 = vlaneseq
    %v4475 = vshrl.u32 %v4474, 7
    %v4476 = vsub.s32 %v4473, %v4475
    %v4477 = vrot.slane %v4463, %v4476
    %v4478 = vcombine.low %v4470, %v4477
    %v4479 = vcombine.low %v3044, %v3043
    %v4480 = vcombine.low %v3045, %v3053
    %v4482 = vunpack.c.l.s4 1983009808
    %v4483 = vunpack.c.0.s8 %v4482
    %v4484 = vlaneseq
    %v4485 = vshrl.u32 %v4484, 7
    %v4486 = vsub.s32 %v4483, %v4485
    %v4487 = vrot.slane %v4479, %v4486
    %v4489 = vunpack.c.l.s4 1983009808
    %v4490 = vunpack.c.0.s8 %v4489
    %v4491 = vlaneseq
    %v4492 = vshrl.u32 %v4491, 7
    %v4493 = vsub.s32 %v4490, %v4492
    %v4494 = vrot.slane %v4480, %v4493
    %v4495 = vcombine.low %v4487, %v4494
    %v4496 = vcombine.low %v3061, %v3060
    %v4497 = vcombine.low %v3062, %v3069
    %v4499 = vunpack.c.l.s4 1983009808
    %v4500 = vunpack.c.0.s8 %v4499
    %v4501 = vlaneseq
    %v4502 = vshrl.u32 %v4501, 7
    %v4503 = vsub.s32 %v4500, %v4502
    %v4504 = vrot.slane %v4496, %v4503
    %v4506 = vunpack.c.l.s4 1983009808
    %v4507 = vunpack.c.0.s8 %v4506
    %v4508 = vlaneseq
    %v4509 = vshrl.u32 %v4508, 7
    %v4510 = vsub.s32 %v4507, %v4509
    %v4511 = vrot.slane %v4497, %v4510
    %v4512 = vcombine.low %v4504, %v4511
    %v4513 = vcombine.low %v3077, %v3085
    %v4514 = vcombine.low %v3084, %v3086
    %v4516 = vunpack.c.l.s4 1983009808
    %v4517 = vunpack.c.0.s8 %v4516
    %v4518 = vlaneseq
    %v4519 = vshrl.u32 %v4518, 7
    %v4520 = vsub.s32 %v4517, %v4519
    %v4521 = vrot.slane %v4513, %v4520
    %v4523 = vunpack.c.l.s4 1983009808
    %v4524 = vunpack.c.0.s8 %v4523
    %v4525 = vlaneseq
    %v4526 = vshrl.u32 %v4525, 7
    %v4527 = vsub.s32 %v4524, %v4526
    %v4528 = vrot.slane %v4514, %v4527
    %v4529 = vcombine.low %v4521, %v4528
    %v4530 = vcombine.low %v3094, %v3102
    %v4531 = vcombine.low %v3101, %v3103
    %v4533 = vunpack.c.l.s4 1983009808
    %v4534 = vunpack.c.0.s8 %v4533
    %v4535 = vlaneseq
    %v4536 = vshrl.u32 %v4535, 7
    %v4537 = vsub.s32 %v4534, %v4536
    %v4538 = vrot.slane %v4530, %v4537
    %v4540 = vunpack.c.l.s4 1983009808
    %v4541 = vunpack.c.0.s8 %v4540
    %v4542 = vlaneseq
    %v4543 = vshrl.u32 %v4542, 7
    %v4544 = vsub.s32 %v4541, %v4543
    %v4545 = vrot.slane %v4531, %v4544
    %v4546 = vcombine.low %v4538, %v4545
    %v4547 = vcombine.low %v3110, %v3118
    %v4548 = vcombine.low %v3126, %v3125
    %v4550 = vunpack.c.l.s4 1983009808
    %v4551 = vunpack.c.0.s8 %v4550
    %v4552 = vlaneseq
    %v4553 = vshrl.u32 %v4552, 7
    %v4554 = vsub.s32 %v4551, %v4553
    %v4555 = vrot.slane %v4547, %v4554
    %v4557 = vunpack.c.l.s4 1983009808
    %v4558 = vunpack.c.0.s8 %v4557
    %v4559 = vlaneseq
    %v4560 = vshrl.u32 %v4559, 7
    %v4561 = vsub.s32 %v4558, %v4560
    %v4562 = vrot.slane %v4548, %v4561
    %v4563 = vcombine.low %v4555, %v4562
    %v4564 = vcombine.low %v3127, %v3135
    %v4565 = vcombine.low %v3143, %v3142
    %v4567 = vunpack.c.l.s4 1983009808
    %v4568 = vunpack.c.0.s8 %v4567
    %v4569 = vlaneseq
    %v4570 = vshrl.u32 %v4569, 7
    %v4571 = vsub.s32 %v4568, %v4570
    %v4572 = vrot.slane %v4564, %v4571
    %v4574 = vunpack.c.l.s4 1983009808
    %v4575 = vunpack.c.0.s8 %v4574
    %v4576 = vlaneseq
    %v4577 = vshrl.u32 %v4576, 7
    %v4578 = vsub.s32 %v4575, %v4577
    %v4579 = vrot.slane %v4565, %v4578
    %v4580 = vcombine.low %v4572, %v4579
    %v4581 = vcombine.low %v3144, %v3151
    %v4582 = vcombine.low %v3159, %v3167
    %v4584 = vunpack.c.l.s4 1983009808
    %v4585 = vunpack.c.0.s8 %v4584
    %v4586 = vlaneseq
    %v4587 = vshrl.u32 %v4586, 7
    %v4588 = vsub.s32 %v4585, %v4587
    %v4589 = vrot.slane %v4581, %v4588
    %v4591 = vunpack.c.l.s4 1983009808
    %v4592 = vunpack.c.0.s8 %v4591
    %v4593 = vlaneseq
    %v4594 = vshrl.u32 %v4593, 7
    %v4595 = vsub.s32 %v4592, %v4594
    %v4596 = vrot.slane %v4582, %v4595
    %v4597 = vcombine.low %v4589, %v4596
    %v4598 = vcombine.low %v3166, %v3168
    %v4599 = vcombine.low %v3176, %v3184
    %v4601 = vunpack.c.l.s4 1983009808
    %v4602 = vunpack.c.0.s8 %v4601
    %v4603 = vlaneseq
    %v4604 = vshrl.u32 %v4603, 7
    %v4605 = vsub.s32 %v4602, %v4604
    %v4606 = vrot.slane %v4598, %v4605
    %v4608 = vunpack.c.l.s4 1983009808
    %v4609 = vunpack.c.0.s8 %v4608
    %v4610 = vlaneseq
    %v4611 = vshrl.u32 %v4610, 7
    %v4612 = vsub.s32 %v4609, %v4611
    %v4613 = vrot.slane %v4599, %v4612
    %v4614 = vcombine.low %v4606, %v4613
    %v4615 = vcombine.low %v3183, %v3185
    %v4616 = vcombine.low %v3192, %v3200
    %v4618 = vunpack.c.l.s4 1983009808
    %v4619 = vunpack.c.0.s8 %v4618
    %v4620 = vlaneseq
    %v4621 = vshrl.u32 %v4620, 7
    %v4622 = vsub.s32 %v4619, %v4621
    %v4623 = vrot.slane %v4615, %v4622
    %v4625 = vunpack.c.l.s4 1983009808
    %v4626 = vunpack.c.0.s8 %v4625
    %v4627 = vlaneseq
    %v4628 = vshrl.u32 %v4627, 7
    %v4629 = vsub.s32 %v4626, %v4628
    %v4630 = vrot.slane %v4616, %v4629
    %v4631 = vcombine.low %v4623, %v4630
    %v4632 = vcombine.low %v3208, %v3207
    %v4633 = vcombine.low %v3209, %v3217
    %v4635 = vunpack.c.l.s4 1983009808
    %v4636 = vunpack.c.0.s8 %v4635
    %v4637 = vlaneseq
    %v4638 = vshrl.u32 %v4637, 7
    %v4639 = vsub.s32 %v4636, %v4638
    %v4640 = vrot.slane %v4632, %v4639
    %v4642 = vunpack.c.l.s4 1983009808
    %v4643 = vunpack.c.0.s8 %v4642
    %v4644 = vlaneseq
    %v4645 = vshrl.u32 %v4644, 7
    %v4646 = vsub.s32 %v4643, %v4645
    %v4647 = vrot.slane %v4633, %v4646
    %v4648 = vcombine.low %v4640, %v4647
    %v4649 = vcombine.low %v3225, %v3224
    %v4650 = vcombine.low %v3226, %v3233
    %v4652 = vunpack.c.l.s4 1983009808
    %v4653 = vunpack.c.0.s8 %v4652
    %v4654 = vlaneseq
    %v4655 = vshrl.u32 %v4654, 7
    %v4656 = vsub.s32 %v4653, %v4655
    %v4657 = vrot.slane %v4649, %v4656
    %v4659 = vunpack.c.l.s4 1983009808
    %v4660 = vunpack.c.0.s8 %v4659
    %v4661 = vlaneseq
    %v4662 = vshrl.u32 %v4661, 7
    %v4663 = vsub.s32 %v4660, %v4662
    %v4664 = vrot.slane %v4650, %v4663
    %v4665 = vcombine.low %v4657, %v4664
    %v4666 = vcombine.low %v3241, %v3249
    %v4667 = vcombine.low %v3248, %v3250
    %v4669 = vunpack.c.l.s4 1983009808
    %v4670 = vunpack.c.0.s8 %v4669
    %v4671 = vlaneseq
    %v4672 = vshrl.u32 %v4671, 7
    %v4673 = vsub.s32 %v4670, %v4672
    %v4674 = vrot.slane %v4666, %v4673
    %v4676 = vunpack.c.l.s4 1983009808
    %v4677 = vunpack.c.0.s8 %v4676
    %v4678 = vlaneseq
    %v4679 = vshrl.u32 %v4678, 7
    %v4680 = vsub.s32 %v4677, %v4679
    %v4681 = vrot.slane %v4667, %v4680
    %v4682 = vcombine.low %v4674, %v4681
    %v4683 = vcombine.low %v3258, %v3266
    %v4684 = vcombine.low %v3265, %v3267
    %v4686 = vunpack.c.l.s4 1983009808
    %v4687 = vunpack.c.0.s8 %v4686
    %v4688 = vlaneseq
    %v4689 = vshrl.u32 %v4688, 7
    %v4690 = vsub.s32 %v4687, %v4689
    %v4691 = vrot.slane %v4683, %v4690
    %v4693 = vunpack.c.l.s4 1983009808
    %v4694 = vunpack.c.0.s8 %v4693
    %v4695 = vlaneseq
    %v4696 = vshrl.u32 %v4695, 7
    %v4697 = vsub.s32 %v4694, %v4696
    %v4698 = vrot.slane %v4684, %v4697
    %v4699 = vcombine.low %v4691, %v4698
    %v4700 = vcombine.low %v3274, %v3282
    %v4701 = vcombine.low %v3290, %v3289
    %v4703 = vunpack.c.l.s4 1983009808
    %v4704 = vunpack.c.0.s8 %v4703
    %v4705 = vlaneseq
    %v4706 = vshrl.u32 %v4705, 7
    %v4707 = vsub.s32 %v4704, %v4706
    %v4708 = vrot.slane %v4700, %v4707
    %v4710 = vunpack.c.l.s4 1983009808
    %v4711 = vunpack.c.0.s8 %v4710
    %v4712 = vlaneseq
    %v4713 = vshrl.u32 %v4712, 7
    %v4714 = vsub.s32 %v4711, %v4713
    %v4715 = vrot.slane %v4701, %v4714
    %v4716 = vcombine.low %v4708, %v4715
    %v4717 = vcombine.low %v3291, %v3299
    %v4718 = vcombine.low %v3307, %v3306
    %v4720 = vunpack.c.l.s4 1983009808
    %v4721 = vunpack.c.0.s8 %v4720
    %v4722 = vlaneseq
    %v4723 = vshrl.u32 %v4722, 7
    %v4724 = vsub.s32 %v4721, %v4723
    %v4725 = vrot.slane %v4717, %v4724
    %v4727 = vunpack.c.l.s4 1983009808
    %v4728 = vunpack.c.0.s8 %v4727
    %v4729 = vlaneseq
    %v4730 = vshrl.u32 %v4729, 7
    %v4731 = vsub.s32 %v4728, %v4730
    %v4732 = vrot.slane %v4718, %v4731
    %v4733 = vcombine.low %v4725, %v4732
    %v4734 = vcombine.low %v3308, %v3315
    %v4735 = vcombine.low %v3323, %v3331
    %v4737 = vunpack.c.l.s4 1983009808
    %v4738 = vunpack.c.0.s8 %v4737
    %v4739 = vlaneseq
    %v4740 = vshrl.u32 %v4739, 7
    %v4741 = vsub.s32 %v4738, %v4740
    %v4742 = vrot.slane %v4734, %v4741
    %v4744 = vunpack.c.l.s4 1983009808
    %v4745 = vunpack.c.0.s8 %v4744
    %v4746 = vlaneseq
    %v4747 = vshrl.u32 %v4746, 7
    %v4748 = vsub.s32 %v4745, %v4747
    %v4749 = vrot.slane %v4735, %v4748
    %v4750 = vcombine.low %v4742, %v4749
    %v4751 = vcombine.low %v3330, %v3332
    %v4752 = vcombine.low %v3340, %v3348
    %v4754 = vunpack.c.l.s4 1983009808
    %v4755 = vunpack.c.0.s8 %v4754
    %v4756 = vlaneseq
    %v4757 = vshrl.u32 %v4756, 7
    %v4758 = vsub.s32 %v4755, %v4757
    %v4759 = vrot.slane %v4751, %v4758
    %v4761 = vunpack.c.l.s4 1983009808
    %v4762 = vunpack.c.0.s8 %v4761
    %v4763 = vlaneseq
    %v4764 = vshrl.u32 %v4763, 7
    %v4765 = vsub.s32 %v4762, %v4764
    %v4766 = vrot.slane %v4752, %v4765
    %v4767 = vcombine.low %v4759, %v4766
    %v4768 = vcombine.low %v3347, %v3349
    %v4769 = vcombine.low %v3356, %v3364
    %v4771 = vunpack.c.l.s4 1983009808
    %v4772 = vunpack.c.0.s8 %v4771
    %v4773 = vlaneseq
    %v4774 = vshrl.u32 %v4773, 7
    %v4775 = vsub.s32 %v4772, %v4774
    %v4776 = vrot.slane %v4768, %v4775
    %v4778 = vunpack.c.l.s4 1983009808
    %v4779 = vunpack.c.0.s8 %v4778
    %v4780 = vlaneseq
    %v4781 = vshrl.u32 %v4780, 7
    %v4782 = vsub.s32 %v4779, %v4781
    %v4783 = vrot.slane %v4769, %v4782
    %v4784 = vcombine.low %v4776, %v4783
    %v4785 = vcombine.low %v3372, %v3371
    %v4786 = vcombine.low %v3373, %v3381
    %v4788 = vunpack.c.l.s4 1983009808
    %v4789 = vunpack.c.0.s8 %v4788
    %v4790 = vlaneseq
    %v4791 = vshrl.u32 %v4790, 7
    %v4792 = vsub.s32 %v4789, %v4791
    %v4793 = vrot.slane %v4785, %v4792
    %v4795 = vunpack.c.l.s4 1983009808
    %v4796 = vunpack.c.0.s8 %v4795
    %v4797 = vlaneseq
    %v4798 = vshrl.u32 %v4797, 7
    %v4799 = vsub.s32 %v4796, %v4798
    %v4800 = vrot.slane %v4786, %v4799
    %v4801 = vcombine.low %v4793, %v4800
    %v4802 = vcombine.low %v3389, %v3388
    %v4803 = vcombine.low %v3390, %v3397
    %v4805 = vunpack.c.l.s4 1983009808
    %v4806 = vunpack.c.0.s8 %v4805
    %v4807 = vlaneseq
    %v4808 = vshrl.u32 %v4807, 7
    %v4809 = vsub.s32 %v4806, %v4808
    %v4810 = vrot.slane %v4802, %v4809
    %v4812 = vunpack.c.l.s4 1983009808
    %v4813 = vunpack.c.0.s8 %v4812
    %v4814 = vlaneseq
    %v4815 = vshrl.u32 %v4814, 7
    %v4816 = vsub.s32 %v4813, %v4815
    %v4817 = vrot.slane %v4803, %v4816
    %v4818 = vcombine.low %v4810, %v4817
    %v4819 = vcombine.low %v3405, %v3413
    %v4820 = vcombine.low %v3412, %v3414
    %v4822 = vunpack.c.l.s4 1983009808
    %v4823 = vunpack.c.0.s8 %v4822
    %v4824 = vlaneseq
    %v4825 = vshrl.u32 %v4824, 7
    %v4826 = vsub.s32 %v4823, %v4825
    %v4827 = vrot.slane %v4819, %v4826
    %v4829 = vunpack.c.l.s4 1983009808
    %v4830 = vunpack.c.0.s8 %v4829
    %v4831 = vlaneseq
    %v4832 = vshrl.u32 %v4831, 7
    %v4833 = vsub.s32 %v4830, %v4832
    %v4834 = vrot.slane %v4820, %v4833
    %v4835 = vcombine.low %v4827, %v4834
    %v4836 = vcombine.low %v3422, %v3430
    %v4837 = vcombine.low %v3429, %v3431
    %v4839 = vunpack.c.l.s4 1983009808
    %v4840 = vunpack.c.0.s8 %v4839
    %v4841 = vlaneseq
    %v4842 = vshrl.u32 %v4841, 7
    %v4843 = vsub.s32 %v4840, %v4842
    %v4844 = vrot.slane %v4836, %v4843
    %v4846 = vunpack.c.l.s4 1983009808
    %v4847 = vunpack.c.0.s8 %v4846
    %v4848 = vlaneseq
    %v4849 = vshrl.u32 %v4848, 7
    %v4850 = vsub.s32 %v4847, %v4849
    %v4851 = vrot.slane %v4837, %v4850
    %v4852 = vcombine.low %v4844, %v4851
    %v4853 = vcombine.low %v3438, %v3446
    %v4854 = vcombine.low %v3454, %v3453
    %v4856 = vunpack.c.l.s4 1983009808
    %v4857 = vunpack.c.0.s8 %v4856
    %v4858 = vlaneseq
    %v4859 = vshrl.u32 %v4858, 7
    %v4860 = vsub.s32 %v4857, %v4859
    %v4861 = vrot.slane %v4853, %v4860
    %v4863 = vunpack.c.l.s4 1983009808
    %v4864 = vunpack.c.0.s8 %v4863
    %v4865 = vlaneseq
    %v4866 = vshrl.u32 %v4865, 7
    %v4867 = vsub.s32 %v4864, %v4866
    %v4868 = vrot.slane %v4854, %v4867
    %v4869 = vcombine.low %v4861, %v4868
    %v4870 = vcombine.low %v3455, %v3463
    %v4871 = vcombine.low %v3471, %v3470
    %v4873 = vunpack.c.l.s4 1983009808
    %v4874 = vunpack.c.0.s8 %v4873
    %v4875 = vlaneseq
    %v4876 = vshrl.u32 %v4875, 7
    %v4877 = vsub.s32 %v4874, %v4876
    %v4878 = vrot.slane %v4870, %v4877
    %v4880 = vunpack.c.l.s4 1983009808
    %v4881 = vunpack.c.0.s8 %v4880
    %v4882 = vlaneseq
    %v4883 = vshrl.u32 %v4882, 7
    %v4884 = vsub.s32 %v4881, %v4883
    %v4885 = vrot.slane %v4871, %v4884
    %v4886 = vcombine.low %v4878, %v4885
    %v4887 = vcombine.low %v3472, %v3479
    %v4888 = vcombine.low %v3487, %v3495
    %v4890 = vunpack.c.l.s4 1983009808
    %v4891 = vunpack.c.0.s8 %v4890
    %v4892 = vlaneseq
    %v4893 = vshrl.u32 %v4892, 7
    %v4894 = vsub.s32 %v4891, %v4893
    %v4895 = vrot.slane %v4887, %v4894
    %v4897 = vunpack.c.l.s4 1983009808
    %v4898 = vunpack.c.0.s8 %v4897
    %v4899 = vlaneseq
    %v4900 = vshrl.u32 %v4899, 7
    %v4901 = vsub.s32 %v4898, %v4900
    %v4902 = vrot.slane %v4888, %v4901
    %v4903 = vcombine.low %v4895, %v4902
    %v4904 = vcombine.low %v3494, %v3496
    %v4905 = vcombine.low %v3504, %v3512
    %v4907 = vunpack.c.l.s4 1983009808
    %v4908 = vunpack.c.0.s8 %v4907
    %v4909 = vlaneseq
    %v4910 = vshrl.u32 %v4909, 7
    %v4911 = vsub.s32 %v4908, %v4910
    %v4912 = vrot.slane %v4904, %v4911
    %v4914 = vunpack.c.l.s4 1983009808
    %v4915 = vunpack.c.0.s8 %v4914
    %v4916 = vlaneseq
    %v4917 = vshrl.u32 %v4916, 7
    %v4918 = vsub.s32 %v4915, %v4917
    %v4919 = vrot.slane %v4905, %v4918
    %v4920 = vcombine.low %v4912, %v4919
    %v4921 = vcombine.low %v3511, %v3513
    %v4922 = vcombine.low %v3520, %v3528
    %v4924 = vunpack.c.l.s4 1983009808
    %v4925 = vunpack.c.0.s8 %v4924
    %v4926 = vlaneseq
    %v4927 = vshrl.u32 %v4926, 7
    %v4928 = vsub.s32 %v4925, %v4927
    %v4929 = vrot.slane %v4921, %v4928
    %v4931 = vunpack.c.l.s4 1983009808
    %v4932 = vunpack.c.0.s8 %v4931
    %v4933 = vlaneseq
    %v4934 = vshrl.u32 %v4933, 7
    %v4935 = vsub.s32 %v4932, %v4934
    %v4936 = vrot.slane %v4922, %v4935
    %v4937 = vcombine.low %v4929, %v4936
    %v4938 = vcombine.low %v3536, %v3535
    %v4939 = vcombine.low %v3537, %v3545
    %v4941 = vunpack.c.l.s4 1983009808
    %v4942 = vunpack.c.0.s8 %v4941
    %v4943 = vlaneseq
    %v4944 = vshrl.u32 %v4943, 7
    %v4945 = vsub.s32 %v4942, %v4944
    %v4946 = vrot.slane %v4938, %v4945
    %v4948 = vunpack.c.l.s4 1983009808
    %v4949 = vunpack.c.0.s8 %v4948
    %v4950 = vlaneseq
    %v4951 = vshrl.u32 %v4950, 7
    %v4952 = vsub.s32 %v4949, %v4951
    %v4953 = vrot.slane %v4939, %v4952
    %v4954 = vcombine.low %v4946, %v4953
    %v4955 = vcombine.low %v3553, %v3552
    %v4956 = vcombine.low %v3554, %v3561
    %v4958 = vunpack.c.l.s4 1983009808
    %v4959 = vunpack.c.0.s8 %v4958
    %v4960 = vlaneseq
    %v4961 = vshrl.u32 %v4960, 7
    %v4962 = vsub.s32 %v4959, %v4961
    %v4963 = vrot.slane %v4955, %v4962
    %v4965 = vunpack.c.l.s4 1983009808
    %v4966 = vunpack.c.0.s8 %v4965
    %v4967 = vlaneseq
    %v4968 = vshrl.u32 %v4967, 7
    %v4969 = vsub.s32 %v4966, %v4968
    %v4970 = vrot.slane %v4956, %v4969
    %v4971 = vcombine.low %v4963, %v4970
    %v4972 = vcombine.low %v3569, %v3577
    %v4973 = vcombine.low %v3576, %v3578
    %v4975 = vunpack.c.l.s4 1983009808
    %v4976 = vunpack.c.0.s8 %v4975
    %v4977 = vlaneseq
    %v4978 = vshrl.u32 %v4977, 7
    %v4979 = vsub.s32 %v4976, %v4978
    %v4980 = vrot.slane %v4972, %v4979
    %v4982 = vunpack.c.l.s4 1983009808
    %v4983 = vunpack.c.0.s8 %v4982
    %v4984 = vlaneseq
    %v4985 = vshrl.u32 %v4984, 7
    %v4986 = vsub.s32 %v4983, %v4985
    %v4987 = vrot.slane %v4973, %v4986
    %v4988 = vcombine.low %v4980, %v4987
    %v4989 = vcombine.low %v3586, %v3594
    %v4990 = vcombine.low %v3593, %v3595
    %v4992 = vunpack.c.l.s4 1983009808
    %v4993 = vunpack.c.0.s8 %v4992
    %v4994 = vlaneseq
    %v4995 = vshrl.u32 %v4994, 7
    %v4996 = vsub.s32 %v4993, %v4995
    %v4997 = vrot.slane %v4989, %v4996
    %v4999 = vunpack.c.l.s4 1983009808
    %v5000 = vunpack.c.0.s8 %v4999
    %v5001 = vlaneseq
    %v5002 = vshrl.u32 %v5001, 7
    %v5003 = vsub.s32 %v5000, %v5002
    %v5004 = vrot.slane %v4990, %v5003
    %v5005 = vcombine.low %v4997, %v5004
    %v5006 = vcombine.low %v3602, %v3610
    %v5007 = vcombine.low %v3618, %v3617
    %v5009 = vunpack.c.l.s4 1983009808
    %v5010 = vunpack.c.0.s8 %v5009
    %v5011 = vlaneseq
    %v5012 = vshrl.u32 %v5011, 7
    %v5013 = vsub.s32 %v5010, %v5012
    %v5014 = vrot.slane %v5006, %v5013
    %v5016 = vunpack.c.l.s4 1983009808
    %v5017 = vunpack.c.0.s8 %v5016
    %v5018 = vlaneseq
    %v5019 = vshrl.u32 %v5018, 7
    %v5020 = vsub.s32 %v5017, %v5019
    %v5021 = vrot.slane %v5007, %v5020
    %v5022 = vcombine.low %v5014, %v5021
    %v5023 = vcombine.low %v3619, %v3627
    %v5024 = vcombine.low %v3635, %v3634
    %v5026 = vunpack.c.l.s4 1983009808
    %v5027 = vunpack.c.0.s8 %v5026
    %v5028 = vlaneseq
    %v5029 = vshrl.u32 %v5028, 7
    %v5030 = vsub.s32 %v5027, %v5029
    %v5031 = vrot.slane %v5023, %v5030
    %v5033 = vunpack.c.l.s4 1983009808
    %v5034 = vunpack.c.0.s8 %v5033
    %v5035 = vlaneseq
    %v5036 = vshrl.u32 %v5035, 7
    %v5037 = vsub.s32 %v5034, %v5036
    %v5038 = vrot.slane %v5024, %v5037
    %v5039 = vcombine.low %v5031, %v5038
    %v5040 = vcombine.low %v3636, %v3643
    %v5041 = vcombine.low %v3651, %v3659
    %v5043 = vunpack.c.l.s4 1983009808
    %v5044 = vunpack.c.0.s8 %v5043
    %v5045 = vlaneseq
    %v5046 = vshrl.u32 %v5045, 7
    %v5047 = vsub.s32 %v5044, %v5046
    %v5048 = vrot.slane %v5040, %v5047
    %v5050 = vunpack.c.l.s4 1983009808
    %v5051 = vunpack.c.0.s8 %v5050
    %v5052 = vlaneseq
    %v5053 = vshrl.u32 %v5052, 7
    %v5054 = vsub.s32 %v5051, %v5053
    %v5055 = vrot.slane %v5041, %v5054
    %v5056 = vcombine.low %v5048, %v5055
    %v5057 = vcombine.low %v3658, %v3660
    %v5058 = vcombine.low %v3668, %v3676
    %v5060 = vunpack.c.l.s4 1983009808
    %v5061 = vunpack.c.0.s8 %v5060
    %v5062 = vlaneseq
    %v5063 = vshrl.u32 %v5062, 7
    %v5064 = vsub.s32 %v5061, %v5063
    %v5065 = vrot.slane %v5057, %v5064
    %v5067 = vunpack.c.l.s4 1983009808
    %v5068 = vunpack.c.0.s8 %v5067
    %v5069 = vlaneseq
    %v5070 = vshrl.u32 %v5069, 7
    %v5071 = vsub.s32 %v5068, %v5070
    %v5072 = vrot.slane %v5058, %v5071
    %v5073 = vcombine.low %v5065, %v5072
    %v5074 = vcombine.low %v3675, %v3677
    %v5075 = vcombine.low %v3684, %v3692
    %v5077 = vunpack.c.l.s4 1983009808
    %v5078 = vunpack.c.0.s8 %v5077
    %v5079 = vlaneseq
    %v5080 = vshrl.u32 %v5079, 7
    %v5081 = vsub.s32 %v5078, %v5080
    %v5082 = vrot.slane %v5074, %v5081
    %v5084 = vunpack.c.l.s4 1983009808
    %v5085 = vunpack.c.0.s8 %v5084
    %v5086 = vlaneseq
    %v5087 = vshrl.u32 %v5086, 7
    %v5088 = vsub.s32 %v5085, %v5087
    %v5089 = vrot.slane %v5075, %v5088
    %v5090 = vcombine.low %v5082, %v5089
    %v5091 = vcombine.low %v3700, %v3699
    %v5092 = vcombine.low %v3701, %v3709
    %v5094 = vunpack.c.l.s4 1983009808
    %v5095 = vunpack.c.0.s8 %v5094
    %v5096 = vlaneseq
    %v5097 = vshrl.u32 %v5096, 7
    %v5098 = vsub.s32 %v5095, %v5097
    %v5099 = vrot.slane %v5091, %v5098
    %v5101 = vunpack.c.l.s4 1983009808
    %v5102 = vunpack.c.0.s8 %v5101
    %v5103 = vlaneseq
    %v5104 = vshrl.u32 %v5103, 7
    %v5105 = vsub.s32 %v5102, %v5104
    %v5106 = vrot.slane %v5092, %v5105
    %v5107 = vcombine.low %v5099, %v5106
    %v5108 = vcombine.low %v3717, %v3716
    %v5109 = vcombine.low %v3718, %v3725
    %v5111 = vunpack.c.l.s4 1983009808
    %v5112 = vunpack.c.0.s8 %v5111
    %v5113 = vlaneseq
    %v5114 = vshrl.u32 %v5113, 7
    %v5115 = vsub.s32 %v5112, %v5114
    %v5116 = vrot.slane %v5108, %v5115
    %v5118 = vunpack.c.l.s4 1983009808
    %v5119 = vunpack.c.0.s8 %v5118
    %v5120 = vlaneseq
    %v5121 = vshrl.u32 %v5120, 7
    %v5122 = vsub.s32 %v5119, %v5121
    %v5123 = vrot.slane %v5109, %v5122
    %v5124 = vcombine.low %v5116, %v5123
    %v5125 = vcombine.low %v3733, %v3741
    %v5126 = vcombine.low %v3740, %v3742
    %v5128 = vunpack.c.l.s4 1983009808
    %v5129 = vunpack.c.0.s8 %v5128
    %v5130 = vlaneseq
    %v5131 = vshrl.u32 %v5130, 7
    %v5132 = vsub.s32 %v5129, %v5131
    %v5133 = vrot.slane %v5125, %v5132
    %v5135 = vunpack.c.l.s4 1983009808
    %v5136 = vunpack.c.0.s8 %v5135
    %v5137 = vlaneseq
    %v5138 = vshrl.u32 %v5137, 7
    %v5139 = vsub.s32 %v5136, %v5138
    %v5140 = vrot.slane %v5126, %v5139
    %v5141 = vcombine.low %v5133, %v5140
    %v5142 = vcombine.low %v3750, %v3758
    %v5143 = vcombine.low %v3757, %v3759
    %v5145 = vunpack.c.l.s4 1983009808
    %v5146 = vunpack.c.0.s8 %v5145
    %v5147 = vlaneseq
    %v5148 = vshrl.u32 %v5147, 7
    %v5149 = vsub.s32 %v5146, %v5148
    %v5150 = vrot.slane %v5142, %v5149
    %v5152 = vunpack.c.l.s4 1983009808
    %v5153 = vunpack.c.0.s8 %v5152
    %v5154 = vlaneseq
    %v5155 = vshrl.u32 %v5154, 7
    %v5156 = vsub.s32 %v5153, %v5155
    %v5157 = vrot.slane %v5143, %v5156
    %v5158 = vcombine.low %v5150, %v5157
    %v5159 = vcombine.low %v3766, %v3774
    %v5160 = vcombine.low %v3782, %v3781
    %v5162 = vunpack.c.l.s4 1983009808
    %v5163 = vunpack.c.0.s8 %v5162
    %v5164 = vlaneseq
    %v5165 = vshrl.u32 %v5164, 7
    %v5166 = vsub.s32 %v5163, %v5165
    %v5167 = vrot.slane %v5159, %v5166
    %v5169 = vunpack.c.l.s4 1983009808
    %v5170 = vunpack.c.0.s8 %v5169
    %v5171 = vlaneseq
    %v5172 = vshrl.u32 %v5171, 7
    %v5173 = vsub.s32 %v5170, %v5172
    %v5174 = vrot.slane %v5160, %v5173
    %v5175 = vcombine.low %v5167, %v5174
    %v5176 = vcombine.low %v3783, %v3791
    %v5177 = vcombine.low %v3799, %v3798
    %v5179 = vunpack.c.l.s4 1983009808
    %v5180 = vunpack.c.0.s8 %v5179
    %v5181 = vlaneseq
    %v5182 = vshrl.u32 %v5181, 7
    %v5183 = vsub.s32 %v5180, %v5182
    %v5184 = vrot.slane %v5176, %v5183
    %v5186 = vunpack.c.l.s4 1983009808
    %v5187 = vunpack.c.0.s8 %v5186
    %v5188 = vlaneseq
    %v5189 = vshrl.u32 %v5188, 7
    %v5190 = vsub.s32 %v5187, %v5189
    %v5191 = vrot.slane %v5177, %v5190
    %v5192 = vcombine.low %v5184, %v5191
    %v5193 = vcombine.low %v3800, %v3807
    %v5194 = vcombine.low %v3815, %v3823
    %v5196 = vunpack.c.l.s4 1983009808
    %v5197 = vunpack.c.0.s8 %v5196
    %v5198 = vlaneseq
    %v5199 = vshrl.u32 %v5198, 7
    %v5200 = vsub.s32 %v5197, %v5199
    %v5201 = vrot.slane %v5193, %v5200
    %v5203 = vunpack.c.l.s4 1983009808
    %v5204 = vunpack.c.0.s8 %v5203
    %v5205 = vlaneseq
    %v5206 = vshrl.u32 %v5205, 7
    %v5207 = vsub.s32 %v5204, %v5206
    %v5208 = vrot.slane %v5194, %v5207
    %v5209 = vcombine.low %v5201, %v5208
    %v5210 = vcombine.low %v3822, %v3824
    %v5211 = vcombine.low %v3832, %v3840
    %v5213 = vunpack.c.l.s4 1983009808
    %v5214 = vunpack.c.0.s8 %v5213
    %v5215 = vlaneseq
    %v5216 = vshrl.u32 %v5215, 7
    %v5217 = vsub.s32 %v5214, %v5216
    %v5218 = vrot.slane %v5210, %v5217
    %v5220 = vunpack.c.l.s4 1983009808
    %v5221 = vunpack.c.0.s8 %v5220
    %v5222 = vlaneseq
    %v5223 = vshrl.u32 %v5222, 7
    %v5224 = vsub.s32 %v5221, %v5223
    %v5225 = vrot.slane %v5211, %v5224
    %v5226 = vcombine.low %v5218, %v5225
    %v5227 = vcombine.low %v3839, %v3841
    %v5228 = vcombine.low %v3848, %v3856
    %v5230 = vunpack.c.l.s4 1983009808
    %v5231 = vunpack.c.0.s8 %v5230
    %v5232 = vlaneseq
    %v5233 = vshrl.u32 %v5232, 7
    %v5234 = vsub.s32 %v5231, %v5233
    %v5235 = vrot.slane %v5227, %v5234
    %v5237 = vunpack.c.l.s4 1983009808
    %v5238 = vunpack.c.0.s8 %v5237
    %v5239 = vlaneseq
    %v5240 = vshrl.u32 %v5239, 7
    %v5241 = vsub.s32 %v5238, %v5240
    %v5242 = vrot.slane %v5228, %v5241
    %v5243 = vcombine.low %v5235, %v5242
    %v5244 = vcombine.low %v3864, %v3863
    %v5245 = vcombine.low %v3865, %v3873
    %v5247 = vunpack.c.l.s4 1983009808
    %v5248 = vunpack.c.0.s8 %v5247
    %v5249 = vlaneseq
    %v5250 = vshrl.u32 %v5249, 7
    %v5251 = vsub.s32 %v5248, %v5250
    %v5252 = vrot.slane %v5244, %v5251
    %v5254 = vunpack.c.l.s4 1983009808
    %v5255 = vunpack.c.0.s8 %v5254
    %v5256 = vlaneseq
    %v5257 = vshrl.u32 %v5256, 7
    %v5258 = vsub.s32 %v5255, %v5257
    %v5259 = vrot.slane %v5245, %v5258
    %v5260 = vcombine.low %v5252, %v5259
    %v5261 = vcombine.low %v3881, %v3880
    %v5262 = vcombine.low %v3882, %v3889
    %v5264 = vunpack.c.l.s4 1983009808
    %v5265 = vunpack.c.0.s8 %v5264
    %v5266 = vlaneseq
    %v5267 = vshrl.u32 %v5266, 7
    %v5268 = vsub.s32 %v5265, %v5267
    %v5269 = vrot.slane %v5261, %v5268
    %v5271 = vunpack.c.l.s4 1983009808
    %v5272 = vunpack.c.0.s8 %v5271
    %v5273 = vlaneseq
    %v5274 = vshrl.u32 %v5273, 7
    %v5275 = vsub.s32 %v5272, %v5274
    %v5276 = vrot.slane %v5262, %v5275
    %v5277 = vcombine.low %v5269, %v5276
    %v5278 = vcombine.low %v3897, %v3905
    %v5279 = vcombine.low %v3904, %v3906
    %v5281 = vunpack.c.l.s4 1983009808
    %v5282 = vunpack.c.0.s8 %v5281
    %v5283 = vlaneseq
    %v5284 = vshrl.u32 %v5283, 7
    %v5285 = vsub.s32 %v5282, %v5284
    %v5286 = vrot.slane %v5278, %v5285
    %v5288 = vunpack.c.l.s4 1983009808
    %v5289 = vunpack.c.0.s8 %v5288
    %v5290 = vlaneseq
    %v5291 = vshrl.u32 %v5290, 7
    %v5292 = vsub.s32 %v5289, %v5291
    %v5293 = vrot.slane %v5279, %v5292
    %v5294 = vcombine.low %v5286, %v5293
    %v5295 = vcombine.low %v3914, %v3922
    %v5296 = vcombine.low %v3921, %v3923
    %v5298 = vunpack.c.l.s4 1983009808
    %v5299 = vunpack.c.0.s8 %v5298
    %v5300 = vlaneseq
    %v5301 = vshrl.u32 %v5300, 7
    %v5302 = vsub.s32 %v5299, %v5301
    %v5303 = vrot.slane %v5295, %v5302
    %v5305 = vunpack.c.l.s4 1983009808
    %v5306 = vunpack.c.0.s8 %v5305
    %v5307 = vlaneseq
    %v5308 = vshrl.u32 %v5307, 7
    %v5309 = vsub.s32 %v5306, %v5308
    %v5310 = vrot.slane %v5296, %v5309
    %v5311 = vcombine.low %v5303, %v5310
    %v5312 = vcombine.low %v3930, %v3938
    %v5313 = vcombine.low %v3946, %v3945
    %v5315 = vunpack.c.l.s4 1983009808
    %v5316 = vunpack.c.0.s8 %v5315
    %v5317 = vlaneseq
    %v5318 = vshrl.u32 %v5317, 7
    %v5319 = vsub.s32 %v5316, %v5318
    %v5320 = vrot.slane %v5312, %v5319
    %v5322 = vunpack.c.l.s4 1983009808
    %v5323 = vunpack.c.0.s8 %v5322
    %v5324 = vlaneseq
    %v5325 = vshrl.u32 %v5324, 7
    %v5326 = vsub.s32 %v5323, %v5325
    %v5327 = vrot.slane %v5313, %v5326
    %v5328 = vcombine.low %v5320, %v5327
    %v5329 = vcombine.low %v3947, %v3955
    %v5330 = vcombine.low %v3963, %v3962
    %v5332 = vunpack.c.l.s4 1983009808
    %v5333 = vunpack.c.0.s8 %v5332
    %v5334 = vlaneseq
    %v5335 = vshrl.u32 %v5334, 7
    %v5336 = vsub.s32 %v5333, %v5335
    %v5337 = vrot.slane %v5329, %v5336
    %v5339 = vunpack.c.l.s4 1983009808
    %v5340 = vunpack.c.0.s8 %v5339
    %v5341 = vlaneseq
    %v5342 = vshrl.u32 %v5341, 7
    %v5343 = vsub.s32 %v5340, %v5342
    %v5344 = vrot.slane %v5330, %v5343
    %v5345 = vcombine.low %v5337, %v5344
    %v5346 = vcombine.low %v3964, %v3971
    %v5347 = vcombine.low %v3979, %v3987
    %v5349 = vunpack.c.l.s4 1983009808
    %v5350 = vunpack.c.0.s8 %v5349
    %v5351 = vlaneseq
    %v5352 = vshrl.u32 %v5351, 7
    %v5353 = vsub.s32 %v5350, %v5352
    %v5354 = vrot.slane %v5346, %v5353
    %v5356 = vunpack.c.l.s4 1983009808
    %v5357 = vunpack.c.0.s8 %v5356
    %v5358 = vlaneseq
    %v5359 = vshrl.u32 %v5358, 7
    %v5360 = vsub.s32 %v5357, %v5359
    %v5361 = vrot.slane %v5347, %v5360
    %v5362 = vcombine.low %v5354, %v5361
    %v5363 = vcombine.low %v3986, %v3988
    %v5364 = vcombine.low %v3996, %v4004
    %v5366 = vunpack.c.l.s4 1983009808
    %v5367 = vunpack.c.0.s8 %v5366
    %v5368 = vlaneseq
    %v5369 = vshrl.u32 %v5368, 7
    %v5370 = vsub.s32 %v5367, %v5369
    %v5371 = vrot.slane %v5363, %v5370
    %v5373 = vunpack.c.l.s4 1983009808
    %v5374 = vunpack.c.0.s8 %v5373
    %v5375 = vlaneseq
    %v5376 = vshrl.u32 %v5375, 7
    %v5377 = vsub.s32 %v5374, %v5376
    %v5378 = vrot.slane %v5364, %v5377
    %v5379 = vcombine.low %v5371, %v5378
    %v5380 = vcombine.low %v4003, %v4005
    %v5381 = vcombine.low %v4012, %v4020
    %v5383 = vunpack.c.l.s4 1983009808
    %v5384 = vunpack.c.0.s8 %v5383
    %v5385 = vlaneseq
    %v5386 = vshrl.u32 %v5385, 7
    %v5387 = vsub.s32 %v5384, %v5386
    %v5388 = vrot.slane %v5380, %v5387
    %v5390 = vunpack.c.l.s4 1983009808
    %v5391 = vunpack.c.0.s8 %v5390
    %v5392 = vlaneseq
    %v5393 = vshrl.u32 %v5392, 7
    %v5394 = vsub.s32 %v5391, %v5393
    %v5395 = vrot.slane %v5381, %v5394
    %v5396 = vcombine.low %v5388, %v5395
    %v5397 = vcombine.low %v4028, %v4027
    %v5398 = vcombine.low %v4029, %v4037
    %v5400 = vunpack.c.l.s4 1983009808
    %v5401 = vunpack.c.0.s8 %v5400
    %v5402 = vlaneseq
    %v5403 = vshrl.u32 %v5402, 7
    %v5404 = vsub.s32 %v5401, %v5403
    %v5405 = vrot.slane %v5397, %v5404
    %v5407 = vunpack.c.l.s4 1983009808
    %v5408 = vunpack.c.0.s8 %v5407
    %v5409 = vlaneseq
    %v5410 = vshrl.u32 %v5409, 7
    %v5411 = vsub.s32 %v5408, %v5410
    %v5412 = vrot.slane %v5398, %v5411
    %v5413 = vcombine.low %v5405, %v5412
    %v5414 = vcombine.low %v4045, %v4044
    %v5415 = vcombine.low %v4046, %v4053
    %v5417 = vunpack.c.l.s4 1983009808
    %v5418 = vunpack.c.0.s8 %v5417
    %v5419 = vlaneseq
    %v5420 = vshrl.u32 %v5419, 7
    %v5421 = vsub.s32 %v5418, %v5420
    %v5422 = vrot.slane %v5414, %v5421
    %v5424 = vunpack.c.l.s4 1983009808
    %v5425 = vunpack.c.0.s8 %v5424
    %v5426 = vlaneseq
    %v5427 = vshrl.u32 %v5426, 7
    %v5428 = vsub.s32 %v5425, %v5427
    %v5429 = vrot.slane %v5415, %v5428
    %v5430 = vcombine.low %v5422, %v5429
    %v5512 = vpack.c.bf16 %v4087, %v4070
    %v5513 = vpack.c.bf16 %v4121, %v4104
    %v5514 = vpack.c.bf16 %v4155, %v4138
    %v5515 = vpack.c.bf16 %v4189, %v4172
    %v5516 = vpack.c.bf16 %v4223, %v4206
    %v5517 = vpack.c.bf16 %v4257, %v4240
    %v5518 = vpack.c.bf16 %v4291, %v4274
    %v5519 = vpack.c.bf16 %v4325, %v4308
    %v5520 = vpack.c.bf16 %v4359, %v4342
    %v5521 = vpack.c.bf16 %v4393, %v4376
    %v5522 = vpack.c.bf16 %v4427, %v4410
    %v5523 = vpack.c.bf16 %v4461, %v4444
    %v5524 = vpack.c.bf16 %v4495, %v4478
    %v5525 = vpack.c.bf16 %v4529, %v4512
    %v5526 = vpack.c.bf16 %v4563, %v4546
    %v5527 = vpack.c.bf16 %v4597, %v4580
    %v5528 = vpack.c.bf16 %v4631, %v4614
    %v5529 = vpack.c.bf16 %v4665, %v4648
    %v5530 = vpack.c.bf16 %v4699, %v4682
    %v5531 = vpack.c.bf16 %v4733, %v4716
    %v5532 = vpack.c.bf16 %v4767, %v4750
    %v5533 = vpack.c.bf16 %v4801, %v4784
    %v5534 = vpack.c.bf16 %v4835, %v4818
    %v5535 = vpack.c.bf16 %v4869, %v4852
    %v5536 = vpack.c.bf16 %v4903, %v4886
    %v5537 = vpack.c.bf16 %v4937, %v4920
    %v5538 = vpack.c.bf16 %v4971, %v4954
    %v5539 = vpack.c.bf16 %v5005, %v4988
    %v5540 = vpack.c.bf16 %v5039, %v5022
    %v5541 = vpack.c.bf16 %v5073, %v5056
    %v5542 = vpack.c.bf16 %v5107, %v5090
    %v5543 = vpack.c.bf16 %v5141, %v5124
    %v5544 = vpack.c.bf16 %v5175, %v5158
    %v5545 = vpack.c.bf16 %v5209, %v5192
    %v5546 = vpack.c.bf16 %v5243, %v5226
    %v5547 = vpack.c.bf16 %v5277, %v5260
    %v5548 = vpack.c.bf16 %v5311, %v5294
    %v5549 = vpack.c.bf16 %v5345, %v5328
    %v5550 = vpack.c.bf16 %v5379, %v5362
    %v5551 = vpack.c.bf16 %v5413, %v5396
    %v5552 = vpack.c.bf16 %v5430, %v5430
    %v5553 = vld [vmem:[%s3] sm:$0xf]
    %v5554 = vld [vmem:[%s3 + $0x4] sm:$0xf]
    %v5555 = vld [vmem:[%s3 + $0x8] sm:$0xf]
    %v5556 = vld [vmem:[%s3 + $0xc] sm:$0xf]
    %v5557 = vld [vmem:[%s3 + $0x10] sm:$0x3]
    %v5563 = vunpack.c.l.b16 %v5553
    %v5564 = vunpack.c.l.b16 %v5554
    %v5565 = vunpack.c.l.b16 %v5555
    %v5566 = vunpack.c.l.b16 %v5556
    %v5567 = vunpack.c.l.b16 %v5557
    %v5568 = vpack.c.b16 %v5564, %v5563
    %v5569 = vpack.c.b16 %v5566, %v5565
    %v5570 = vpack.c.b16 %v5567, %v5567
    %vm5573 = vcmask 293888
    %v5575 = vsel %vm5573, %v5512, 0
    %v5578 = vsel %vm5573, %v5513, 0
    %v5581 = vsel %vm5573, %v5514, 0
    %v5584 = vsel %vm5573, %v5515, 0
    %v5587 = vsel %vm5573, %v5516, 0
    %v5590 = vsel %vm5573, %v5517, 0
    %v5593 = vsel %vm5573, %v5518, 0
    %v5596 = vsel %vm5573, %v5519, 0
    %v5599 = vsel %vm5573, %v5520, 0
    %v5602 = vsel %vm5573, %v5521, 0
    %v5605 = vsel %vm5573, %v5522, 0
    %v5608 = vsel %vm5573, %v5523, 0
    %v5611 = vsel %vm5573, %v5524, 0
    %v5614 = vsel %vm5573, %v5525, 0
    %v5617 = vsel %vm5573, %v5526, 0
    %v5620 = vsel %vm5573, %v5527, 0
    %v5623 = vsel %vm5573, %v5528, 0
    %v5626 = vsel %vm5573, %v5529, 0
    %v5629 = vsel %vm5573, %v5530, 0
    %v5632 = vsel %vm5573, %v5531, 0
    %v5635 = vsel %vm5573, %v5532, 0
    %v5638 = vsel %vm5573, %v5533, 0
    %v5641 = vsel %vm5573, %v5534, 0
    %v5644 = vsel %vm5573, %v5535, 0
    %v5647 = vsel %vm5573, %v5536, 0
    %v5650 = vsel %vm5573, %v5537, 0
    %v5653 = vsel %vm5573, %v5538, 0
    %v5656 = vsel %vm5573, %v5539, 0
    %v5659 = vsel %vm5573, %v5540, 0
    %v5662 = vsel %vm5573, %v5541, 0
    %v5665 = vsel %vm5573, %v5542, 0
    %v5668 = vsel %vm5573, %v5543, 0
    %v5671 = vsel %vm5573, %v5544, 0
    %v5674 = vsel %vm5573, %v5545, 0
    %v5677 = vsel %vm5573, %v5546, 0
    %v5680 = vsel %vm5573, %v5547, 0
    %v5683 = vsel %vm5573, %v5548, 0
    %v5686 = vsel %vm5573, %v5549, 0
    %v5689 = vsel %vm5573, %v5550, 0
    %v5692 = vsel %vm5573, %v5551, 0
    %v5695 = vsel %vm5573, %v5552, 0
    %vm5697 = vcmask 1041408
    %v5699 = vsel %vm5697, %v5570, 0
    %5701 = vmatprep.subr.bf16.mxu0 0
    %5702 = vmatpush1.bf16.msra.mxu0 0
    %5703 = vmatprep.subr.bf16.mxu0 0
    %5704 = vmatpush1.bf16.msra.mxu0 0
    %5705 = vmatprep.subr.bf16.mxu0 0
    %5706 = vmatpush1.bf16.msra.mxu0 0
    %5707 = vmatprep.subr.bf16.mxu0 0
    %5708 = vmatpush1.bf16.msra.mxu0 0
    %5709 = vmatprep.subr.bf16.mxu0 0
    %5710 = vmatpush1.bf16.msra.mxu0 0
    %5711 = vmatprep.subr.bf16.mxu0 0
    %5712 = vmatpush1.bf16.msra.mxu0 %v5699
    %5713 = vmatprep.subr.bf16.mxu0 0
    %5714 = vmatpush1.bf16.msra.mxu0 %v5569
    %5715 = vmatprep.subr.bf16.mxu0 0
    %5716 = vmatpush1.bf16.msra.mxu0 %v5568
    %5717 = vmatprep.subr.bf16.mxu0 0
    %5718 = vmatpush2.bf16.msra.mxu0 0
    %5719 = vmatprep.subr.bf16.mxu0 0
    %5720 = vmatpush2.bf16.msra.mxu0 0
    %5721 = vmatprep.subr.bf16.mxu0 0
    %5722 = vmatpush2.bf16.msra.mxu0 0
    %5723 = vmatprep.subr.bf16.mxu0 0
    %5724 = vmatpush2.bf16.msra.mxu0 0
    %5725 = vmatprep.subr.bf16.mxu0 0
    %5726 = vmatpush2.bf16.msra.mxu0 0
    %5727 = vmatprep.subr.bf16.mxu0 0
    %5728 = vmatpush2.bf16.msra.mxu0 0
    %5729 = vmatprep.subr.bf16.mxu0 0
    %5730 = vmatpush2.bf16.msra.mxu0 0
    %5731 = vmatprep.subr.bf16.mxu0 0
    %5732 = vmatpush2.bf16.msra.mxu0 0
    %5733 = vmatprep.mubr.bf16.mxu0 0
    %5734 = vmatmul.mubr.bf16.gmra.mxu0 %v5575
    %v5735 = vpop.f32.mrf.mxu0
    %v5736 = vadd.f32 0.0, %v5735
    %v5737 = vpop.f32.mrf.mxu0
    %v5738 = vpop.f32.mrf.mxu0
    %v5739 = vadd.f32 0.0, %v5738
    %v5740 = vpop.f32.mrf.mxu0
    %5741 = vmatprep.mubr.bf16.mxu0 0
    %5742 = vmatmul.mubr.bf16.gmra.mxu0 %v5578
    %v5743 = vpop.f32.mrf.mxu0
    %v5744 = vadd.f32 0.0, %v5743
    %v5745 = vpop.f32.mrf.mxu0
    %v5746 = vpop.f32.mrf.mxu0
    %v5747 = vadd.f32 0.0, %v5746
    %v5748 = vpop.f32.mrf.mxu0
    %5749 = vmatprep.mubr.bf16.mxu0 0
    %5750 = vmatmul.mubr.bf16.gmra.mxu0 %v5581
    %v5751 = vpop.f32.mrf.mxu0
    %v5752 = vadd.f32 0.0, %v5751
    %v5753 = vpop.f32.mrf.mxu0
    %v5754 = vpop.f32.mrf.mxu0
    %v5755 = vadd.f32 0.0, %v5754
    %v5756 = vpop.f32.mrf.mxu0
    %5757 = vmatprep.mubr.bf16.mxu0 0
    %5758 = vmatmul.mubr.bf16.gmra.mxu0 %v5584
    %v5759 = vpop.f32.mrf.mxu0
    %v5760 = vadd.f32 0.0, %v5759
    %v5761 = vpop.f32.mrf.mxu0
    %v5762 = vpop.f32.mrf.mxu0
    %v5763 = vadd.f32 0.0, %v5762
    %v5764 = vpop.f32.mrf.mxu0
    %5765 = vmatprep.mubr.bf16.mxu0 0
    %5766 = vmatmul.mubr.bf16.gmra.mxu0 %v5587
    %v5767 = vpop.f32.mrf.mxu0
    %v5768 = vadd.f32 0.0, %v5767
    %v5769 = vpop.f32.mrf.mxu0
    %v5770 = vpop.f32.mrf.mxu0
    %v5771 = vadd.f32 0.0, %v5770
    %v5772 = vpop.f32.mrf.mxu0
    %5773 = vmatprep.mubr.bf16.mxu0 0
    %5774 = vmatmul.mubr.bf16.gmra.mxu0 %v5590
    %v5775 = vpop.f32.mrf.mxu0
    %v5776 = vadd.f32 0.0, %v5775
    %v5777 = vpop.f32.mrf.mxu0
    %v5778 = vpop.f32.mrf.mxu0
    %v5779 = vadd.f32 0.0, %v5778
    %v5780 = vpop.f32.mrf.mxu0
    %5781 = vmatprep.mubr.bf16.mxu0 0
    %5782 = vmatmul.mubr.bf16.gmra.mxu0 %v5593
    %v5783 = vpop.f32.mrf.mxu0
    %v5784 = vadd.f32 0.0, %v5783
    %v5785 = vpop.f32.mrf.mxu0
    %v5786 = vpop.f32.mrf.mxu0
    %v5787 = vadd.f32 0.0, %v5786
    %v5788 = vpop.f32.mrf.mxu0
    %5789 = vmatprep.mubr.bf16.mxu0 0
    %5790 = vmatmul.mubr.bf16.gmra.mxu0 %v5596
    %v5791 = vpop.f32.mrf.mxu0
    %v5792 = vadd.f32 0.0, %v5791
    %v5793 = vpop.f32.mrf.mxu0
    %v5794 = vpop.f32.mrf.mxu0
    %v5795 = vadd.f32 0.0, %v5794
    %v5796 = vpop.f32.mrf.mxu0
    %5797 = vmatprep.mubr.bf16.mxu0 0
    %5798 = vmatmul.mubr.bf16.gmra.mxu0 %v5599
    %v5799 = vpop.f32.mrf.mxu0
    %v5800 = vadd.f32 0.0, %v5799
    %v5801 = vpop.f32.mrf.mxu0
    %v5802 = vpop.f32.mrf.mxu0
    %v5803 = vadd.f32 0.0, %v5802
    %v5804 = vpop.f32.mrf.mxu0
    %5805 = vmatprep.mubr.bf16.mxu0 0
    %5806 = vmatmul.mubr.bf16.gmra.mxu0 %v5602
    %v5807 = vpop.f32.mrf.mxu0
    %v5808 = vadd.f32 0.0, %v5807
    %v5809 = vpop.f32.mrf.mxu0
    %v5810 = vpop.f32.mrf.mxu0
    %v5811 = vadd.f32 0.0, %v5810
    %v5812 = vpop.f32.mrf.mxu0
    %5813 = vmatprep.mubr.bf16.mxu0 0
    %5814 = vmatmul.mubr.bf16.gmra.mxu0 %v5605
    %v5815 = vpop.f32.mrf.mxu0
    %v5816 = vadd.f32 0.0, %v5815
    %v5817 = vpop.f32.mrf.mxu0
    %v5818 = vpop.f32.mrf.mxu0
    %v5819 = vadd.f32 0.0, %v5818
    %v5820 = vpop.f32.mrf.mxu0
    %5821 = vmatprep.mubr.bf16.mxu0 0
    %5822 = vmatmul.mubr.bf16.gmra.mxu0 %v5608
    %v5823 = vpop.f32.mrf.mxu0
    %v5824 = vadd.f32 0.0, %v5823
    %v5825 = vpop.f32.mrf.mxu0
    %v5826 = vpop.f32.mrf.mxu0
    %v5827 = vadd.f32 0.0, %v5826
    %v5828 = vpop.f32.mrf.mxu0
    %5829 = vmatprep.mubr.bf16.mxu0 0
    %5830 = vmatmul.mubr.bf16.gmra.mxu0 %v5611
    %v5831 = vpop.f32.mrf.mxu0
    %v5832 = vadd.f32 0.0, %v5831
    %v5833 = vpop.f32.mrf.mxu0
    %v5834 = vpop.f32.mrf.mxu0
    %v5835 = vadd.f32 0.0, %v5834
    %v5836 = vpop.f32.mrf.mxu0
    %5837 = vmatprep.mubr.bf16.mxu0 0
    %5838 = vmatmul.mubr.bf16.gmra.mxu0 %v5614
    %v5839 = vpop.f32.mrf.mxu0
    %v5840 = vadd.f32 0.0, %v5839
    %v5841 = vpop.f32.mrf.mxu0
    %v5842 = vpop.f32.mrf.mxu0
    %v5843 = vadd.f32 0.0, %v5842
    %v5844 = vpop.f32.mrf.mxu0
    %5845 = vmatprep.mubr.bf16.mxu0 0
    %5846 = vmatmul.mubr.bf16.gmra.mxu0 %v5617
    %v5847 = vpop.f32.mrf.mxu0
    %v5848 = vadd.f32 0.0, %v5847
    %v5849 = vpop.f32.mrf.mxu0
    %v5850 = vpop.f32.mrf.mxu0
    %v5851 = vadd.f32 0.0, %v5850
    %v5852 = vpop.f32.mrf.mxu0
    %5853 = vmatprep.mubr.bf16.mxu0 0
    %5854 = vmatmul.mubr.bf16.gmra.mxu0 %v5620
    %v5855 = vpop.f32.mrf.mxu0
    %v5856 = vadd.f32 0.0, %v5855
    %v5857 = vpop.f32.mrf.mxu0
    %v5858 = vpop.f32.mrf.mxu0
    %v5859 = vadd.f32 0.0, %v5858
    %v5860 = vpop.f32.mrf.mxu0
    %5861 = vmatprep.mubr.bf16.mxu0 0
    %5862 = vmatmul.mubr.bf16.gmra.mxu0 %v5623
    %v5863 = vpop.f32.mrf.mxu0
    %v5864 = vadd.f32 0.0, %v5863
    %v5865 = vpop.f32.mrf.mxu0
    %v5866 = vpop.f32.mrf.mxu0
    %v5867 = vadd.f32 0.0, %v5866
    %v5868 = vpop.f32.mrf.mxu0
    %5869 = vmatprep.mubr.bf16.mxu0 0
    %5870 = vmatmul.mubr.bf16.gmra.mxu0 %v5626
    %v5871 = vpop.f32.mrf.mxu0
    %v5872 = vadd.f32 0.0, %v5871
    %v5873 = vpop.f32.mrf.mxu0
    %v5874 = vpop.f32.mrf.mxu0
    %v5875 = vadd.f32 0.0, %v5874
    %v5876 = vpop.f32.mrf.mxu0
    %5877 = vmatprep.mubr.bf16.mxu0 0
    %5878 = vmatmul.mubr.bf16.gmra.mxu0 %v5629
    %v5879 = vpop.f32.mrf.mxu0
    %v5880 = vadd.f32 0.0, %v5879
    %v5881 = vpop.f32.mrf.mxu0
    %v5882 = vpop.f32.mrf.mxu0
    %v5883 = vadd.f32 0.0, %v5882
    %v5884 = vpop.f32.mrf.mxu0
    %5885 = vmatprep.mubr.bf16.mxu0 0
    %5886 = vmatmul.mubr.bf16.gmra.mxu0 %v5632
    %v5887 = vpop.f32.mrf.mxu0
    %v5888 = vadd.f32 0.0, %v5887
    %v5889 = vpop.f32.mrf.mxu0
    %v5890 = vpop.f32.mrf.mxu0
    %v5891 = vadd.f32 0.0, %v5890
    %v5892 = vpop.f32.mrf.mxu0
    %5893 = vmatprep.mubr.bf16.mxu0 0
    %5894 = vmatmul.mubr.bf16.gmra.mxu0 %v5635
    %v5895 = vpop.f32.mrf.mxu0
    %v5896 = vadd.f32 0.0, %v5895
    %v5897 = vpop.f32.mrf.mxu0
    %v5898 = vpop.f32.mrf.mxu0
    %v5899 = vadd.f32 0.0, %v5898
    %v5900 = vpop.f32.mrf.mxu0
    %5901 = vmatprep.mubr.bf16.mxu0 0
    %5902 = vmatmul.mubr.bf16.gmra.mxu0 %v5638
    %v5903 = vpop.f32.mrf.mxu0
    %v5904 = vadd.f32 0.0, %v5903
    %v5905 = vpop.f32.mrf.mxu0
    %v5906 = vpop.f32.mrf.mxu0
    %v5907 = vadd.f32 0.0, %v5906
    %v5908 = vpop.f32.mrf.mxu0
    %5909 = vmatprep.mubr.bf16.mxu0 0
    %5910 = vmatmul.mubr.bf16.gmra.mxu0 %v5641
    %v5911 = vpop.f32.mrf.mxu0
    %v5912 = vadd.f32 0.0, %v5911
    %v5913 = vpop.f32.mrf.mxu0
    %v5914 = vpop.f32.mrf.mxu0
    %v5915 = vadd.f32 0.0, %v5914
    %v5916 = vpop.f32.mrf.mxu0
    %5917 = vmatprep.mubr.bf16.mxu0 0
    %5918 = vmatmul.mubr.bf16.gmra.mxu0 %v5644
    %v5919 = vpop.f32.mrf.mxu0
    %v5920 = vadd.f32 0.0, %v5919
    %v5921 = vpop.f32.mrf.mxu0
    %v5922 = vpop.f32.mrf.mxu0
    %v5923 = vadd.f32 0.0, %v5922
    %v5924 = vpop.f32.mrf.mxu0
    %5925 = vmatprep.mubr.bf16.mxu0 0
    %5926 = vmatmul.mubr.bf16.gmra.mxu0 %v5647
    %v5927 = vpop.f32.mrf.mxu0
    %v5928 = vadd.f32 0.0, %v5927
    %v5929 = vpop.f32.mrf.mxu0
    %v5930 = vpop.f32.mrf.mxu0
    %v5931 = vadd.f32 0.0, %v5930
    %v5932 = vpop.f32.mrf.mxu0
    %5933 = vmatprep.mubr.bf16.mxu0 0
    %5934 = vmatmul.mubr.bf16.gmra.mxu0 %v5650
    %v5935 = vpop.f32.mrf.mxu0
    %v5936 = vadd.f32 0.0, %v5935
    %v5937 = vpop.f32.mrf.mxu0
    %v5938 = vpop.f32.mrf.mxu0
    %v5939 = vadd.f32 0.0, %v5938
    %v5940 = vpop.f32.mrf.mxu0
    %5941 = vmatprep.mubr.bf16.mxu0 0
    %5942 = vmatmul.mubr.bf16.gmra.mxu0 %v5653
    %v5943 = vpop.f32.mrf.mxu0
    %v5944 = vadd.f32 0.0, %v5943
    %v5945 = vpop.f32.mrf.mxu0
    %v5946 = vpop.f32.mrf.mxu0
    %v5947 = vadd.f32 0.0, %v5946
    %v5948 = vpop.f32.mrf.mxu0
    %5949 = vmatprep.mubr.bf16.mxu0 0
    %5950 = vmatmul.mubr.bf16.gmra.mxu0 %v5656
    %v5951 = vpop.f32.mrf.mxu0
    %v5952 = vadd.f32 0.0, %v5951
    %v5953 = vpop.f32.mrf.mxu0
    %v5954 = vpop.f32.mrf.mxu0
    %v5955 = vadd.f32 0.0, %v5954
    %v5956 = vpop.f32.mrf.mxu0
    %5957 = vmatprep.mubr.bf16.mxu0 0
    %5958 = vmatmul.mubr.bf16.gmra.mxu0 %v5659
    %v5959 = vpop.f32.mrf.mxu0
    %v5960 = vadd.f32 0.0, %v5959
    %v5961 = vpop.f32.mrf.mxu0
    %v5962 = vpop.f32.mrf.mxu0
    %v5963 = vadd.f32 0.0, %v5962
    %v5964 = vpop.f32.mrf.mxu0
    %5965 = vmatprep.mubr.bf16.mxu0 0
    %5966 = vmatmul.mubr.bf16.gmra.mxu0 %v5662
    %v5967 = vpop.f32.mrf.mxu0
    %v5968 = vadd.f32 0.0, %v5967
    %v5969 = vpop.f32.mrf.mxu0
    %v5970 = vpop.f32.mrf.mxu0
    %v5971 = vadd.f32 0.0, %v5970
    %v5972 = vpop.f32.mrf.mxu0
    %5973 = vmatprep.mubr.bf16.mxu0 0
    %5974 = vmatmul.mubr.bf16.gmra.mxu0 %v5665
    %v5975 = vpop.f32.mrf.mxu0
    %v5976 = vadd.f32 0.0, %v5975
    %v5977 = vpop.f32.mrf.mxu0
    %v5978 = vpop.f32.mrf.mxu0
    %v5979 = vadd.f32 0.0, %v5978
    %v5980 = vpop.f32.mrf.mxu0
    %5981 = vmatprep.mubr.bf16.mxu0 0
    %5982 = vmatmul.mubr.bf16.gmra.mxu0 %v5668
    %v5983 = vpop.f32.mrf.mxu0
    %v5984 = vadd.f32 0.0, %v5983
    %v5985 = vpop.f32.mrf.mxu0
    %v5986 = vpop.f32.mrf.mxu0
    %v5987 = vadd.f32 0.0, %v5986
    %v5988 = vpop.f32.mrf.mxu0
    %5989 = vmatprep.mubr.bf16.mxu0 0
    %5990 = vmatmul.mubr.bf16.gmra.mxu0 %v5671
    %v5991 = vpop.f32.mrf.mxu0
    %v5992 = vadd.f32 0.0, %v5991
    %v5993 = vpop.f32.mrf.mxu0
    %v5994 = vpop.f32.mrf.mxu0
    %v5995 = vadd.f32 0.0, %v5994
    %v5996 = vpop.f32.mrf.mxu0
    %5997 = vmatprep.mubr.bf16.mxu0 0
    %5998 = vmatmul.mubr.bf16.gmra.mxu0 %v5674
    %v5999 = vpop.f32.mrf.mxu0
    %v6000 = vadd.f32 0.0, %v5999
    %v6001 = vpop.f32.mrf.mxu0
    %v6002 = vpop.f32.mrf.mxu0
    %v6003 = vadd.f32 0.0, %v6002
    %v6004 = vpop.f32.mrf.mxu0
    %6005 = vmatprep.mubr.bf16.mxu0 0
    %6006 = vmatmul.mubr.bf16.gmra.mxu0 %v5677
    %v6007 = vpop.f32.mrf.mxu0
    %v6008 = vadd.f32 0.0, %v6007
    %v6009 = vpop.f32.mrf.mxu0
    %v6010 = vpop.f32.mrf.mxu0
    %v6011 = vadd.f32 0.0, %v6010
    %v6012 = vpop.f32.mrf.mxu0
    %6013 = vmatprep.mubr.bf16.mxu0 0
    %6014 = vmatmul.mubr.bf16.gmra.mxu0 %v5680
    %v6015 = vpop.f32.mrf.mxu0
    %v6016 = vadd.f32 0.0, %v6015
    %v6017 = vpop.f32.mrf.mxu0
    %v6018 = vpop.f32.mrf.mxu0
    %v6019 = vadd.f32 0.0, %v6018
    %v6020 = vpop.f32.mrf.mxu0
    %6021 = vmatprep.mubr.bf16.mxu0 0
    %6022 = vmatmul.mubr.bf16.gmra.mxu0 %v5683
    %v6023 = vpop.f32.mrf.mxu0
    %v6024 = vadd.f32 0.0, %v6023
    %v6025 = vpop.f32.mrf.mxu0
    %v6026 = vpop.f32.mrf.mxu0
    %v6027 = vadd.f32 0.0, %v6026
    %v6028 = vpop.f32.mrf.mxu0
    %6029 = vmatprep.mubr.bf16.mxu0 0
    %6030 = vmatmul.mubr.bf16.gmra.mxu0 %v5686
    %v6031 = vpop.f32.mrf.mxu0
    %v6032 = vadd.f32 0.0, %v6031
    %v6033 = vpop.f32.mrf.mxu0
    %v6034 = vpop.f32.mrf.mxu0
    %v6035 = vadd.f32 0.0, %v6034
    %v6036 = vpop.f32.mrf.mxu0
    %6037 = vmatprep.mubr.bf16.mxu0 0
    %6038 = vmatmul.mubr.bf16.gmra.mxu0 %v5689
    %v6039 = vpop.f32.mrf.mxu0
    %v6040 = vadd.f32 0.0, %v6039
    %v6041 = vpop.f32.mrf.mxu0
    %v6042 = vpop.f32.mrf.mxu0
    %v6043 = vadd.f32 0.0, %v6042
    %v6044 = vpop.f32.mrf.mxu0
    %6045 = vmatprep.mubr.bf16.mxu0 0
    %6046 = vmatmul.mubr.bf16.gmra.mxu0 %v5692
    %v6047 = vpop.f32.mrf.mxu0
    %v6048 = vadd.f32 0.0, %v6047
    %v6049 = vpop.f32.mrf.mxu0
    %v6050 = vpop.f32.mrf.mxu0
    %v6051 = vadd.f32 0.0, %v6050
    %v6052 = vpop.f32.mrf.mxu0
    %6053 = vmatprep.mubr.bf16.mxu0 0
    %6054 = vmatmul.mubr.bf16.gmra.mxu0 %v5695
    %v6055 = vpop.f32.mrf.mxu0
    %v6056 = vadd.f32 0.0, %v6055
    %v6057 = vpop.f32.mrf.mxu0
    %v6058 = vpop.f32.mrf.mxu0
    %v6059 = vpop.f32.mrf.mxu0
    %6060 = vdwg.mxu0
    %v6061 = vld [vmem:[%s2] sm:$0xff]
    %v6062 = vld [vmem:[%s2 + $0x8] sm:$0xff]
    %v6063 = vld [vmem:[%s2 + $0x10] sm:$0xff]
    %v6064 = vld [vmem:[%s2 + $0x18] sm:$0xff]
    %v6065 = vld [vmem:[%s2 + $0x20] sm:$0xff]
    %v6066 = vld [vmem:[%s2 + $0x28] sm:$0xff]
    %v6067 = vld [vmem:[%s2 + $0x30] sm:$0xff]
    %v6068 = vld [vmem:[%s2 + $0x38] sm:$0xff]
    %v6069 = vld [vmem:[%s2 + $0x40] sm:$0xff]
    %v6070 = vld [vmem:[%s2 + $0x48] sm:$0xff]
    %v6071 = vld [vmem:[%s2 + $0x50] sm:$0xff]
    %v6072 = vld [vmem:[%s2 + $0x58] sm:$0xff]
    %v6073 = vld [vmem:[%s2 + $0x60] sm:$0xff]
    %v6074 = vld [vmem:[%s2 + $0x68] sm:$0xff]
    %v6075 = vld [vmem:[%s2 + $0x70] sm:$0xff]
    %v6076 = vld [vmem:[%s2 + $0x78] sm:$0xff]
    %v6077 = vld [vmem:[%s2 + $0x80] sm:$0xff]
    %v6078 = vld [vmem:[%s2 + $0x88] sm:$0xff]
    %v6079 = vld [vmem:[%s2 + $0x90] sm:$0xff]
    %v6080 = vld [vmem:[%s2 + $0x98] sm:$0xff]
    %v6081 = vld [vmem:[%s2 + $0xa0] sm:$0xff]
    %v6082 = vld [vmem:[%s2 + $0xa8] sm:$0xff]
    %v6083 = vld [vmem:[%s2 + $0xb0] sm:$0xff]
    %v6084 = vld [vmem:[%s2 + $0xb8] sm:$0xff]
    %v6085 = vld [vmem:[%s2 + $0xc0] sm:$0xff]
    %v6086 = vld [vmem:[%s2 + $0xc8] sm:$0xff]
    %v6087 = vld [vmem:[%s2 + $0xd0] sm:$0xff]
    %v6088 = vld [vmem:[%s2 + $0xd8] sm:$0xff]
    %v6089 = vld [vmem:[%s2 + $0xe0] sm:$0xff]
    %v6090 = vld [vmem:[%s2 + $0xe8] sm:$0xff]
    %v6091 = vld [vmem:[%s2 + $0xf0] sm:$0xff]
    %v6092 = vld [vmem:[%s2 + $0xf8] sm:$0xff]
    %v6093 = vld [vmem:[%s2 + $0x100] sm:$0xff]
    %v6094 = vld [vmem:[%s2 + $0x108] sm:$0xff]
    %v6095 = vld [vmem:[%s2 + $0x110] sm:$0xff]
    %v6096 = vld [vmem:[%s2 + $0x118] sm:$0xff]
    %v6097 = vld [vmem:[%s2 + $0x120] sm:$0xff]
    %v6098 = vld [vmem:[%s2 + $0x128] sm:$0xff]
    %v6099 = vld [vmem:[%s2 + $0x130] sm:$0xff]
    %v6100 = vld [vmem:[%s2 + $0x138] sm:$0xff]
    %v6101 = vld [vmem:[%s2 + $0x140] sm:$0xff]
    %v6102 = vld [vmem:[%s2 + $0x148] sm:$0xff]
    %v6103 = vld [vmem:[%s2 + $0x150] sm:$0xff]
    %v6104 = vld [vmem:[%s2 + $0x158] sm:$0xff]
    %v6105 = vld [vmem:[%s2 + $0x160] sm:$0xff]
    %v6106 = vld [vmem:[%s2 + $0x168] sm:$0xff]
    %v6107 = vld [vmem:[%s2 + $0x170] sm:$0xff]
    %v6108 = vld [vmem:[%s2 + $0x178] sm:$0xff]
    %v6109 = vld [vmem:[%s2 + $0x180] sm:$0xff]
    %v6110 = vld [vmem:[%s2 + $0x188] sm:$0xff]
    %v6111 = vld [vmem:[%s2 + $0x190] sm:$0xff]
    %v6112 = vld [vmem:[%s2 + $0x198] sm:$0xff]
    %v6113 = vld [vmem:[%s2 + $0x1a0] sm:$0xff]
    %v6114 = vld [vmem:[%s2 + $0x1a8] sm:$0xff]
    %v6115 = vld [vmem:[%s2 + $0x1b0] sm:$0xff]
    %v6116 = vld [vmem:[%s2 + $0x1b8] sm:$0xff]
    %v6117 = vld [vmem:[%s2 + $0x1c0] sm:$0xff]
    %v6118 = vld [vmem:[%s2 + $0x1c8] sm:$0xff]
    %v6119 = vld [vmem:[%s2 + $0x1d0] sm:$0xff]
    %v6120 = vld [vmem:[%s2 + $0x1d8] sm:$0xff]
    %v6121 = vld [vmem:[%s2 + $0x1e0] sm:$0xff]
    %v6122 = vld [vmem:[%s2 + $0x1e8] sm:$0xff]
    %v6123 = vld [vmem:[%s2 + $0x1f0] sm:$0xff]
    %v6124 = vld [vmem:[%s2 + $0x1f8] sm:$0xff]
    %v6125 = vld [vmem:[%s2 + $0x200] sm:$0xff]
    %v6126 = vld [vmem:[%s2 + $0x208] sm:$0xff]
    %v6127 = vld [vmem:[%s2 + $0x210] sm:$0xff]
    %v6128 = vld [vmem:[%s2 + $0x218] sm:$0xff]
    %v6129 = vld [vmem:[%s2 + $0x220] sm:$0xff]
    %v6130 = vld [vmem:[%s2 + $0x228] sm:$0xff]
    %v6131 = vld [vmem:[%s2 + $0x230] sm:$0xff]
    %v6132 = vld [vmem:[%s2 + $0x238] sm:$0xff]
    %v6133 = vld [vmem:[%s2 + $0x240] sm:$0xff]
    %v6134 = vld [vmem:[%s2 + $0x248] sm:$0xff]
    %v6135 = vld [vmem:[%s2 + $0x250] sm:$0xff]
    %v6136 = vld [vmem:[%s2 + $0x258] sm:$0xff]
    %v6137 = vld [vmem:[%s2 + $0x260] sm:$0xff]
    %v6138 = vld [vmem:[%s2 + $0x268] sm:$0xff]
    %v6139 = vld [vmem:[%s2 + $0x270] sm:$0xff]
    %v6140 = vld [vmem:[%s2 + $0x278] sm:$0xff]
    %v6141 = vld [vmem:[%s2 + $0x280] sm:$0xff]
    %6143 = vset.pattern.permute.xlu0 0
    %6144 = vperm.xlu0 %6143, %v6061
    %v6145 = vpop.permute.xlu0 %6144
    %6148 = vset.pattern.permute.xlu0 0
    %6149 = vperm.xlu0 %6148, %v6062
    %v6150 = vpop.permute.xlu0 %6149
    %6153 = vset.pattern.permute.xlu0 0
    %6154 = vperm.xlu0 %6153, %v6063
    %v6155 = vpop.permute.xlu0 %6154
    %6158 = vset.pattern.permute.xlu0 0
    %6159 = vperm.xlu0 %6158, %v6064
    %v6160 = vpop.permute.xlu0 %6159
    %6163 = vset.pattern.permute.xlu0 0
    %6164 = vperm.xlu0 %6163, %v6065
    %v6165 = vpop.permute.xlu0 %6164
    %6168 = vset.pattern.permute.xlu0 0
    %6169 = vperm.xlu0 %6168, %v6066
    %v6170 = vpop.permute.xlu0 %6169
    %6173 = vset.pattern.permute.xlu0 0
    %6174 = vperm.xlu0 %6173, %v6067
    %v6175 = vpop.permute.xlu0 %6174
    %6178 = vset.pattern.permute.xlu0 0
    %6179 = vperm.xlu0 %6178, %v6068
    %v6180 = vpop.permute.xlu0 %6179
    %6183 = vset.pattern.permute.xlu0 0
    %6184 = vperm.xlu0 %6183, %v6069
    %v6185 = vpop.permute.xlu0 %6184
    %6188 = vset.pattern.permute.xlu0 0
    %6189 = vperm.xlu0 %6188, %v6070
    %v6190 = vpop.permute.xlu0 %6189
    %6193 = vset.pattern.permute.xlu0 0
    %6194 = vperm.xlu0 %6193, %v6071
    %v6195 = vpop.permute.xlu0 %6194
    %6198 = vset.pattern.permute.xlu0 0
    %6199 = vperm.xlu0 %6198, %v6072
    %v6200 = vpop.permute.xlu0 %6199
    %6203 = vset.pattern.permute.xlu0 0
    %6204 = vperm.xlu0 %6203, %v6073
    %v6205 = vpop.permute.xlu0 %6204
    %6208 = vset.pattern.permute.xlu0 0
    %6209 = vperm.xlu0 %6208, %v6074
    %v6210 = vpop.permute.xlu0 %6209
    %6213 = vset.pattern.permute.xlu0 0
    %6214 = vperm.xlu0 %6213, %v6075
    %v6215 = vpop.permute.xlu0 %6214
    %6218 = vset.pattern.permute.xlu0 0
    %6219 = vperm.xlu0 %6218, %v6076
    %v6220 = vpop.permute.xlu0 %6219
    %6223 = vset.pattern.permute.xlu0 0
    %6224 = vperm.xlu0 %6223, %v6077
    %v6225 = vpop.permute.xlu0 %6224
    %6228 = vset.pattern.permute.xlu0 0
    %6229 = vperm.xlu0 %6228, %v6078
    %v6230 = vpop.permute.xlu0 %6229
    %6233 = vset.pattern.permute.xlu0 0
    %6234 = vperm.xlu0 %6233, %v6079
    %v6235 = vpop.permute.xlu0 %6234
    %6238 = vset.pattern.permute.xlu0 0
    %6239 = vperm.xlu0 %6238, %v6080
    %v6240 = vpop.permute.xlu0 %6239
    %6243 = vset.pattern.permute.xlu0 0
    %6244 = vperm.xlu0 %6243, %v6081
    %v6245 = vpop.permute.xlu0 %6244
    %6248 = vset.pattern.permute.xlu0 0
    %6249 = vperm.xlu0 %6248, %v6082
    %v6250 = vpop.permute.xlu0 %6249
    %6253 = vset.pattern.permute.xlu0 0
    %6254 = vperm.xlu0 %6253, %v6083
    %v6255 = vpop.permute.xlu0 %6254
    %6258 = vset.pattern.permute.xlu0 0
    %6259 = vperm.xlu0 %6258, %v6084
    %v6260 = vpop.permute.xlu0 %6259
    %6263 = vset.pattern.permute.xlu0 0
    %6264 = vperm.xlu0 %6263, %v6085
    %v6265 = vpop.permute.xlu0 %6264
    %6268 = vset.pattern.permute.xlu0 0
    %6269 = vperm.xlu0 %6268, %v6086
    %v6270 = vpop.permute.xlu0 %6269
    %6273 = vset.pattern.permute.xlu0 0
    %6274 = vperm.xlu0 %6273, %v6087
    %v6275 = vpop.permute.xlu0 %6274
    %6278 = vset.pattern.permute.xlu0 0
    %6279 = vperm.xlu0 %6278, %v6088
    %v6280 = vpop.permute.xlu0 %6279
    %6283 = vset.pattern.permute.xlu0 0
    %6284 = vperm.xlu0 %6283, %v6089
    %v6285 = vpop.permute.xlu0 %6284
    %6288 = vset.pattern.permute.xlu0 0
    %6289 = vperm.xlu0 %6288, %v6090
    %v6290 = vpop.permute.xlu0 %6289
    %6293 = vset.pattern.permute.xlu0 0
    %6294 = vperm.xlu0 %6293, %v6091
    %v6295 = vpop.permute.xlu0 %6294
    %6298 = vset.pattern.permute.xlu0 0
    %6299 = vperm.xlu0 %6298, %v6092
    %v6300 = vpop.permute.xlu0 %6299
    %6303 = vset.pattern.permute.xlu0 0
    %6304 = vperm.xlu0 %6303, %v6093
    %v6305 = vpop.permute.xlu0 %6304
    %6308 = vset.pattern.permute.xlu0 0
    %6309 = vperm.xlu0 %6308, %v6094
    %v6310 = vpop.permute.xlu0 %6309
    %6313 = vset.pattern.permute.xlu0 0
    %6314 = vperm.xlu0 %6313, %v6095
    %v6315 = vpop.permute.xlu0 %6314
    %6318 = vset.pattern.permute.xlu0 0
    %6319 = vperm.xlu0 %6318, %v6096
    %v6320 = vpop.permute.xlu0 %6319
    %6323 = vset.pattern.permute.xlu0 0
    %6324 = vperm.xlu0 %6323, %v6097
    %v6325 = vpop.permute.xlu0 %6324
    %6328 = vset.pattern.permute.xlu0 0
    %6329 = vperm.xlu0 %6328, %v6098
    %v6330 = vpop.permute.xlu0 %6329
    %6333 = vset.pattern.permute.xlu0 0
    %6334 = vperm.xlu0 %6333, %v6099
    %v6335 = vpop.permute.xlu0 %6334
    %6338 = vset.pattern.permute.xlu0 0
    %6339 = vperm.xlu0 %6338, %v6100
    %v6340 = vpop.permute.xlu0 %6339
    %6343 = vset.pattern.permute.xlu0 0
    %6344 = vperm.xlu0 %6343, %v6101
    %v6345 = vpop.permute.xlu0 %6344
    %6348 = vset.pattern.permute.xlu0 0
    %6349 = vperm.xlu0 %6348, %v6102
    %v6350 = vpop.permute.xlu0 %6349
    %6353 = vset.pattern.permute.xlu0 0
    %6354 = vperm.xlu0 %6353, %v6103
    %v6355 = vpop.permute.xlu0 %6354
    %6358 = vset.pattern.permute.xlu0 0
    %6359 = vperm.xlu0 %6358, %v6104
    %v6360 = vpop.permute.xlu0 %6359
    %6363 = vset.pattern.permute.xlu0 0
    %6364 = vperm.xlu0 %6363, %v6105
    %v6365 = vpop.permute.xlu0 %6364
    %6368 = vset.pattern.permute.xlu0 0
    %6369 = vperm.xlu0 %6368, %v6106
    %v6370 = vpop.permute.xlu0 %6369
    %6373 = vset.pattern.permute.xlu0 0
    %6374 = vperm.xlu0 %6373, %v6107
    %v6375 = vpop.permute.xlu0 %6374
    %6378 = vset.pattern.permute.xlu0 0
    %6379 = vperm.xlu0 %6378, %v6108
    %v6380 = vpop.permute.xlu0 %6379
    %6383 = vset.pattern.permute.xlu0 0
    %6384 = vperm.xlu0 %6383, %v6109
    %v6385 = vpop.permute.xlu0 %6384
    %6388 = vset.pattern.permute.xlu0 0
    %6389 = vperm.xlu0 %6388, %v6110
    %v6390 = vpop.permute.xlu0 %6389
    %6393 = vset.pattern.permute.xlu0 0
    %6394 = vperm.xlu0 %6393, %v6111
    %v6395 = vpop.permute.xlu0 %6394
    %6398 = vset.pattern.permute.xlu0 0
    %6399 = vperm.xlu0 %6398, %v6112
    %v6400 = vpop.permute.xlu0 %6399
    %6403 = vset.pattern.permute.xlu0 0
    %6404 = vperm.xlu0 %6403, %v6113
    %v6405 = vpop.permute.xlu0 %6404
    %6408 = vset.pattern.permute.xlu0 0
    %6409 = vperm.xlu0 %6408, %v6114
    %v6410 = vpop.permute.xlu0 %6409
    %6413 = vset.pattern.permute.xlu0 0
    %6414 = vperm.xlu0 %6413, %v6115
    %v6415 = vpop.permute.xlu0 %6414
    %6418 = vset.pattern.permute.xlu0 0
    %6419 = vperm.xlu0 %6418, %v6116
    %v6420 = vpop.permute.xlu0 %6419
    %6423 = vset.pattern.permute.xlu0 0
    %6424 = vperm.xlu0 %6423, %v6117
    %v6425 = vpop.permute.xlu0 %6424
    %6428 = vset.pattern.permute.xlu0 0
    %6429 = vperm.xlu0 %6428, %v6118
    %v6430 = vpop.permute.xlu0 %6429
    %6433 = vset.pattern.permute.xlu0 0
    %6434 = vperm.xlu0 %6433, %v6119
    %v6435 = vpop.permute.xlu0 %6434
    %6438 = vset.pattern.permute.xlu0 0
    %6439 = vperm.xlu0 %6438, %v6120
    %v6440 = vpop.permute.xlu0 %6439
    %6443 = vset.pattern.permute.xlu0 0
    %6444 = vperm.xlu0 %6443, %v6121
    %v6445 = vpop.permute.xlu0 %6444
    %6448 = vset.pattern.permute.xlu0 0
    %6449 = vperm.xlu0 %6448, %v6122
    %v6450 = vpop.permute.xlu0 %6449
    %6453 = vset.pattern.permute.xlu0 0
    %6454 = vperm.xlu0 %6453, %v6123
    %v6455 = vpop.permute.xlu0 %6454
    %6458 = vset.pattern.permute.xlu0 0
    %6459 = vperm.xlu0 %6458, %v6124
    %v6460 = vpop.permute.xlu0 %6459
    %6463 = vset.pattern.permute.xlu0 0
    %6464 = vperm.xlu0 %6463, %v6125
    %v6465 = vpop.permute.xlu0 %6464
    %6468 = vset.pattern.permute.xlu0 0
    %6469 = vperm.xlu0 %6468, %v6126
    %v6470 = vpop.permute.xlu0 %6469
    %6473 = vset.pattern.permute.xlu0 0
    %6474 = vperm.xlu0 %6473, %v6127
    %v6475 = vpop.permute.xlu0 %6474
    %6478 = vset.pattern.permute.xlu0 0
    %6479 = vperm.xlu0 %6478, %v6128
    %v6480 = vpop.permute.xlu0 %6479
    %6483 = vset.pattern.permute.xlu0 0
    %6484 = vperm.xlu0 %6483, %v6129
    %v6485 = vpop.permute.xlu0 %6484
    %6488 = vset.pattern.permute.xlu0 0
    %6489 = vperm.xlu0 %6488, %v6130
    %v6490 = vpop.permute.xlu0 %6489
    %6493 = vset.pattern.permute.xlu0 0
    %6494 = vperm.xlu0 %6493, %v6131
    %v6495 = vpop.permute.xlu0 %6494
    %6498 = vset.pattern.permute.xlu0 0
    %6499 = vperm.xlu0 %6498, %v6132
    %v6500 = vpop.permute.xlu0 %6499
    %6503 = vset.pattern.permute.xlu0 0
    %6504 = vperm.xlu0 %6503, %v6133
    %v6505 = vpop.permute.xlu0 %6504
    %6508 = vset.pattern.permute.xlu0 0
    %6509 = vperm.xlu0 %6508, %v6134
    %v6510 = vpop.permute.xlu0 %6509
    %6513 = vset.pattern.permute.xlu0 0
    %6514 = vperm.xlu0 %6513, %v6135
    %v6515 = vpop.permute.xlu0 %6514
    %6518 = vset.pattern.permute.xlu0 0
    %6519 = vperm.xlu0 %6518, %v6136
    %v6520 = vpop.permute.xlu0 %6519
    %6523 = vset.pattern.permute.xlu0 0
    %6524 = vperm.xlu0 %6523, %v6137
    %v6525 = vpop.permute.xlu0 %6524
    %6528 = vset.pattern.permute.xlu0 0
    %6529 = vperm.xlu0 %6528, %v6138
    %v6530 = vpop.permute.xlu0 %6529
    %6533 = vset.pattern.permute.xlu0 0
    %6534 = vperm.xlu0 %6533, %v6139
    %v6535 = vpop.permute.xlu0 %6534
    %6538 = vset.pattern.permute.xlu0 0
    %6539 = vperm.xlu0 %6538, %v6140
    %v6540 = vpop.permute.xlu0 %6539
    %6543 = vset.pattern.permute.xlu0 0
    %6544 = vperm.xlu0 %6543, %v6141
    %v6545 = vpop.permute.xlu0 %6544
    %v6547 = vmul.f32 %v5736, %v6145
    %v6548 = vmul.f32 %v5739, %v6150
    %v6549 = vmul.f32 %v5744, %v6155
    %v6550 = vmul.f32 %v5747, %v6160
    %v6551 = vmul.f32 %v5752, %v6165
    %v6552 = vmul.f32 %v5755, %v6170
    %v6553 = vmul.f32 %v5760, %v6175
    %v6554 = vmul.f32 %v5763, %v6180
    %v6555 = vmul.f32 %v5768, %v6185
    %v6556 = vmul.f32 %v5771, %v6190
    %v6557 = vmul.f32 %v5776, %v6195
    %v6558 = vmul.f32 %v5779, %v6200
    %v6559 = vmul.f32 %v5784, %v6205
    %v6560 = vmul.f32 %v5787, %v6210
    %v6561 = vmul.f32 %v5792, %v6215
    %v6562 = vmul.f32 %v5795, %v6220
    %v6563 = vmul.f32 %v5800, %v6225
    %v6564 = vmul.f32 %v5803, %v6230
    %v6565 = vmul.f32 %v5808, %v6235
    %v6566 = vmul.f32 %v5811, %v6240
    %v6567 = vmul.f32 %v5816, %v6245
    %v6568 = vmul.f32 %v5819, %v6250
    %v6569 = vmul.f32 %v5824, %v6255
    %v6570 = vmul.f32 %v5827, %v6260
    %v6571 = vmul.f32 %v5832, %v6265
    %v6572 = vmul.f32 %v5835, %v6270
    %v6573 = vmul.f32 %v5840, %v6275
    %v6574 = vmul.f32 %v5843, %v6280
    %v6575 = vmul.f32 %v5848, %v6285
    %v6576 = vmul.f32 %v5851, %v6290
    %v6577 = vmul.f32 %v5856, %v6295
    %v6578 = vmul.f32 %v5859, %v6300
    %v6579 = vmul.f32 %v5864, %v6305
    %v6580 = vmul.f32 %v5867, %v6310
    %v6581 = vmul.f32 %v5872, %v6315
    %v6582 = vmul.f32 %v5875, %v6320
    %v6583 = vmul.f32 %v5880, %v6325
    %v6584 = vmul.f32 %v5883, %v6330
    %v6585 = vmul.f32 %v5888, %v6335
    %v6586 = vmul.f32 %v5891, %v6340
    %v6587 = vmul.f32 %v5896, %v6345
    %v6588 = vmul.f32 %v5899, %v6350
    %v6589 = vmul.f32 %v5904, %v6355
    %v6590 = vmul.f32 %v5907, %v6360
    %v6591 = vmul.f32 %v5912, %v6365
    %v6592 = vmul.f32 %v5915, %v6370
    %v6593 = vmul.f32 %v5920, %v6375
    %v6594 = vmul.f32 %v5923, %v6380
    %v6595 = vmul.f32 %v5928, %v6385
    %v6596 = vmul.f32 %v5931, %v6390
    %v6597 = vmul.f32 %v5936, %v6395
    %v6598 = vmul.f32 %v5939, %v6400
    %v6599 = vmul.f32 %v5944, %v6405
    %v6600 = vmul.f32 %v5947, %v6410
    %v6601 = vmul.f32 %v5952, %v6415
    %v6602 = vmul.f32 %v5955, %v6420
    %v6603 = vmul.f32 %v5960, %v6425
    %v6604 = vmul.f32 %v5963, %v6430
    %v6605 = vmul.f32 %v5968, %v6435
    %v6606 = vmul.f32 %v5971, %v6440
    %v6607 = vmul.f32 %v5976, %v6445
    %v6608 = vmul.f32 %v5979, %v6450
    %v6609 = vmul.f32 %v5984, %v6455
    %v6610 = vmul.f32 %v5987, %v6460
    %v6611 = vmul.f32 %v5992, %v6465
    %v6612 = vmul.f32 %v5995, %v6470
    %v6613 = vmul.f32 %v6000, %v6475
    %v6614 = vmul.f32 %v6003, %v6480
    %v6615 = vmul.f32 %v6008, %v6485
    %v6616 = vmul.f32 %v6011, %v6490
    %v6617 = vmul.f32 %v6016, %v6495
    %v6618 = vmul.f32 %v6019, %v6500
    %v6619 = vmul.f32 %v6024, %v6505
    %v6620 = vmul.f32 %v6027, %v6510
    %v6621 = vmul.f32 %v6032, %v6515
    %v6622 = vmul.f32 %v6035, %v6520
    %v6623 = vmul.f32 %v6040, %v6525
    %v6624 = vmul.f32 %v6043, %v6530
    %v6625 = vmul.f32 %v6048, %v6535
    %v6626 = vmul.f32 %v6051, %v6540
    %v6627 = vmul.f32 %v6056, %v6545
    %v6628 = vsel %vm916, %v6547, 0.0
    %v6629 = vsel %vm916, %v6548, 0.0
    %v6630 = vadd.f32 %v6628, %v6629
    %v6631 = vsel %vm916, %v6549, 0.0
    %v6632 = vadd.f32 %v6630, %v6631
    %v6633 = vsel %vm916, %v6550, 0.0
    %v6634 = vadd.f32 %v6632, %v6633
    %v6635 = vsel %vm916, %v6551, 0.0
    %v6636 = vadd.f32 %v6634, %v6635
    %v6637 = vsel %vm916, %v6552, 0.0
    %v6638 = vadd.f32 %v6636, %v6637
    %v6639 = vsel %vm916, %v6553, 0.0
    %v6640 = vadd.f32 %v6638, %v6639
    %v6641 = vsel %vm916, %v6554, 0.0
    %v6642 = vadd.f32 %v6640, %v6641
    %v6643 = vsel %vm916, %v6555, 0.0
    %v6644 = vadd.f32 %v6642, %v6643
    %v6645 = vsel %vm916, %v6556, 0.0
    %v6646 = vadd.f32 %v6644, %v6645
    %v6647 = vsel %vm916, %v6557, 0.0
    %v6648 = vadd.f32 %v6646, %v6647
    %v6649 = vsel %vm916, %v6558, 0.0
    %v6650 = vadd.f32 %v6648, %v6649
    %v6651 = vsel %vm916, %v6559, 0.0
    %v6652 = vadd.f32 %v6650, %v6651
    %v6653 = vsel %vm916, %v6560, 0.0
    %v6654 = vadd.f32 %v6652, %v6653
    %v6655 = vsel %vm916, %v6561, 0.0
    %v6656 = vadd.f32 %v6654, %v6655
    %v6657 = vsel %vm916, %v6562, 0.0
    %v6658 = vadd.f32 %v6656, %v6657
    %v6659 = vsel %vm916, %v6563, 0.0
    %v6660 = vadd.f32 %v6658, %v6659
    %v6661 = vsel %vm916, %v6564, 0.0
    %v6662 = vadd.f32 %v6660, %v6661
    %v6663 = vsel %vm916, %v6565, 0.0
    %v6664 = vadd.f32 %v6662, %v6663
    %v6665 = vsel %vm916, %v6566, 0.0
    %v6666 = vadd.f32 %v6664, %v6665
    %v6667 = vsel %vm916, %v6567, 0.0
    %v6668 = vadd.f32 %v6666, %v6667
    %v6669 = vsel %vm916, %v6568, 0.0
    %v6670 = vadd.f32 %v6668, %v6669
    %v6671 = vsel %vm916, %v6569, 0.0
    %v6672 = vadd.f32 %v6670, %v6671
    %v6673 = vsel %vm916, %v6570, 0.0
    %v6674 = vadd.f32 %v6672, %v6673
    %v6675 = vsel %vm916, %v6571, 0.0
    %v6676 = vadd.f32 %v6674, %v6675
    %v6677 = vsel %vm916, %v6572, 0.0
    %v6678 = vadd.f32 %v6676, %v6677
    %v6679 = vsel %vm916, %v6573, 0.0
    %v6680 = vadd.f32 %v6678, %v6679
    %v6681 = vsel %vm916, %v6574, 0.0
    %v6682 = vadd.f32 %v6680, %v6681
    %v6683 = vsel %vm916, %v6575, 0.0
    %v6684 = vadd.f32 %v6682, %v6683
    %v6685 = vsel %vm916, %v6576, 0.0
    %v6686 = vadd.f32 %v6684, %v6685
    %v6687 = vsel %vm916, %v6577, 0.0
    %v6688 = vadd.f32 %v6686, %v6687
    %v6689 = vsel %vm916, %v6578, 0.0
    %v6690 = vadd.f32 %v6688, %v6689
    %v6691 = vsel %vm916, %v6579, 0.0
    %v6692 = vadd.f32 %v6690, %v6691
    %v6693 = vsel %vm916, %v6580, 0.0
    %v6694 = vadd.f32 %v6692, %v6693
    %v6695 = vsel %vm916, %v6581, 0.0
    %v6696 = vadd.f32 %v6694, %v6695
    %v6697 = vsel %vm916, %v6582, 0.0
    %v6698 = vadd.f32 %v6696, %v6697
    %v6699 = vsel %vm916, %v6583, 0.0
    %v6700 = vadd.f32 %v6698, %v6699
    %v6701 = vsel %vm916, %v6584, 0.0
    %v6702 = vadd.f32 %v6700, %v6701
    %v6703 = vsel %vm916, %v6585, 0.0
    %v6704 = vadd.f32 %v6702, %v6703
    %v6705 = vsel %vm916, %v6586, 0.0
    %v6706 = vadd.f32 %v6704, %v6705
    %v6707 = vsel %vm916, %v6587, 0.0
    %v6708 = vadd.f32 %v6706, %v6707
    %v6709 = vsel %vm916, %v6588, 0.0
    %v6710 = vadd.f32 %v6708, %v6709
    %v6711 = vsel %vm916, %v6589, 0.0
    %v6712 = vadd.f32 %v6710, %v6711
    %v6713 = vsel %vm916, %v6590, 0.0
    %v6714 = vadd.f32 %v6712, %v6713
    %v6715 = vsel %vm916, %v6591, 0.0
    %v6716 = vadd.f32 %v6714, %v6715
    %v6717 = vsel %vm916, %v6592, 0.0
    %v6718 = vadd.f32 %v6716, %v6717
    %v6719 = vsel %vm916, %v6593, 0.0
    %v6720 = vadd.f32 %v6718, %v6719
    %v6721 = vsel %vm916, %v6594, 0.0
    %v6722 = vadd.f32 %v6720, %v6721
    %v6723 = vsel %vm916, %v6595, 0.0
    %v6724 = vadd.f32 %v6722, %v6723
    %v6725 = vsel %vm916, %v6596, 0.0
    %v6726 = vadd.f32 %v6724, %v6725
    %v6727 = vsel %vm916, %v6597, 0.0
    %v6728 = vadd.f32 %v6726, %v6727
    %v6729 = vsel %vm916, %v6598, 0.0
    %v6730 = vadd.f32 %v6728, %v6729
    %v6731 = vsel %vm916, %v6599, 0.0
    %v6732 = vadd.f32 %v6730, %v6731
    %v6733 = vsel %vm916, %v6600, 0.0
    %v6734 = vadd.f32 %v6732, %v6733
    %v6735 = vsel %vm916, %v6601, 0.0
    %v6736 = vadd.f32 %v6734, %v6735
    %v6737 = vsel %vm916, %v6602, 0.0
    %v6738 = vadd.f32 %v6736, %v6737
    %v6739 = vsel %vm916, %v6603, 0.0
    %v6740 = vadd.f32 %v6738, %v6739
    %v6741 = vsel %vm916, %v6604, 0.0
    %v6742 = vadd.f32 %v6740, %v6741
    %v6743 = vsel %vm916, %v6605, 0.0
    %v6744 = vadd.f32 %v6742, %v6743
    %v6745 = vsel %vm916, %v6606, 0.0
    %v6746 = vadd.f32 %v6744, %v6745
    %v6747 = vsel %vm916, %v6607, 0.0
    %v6748 = vadd.f32 %v6746, %v6747
    %v6749 = vsel %vm916, %v6608, 0.0
    %v6750 = vadd.f32 %v6748, %v6749
    %v6751 = vsel %vm916, %v6609, 0.0
    %v6752 = vadd.f32 %v6750, %v6751
    %v6753 = vsel %vm916, %v6610, 0.0
    %v6754 = vadd.f32 %v6752, %v6753
    %v6755 = vsel %vm916, %v6611, 0.0
    %v6756 = vadd.f32 %v6754, %v6755
    %v6757 = vsel %vm916, %v6612, 0.0
    %v6758 = vadd.f32 %v6756, %v6757
    %v6759 = vsel %vm916, %v6613, 0.0
    %v6760 = vadd.f32 %v6758, %v6759
    %v6761 = vsel %vm916, %v6614, 0.0
    %v6762 = vadd.f32 %v6760, %v6761
    %v6763 = vsel %vm916, %v6615, 0.0
    %v6764 = vadd.f32 %v6762, %v6763
    %v6765 = vsel %vm916, %v6616, 0.0
    %v6766 = vadd.f32 %v6764, %v6765
    %v6767 = vsel %vm916, %v6617, 0.0
    %v6768 = vadd.f32 %v6766, %v6767
    %v6769 = vsel %vm916, %v6618, 0.0
    %v6770 = vadd.f32 %v6768, %v6769
    %v6771 = vsel %vm916, %v6619, 0.0
    %v6772 = vadd.f32 %v6770, %v6771
    %v6773 = vsel %vm916, %v6620, 0.0
    %v6774 = vadd.f32 %v6772, %v6773
    %v6775 = vsel %vm916, %v6621, 0.0
    %v6776 = vadd.f32 %v6774, %v6775
    %v6777 = vsel %vm916, %v6622, 0.0
    %v6778 = vadd.f32 %v6776, %v6777
    %v6779 = vsel %vm916, %v6623, 0.0
    %v6780 = vadd.f32 %v6778, %v6779
    %v6781 = vsel %vm916, %v6624, 0.0
    %v6782 = vadd.f32 %v6780, %v6781
    %v6783 = vsel %vm916, %v6625, 0.0
    %v6784 = vadd.f32 %v6782, %v6783
    %v6785 = vsel %vm916, %v6626, 0.0
    %v6786 = vadd.f32 %v6784, %v6785
    %v6787 = vsel %vm916, %v6627, 0.0
    %v6788 = vadd.f32 %v6786, %v6787
    %v6789 = vrot.slane %v6788, 4
    %v6790 = vadd.f32 %v6788, %v6789
    %v6791 = vrot.slane %v6790, 2
    %v6792 = vadd.f32 %v6790, %v6791
    %v6793 = vrot.slane %v6792, 1
    %v6794 = vadd.f32 %v6792, %v6793
    %v6795 = vrcp.pop 512.0
    %v6796 = vmul.f32 %v6794, %v6795
    %v6797 = vsub.f32 %v5736, %v6796
    %v6798 = vsub.f32 %v5739, %v6796
    %v6799 = vsub.f32 %v5744, %v6796
    %v6800 = vsub.f32 %v5747, %v6796
    %v6801 = vsub.f32 %v5752, %v6796
    %v6802 = vsub.f32 %v5755, %v6796
    %v6803 = vsub.f32 %v5760, %v6796
    %v6804 = vsub.f32 %v5763, %v6796
    %v6805 = vsub.f32 %v5768, %v6796
    %v6806 = vsub.f32 %v5771, %v6796
    %v6807 = vsub.f32 %v5776, %v6796
    %v6808 = vsub.f32 %v5779, %v6796
    %v6809 = vsub.f32 %v5784, %v6796
    %v6810 = vsub.f32 %v5787, %v6796
    %v6811 = vsub.f32 %v5792, %v6796
    %v6812 = vsub.f32 %v5795, %v6796
    %v6813 = vsub.f32 %v5800, %v6796
    %v6814 = vsub.f32 %v5803, %v6796
    %v6815 = vsub.f32 %v5808, %v6796
    %v6816 = vsub.f32 %v5811, %v6796
    %v6817 = vsub.f32 %v5816, %v6796
    %v6818 = vsub.f32 %v5819, %v6796
    %v6819 = vsub.f32 %v5824, %v6796
    %v6820 = vsub.f32 %v5827, %v6796
    %v6821 = vsub.f32 %v5832, %v6796
    %v6822 = vsub.f32 %v5835, %v6796
    %v6823 = vsub.f32 %v5840, %v6796
    %v6824 = vsub.f32 %v5843, %v6796
    %v6825 = vsub.f32 %v5848, %v6796
    %v6826 = vsub.f32 %v5851, %v6796
    %v6827 = vsub.f32 %v5856, %v6796
    %v6828 = vsub.f32 %v5859, %v6796
    %v6829 = vsub.f32 %v5864, %v6796
    %v6830 = vsub.f32 %v5867, %v6796
    %v6831 = vsub.f32 %v5872, %v6796
    %v6832 = vsub.f32 %v5875, %v6796
    %v6833 = vsub.f32 %v5880, %v6796
    %v6834 = vsub.f32 %v5883, %v6796
    %v6835 = vsub.f32 %v5888, %v6796
    %v6836 = vsub.f32 %v5891, %v6796
    %v6837 = vsub.f32 %v5896, %v6796
    %v6838 = vsub.f32 %v5899, %v6796
    %v6839 = vsub.f32 %v5904, %v6796
    %v6840 = vsub.f32 %v5907, %v6796
    %v6841 = vsub.f32 %v5912, %v6796
    %v6842 = vsub.f32 %v5915, %v6796
    %v6843 = vsub.f32 %v5920, %v6796
    %v6844 = vsub.f32 %v5923, %v6796
    %v6845 = vsub.f32 %v5928, %v6796
    %v6846 = vsub.f32 %v5931, %v6796
    %v6847 = vsub.f32 %v5936, %v6796
    %v6848 = vsub.f32 %v5939, %v6796
    %v6849 = vsub.f32 %v5944, %v6796
    %v6850 = vsub.f32 %v5947, %v6796
    %v6851 = vsub.f32 %v5952, %v6796
    %v6852 = vsub.f32 %v5955, %v6796
    %v6853 = vsub.f32 %v5960, %v6796
    %v6854 = vsub.f32 %v5963, %v6796
    %v6855 = vsub.f32 %v5968, %v6796
    %v6856 = vsub.f32 %v5971, %v6796
    %v6857 = vsub.f32 %v5976, %v6796
    %v6858 = vsub.f32 %v5979, %v6796
    %v6859 = vsub.f32 %v5984, %v6796
    %v6860 = vsub.f32 %v5987, %v6796
    %v6861 = vsub.f32 %v5992, %v6796
    %v6862 = vsub.f32 %v5995, %v6796
    %v6863 = vsub.f32 %v6000, %v6796
    %v6864 = vsub.f32 %v6003, %v6796
    %v6865 = vsub.f32 %v6008, %v6796
    %v6866 = vsub.f32 %v6011, %v6796
    %v6867 = vsub.f32 %v6016, %v6796
    %v6868 = vsub.f32 %v6019, %v6796
    %v6869 = vsub.f32 %v6024, %v6796
    %v6870 = vsub.f32 %v6027, %v6796
    %v6871 = vsub.f32 %v6032, %v6796
    %v6872 = vsub.f32 %v6035, %v6796
    %v6873 = vsub.f32 %v6040, %v6796
    %v6874 = vsub.f32 %v6043, %v6796
    %v6875 = vsub.f32 %v6048, %v6796
    %v6876 = vsub.f32 %v6051, %v6796
    %v6877 = vsub.f32 %v6056, %v6796
    %v6878 = vmul.f32 %v6797, %v6797
    %v6879 = vmul.f32 %v6798, %v6798
    %v6880 = vmul.f32 %v6799, %v6799
    %v6881 = vmul.f32 %v6800, %v6800
    %v6882 = vmul.f32 %v6801, %v6801
    %v6883 = vmul.f32 %v6802, %v6802
    %v6884 = vmul.f32 %v6803, %v6803
    %v6885 = vmul.f32 %v6804, %v6804
    %v6886 = vmul.f32 %v6805, %v6805
    %v6887 = vmul.f32 %v6806, %v6806
    %v6888 = vmul.f32 %v6807, %v6807
    %v6889 = vmul.f32 %v6808, %v6808
    %v6890 = vmul.f32 %v6809, %v6809
    %v6891 = vmul.f32 %v6810, %v6810
    %v6892 = vmul.f32 %v6811, %v6811
    %v6893 = vmul.f32 %v6812, %v6812
    %v6894 = vmul.f32 %v6813, %v6813
    %v6895 = vmul.f32 %v6814, %v6814
    %v6896 = vmul.f32 %v6815, %v6815
    %v6897 = vmul.f32 %v6816, %v6816
    %v6898 = vmul.f32 %v6817, %v6817
    %v6899 = vmul.f32 %v6818, %v6818
    %v6900 = vmul.f32 %v6819, %v6819
    %v6901 = vmul.f32 %v6820, %v6820
    %v6902 = vmul.f32 %v6821, %v6821
    %v6903 = vmul.f32 %v6822, %v6822
    %v6904 = vmul.f32 %v6823, %v6823
    %v6905 = vmul.f32 %v6824, %v6824
    %v6906 = vmul.f32 %v6825, %v6825
    %v6907 = vmul.f32 %v6826, %v6826
    %v6908 = vmul.f32 %v6827, %v6827
    %v6909 = vmul.f32 %v6828, %v6828
    %v6910 = vmul.f32 %v6829, %v6829
    %v6911 = vmul.f32 %v6830, %v6830
    %v6912 = vmul.f32 %v6831, %v6831
    %v6913 = vmul.f32 %v6832, %v6832
    %v6914 = vmul.f32 %v6833, %v6833
    %v6915 = vmul.f32 %v6834, %v6834
    %v6916 = vmul.f32 %v6835, %v6835
    %v6917 = vmul.f32 %v6836, %v6836
    %v6918 = vmul.f32 %v6837, %v6837
    %v6919 = vmul.f32 %v6838, %v6838
    %v6920 = vmul.f32 %v6839, %v6839
    %v6921 = vmul.f32 %v6840, %v6840
    %v6922 = vmul.f32 %v6841, %v6841
    %v6923 = vmul.f32 %v6842, %v6842
    %v6924 = vmul.f32 %v6843, %v6843
    %v6925 = vmul.f32 %v6844, %v6844
    %v6926 = vmul.f32 %v6845, %v6845
    %v6927 = vmul.f32 %v6846, %v6846
    %v6928 = vmul.f32 %v6847, %v6847
    %v6929 = vmul.f32 %v6848, %v6848
    %v6930 = vmul.f32 %v6849, %v6849
    %v6931 = vmul.f32 %v6850, %v6850
    %v6932 = vmul.f32 %v6851, %v6851
    %v6933 = vmul.f32 %v6852, %v6852
    %v6934 = vmul.f32 %v6853, %v6853
    %v6935 = vmul.f32 %v6854, %v6854
    %v6936 = vmul.f32 %v6855, %v6855
    %v6937 = vmul.f32 %v6856, %v6856
    %v6938 = vmul.f32 %v6857, %v6857
    %v6939 = vmul.f32 %v6858, %v6858
    %v6940 = vmul.f32 %v6859, %v6859
    %v6941 = vmul.f32 %v6860, %v6860
    %v6942 = vmul.f32 %v6861, %v6861
    %v6943 = vmul.f32 %v6862, %v6862
    %v6944 = vmul.f32 %v6863, %v6863
    %v6945 = vmul.f32 %v6864, %v6864
    %v6946 = vmul.f32 %v6865, %v6865
    %v6947 = vmul.f32 %v6866, %v6866
    %v6948 = vmul.f32 %v6867, %v6867
    %v6949 = vmul.f32 %v6868, %v6868
    %v6950 = vmul.f32 %v6869, %v6869
    %v6951 = vmul.f32 %v6870, %v6870
    %v6952 = vmul.f32 %v6871, %v6871
    %v6953 = vmul.f32 %v6872, %v6872
    %v6954 = vmul.f32 %v6873, %v6873
    %v6955 = vmul.f32 %v6874, %v6874
    %v6956 = vmul.f32 %v6875, %v6875
    %v6957 = vmul.f32 %v6876, %v6876
    %v6958 = vmul.f32 %v6877, %v6877
    %v6959 = vmul.f32 %v6878, %v6145
    %v6960 = vmul.f32 %v6879, %v6150
    %v6961 = vmul.f32 %v6880, %v6155
    %v6962 = vmul.f32 %v6881, %v6160
    %v6963 = vmul.f32 %v6882, %v6165
    %v6964 = vmul.f32 %v6883, %v6170
    %v6965 = vmul.f32 %v6884, %v6175
    %v6966 = vmul.f32 %v6885, %v6180
    %v6967 = vmul.f32 %v6886, %v6185
    %v6968 = vmul.f32 %v6887, %v6190
    %v6969 = vmul.f32 %v6888, %v6195
    %v6970 = vmul.f32 %v6889, %v6200
    %v6971 = vmul.f32 %v6890, %v6205
    %v6972 = vmul.f32 %v6891, %v6210
    %v6973 = vmul.f32 %v6892, %v6215
    %v6974 = vmul.f32 %v6893, %v6220
    %v6975 = vmul.f32 %v6894, %v6225
    %v6976 = vmul.f32 %v6895, %v6230
    %v6977 = vmul.f32 %v6896, %v6235
    %v6978 = vmul.f32 %v6897, %v6240
    %v6979 = vmul.f32 %v6898, %v6245
    %v6980 = vmul.f32 %v6899, %v6250
    %v6981 = vmul.f32 %v6900, %v6255
    %v6982 = vmul.f32 %v6901, %v6260
    %v6983 = vmul.f32 %v6902, %v6265
    %v6984 = vmul.f32 %v6903, %v6270
    %v6985 = vmul.f32 %v6904, %v6275
    %v6986 = vmul.f32 %v6905, %v6280
    %v6987 = vmul.f32 %v6906, %v6285
    %v6988 = vmul.f32 %v6907, %v6290
    %v6989 = vmul.f32 %v6908, %v6295
    %v6990 = vmul.f32 %v6909, %v6300
    %v6991 = vmul.f32 %v6910, %v6305
    %v6992 = vmul.f32 %v6911, %v6310
    %v6993 = vmul.f32 %v6912, %v6315
    %v6994 = vmul.f32 %v6913, %v6320
    %v6995 = vmul.f32 %v6914, %v6325
    %v6996 = vmul.f32 %v6915, %v6330
    %v6997 = vmul.f32 %v6916, %v6335
    %v6998 = vmul.f32 %v6917, %v6340
    %v6999 = vmul.f32 %v6918, %v6345
    %v7000 = vmul.f32 %v6919, %v6350
    %v7001 = vmul.f32 %v6920, %v6355
    %v7002 = vmul.f32 %v6921, %v6360
    %v7003 = vmul.f32 %v6922, %v6365
    %v7004 = vmul.f32 %v6923, %v6370
    %v7005 = vmul.f32 %v6924, %v6375
    %v7006 = vmul.f32 %v6925, %v6380
    %v7007 = vmul.f32 %v6926, %v6385
    %v7008 = vmul.f32 %v6927, %v6390
    %v7009 = vmul.f32 %v6928, %v6395
    %v7010 = vmul.f32 %v6929, %v6400
    %v7011 = vmul.f32 %v6930, %v6405
    %v7012 = vmul.f32 %v6931, %v6410
    %v7013 = vmul.f32 %v6932, %v6415
    %v7014 = vmul.f32 %v6933, %v6420
    %v7015 = vmul.f32 %v6934, %v6425
    %v7016 = vmul.f32 %v6935, %v6430
    %v7017 = vmul.f32 %v6936, %v6435
    %v7018 = vmul.f32 %v6937, %v6440
    %v7019 = vmul.f32 %v6938, %v6445
    %v7020 = vmul.f32 %v6939, %v6450
    %v7021 = vmul.f32 %v6940, %v6455
    %v7022 = vmul.f32 %v6941, %v6460
    %v7023 = vmul.f32 %v6942, %v6465
    %v7024 = vmul.f32 %v6943, %v6470
    %v7025 = vmul.f32 %v6944, %v6475
    %v7026 = vmul.f32 %v6945, %v6480
    %v7027 = vmul.f32 %v6946, %v6485
    %v7028 = vmul.f32 %v6947, %v6490
    %v7029 = vmul.f32 %v6948, %v6495
    %v7030 = vmul.f32 %v6949, %v6500
    %v7031 = vmul.f32 %v6950, %v6505
    %v7032 = vmul.f32 %v6951, %v6510
    %v7033 = vmul.f32 %v6952, %v6515
    %v7034 = vmul.f32 %v6953, %v6520
    %v7035 = vmul.f32 %v6954, %v6525
    %v7036 = vmul.f32 %v6955, %v6530
    %v7037 = vmul.f32 %v6956, %v6535
    %v7038 = vmul.f32 %v6957, %v6540
    %v7039 = vmul.f32 %v6958, %v6545
    %v7040 = vsel %vm916, %v6959, 0.0
    %v7041 = vsel %vm916, %v6960, 0.0
    %v7042 = vadd.f32 %v7040, %v7041
    %v7043 = vsel %vm916, %v6961, 0.0
    %v7044 = vadd.f32 %v7042, %v7043
    %v7045 = vsel %vm916, %v6962, 0.0
    %v7046 = vadd.f32 %v7044, %v7045
    %v7047 = vsel %vm916, %v6963, 0.0
    %v7048 = vadd.f32 %v7046, %v7047
    %v7049 = vsel %vm916, %v6964, 0.0
    %v7050 = vadd.f32 %v7048, %v7049
    %v7051 = vsel %vm916, %v6965, 0.0
    %v7052 = vadd.f32 %v7050, %v7051
    %v7053 = vsel %vm916, %v6966, 0.0
    %v7054 = vadd.f32 %v7052, %v7053
    %v7055 = vsel %vm916, %v6967, 0.0
    %v7056 = vadd.f32 %v7054, %v7055
    %v7057 = vsel %vm916, %v6968, 0.0
    %v7058 = vadd.f32 %v7056, %v7057
    %v7059 = vsel %vm916, %v6969, 0.0
    %v7060 = vadd.f32 %v7058, %v7059
    %v7061 = vsel %vm916, %v6970, 0.0
    %v7062 = vadd.f32 %v7060, %v7061
    %v7063 = vsel %vm916, %v6971, 0.0
    %v7064 = vadd.f32 %v7062, %v7063
    %v7065 = vsel %vm916, %v6972, 0.0
    %v7066 = vadd.f32 %v7064, %v7065
    %v7067 = vsel %vm916, %v6973, 0.0
    %v7068 = vadd.f32 %v7066, %v7067
    %v7069 = vsel %vm916, %v6974, 0.0
    %v7070 = vadd.f32 %v7068, %v7069
    %v7071 = vsel %vm916, %v6975, 0.0
    %v7072 = vadd.f32 %v7070, %v7071
    %v7073 = vsel %vm916, %v6976, 0.0
    %v7074 = vadd.f32 %v7072, %v7073
    %v7075 = vsel %vm916, %v6977, 0.0
    %v7076 = vadd.f32 %v7074, %v7075
    %v7077 = vsel %vm916, %v6978, 0.0
    %v7078 = vadd.f32 %v7076, %v7077
    %v7079 = vsel %vm916, %v6979, 0.0
    %v7080 = vadd.f32 %v7078, %v7079
    %v7081 = vsel %vm916, %v6980, 0.0
    %v7082 = vadd.f32 %v7080, %v7081
    %v7083 = vsel %vm916, %v6981, 0.0
    %v7084 = vadd.f32 %v7082, %v7083
    %v7085 = vsel %vm916, %v6982, 0.0
    %v7086 = vadd.f32 %v7084, %v7085
    %v7087 = vsel %vm916, %v6983, 0.0
    %v7088 = vadd.f32 %v7086, %v7087
    %v7089 = vsel %vm916, %v6984, 0.0
    %v7090 = vadd.f32 %v7088, %v7089
    %v7091 = vsel %vm916, %v6985, 0.0
    %v7092 = vadd.f32 %v7090, %v7091
    %v7093 = vsel %vm916, %v6986, 0.0
    %v7094 = vadd.f32 %v7092, %v7093
    %v7095 = vsel %vm916, %v6987, 0.0
    %v7096 = vadd.f32 %v7094, %v7095
    %v7097 = vsel %vm916, %v6988, 0.0
    %v7098 = vadd.f32 %v7096, %v7097
    %v7099 = vsel %vm916, %v6989, 0.0
    %v7100 = vadd.f32 %v7098, %v7099
    %v7101 = vsel %vm916, %v6990, 0.0
    %v7102 = vadd.f32 %v7100, %v7101
    %v7103 = vsel %vm916, %v6991, 0.0
    %v7104 = vadd.f32 %v7102, %v7103
    %v7105 = vsel %vm916, %v6992, 0.0
    %v7106 = vadd.f32 %v7104, %v7105
    %v7107 = vsel %vm916, %v6993, 0.0
    %v7108 = vadd.f32 %v7106, %v7107
    %v7109 = vsel %vm916, %v6994, 0.0
    %v7110 = vadd.f32 %v7108, %v7109
    %v7111 = vsel %vm916, %v6995, 0.0
    %v7112 = vadd.f32 %v7110, %v7111
    %v7113 = vsel %vm916, %v6996, 0.0
    %v7114 = vadd.f32 %v7112, %v7113
    %v7115 = vsel %vm916, %v6997, 0.0
    %v7116 = vadd.f32 %v7114, %v7115
    %v7117 = vsel %vm916, %v6998, 0.0
    %v7118 = vadd.f32 %v7116, %v7117
    %v7119 = vsel %vm916, %v6999, 0.0
    %v7120 = vadd.f32 %v7118, %v7119
    %v7121 = vsel %vm916, %v7000, 0.0
    %v7122 = vadd.f32 %v7120, %v7121
    %v7123 = vsel %vm916, %v7001, 0.0
    %v7124 = vadd.f32 %v7122, %v7123
    %v7125 = vsel %vm916, %v7002, 0.0
    %v7126 = vadd.f32 %v7124, %v7125
    %v7127 = vsel %vm916, %v7003, 0.0
    %v7128 = vadd.f32 %v7126, %v7127
    %v7129 = vsel %vm916, %v7004, 0.0
    %v7130 = vadd.f32 %v7128, %v7129
    %v7131 = vsel %vm916, %v7005, 0.0
    %v7132 = vadd.f32 %v7130, %v7131
    %v7133 = vsel %vm916, %v7006, 0.0
    %v7134 = vadd.f32 %v7132, %v7133
    %v7135 = vsel %vm916, %v7007, 0.0
    %v7136 = vadd.f32 %v7134, %v7135
    %v7137 = vsel %vm916, %v7008, 0.0
    %v7138 = vadd.f32 %v7136, %v7137
    %v7139 = vsel %vm916, %v7009, 0.0
    %v7140 = vadd.f32 %v7138, %v7139
    %v7141 = vsel %vm916, %v7010, 0.0
    %v7142 = vadd.f32 %v7140, %v7141
    %v7143 = vsel %vm916, %v7011, 0.0
    %v7144 = vadd.f32 %v7142, %v7143
    %v7145 = vsel %vm916, %v7012, 0.0
    %v7146 = vadd.f32 %v7144, %v7145
    %v7147 = vsel %vm916, %v7013, 0.0
    %v7148 = vadd.f32 %v7146, %v7147
    %v7149 = vsel %vm916, %v7014, 0.0
    %v7150 = vadd.f32 %v7148, %v7149
    %v7151 = vsel %vm916, %v7015, 0.0
    %v7152 = vadd.f32 %v7150, %v7151
    %v7153 = vsel %vm916, %v7016, 0.0
    %v7154 = vadd.f32 %v7152, %v7153
    %v7155 = vsel %vm916, %v7017, 0.0
    %v7156 = vadd.f32 %v7154, %v7155
    %v7157 = vsel %vm916, %v7018, 0.0
    %v7158 = vadd.f32 %v7156, %v7157
    %v7159 = vsel %vm916, %v7019, 0.0
    %v7160 = vadd.f32 %v7158, %v7159
    %v7161 = vsel %vm916, %v7020, 0.0
    %v7162 = vadd.f32 %v7160, %v7161
    %v7163 = vsel %vm916, %v7021, 0.0
    %v7164 = vadd.f32 %v7162, %v7163
    %v7165 = vsel %vm916, %v7022, 0.0
    %v7166 = vadd.f32 %v7164, %v7165
    %v7167 = vsel %vm916, %v7023, 0.0
    %v7168 = vadd.f32 %v7166, %v7167
    %v7169 = vsel %vm916, %v7024, 0.0
    %v7170 = vadd.f32 %v7168, %v7169
    %v7171 = vsel %vm916, %v7025, 0.0
    %v7172 = vadd.f32 %v7170, %v7171
    %v7173 = vsel %vm916, %v7026, 0.0
    %v7174 = vadd.f32 %v7172, %v7173
    %v7175 = vsel %vm916, %v7027, 0.0
    %v7176 = vadd.f32 %v7174, %v7175
    %v7177 = vsel %vm916, %v7028, 0.0
    %v7178 = vadd.f32 %v7176, %v7177
    %v7179 = vsel %vm916, %v7029, 0.0
    %v7180 = vadd.f32 %v7178, %v7179
    %v7181 = vsel %vm916, %v7030, 0.0
    %v7182 = vadd.f32 %v7180, %v7181
    %v7183 = vsel %vm916, %v7031, 0.0
    %v7184 = vadd.f32 %v7182, %v7183
    %v7185 = vsel %vm916, %v7032, 0.0
    %v7186 = vadd.f32 %v7184, %v7185
    %v7187 = vsel %vm916, %v7033, 0.0
    %v7188 = vadd.f32 %v7186, %v7187
    %v7189 = vsel %vm916, %v7034, 0.0
    %v7190 = vadd.f32 %v7188, %v7189
    %v7191 = vsel %vm916, %v7035, 0.0
    %v7192 = vadd.f32 %v7190, %v7191
    %v7193 = vsel %vm916, %v7036, 0.0
    %v7194 = vadd.f32 %v7192, %v7193
    %v7195 = vsel %vm916, %v7037, 0.0
    %v7196 = vadd.f32 %v7194, %v7195
    %v7197 = vsel %vm916, %v7038, 0.0
    %v7198 = vadd.f32 %v7196, %v7197
    %v7199 = vsel %vm916, %v7039, 0.0
    %v7200 = vadd.f32 %v7198, %v7199
    %v7201 = vrot.slane %v7200, 4
    %v7202 = vadd.f32 %v7200, %v7201
    %v7203 = vrot.slane %v7202, 2
    %v7204 = vadd.f32 %v7202, %v7203
    %v7205 = vrot.slane %v7204, 1
    %v7206 = vadd.f32 %v7204, %v7205
    %v7207 = vmul.f32 %v7206, %v6795
    %v7208 = vadd.f32 %v7207, 1e-05
    %v7209 = vrsqrt.pop %v7208
    %v7210 = vmul.f32 %v6797, %v7209
    %v7211 = vmul.f32 %v6798, %v7209
    %v7212 = vmul.f32 %v6799, %v7209
    %v7213 = vmul.f32 %v6800, %v7209
    %v7214 = vmul.f32 %v6801, %v7209
    %v7215 = vmul.f32 %v6802, %v7209
    %v7216 = vmul.f32 %v6803, %v7209
    %v7217 = vmul.f32 %v6804, %v7209
    %v7218 = vmul.f32 %v6805, %v7209
    %v7219 = vmul.f32 %v6806, %v7209
    %v7220 = vmul.f32 %v6807, %v7209
    %v7221 = vmul.f32 %v6808, %v7209
    %v7222 = vmul.f32 %v6809, %v7209
    %v7223 = vmul.f32 %v6810, %v7209
    %v7224 = vmul.f32 %v6811, %v7209
    %v7225 = vmul.f32 %v6812, %v7209
    %v7226 = vmul.f32 %v6813, %v7209
    %v7227 = vmul.f32 %v6814, %v7209
    %v7228 = vmul.f32 %v6815, %v7209
    %v7229 = vmul.f32 %v6816, %v7209
    %v7230 = vmul.f32 %v6817, %v7209
    %v7231 = vmul.f32 %v6818, %v7209
    %v7232 = vmul.f32 %v6819, %v7209
    %v7233 = vmul.f32 %v6820, %v7209
    %v7234 = vmul.f32 %v6821, %v7209
    %v7235 = vmul.f32 %v6822, %v7209
    %v7236 = vmul.f32 %v6823, %v7209
    %v7237 = vmul.f32 %v6824, %v7209
    %v7238 = vmul.f32 %v6825, %v7209
    %v7239 = vmul.f32 %v6826, %v7209
    %v7240 = vmul.f32 %v6827, %v7209
    %v7241 = vmul.f32 %v6828, %v7209
    %v7242 = vmul.f32 %v6829, %v7209
    %v7243 = vmul.f32 %v6830, %v7209
    %v7244 = vmul.f32 %v6831, %v7209
    %v7245 = vmul.f32 %v6832, %v7209
    %v7246 = vmul.f32 %v6833, %v7209
    %v7247 = vmul.f32 %v6834, %v7209
    %v7248 = vmul.f32 %v6835, %v7209
    %v7249 = vmul.f32 %v6836, %v7209
    %v7250 = vmul.f32 %v6837, %v7209
    %v7251 = vmul.f32 %v6838, %v7209
    %v7252 = vmul.f32 %v6839, %v7209
    %v7253 = vmul.f32 %v6840, %v7209
    %v7254 = vmul.f32 %v6841, %v7209
    %v7255 = vmul.f32 %v6842, %v7209
    %v7256 = vmul.f32 %v6843, %v7209
    %v7257 = vmul.f32 %v6844, %v7209
    %v7258 = vmul.f32 %v6845, %v7209
    %v7259 = vmul.f32 %v6846, %v7209
    %v7260 = vmul.f32 %v6847, %v7209
    %v7261 = vmul.f32 %v6848, %v7209
    %v7262 = vmul.f32 %v6849, %v7209
    %v7263 = vmul.f32 %v6850, %v7209
    %v7264 = vmul.f32 %v6851, %v7209
    %v7265 = vmul.f32 %v6852, %v7209
    %v7266 = vmul.f32 %v6853, %v7209
    %v7267 = vmul.f32 %v6854, %v7209
    %v7268 = vmul.f32 %v6855, %v7209
    %v7269 = vmul.f32 %v6856, %v7209
    %v7270 = vmul.f32 %v6857, %v7209
    %v7271 = vmul.f32 %v6858, %v7209
    %v7272 = vmul.f32 %v6859, %v7209
    %v7273 = vmul.f32 %v6860, %v7209
    %v7274 = vmul.f32 %v6861, %v7209
    %v7275 = vmul.f32 %v6862, %v7209
    %v7276 = vmul.f32 %v6863, %v7209
    %v7277 = vmul.f32 %v6864, %v7209
    %v7278 = vmul.f32 %v6865, %v7209
    %v7279 = vmul.f32 %v6866, %v7209
    %v7280 = vmul.f32 %v6867, %v7209
    %v7281 = vmul.f32 %v6868, %v7209
    %v7282 = vmul.f32 %v6869, %v7209
    %v7283 = vmul.f32 %v6870, %v7209
    %v7284 = vmul.f32 %v6871, %v7209
    %v7285 = vmul.f32 %v6872, %v7209
    %v7286 = vmul.f32 %v6873, %v7209
    %v7287 = vmul.f32 %v6874, %v7209
    %v7288 = vmul.f32 %v6875, %v7209
    %v7289 = vmul.f32 %v6876, %v7209
    %v7290 = vmul.f32 %v6877, %v7209
    %v7291 = vld [vmem:[%s4] sm:$0x1]
    %v7293 = vlaneseq
    %v7294 = vshrl.u32 %v7293, 7
    %v7295 = vsub.s32 0, %v7294
    %v7296 = vrot.slane %v7291, %v7295
    %v7298 = vmul.f32 %v7210, %v7296
    %v7299 = vmul.f32 %v7211, %v7296
    %v7300 = vmul.f32 %v7212, %v7296
    %v7301 = vmul.f32 %v7213, %v7296
    %v7302 = vmul.f32 %v7214, %v7296
    %v7303 = vmul.f32 %v7215, %v7296
    %v7304 = vmul.f32 %v7216, %v7296
    %v7305 = vmul.f32 %v7217, %v7296
    %v7306 = vmul.f32 %v7218, %v7296
    %v7307 = vmul.f32 %v7219, %v7296
    %v7308 = vmul.f32 %v7220, %v7296
    %v7309 = vmul.f32 %v7221, %v7296
    %v7310 = vmul.f32 %v7222, %v7296
    %v7311 = vmul.f32 %v7223, %v7296
    %v7312 = vmul.f32 %v7224, %v7296
    %v7313 = vmul.f32 %v7225, %v7296
    %v7314 = vmul.f32 %v7226, %v7296
    %v7315 = vmul.f32 %v7227, %v7296
    %v7316 = vmul.f32 %v7228, %v7296
    %v7317 = vmul.f32 %v7229, %v7296
    %v7318 = vmul.f32 %v7230, %v7296
    %v7319 = vmul.f32 %v7231, %v7296
    %v7320 = vmul.f32 %v7232, %v7296
    %v7321 = vmul.f32 %v7233, %v7296
    %v7322 = vmul.f32 %v7234, %v7296
    %v7323 = vmul.f32 %v7235, %v7296
    %v7324 = vmul.f32 %v7236, %v7296
    %v7325 = vmul.f32 %v7237, %v7296
    %v7326 = vmul.f32 %v7238, %v7296
    %v7327 = vmul.f32 %v7239, %v7296
    %v7328 = vmul.f32 %v7240, %v7296
    %v7329 = vmul.f32 %v7241, %v7296
    %v7330 = vmul.f32 %v7242, %v7296
    %v7331 = vmul.f32 %v7243, %v7296
    %v7332 = vmul.f32 %v7244, %v7296
    %v7333 = vmul.f32 %v7245, %v7296
    %v7334 = vmul.f32 %v7246, %v7296
    %v7335 = vmul.f32 %v7247, %v7296
    %v7336 = vmul.f32 %v7248, %v7296
    %v7337 = vmul.f32 %v7249, %v7296
    %v7338 = vmul.f32 %v7250, %v7296
    %v7339 = vmul.f32 %v7251, %v7296
    %v7340 = vmul.f32 %v7252, %v7296
    %v7341 = vmul.f32 %v7253, %v7296
    %v7342 = vmul.f32 %v7254, %v7296
    %v7343 = vmul.f32 %v7255, %v7296
    %v7344 = vmul.f32 %v7256, %v7296
    %v7345 = vmul.f32 %v7257, %v7296
    %v7346 = vmul.f32 %v7258, %v7296
    %v7347 = vmul.f32 %v7259, %v7296
    %v7348 = vmul.f32 %v7260, %v7296
    %v7349 = vmul.f32 %v7261, %v7296
    %v7350 = vmul.f32 %v7262, %v7296
    %v7351 = vmul.f32 %v7263, %v7296
    %v7352 = vmul.f32 %v7264, %v7296
    %v7353 = vmul.f32 %v7265, %v7296
    %v7354 = vmul.f32 %v7266, %v7296
    %v7355 = vmul.f32 %v7267, %v7296
    %v7356 = vmul.f32 %v7268, %v7296
    %v7357 = vmul.f32 %v7269, %v7296
    %v7358 = vmul.f32 %v7270, %v7296
    %v7359 = vmul.f32 %v7271, %v7296
    %v7360 = vmul.f32 %v7272, %v7296
    %v7361 = vmul.f32 %v7273, %v7296
    %v7362 = vmul.f32 %v7274, %v7296
    %v7363 = vmul.f32 %v7275, %v7296
    %v7364 = vmul.f32 %v7276, %v7296
    %v7365 = vmul.f32 %v7277, %v7296
    %v7366 = vmul.f32 %v7278, %v7296
    %v7367 = vmul.f32 %v7279, %v7296
    %v7368 = vmul.f32 %v7280, %v7296
    %v7369 = vmul.f32 %v7281, %v7296
    %v7370 = vmul.f32 %v7282, %v7296
    %v7371 = vmul.f32 %v7283, %v7296
    %v7372 = vmul.f32 %v7284, %v7296
    %v7373 = vmul.f32 %v7285, %v7296
    %v7374 = vmul.f32 %v7286, %v7296
    %v7375 = vmul.f32 %v7287, %v7296
    %v7376 = vmul.f32 %v7288, %v7296
    %v7377 = vmul.f32 %v7289, %v7296
    %v7378 = vmul.f32 %v7290, %v7296
    %v7379 = vld [vmem:[%s5] sm:$0x1]
    %v7381 = vlaneseq
    %v7382 = vshrl.u32 %v7381, 7
    %v7383 = vsub.s32 0, %v7382
    %v7384 = vrot.slane %v7379, %v7383
    %v7386 = vadd.f32 %v7298, %v7384
    %v7387 = vadd.f32 %v7299, %v7384
    %v7388 = vadd.f32 %v7300, %v7384
    %v7389 = vadd.f32 %v7301, %v7384
    %v7390 = vadd.f32 %v7302, %v7384
    %v7391 = vadd.f32 %v7303, %v7384
    %v7392 = vadd.f32 %v7304, %v7384
    %v7393 = vadd.f32 %v7305, %v7384
    %v7394 = vadd.f32 %v7306, %v7384
    %v7395 = vadd.f32 %v7307, %v7384
    %v7396 = vadd.f32 %v7308, %v7384
    %v7397 = vadd.f32 %v7309, %v7384
    %v7398 = vadd.f32 %v7310, %v7384
    %v7399 = vadd.f32 %v7311, %v7384
    %v7400 = vadd.f32 %v7312, %v7384
    %v7401 = vadd.f32 %v7313, %v7384
    %v7402 = vadd.f32 %v7314, %v7384
    %v7403 = vadd.f32 %v7315, %v7384
    %v7404 = vadd.f32 %v7316, %v7384
    %v7405 = vadd.f32 %v7317, %v7384
    %v7406 = vadd.f32 %v7318, %v7384
    %v7407 = vadd.f32 %v7319, %v7384
    %v7408 = vadd.f32 %v7320, %v7384
    %v7409 = vadd.f32 %v7321, %v7384
    %v7410 = vadd.f32 %v7322, %v7384
    %v7411 = vadd.f32 %v7323, %v7384
    %v7412 = vadd.f32 %v7324, %v7384
    %v7413 = vadd.f32 %v7325, %v7384
    %v7414 = vadd.f32 %v7326, %v7384
    %v7415 = vadd.f32 %v7327, %v7384
    %v7416 = vadd.f32 %v7328, %v7384
    %v7417 = vadd.f32 %v7329, %v7384
    %v7418 = vadd.f32 %v7330, %v7384
    %v7419 = vadd.f32 %v7331, %v7384
    %v7420 = vadd.f32 %v7332, %v7384
    %v7421 = vadd.f32 %v7333, %v7384
    %v7422 = vadd.f32 %v7334, %v7384
    %v7423 = vadd.f32 %v7335, %v7384
    %v7424 = vadd.f32 %v7336, %v7384
    %v7425 = vadd.f32 %v7337, %v7384
    %v7426 = vadd.f32 %v7338, %v7384
    %v7427 = vadd.f32 %v7339, %v7384
    %v7428 = vadd.f32 %v7340, %v7384
    %v7429 = vadd.f32 %v7341, %v7384
    %v7430 = vadd.f32 %v7342, %v7384
    %v7431 = vadd.f32 %v7343, %v7384
    %v7432 = vadd.f32 %v7344, %v7384
    %v7433 = vadd.f32 %v7345, %v7384
    %v7434 = vadd.f32 %v7346, %v7384
    %v7435 = vadd.f32 %v7347, %v7384
    %v7436 = vadd.f32 %v7348, %v7384
    %v7437 = vadd.f32 %v7349, %v7384
    %v7438 = vadd.f32 %v7350, %v7384
    %v7439 = vadd.f32 %v7351, %v7384
    %v7440 = vadd.f32 %v7352, %v7384
    %v7441 = vadd.f32 %v7353, %v7384
    %v7442 = vadd.f32 %v7354, %v7384
    %v7443 = vadd.f32 %v7355, %v7384
    %v7444 = vadd.f32 %v7356, %v7384
    %v7445 = vadd.f32 %v7357, %v7384
    %v7446 = vadd.f32 %v7358, %v7384
    %v7447 = vadd.f32 %v7359, %v7384
    %v7448 = vadd.f32 %v7360, %v7384
    %v7449 = vadd.f32 %v7361, %v7384
    %v7450 = vadd.f32 %v7362, %v7384
    %v7451 = vadd.f32 %v7363, %v7384
    %v7452 = vadd.f32 %v7364, %v7384
    %v7453 = vadd.f32 %v7365, %v7384
    %v7454 = vadd.f32 %v7366, %v7384
    %v7455 = vadd.f32 %v7367, %v7384
    %v7456 = vadd.f32 %v7368, %v7384
    %v7457 = vadd.f32 %v7369, %v7384
    %v7458 = vadd.f32 %v7370, %v7384
    %v7459 = vadd.f32 %v7371, %v7384
    %v7460 = vadd.f32 %v7372, %v7384
    %v7461 = vadd.f32 %v7373, %v7384
    %v7462 = vadd.f32 %v7374, %v7384
    %v7463 = vadd.f32 %v7375, %v7384
    %v7464 = vadd.f32 %v7376, %v7384
    %v7465 = vadd.f32 %v7377, %v7384
    %v7466 = vadd.f32 %v7378, %v7384
    %vm7467 = vcmp.gt.f32.partialorder %v7386, 0.0
    %vm7468 = vcmp.gt.f32.partialorder %v7387, 0.0
    %vm7469 = vcmp.gt.f32.partialorder %v7388, 0.0
    %vm7470 = vcmp.gt.f32.partialorder %v7389, 0.0
    %vm7471 = vcmp.gt.f32.partialorder %v7390, 0.0
    %vm7472 = vcmp.gt.f32.partialorder %v7391, 0.0
    %vm7473 = vcmp.gt.f32.partialorder %v7392, 0.0
    %vm7474 = vcmp.gt.f32.partialorder %v7393, 0.0
    %vm7475 = vcmp.gt.f32.partialorder %v7394, 0.0
    %vm7476 = vcmp.gt.f32.partialorder %v7395, 0.0
    %vm7477 = vcmp.gt.f32.partialorder %v7396, 0.0
    %vm7478 = vcmp.gt.f32.partialorder %v7397, 0.0
    %vm7479 = vcmp.gt.f32.partialorder %v7398, 0.0
    %vm7480 = vcmp.gt.f32.partialorder %v7399, 0.0
    %vm7481 = vcmp.gt.f32.partialorder %v7400, 0.0
    %vm7482 = vcmp.gt.f32.partialorder %v7401, 0.0
    %vm7483 = vcmp.gt.f32.partialorder %v7402, 0.0
    %vm7484 = vcmp.gt.f32.partialorder %v7403, 0.0
    %vm7485 = vcmp.gt.f32.partialorder %v7404, 0.0
    %vm7486 = vcmp.gt.f32.partialorder %v7405, 0.0
    %vm7487 = vcmp.gt.f32.partialorder %v7406, 0.0
    %vm7488 = vcmp.gt.f32.partialorder %v7407, 0.0
    %vm7489 = vcmp.gt.f32.partialorder %v7408, 0.0
    %vm7490 = vcmp.gt.f32.partialorder %v7409, 0.0
    %vm7491 = vcmp.gt.f32.partialorder %v7410, 0.0
    %vm7492 = vcmp.gt.f32.partialorder %v7411, 0.0
    %vm7493 = vcmp.gt.f32.partialorder %v7412, 0.0
    %vm7494 = vcmp.gt.f32.partialorder %v7413, 0.0
    %vm7495 = vcmp.gt.f32.partialorder %v7414, 0.0
    %vm7496 = vcmp.gt.f32.partialorder %v7415, 0.0
    %vm7497 = vcmp.gt.f32.partialorder %v7416, 0.0
    %vm7498 = vcmp.gt.f32.partialorder %v7417, 0.0
    %vm7499 = vcmp.gt.f32.partialorder %v7418, 0.0
    %vm7500 = vcmp.gt.f32.partialorder %v7419, 0.0
    %vm7501 = vcmp.gt.f32.partialorder %v7420, 0.0
    %vm7502 = vcmp.gt.f32.partialorder %v7421, 0.0
    %vm7503 = vcmp.gt.f32.partialorder %v7422, 0.0
    %vm7504 = vcmp.gt.f32.partialorder %v7423, 0.0
    %vm7505 = vcmp.gt.f32.partialorder %v7424, 0.0
    %vm7506 = vcmp.gt.f32.partialorder %v7425, 0.0
    %vm7507 = vcmp.gt.f32.partialorder %v7426, 0.0
    %vm7508 = vcmp.gt.f32.partialorder %v7427, 0.0
    %vm7509 = vcmp.gt.f32.partialorder %v7428, 0.0
    %vm7510 = vcmp.gt.f32.partialorder %v7429, 0.0
    %vm7511 = vcmp.gt.f32.partialorder %v7430, 0.0
    %vm7512 = vcmp.gt.f32.partialorder %v7431, 0.0
    %vm7513 = vcmp.gt.f32.partialorder %v7432, 0.0
    %vm7514 = vcmp.gt.f32.partialorder %v7433, 0.0
    %vm7515 = vcmp.gt.f32.partialorder %v7434, 0.0
    %vm7516 = vcmp.gt.f32.partialorder %v7435, 0.0
    %vm7517 = vcmp.gt.f32.partialorder %v7436, 0.0
    %vm7518 = vcmp.gt.f32.partialorder %v7437, 0.0
    %vm7519 = vcmp.gt.f32.partialorder %v7438, 0.0
    %vm7520 = vcmp.gt.f32.partialorder %v7439, 0.0
    %vm7521 = vcmp.gt.f32.partialorder %v7440, 0.0
    %vm7522 = vcmp.gt.f32.partialorder %v7441, 0.0
    %vm7523 = vcmp.gt.f32.partialorder %v7442, 0.0
    %vm7524 = vcmp.gt.f32.partialorder %v7443, 0.0
    %vm7525 = vcmp.gt.f32.partialorder %v7444, 0.0
    %vm7526 = vcmp.gt.f32.partialorder %v7445, 0.0
    %vm7527 = vcmp.gt.f32.partialorder %v7446, 0.0
    %vm7528 = vcmp.gt.f32.partialorder %v7447, 0.0
    %vm7529 = vcmp.gt.f32.partialorder %v7448, 0.0
    %vm7530 = vcmp.gt.f32.partialorder %v7449, 0.0
    %vm7531 = vcmp.gt.f32.partialorder %v7450, 0.0
    %vm7532 = vcmp.gt.f32.partialorder %v7451, 0.0
    %vm7533 = vcmp.gt.f32.partialorder %v7452, 0.0
    %vm7534 = vcmp.gt.f32.partialorder %v7453, 0.0
    %vm7535 = vcmp.gt.f32.partialorder %v7454, 0.0
    %vm7536 = vcmp.gt.f32.partialorder %v7455, 0.0
    %vm7537 = vcmp.gt.f32.partialorder %v7456, 0.0
    %vm7538 = vcmp.gt.f32.partialorder %v7457, 0.0
    %vm7539 = vcmp.gt.f32.partialorder %v7458, 0.0
    %vm7540 = vcmp.gt.f32.partialorder %v7459, 0.0
    %vm7541 = vcmp.gt.f32.partialorder %v7460, 0.0
    %vm7542 = vcmp.gt.f32.partialorder %v7461, 0.0
    %vm7543 = vcmp.gt.f32.partialorder %v7462, 0.0
    %vm7544 = vcmp.gt.f32.partialorder %v7463, 0.0
    %vm7545 = vcmp.gt.f32.partialorder %v7464, 0.0
    %vm7546 = vcmp.gt.f32.partialorder %v7465, 0.0
    %vm7547 = vcmp.gt.f32.partialorder %v7466, 0.0
    %v7548 = vmul.f32 %v7386, 0.2
    %v7549 = vmul.f32 %v7387, 0.2
    %v7550 = vmul.f32 %v7388, 0.2
    %v7551 = vmul.f32 %v7389, 0.2
    %v7552 = vmul.f32 %v7390, 0.2
    %v7553 = vmul.f32 %v7391, 0.2
    %v7554 = vmul.f32 %v7392, 0.2
    %v7555 = vmul.f32 %v7393, 0.2
    %v7556 = vmul.f32 %v7394, 0.2
    %v7557 = vmul.f32 %v7395, 0.2
    %v7558 = vmul.f32 %v7396, 0.2
    %v7559 = vmul.f32 %v7397, 0.2
    %v7560 = vmul.f32 %v7398, 0.2
    %v7561 = vmul.f32 %v7399, 0.2
    %v7562 = vmul.f32 %v7400, 0.2
    %v7563 = vmul.f32 %v7401, 0.2
    %v7564 = vmul.f32 %v7402, 0.2
    %v7565 = vmul.f32 %v7403, 0.2
    %v7566 = vmul.f32 %v7404, 0.2
    %v7567 = vmul.f32 %v7405, 0.2
    %v7568 = vmul.f32 %v7406, 0.2
    %v7569 = vmul.f32 %v7407, 0.2
    %v7570 = vmul.f32 %v7408, 0.2
    %v7571 = vmul.f32 %v7409, 0.2
    %v7572 = vmul.f32 %v7410, 0.2
    %v7573 = vmul.f32 %v7411, 0.2
    %v7574 = vmul.f32 %v7412, 0.2
    %v7575 = vmul.f32 %v7413, 0.2
    %v7576 = vmul.f32 %v7414, 0.2
    %v7577 = vmul.f32 %v7415, 0.2
    %v7578 = vmul.f32 %v7416, 0.2
    %v7579 = vmul.f32 %v7417, 0.2
    %v7580 = vmul.f32 %v7418, 0.2
    %v7581 = vmul.f32 %v7419, 0.2
    %v7582 = vmul.f32 %v7420, 0.2
    %v7583 = vmul.f32 %v7421, 0.2
    %v7584 = vmul.f32 %v7422, 0.2
    %v7585 = vmul.f32 %v7423, 0.2
    %v7586 = vmul.f32 %v7424, 0.2
    %v7587 = vmul.f32 %v7425, 0.2
    %v7588 = vmul.f32 %v7426, 0.2
    %v7589 = vmul.f32 %v7427, 0.2
    %v7590 = vmul.f32 %v7428, 0.2
    %v7591 = vmul.f32 %v7429, 0.2
    %v7592 = vmul.f32 %v7430, 0.2
    %v7593 = vmul.f32 %v7431, 0.2
    %v7594 = vmul.f32 %v7432, 0.2
    %v7595 = vmul.f32 %v7433, 0.2
    %v7596 = vmul.f32 %v7434, 0.2
    %v7597 = vmul.f32 %v7435, 0.2
    %v7598 = vmul.f32 %v7436, 0.2
    %v7599 = vmul.f32 %v7437, 0.2
    %v7600 = vmul.f32 %v7438, 0.2
    %v7601 = vmul.f32 %v7439, 0.2
    %v7602 = vmul.f32 %v7440, 0.2
    %v7603 = vmul.f32 %v7441, 0.2
    %v7604 = vmul.f32 %v7442, 0.2
    %v7605 = vmul.f32 %v7443, 0.2
    %v7606 = vmul.f32 %v7444, 0.2
    %v7607 = vmul.f32 %v7445, 0.2
    %v7608 = vmul.f32 %v7446, 0.2
    %v7609 = vmul.f32 %v7447, 0.2
    %v7610 = vmul.f32 %v7448, 0.2
    %v7611 = vmul.f32 %v7449, 0.2
    %v7612 = vmul.f32 %v7450, 0.2
    %v7613 = vmul.f32 %v7451, 0.2
    %v7614 = vmul.f32 %v7452, 0.2
    %v7615 = vmul.f32 %v7453, 0.2
    %v7616 = vmul.f32 %v7454, 0.2
    %v7617 = vmul.f32 %v7455, 0.2
    %v7618 = vmul.f32 %v7456, 0.2
    %v7619 = vmul.f32 %v7457, 0.2
    %v7620 = vmul.f32 %v7458, 0.2
    %v7621 = vmul.f32 %v7459, 0.2
    %v7622 = vmul.f32 %v7460, 0.2
    %v7623 = vmul.f32 %v7461, 0.2
    %v7624 = vmul.f32 %v7462, 0.2
    %v7625 = vmul.f32 %v7463, 0.2
    %v7626 = vmul.f32 %v7464, 0.2
    %v7627 = vmul.f32 %v7465, 0.2
    %v7628 = vmul.f32 %v7466, 0.2
    %v7629 = vsel %vm7467, %v7386, %v7548
    %v7630 = vsel %vm7468, %v7387, %v7549
    %v7631 = vsel %vm7469, %v7388, %v7550
    %v7632 = vsel %vm7470, %v7389, %v7551
    %v7633 = vsel %vm7471, %v7390, %v7552
    %v7634 = vsel %vm7472, %v7391, %v7553
    %v7635 = vsel %vm7473, %v7392, %v7554
    %v7636 = vsel %vm7474, %v7393, %v7555
    %v7637 = vsel %vm7475, %v7394, %v7556
    %v7638 = vsel %vm7476, %v7395, %v7557
    %v7639 = vsel %vm7477, %v7396, %v7558
    %v7640 = vsel %vm7478, %v7397, %v7559
    %v7641 = vsel %vm7479, %v7398, %v7560
    %v7642 = vsel %vm7480, %v7399, %v7561
    %v7643 = vsel %vm7481, %v7400, %v7562
    %v7644 = vsel %vm7482, %v7401, %v7563
    %v7645 = vsel %vm7483, %v7402, %v7564
    %v7646 = vsel %vm7484, %v7403, %v7565
    %v7647 = vsel %vm7485, %v7404, %v7566
    %v7648 = vsel %vm7486, %v7405, %v7567
    %v7649 = vsel %vm7487, %v7406, %v7568
    %v7650 = vsel %vm7488, %v7407, %v7569
    %v7651 = vsel %vm7489, %v7408, %v7570
    %v7652 = vsel %vm7490, %v7409, %v7571
    %v7653 = vsel %vm7491, %v7410, %v7572
    %v7654 = vsel %vm7492, %v7411, %v7573
    %v7655 = vsel %vm7493, %v7412, %v7574
    %v7656 = vsel %vm7494, %v7413, %v7575
    %v7657 = vsel %vm7495, %v7414, %v7576
    %v7658 = vsel %vm7496, %v7415, %v7577
    %v7659 = vsel %vm7497, %v7416, %v7578
    %v7660 = vsel %vm7498, %v7417, %v7579
    %v7661 = vsel %vm7499, %v7418, %v7580
    %v7662 = vsel %vm7500, %v7419, %v7581
    %v7663 = vsel %vm7501, %v7420, %v7582
    %v7664 = vsel %vm7502, %v7421, %v7583
    %v7665 = vsel %vm7503, %v7422, %v7584
    %v7666 = vsel %vm7504, %v7423, %v7585
    %v7667 = vsel %vm7505, %v7424, %v7586
    %v7668 = vsel %vm7506, %v7425, %v7587
    %v7669 = vsel %vm7507, %v7426, %v7588
    %v7670 = vsel %vm7508, %v7427, %v7589
    %v7671 = vsel %vm7509, %v7428, %v7590
    %v7672 = vsel %vm7510, %v7429, %v7591
    %v7673 = vsel %vm7511, %v7430, %v7592
    %v7674 = vsel %vm7512, %v7431, %v7593
    %v7675 = vsel %vm7513, %v7432, %v7594
    %v7676 = vsel %vm7514, %v7433, %v7595
    %v7677 = vsel %vm7515, %v7434, %v7596
    %v7678 = vsel %vm7516, %v7435, %v7597
    %v7679 = vsel %vm7517, %v7436, %v7598
    %v7680 = vsel %vm7518, %v7437, %v7599
    %v7681 = vsel %vm7519, %v7438, %v7600
    %v7682 = vsel %vm7520, %v7439, %v7601
    %v7683 = vsel %vm7521, %v7440, %v7602
    %v7684 = vsel %vm7522, %v7441, %v7603
    %v7685 = vsel %vm7523, %v7442, %v7604
    %v7686 = vsel %vm7524, %v7443, %v7605
    %v7687 = vsel %vm7525, %v7444, %v7606
    %v7688 = vsel %vm7526, %v7445, %v7607
    %v7689 = vsel %vm7527, %v7446, %v7608
    %v7690 = vsel %vm7528, %v7447, %v7609
    %v7691 = vsel %vm7529, %v7448, %v7610
    %v7692 = vsel %vm7530, %v7449, %v7611
    %v7693 = vsel %vm7531, %v7450, %v7612
    %v7694 = vsel %vm7532, %v7451, %v7613
    %v7695 = vsel %vm7533, %v7452, %v7614
    %v7696 = vsel %vm7534, %v7453, %v7615
    %v7697 = vsel %vm7535, %v7454, %v7616
    %v7698 = vsel %vm7536, %v7455, %v7617
    %v7699 = vsel %vm7537, %v7456, %v7618
    %v7700 = vsel %vm7538, %v7457, %v7619
    %v7701 = vsel %vm7539, %v7458, %v7620
    %v7702 = vsel %vm7540, %v7459, %v7621
    %v7703 = vsel %vm7541, %v7460, %v7622
    %v7704 = vsel %vm7542, %v7461, %v7623
    %v7705 = vsel %vm7543, %v7462, %v7624
    %v7706 = vsel %vm7544, %v7463, %v7625
    %v7707 = vsel %vm7545, %v7464, %v7626
    %v7708 = vsel %vm7546, %v7465, %v7627
    %v7709 = vsel %vm7547, %v7466, %v7628
    %v7710 = vmul.f32 %v7629, %v6145
    %v7711 = vmul.f32 %v7630, %v6150
    %v7712 = vmul.f32 %v7631, %v6155
    %v7713 = vmul.f32 %v7632, %v6160
    %v7714 = vmul.f32 %v7633, %v6165
    %v7715 = vmul.f32 %v7634, %v6170
    %v7716 = vmul.f32 %v7635, %v6175
    %v7717 = vmul.f32 %v7636, %v6180
    %v7718 = vmul.f32 %v7637, %v6185
    %v7719 = vmul.f32 %v7638, %v6190
    %v7720 = vmul.f32 %v7639, %v6195
    %v7721 = vmul.f32 %v7640, %v6200
    %v7722 = vmul.f32 %v7641, %v6205
    %v7723 = vmul.f32 %v7642, %v6210
    %v7724 = vmul.f32 %v7643, %v6215
    %v7725 = vmul.f32 %v7644, %v6220
    %v7726 = vmul.f32 %v7645, %v6225
    %v7727 = vmul.f32 %v7646, %v6230
    %v7728 = vmul.f32 %v7647, %v6235
    %v7729 = vmul.f32 %v7648, %v6240
    %v7730 = vmul.f32 %v7649, %v6245
    %v7731 = vmul.f32 %v7650, %v6250
    %v7732 = vmul.f32 %v7651, %v6255
    %v7733 = vmul.f32 %v7652, %v6260
    %v7734 = vmul.f32 %v7653, %v6265
    %v7735 = vmul.f32 %v7654, %v6270
    %v7736 = vmul.f32 %v7655, %v6275
    %v7737 = vmul.f32 %v7656, %v6280
    %v7738 = vmul.f32 %v7657, %v6285
    %v7739 = vmul.f32 %v7658, %v6290
    %v7740 = vmul.f32 %v7659, %v6295
    %v7741 = vmul.f32 %v7660, %v6300
    %v7742 = vmul.f32 %v7661, %v6305
    %v7743 = vmul.f32 %v7662, %v6310
    %v7744 = vmul.f32 %v7663, %v6315
    %v7745 = vmul.f32 %v7664, %v6320
    %v7746 = vmul.f32 %v7665, %v6325
    %v7747 = vmul.f32 %v7666, %v6330
    %v7748 = vmul.f32 %v7667, %v6335
    %v7749 = vmul.f32 %v7668, %v6340
    %v7750 = vmul.f32 %v7669, %v6345
    %v7751 = vmul.f32 %v7670, %v6350
    %v7752 = vmul.f32 %v7671, %v6355
    %v7753 = vmul.f32 %v7672, %v6360
    %v7754 = vmul.f32 %v7673, %v6365
    %v7755 = vmul.f32 %v7674, %v6370
    %v7756 = vmul.f32 %v7675, %v6375
    %v7757 = vmul.f32 %v7676, %v6380
    %v7758 = vmul.f32 %v7677, %v6385
    %v7759 = vmul.f32 %v7678, %v6390
    %v7760 = vmul.f32 %v7679, %v6395
    %v7761 = vmul.f32 %v7680, %v6400
    %v7762 = vmul.f32 %v7681, %v6405
    %v7763 = vmul.f32 %v7682, %v6410
    %v7764 = vmul.f32 %v7683, %v6415
    %v7765 = vmul.f32 %v7684, %v6420
    %v7766 = vmul.f32 %v7685, %v6425
    %v7767 = vmul.f32 %v7686, %v6430
    %v7768 = vmul.f32 %v7687, %v6435
    %v7769 = vmul.f32 %v7688, %v6440
    %v7770 = vmul.f32 %v7689, %v6445
    %v7771 = vmul.f32 %v7690, %v6450
    %v7772 = vmul.f32 %v7691, %v6455
    %v7773 = vmul.f32 %v7692, %v6460
    %v7774 = vmul.f32 %v7693, %v6465
    %v7775 = vmul.f32 %v7694, %v6470
    %v7776 = vmul.f32 %v7695, %v6475
    %v7777 = vmul.f32 %v7696, %v6480
    %v7778 = vmul.f32 %v7697, %v6485
    %v7779 = vmul.f32 %v7698, %v6490
    %v7780 = vmul.f32 %v7699, %v6495
    %v7781 = vmul.f32 %v7700, %v6500
    %v7782 = vmul.f32 %v7701, %v6505
    %v7783 = vmul.f32 %v7702, %v6510
    %v7784 = vmul.f32 %v7703, %v6515
    %v7785 = vmul.f32 %v7704, %v6520
    %v7786 = vmul.f32 %v7705, %v6525
    %v7787 = vmul.f32 %v7706, %v6530
    %v7788 = vmul.f32 %v7707, %v6535
    %v7789 = vmul.f32 %v7708, %v6540
    %v7790 = vmul.f32 %v7709, %v6545
    %v7872 = vcombine.high %v7710, %v7710
    %v7874 = vunpack.c.l.s4 1983009808
    %v7875 = vunpack.c.0.s8 %v7874
    %v7876 = vlaneseq
    %v7877 = vshrl.u32 %v7876, 7
    %v7878 = vsub.s32 %v7875, %v7877
    %v7879 = vrot.slane %v7710, %v7878
    %v7881 = vunpack.c.l.s4 1983009808
    %v7882 = vunpack.c.0.s8 %v7881
    %v7883 = vlaneseq
    %v7884 = vshrl.u32 %v7883, 7
    %v7885 = vsub.s32 %v7882, %v7884
    %v7886 = vrot.slane %v7872, %v7885
    %v7887 = vcombine.high %v7879, %v7879
    %v7888 = vcombine.high %v7886, %v7886
    %v7889 = vcombine.high %v7711, %v7711
    %v7891 = vunpack.c.l.s4 1983009808
    %v7892 = vunpack.c.0.s8 %v7891
    %v7893 = vlaneseq
    %v7894 = vshrl.u32 %v7893, 7
    %v7895 = vsub.s32 %v7892, %v7894
    %v7896 = vrot.slane %v7711, %v7895
    %v7898 = vunpack.c.l.s4 1983009808
    %v7899 = vunpack.c.0.s8 %v7898
    %v7900 = vlaneseq
    %v7901 = vshrl.u32 %v7900, 7
    %v7902 = vsub.s32 %v7899, %v7901
    %v7903 = vrot.slane %v7889, %v7902
    %v7904 = vcombine.high %v7896, %v7896
    %v7905 = vcombine.high %v7903, %v7903
    %v7906 = vcombine.high %v7712, %v7712
    %v7908 = vunpack.c.l.s4 1983009808
    %v7909 = vunpack.c.0.s8 %v7908
    %v7910 = vlaneseq
    %v7911 = vshrl.u32 %v7910, 7
    %v7912 = vsub.s32 %v7909, %v7911
    %v7913 = vrot.slane %v7712, %v7912
    %v7915 = vunpack.c.l.s4 1983009808
    %v7916 = vunpack.c.0.s8 %v7915
    %v7917 = vlaneseq
    %v7918 = vshrl.u32 %v7917, 7
    %v7919 = vsub.s32 %v7916, %v7918
    %v7920 = vrot.slane %v7906, %v7919
    %v7921 = vcombine.high %v7913, %v7913
    %v7922 = vcombine.high %v7920, %v7920
    %v7923 = vcombine.high %v7713, %v7713
    %v7925 = vunpack.c.l.s4 1983009808
    %v7926 = vunpack.c.0.s8 %v7925
    %v7927 = vlaneseq
    %v7928 = vshrl.u32 %v7927, 7
    %v7929 = vsub.s32 %v7926, %v7928
    %v7930 = vrot.slane %v7713, %v7929
    %v7932 = vunpack.c.l.s4 1983009808
    %v7933 = vunpack.c.0.s8 %v7932
    %v7934 = vlaneseq
    %v7935 = vshrl.u32 %v7934, 7
    %v7936 = vsub.s32 %v7933, %v7935
    %v7937 = vrot.slane %v7923, %v7936
    %v7938 = vcombine.high %v7930, %v7930
    %v7939 = vcombine.high %v7937, %v7937
    %v7940 = vcombine.high %v7714, %v7714
    %v7942 = vunpack.c.l.s4 1983009808
    %v7943 = vunpack.c.0.s8 %v7942
    %v7944 = vlaneseq
    %v7945 = vshrl.u32 %v7944, 7
    %v7946 = vsub.s32 %v7943, %v7945
    %v7947 = vrot.slane %v7714, %v7946
    %v7949 = vunpack.c.l.s4 1983009808
    %v7950 = vunpack.c.0.s8 %v7949
    %v7951 = vlaneseq
    %v7952 = vshrl.u32 %v7951, 7
    %v7953 = vsub.s32 %v7950, %v7952
    %v7954 = vrot.slane %v7940, %v7953
    %v7955 = vcombine.high %v7947, %v7947
    %v7956 = vcombine.high %v7954, %v7954
    %v7957 = vcombine.high %v7715, %v7715
    %v7959 = vunpack.c.l.s4 1983009808
    %v7960 = vunpack.c.0.s8 %v7959
    %v7961 = vlaneseq
    %v7962 = vshrl.u32 %v7961, 7
    %v7963 = vsub.s32 %v7960, %v7962
    %v7964 = vrot.slane %v7715, %v7963
    %v7966 = vunpack.c.l.s4 1983009808
    %v7967 = vunpack.c.0.s8 %v7966
    %v7968 = vlaneseq
    %v7969 = vshrl.u32 %v7968, 7
    %v7970 = vsub.s32 %v7967, %v7969
    %v7971 = vrot.slane %v7957, %v7970
    %v7972 = vcombine.high %v7964, %v7964
    %v7973 = vcombine.high %v7971, %v7971
    %v7974 = vcombine.high %v7716, %v7716
    %v7976 = vunpack.c.l.s4 1983009808
    %v7977 = vunpack.c.0.s8 %v7976
    %v7978 = vlaneseq
    %v7979 = vshrl.u32 %v7978, 7
    %v7980 = vsub.s32 %v7977, %v7979
    %v7981 = vrot.slane %v7716, %v7980
    %v7983 = vunpack.c.l.s4 1983009808
    %v7984 = vunpack.c.0.s8 %v7983
    %v7985 = vlaneseq
    %v7986 = vshrl.u32 %v7985, 7
    %v7987 = vsub.s32 %v7984, %v7986
    %v7988 = vrot.slane %v7974, %v7987
    %v7989 = vcombine.high %v7981, %v7981
    %v7990 = vcombine.high %v7988, %v7988
    %v7991 = vcombine.high %v7717, %v7717
    %v7993 = vunpack.c.l.s4 1983009808
    %v7994 = vunpack.c.0.s8 %v7993
    %v7995 = vlaneseq
    %v7996 = vshrl.u32 %v7995, 7
    %v7997 = vsub.s32 %v7994, %v7996
    %v7998 = vrot.slane %v7717, %v7997
    %v8000 = vunpack.c.l.s4 1983009808
    %v8001 = vunpack.c.0.s8 %v8000
    %v8002 = vlaneseq
    %v8003 = vshrl.u32 %v8002, 7
    %v8004 = vsub.s32 %v8001, %v8003
    %v8005 = vrot.slane %v7991, %v8004
    %v8006 = vcombine.high %v7998, %v7998
    %v8007 = vcombine.high %v8005, %v8005
    %v8008 = vcombine.high %v7718, %v7718
    %v8010 = vunpack.c.l.s4 1983009808
    %v8011 = vunpack.c.0.s8 %v8010
    %v8012 = vlaneseq
    %v8013 = vshrl.u32 %v8012, 7
    %v8014 = vsub.s32 %v8011, %v8013
    %v8015 = vrot.slane %v7718, %v8014
    %v8017 = vunpack.c.l.s4 1983009808
    %v8018 = vunpack.c.0.s8 %v8017
    %v8019 = vlaneseq
    %v8020 = vshrl.u32 %v8019, 7
    %v8021 = vsub.s32 %v8018, %v8020
    %v8022 = vrot.slane %v8008, %v8021
    %v8023 = vcombine.high %v8015, %v8015
    %v8024 = vcombine.high %v8022, %v8022
    %v8025 = vcombine.high %v7719, %v7719
    %v8027 = vunpack.c.l.s4 1983009808
    %v8028 = vunpack.c.0.s8 %v8027
    %v8029 = vlaneseq
    %v8030 = vshrl.u32 %v8029, 7
    %v8031 = vsub.s32 %v8028, %v8030
    %v8032 = vrot.slane %v7719, %v8031
    %v8034 = vunpack.c.l.s4 1983009808
    %v8035 = vunpack.c.0.s8 %v8034
    %v8036 = vlaneseq
    %v8037 = vshrl.u32 %v8036, 7
    %v8038 = vsub.s32 %v8035, %v8037
    %v8039 = vrot.slane %v8025, %v8038
    %v8040 = vcombine.high %v8032, %v8032
    %v8041 = vcombine.high %v8039, %v8039
    %v8042 = vcombine.high %v7720, %v7720
    %v8044 = vunpack.c.l.s4 1983009808
    %v8045 = vunpack.c.0.s8 %v8044
    %v8046 = vlaneseq
    %v8047 = vshrl.u32 %v8046, 7
    %v8048 = vsub.s32 %v8045, %v8047
    %v8049 = vrot.slane %v7720, %v8048
    %v8051 = vunpack.c.l.s4 1983009808
    %v8052 = vunpack.c.0.s8 %v8051
    %v8053 = vlaneseq
    %v8054 = vshrl.u32 %v8053, 7
    %v8055 = vsub.s32 %v8052, %v8054
    %v8056 = vrot.slane %v8042, %v8055
    %v8057 = vcombine.high %v8049, %v8049
    %v8058 = vcombine.high %v8056, %v8056
    %v8059 = vcombine.high %v7721, %v7721
    %v8061 = vunpack.c.l.s4 1983009808
    %v8062 = vunpack.c.0.s8 %v8061
    %v8063 = vlaneseq
    %v8064 = vshrl.u32 %v8063, 7
    %v8065 = vsub.s32 %v8062, %v8064
    %v8066 = vrot.slane %v7721, %v8065
    %v8068 = vunpack.c.l.s4 1983009808
    %v8069 = vunpack.c.0.s8 %v8068
    %v8070 = vlaneseq
    %v8071 = vshrl.u32 %v8070, 7
    %v8072 = vsub.s32 %v8069, %v8071
    %v8073 = vrot.slane %v8059, %v8072
    %v8074 = vcombine.high %v8066, %v8066
    %v8075 = vcombine.high %v8073, %v8073
    %v8076 = vcombine.high %v7722, %v7722
    %v8078 = vunpack.c.l.s4 1983009808
    %v8079 = vunpack.c.0.s8 %v8078
    %v8080 = vlaneseq
    %v8081 = vshrl.u32 %v8080, 7
    %v8082 = vsub.s32 %v8079, %v8081
    %v8083 = vrot.slane %v7722, %v8082
    %v8085 = vunpack.c.l.s4 1983009808
    %v8086 = vunpack.c.0.s8 %v8085
    %v8087 = vlaneseq
    %v8088 = vshrl.u32 %v8087, 7
    %v8089 = vsub.s32 %v8086, %v8088
    %v8090 = vrot.slane %v8076, %v8089
    %v8091 = vcombine.high %v8083, %v8083
    %v8092 = vcombine.high %v8090, %v8090
    %v8093 = vcombine.high %v7723, %v7723
    %v8095 = vunpack.c.l.s4 1983009808
    %v8096 = vunpack.c.0.s8 %v8095
    %v8097 = vlaneseq
    %v8098 = vshrl.u32 %v8097, 7
    %v8099 = vsub.s32 %v8096, %v8098
    %v8100 = vrot.slane %v7723, %v8099
    %v8102 = vunpack.c.l.s4 1983009808
    %v8103 = vunpack.c.0.s8 %v8102
    %v8104 = vlaneseq
    %v8105 = vshrl.u32 %v8104, 7
    %v8106 = vsub.s32 %v8103, %v8105
    %v8107 = vrot.slane %v8093, %v8106
    %v8108 = vcombine.high %v8100, %v8100
    %v8109 = vcombine.high %v8107, %v8107
    %v8110 = vcombine.high %v7724, %v7724
    %v8112 = vunpack.c.l.s4 1983009808
    %v8113 = vunpack.c.0.s8 %v8112
    %v8114 = vlaneseq
    %v8115 = vshrl.u32 %v8114, 7
    %v8116 = vsub.s32 %v8113, %v8115
    %v8117 = vrot.slane %v7724, %v8116
    %v8119 = vunpack.c.l.s4 1983009808
    %v8120 = vunpack.c.0.s8 %v8119
    %v8121 = vlaneseq
    %v8122 = vshrl.u32 %v8121, 7
    %v8123 = vsub.s32 %v8120, %v8122
    %v8124 = vrot.slane %v8110, %v8123
    %v8125 = vcombine.high %v8117, %v8117
    %v8126 = vcombine.high %v8124, %v8124
    %v8127 = vcombine.high %v7725, %v7725
    %v8129 = vunpack.c.l.s4 1983009808
    %v8130 = vunpack.c.0.s8 %v8129
    %v8131 = vlaneseq
    %v8132 = vshrl.u32 %v8131, 7
    %v8133 = vsub.s32 %v8130, %v8132
    %v8134 = vrot.slane %v7725, %v8133
    %v8136 = vunpack.c.l.s4 1983009808
    %v8137 = vunpack.c.0.s8 %v8136
    %v8138 = vlaneseq
    %v8139 = vshrl.u32 %v8138, 7
    %v8140 = vsub.s32 %v8137, %v8139
    %v8141 = vrot.slane %v8127, %v8140
    %v8142 = vcombine.high %v8134, %v8134
    %v8143 = vcombine.high %v8141, %v8141
    %v8144 = vcombine.high %v7726, %v7726
    %v8146 = vunpack.c.l.s4 1983009808
    %v8147 = vunpack.c.0.s8 %v8146
    %v8148 = vlaneseq
    %v8149 = vshrl.u32 %v8148, 7
    %v8150 = vsub.s32 %v8147, %v8149
    %v8151 = vrot.slane %v7726, %v8150
    %v8153 = vunpack.c.l.s4 1983009808
    %v8154 = vunpack.c.0.s8 %v8153
    %v8155 = vlaneseq
    %v8156 = vshrl.u32 %v8155, 7
    %v8157 = vsub.s32 %v8154, %v8156
    %v8158 = vrot.slane %v8144, %v8157
    %v8159 = vcombine.high %v8151, %v8151
    %v8160 = vcombine.high %v8158, %v8158
    %v8161 = vcombine.high %v7727, %v7727
    %v8163 = vunpack.c.l.s4 1983009808
    %v8164 = vunpack.c.0.s8 %v8163
    %v8165 = vlaneseq
    %v8166 = vshrl.u32 %v8165, 7
    %v8167 = vsub.s32 %v8164, %v8166
    %v8168 = vrot.slane %v7727, %v8167
    %v8170 = vunpack.c.l.s4 1983009808
    %v8171 = vunpack.c.0.s8 %v8170
    %v8172 = vlaneseq
    %v8173 = vshrl.u32 %v8172, 7
    %v8174 = vsub.s32 %v8171, %v8173
    %v8175 = vrot.slane %v8161, %v8174
    %v8176 = vcombine.high %v8168, %v8168
    %v8177 = vcombine.high %v8175, %v8175
    %v8178 = vcombine.high %v7728, %v7728
    %v8180 = vunpack.c.l.s4 1983009808
    %v8181 = vunpack.c.0.s8 %v8180
    %v8182 = vlaneseq
    %v8183 = vshrl.u32 %v8182, 7
    %v8184 = vsub.s32 %v8181, %v8183
    %v8185 = vrot.slane %v7728, %v8184
    %v8187 = vunpack.c.l.s4 1983009808
    %v8188 = vunpack.c.0.s8 %v8187
    %v8189 = vlaneseq
    %v8190 = vshrl.u32 %v8189, 7
    %v8191 = vsub.s32 %v8188, %v8190
    %v8192 = vrot.slane %v8178, %v8191
    %v8193 = vcombine.high %v8185, %v8185
    %v8194 = vcombine.high %v8192, %v8192
    %v8195 = vcombine.high %v7729, %v7729
    %v8197 = vunpack.c.l.s4 1983009808
    %v8198 = vunpack.c.0.s8 %v8197
    %v8199 = vlaneseq
    %v8200 = vshrl.u32 %v8199, 7
    %v8201 = vsub.s32 %v8198, %v8200
    %v8202 = vrot.slane %v7729, %v8201
    %v8204 = vunpack.c.l.s4 1983009808
    %v8205 = vunpack.c.0.s8 %v8204
    %v8206 = vlaneseq
    %v8207 = vshrl.u32 %v8206, 7
    %v8208 = vsub.s32 %v8205, %v8207
    %v8209 = vrot.slane %v8195, %v8208
    %v8210 = vcombine.high %v8202, %v8202
    %v8211 = vcombine.high %v8209, %v8209
    %v8212 = vcombine.high %v7730, %v7730
    %v8214 = vunpack.c.l.s4 1983009808
    %v8215 = vunpack.c.0.s8 %v8214
    %v8216 = vlaneseq
    %v8217 = vshrl.u32 %v8216, 7
    %v8218 = vsub.s32 %v8215, %v8217
    %v8219 = vrot.slane %v7730, %v8218
    %v8221 = vunpack.c.l.s4 1983009808
    %v8222 = vunpack.c.0.s8 %v8221
    %v8223 = vlaneseq
    %v8224 = vshrl.u32 %v8223, 7
    %v8225 = vsub.s32 %v8222, %v8224
    %v8226 = vrot.slane %v8212, %v8225
    %v8227 = vcombine.high %v8219, %v8219
    %v8228 = vcombine.high %v8226, %v8226
    %v8229 = vcombine.high %v7731, %v7731
    %v8231 = vunpack.c.l.s4 1983009808
    %v8232 = vunpack.c.0.s8 %v8231
    %v8233 = vlaneseq
    %v8234 = vshrl.u32 %v8233, 7
    %v8235 = vsub.s32 %v8232, %v8234
    %v8236 = vrot.slane %v7731, %v8235
    %v8238 = vunpack.c.l.s4 1983009808
    %v8239 = vunpack.c.0.s8 %v8238
    %v8240 = vlaneseq
    %v8241 = vshrl.u32 %v8240, 7
    %v8242 = vsub.s32 %v8239, %v8241
    %v8243 = vrot.slane %v8229, %v8242
    %v8244 = vcombine.high %v8236, %v8236
    %v8245 = vcombine.high %v8243, %v8243
    %v8246 = vcombine.high %v7732, %v7732
    %v8248 = vunpack.c.l.s4 1983009808
    %v8249 = vunpack.c.0.s8 %v8248
    %v8250 = vlaneseq
    %v8251 = vshrl.u32 %v8250, 7
    %v8252 = vsub.s32 %v8249, %v8251
    %v8253 = vrot.slane %v7732, %v8252
    %v8255 = vunpack.c.l.s4 1983009808
    %v8256 = vunpack.c.0.s8 %v8255
    %v8257 = vlaneseq
    %v8258 = vshrl.u32 %v8257, 7
    %v8259 = vsub.s32 %v8256, %v8258
    %v8260 = vrot.slane %v8246, %v8259
    %v8261 = vcombine.high %v8253, %v8253
    %v8262 = vcombine.high %v8260, %v8260
    %v8263 = vcombine.high %v7733, %v7733
    %v8265 = vunpack.c.l.s4 1983009808
    %v8266 = vunpack.c.0.s8 %v8265
    %v8267 = vlaneseq
    %v8268 = vshrl.u32 %v8267, 7
    %v8269 = vsub.s32 %v8266, %v8268
    %v8270 = vrot.slane %v7733, %v8269
    %v8272 = vunpack.c.l.s4 1983009808
    %v8273 = vunpack.c.0.s8 %v8272
    %v8274 = vlaneseq
    %v8275 = vshrl.u32 %v8274, 7
    %v8276 = vsub.s32 %v8273, %v8275
    %v8277 = vrot.slane %v8263, %v8276
    %v8278 = vcombine.high %v8270, %v8270
    %v8279 = vcombine.high %v8277, %v8277
    %v8280 = vcombine.high %v7734, %v7734
    %v8282 = vunpack.c.l.s4 1983009808
    %v8283 = vunpack.c.0.s8 %v8282
    %v8284 = vlaneseq
    %v8285 = vshrl.u32 %v8284, 7
    %v8286 = vsub.s32 %v8283, %v8285
    %v8287 = vrot.slane %v7734, %v8286
    %v8289 = vunpack.c.l.s4 1983009808
    %v8290 = vunpack.c.0.s8 %v8289
    %v8291 = vlaneseq
    %v8292 = vshrl.u32 %v8291, 7
    %v8293 = vsub.s32 %v8290, %v8292
    %v8294 = vrot.slane %v8280, %v8293
    %v8295 = vcombine.high %v8287, %v8287
    %v8296 = vcombine.high %v8294, %v8294
    %v8297 = vcombine.high %v7735, %v7735
    %v8299 = vunpack.c.l.s4 1983009808
    %v8300 = vunpack.c.0.s8 %v8299
    %v8301 = vlaneseq
    %v8302 = vshrl.u32 %v8301, 7
    %v8303 = vsub.s32 %v8300, %v8302
    %v8304 = vrot.slane %v7735, %v8303
    %v8306 = vunpack.c.l.s4 1983009808
    %v8307 = vunpack.c.0.s8 %v8306
    %v8308 = vlaneseq
    %v8309 = vshrl.u32 %v8308, 7
    %v8310 = vsub.s32 %v8307, %v8309
    %v8311 = vrot.slane %v8297, %v8310
    %v8312 = vcombine.high %v8304, %v8304
    %v8313 = vcombine.high %v8311, %v8311
    %v8314 = vcombine.high %v7736, %v7736
    %v8316 = vunpack.c.l.s4 1983009808
    %v8317 = vunpack.c.0.s8 %v8316
    %v8318 = vlaneseq
    %v8319 = vshrl.u32 %v8318, 7
    %v8320 = vsub.s32 %v8317, %v8319
    %v8321 = vrot.slane %v7736, %v8320
    %v8323 = vunpack.c.l.s4 1983009808
    %v8324 = vunpack.c.0.s8 %v8323
    %v8325 = vlaneseq
    %v8326 = vshrl.u32 %v8325, 7
    %v8327 = vsub.s32 %v8324, %v8326
    %v8328 = vrot.slane %v8314, %v8327
    %v8329 = vcombine.high %v8321, %v8321
    %v8330 = vcombine.high %v8328, %v8328
    %v8331 = vcombine.high %v7737, %v7737
    %v8333 = vunpack.c.l.s4 1983009808
    %v8334 = vunpack.c.0.s8 %v8333
    %v8335 = vlaneseq
    %v8336 = vshrl.u32 %v8335, 7
    %v8337 = vsub.s32 %v8334, %v8336
    %v8338 = vrot.slane %v7737, %v8337
    %v8340 = vunpack.c.l.s4 1983009808
    %v8341 = vunpack.c.0.s8 %v8340
    %v8342 = vlaneseq
    %v8343 = vshrl.u32 %v8342, 7
    %v8344 = vsub.s32 %v8341, %v8343
    %v8345 = vrot.slane %v8331, %v8344
    %v8346 = vcombine.high %v8338, %v8338
    %v8347 = vcombine.high %v8345, %v8345
    %v8348 = vcombine.high %v7738, %v7738
    %v8350 = vunpack.c.l.s4 1983009808
    %v8351 = vunpack.c.0.s8 %v8350
    %v8352 = vlaneseq
    %v8353 = vshrl.u32 %v8352, 7
    %v8354 = vsub.s32 %v8351, %v8353
    %v8355 = vrot.slane %v7738, %v8354
    %v8357 = vunpack.c.l.s4 1983009808
    %v8358 = vunpack.c.0.s8 %v8357
    %v8359 = vlaneseq
    %v8360 = vshrl.u32 %v8359, 7
    %v8361 = vsub.s32 %v8358, %v8360
    %v8362 = vrot.slane %v8348, %v8361
    %v8363 = vcombine.high %v8355, %v8355
    %v8364 = vcombine.high %v8362, %v8362
    %v8365 = vcombine.high %v7739, %v7739
    %v8367 = vunpack.c.l.s4 1983009808
    %v8368 = vunpack.c.0.s8 %v8367
    %v8369 = vlaneseq
    %v8370 = vshrl.u32 %v8369, 7
    %v8371 = vsub.s32 %v8368, %v8370
    %v8372 = vrot.slane %v7739, %v8371
    %v8374 = vunpack.c.l.s4 1983009808
    %v8375 = vunpack.c.0.s8 %v8374
    %v8376 = vlaneseq
    %v8377 = vshrl.u32 %v8376, 7
    %v8378 = vsub.s32 %v8375, %v8377
    %v8379 = vrot.slane %v8365, %v8378
    %v8380 = vcombine.high %v8372, %v8372
    %v8381 = vcombine.high %v8379, %v8379
    %v8382 = vcombine.high %v7740, %v7740
    %v8384 = vunpack.c.l.s4 1983009808
    %v8385 = vunpack.c.0.s8 %v8384
    %v8386 = vlaneseq
    %v8387 = vshrl.u32 %v8386, 7
    %v8388 = vsub.s32 %v8385, %v8387
    %v8389 = vrot.slane %v7740, %v8388
    %v8391 = vunpack.c.l.s4 1983009808
    %v8392 = vunpack.c.0.s8 %v8391
    %v8393 = vlaneseq
    %v8394 = vshrl.u32 %v8393, 7
    %v8395 = vsub.s32 %v8392, %v8394
    %v8396 = vrot.slane %v8382, %v8395
    %v8397 = vcombine.high %v8389, %v8389
    %v8398 = vcombine.high %v8396, %v8396
    %v8399 = vcombine.high %v7741, %v7741
    %v8401 = vunpack.c.l.s4 1983009808
    %v8402 = vunpack.c.0.s8 %v8401
    %v8403 = vlaneseq
    %v8404 = vshrl.u32 %v8403, 7
    %v8405 = vsub.s32 %v8402, %v8404
    %v8406 = vrot.slane %v7741, %v8405
    %v8408 = vunpack.c.l.s4 1983009808
    %v8409 = vunpack.c.0.s8 %v8408
    %v8410 = vlaneseq
    %v8411 = vshrl.u32 %v8410, 7
    %v8412 = vsub.s32 %v8409, %v8411
    %v8413 = vrot.slane %v8399, %v8412
    %v8414 = vcombine.high %v8406, %v8406
    %v8415 = vcombine.high %v8413, %v8413
    %v8416 = vcombine.high %v7742, %v7742
    %v8418 = vunpack.c.l.s4 1983009808
    %v8419 = vunpack.c.0.s8 %v8418
    %v8420 = vlaneseq
    %v8421 = vshrl.u32 %v8420, 7
    %v8422 = vsub.s32 %v8419, %v8421
    %v8423 = vrot.slane %v7742, %v8422
    %v8425 = vunpack.c.l.s4 1983009808
    %v8426 = vunpack.c.0.s8 %v8425
    %v8427 = vlaneseq
    %v8428 = vshrl.u32 %v8427, 7
    %v8429 = vsub.s32 %v8426, %v8428
    %v8430 = vrot.slane %v8416, %v8429
    %v8431 = vcombine.high %v8423, %v8423
    %v8432 = vcombine.high %v8430, %v8430
    %v8433 = vcombine.high %v7743, %v7743
    %v8435 = vunpack.c.l.s4 1983009808
    %v8436 = vunpack.c.0.s8 %v8435
    %v8437 = vlaneseq
    %v8438 = vshrl.u32 %v8437, 7
    %v8439 = vsub.s32 %v8436, %v8438
    %v8440 = vrot.slane %v7743, %v8439
    %v8442 = vunpack.c.l.s4 1983009808
    %v8443 = vunpack.c.0.s8 %v8442
    %v8444 = vlaneseq
    %v8445 = vshrl.u32 %v8444, 7
    %v8446 = vsub.s32 %v8443, %v8445
    %v8447 = vrot.slane %v8433, %v8446
    %v8448 = vcombine.high %v8440, %v8440
    %v8449 = vcombine.high %v8447, %v8447
    %v8450 = vcombine.high %v7744, %v7744
    %v8452 = vunpack.c.l.s4 1983009808
    %v8453 = vunpack.c.0.s8 %v8452
    %v8454 = vlaneseq
    %v8455 = vshrl.u32 %v8454, 7
    %v8456 = vsub.s32 %v8453, %v8455
    %v8457 = vrot.slane %v7744, %v8456
    %v8459 = vunpack.c.l.s4 1983009808
    %v8460 = vunpack.c.0.s8 %v8459
    %v8461 = vlaneseq
    %v8462 = vshrl.u32 %v8461, 7
    %v8463 = vsub.s32 %v8460, %v8462
    %v8464 = vrot.slane %v8450, %v8463
    %v8465 = vcombine.high %v8457, %v8457
    %v8466 = vcombine.high %v8464, %v8464
    %v8467 = vcombine.high %v7745, %v7745
    %v8469 = vunpack.c.l.s4 1983009808
    %v8470 = vunpack.c.0.s8 %v8469
    %v8471 = vlaneseq
    %v8472 = vshrl.u32 %v8471, 7
    %v8473 = vsub.s32 %v8470, %v8472
    %v8474 = vrot.slane %v7745, %v8473
    %v8476 = vunpack.c.l.s4 1983009808
    %v8477 = vunpack.c.0.s8 %v8476
    %v8478 = vlaneseq
    %v8479 = vshrl.u32 %v8478, 7
    %v8480 = vsub.s32 %v8477, %v8479
    %v8481 = vrot.slane %v8467, %v8480
    %v8482 = vcombine.high %v8474, %v8474
    %v8483 = vcombine.high %v8481, %v8481
    %v8484 = vcombine.high %v7746, %v7746
    %v8486 = vunpack.c.l.s4 1983009808
    %v8487 = vunpack.c.0.s8 %v8486
    %v8488 = vlaneseq
    %v8489 = vshrl.u32 %v8488, 7
    %v8490 = vsub.s32 %v8487, %v8489
    %v8491 = vrot.slane %v7746, %v8490
    %v8493 = vunpack.c.l.s4 1983009808
    %v8494 = vunpack.c.0.s8 %v8493
    %v8495 = vlaneseq
    %v8496 = vshrl.u32 %v8495, 7
    %v8497 = vsub.s32 %v8494, %v8496
    %v8498 = vrot.slane %v8484, %v8497
    %v8499 = vcombine.high %v8491, %v8491
    %v8500 = vcombine.high %v8498, %v8498
    %v8501 = vcombine.high %v7747, %v7747
    %v8503 = vunpack.c.l.s4 1983009808
    %v8504 = vunpack.c.0.s8 %v8503
    %v8505 = vlaneseq
    %v8506 = vshrl.u32 %v8505, 7
    %v8507 = vsub.s32 %v8504, %v8506
    %v8508 = vrot.slane %v7747, %v8507
    %v8510 = vunpack.c.l.s4 1983009808
    %v8511 = vunpack.c.0.s8 %v8510
    %v8512 = vlaneseq
    %v8513 = vshrl.u32 %v8512, 7
    %v8514 = vsub.s32 %v8511, %v8513
    %v8515 = vrot.slane %v8501, %v8514
    %v8516 = vcombine.high %v8508, %v8508
    %v8517 = vcombine.high %v8515, %v8515
    %v8518 = vcombine.high %v7748, %v7748
    %v8520 = vunpack.c.l.s4 1983009808
    %v8521 = vunpack.c.0.s8 %v8520
    %v8522 = vlaneseq
    %v8523 = vshrl.u32 %v8522, 7
    %v8524 = vsub.s32 %v8521, %v8523
    %v8525 = vrot.slane %v7748, %v8524
    %v8527 = vunpack.c.l.s4 1983009808
    %v8528 = vunpack.c.0.s8 %v8527
    %v8529 = vlaneseq
    %v8530 = vshrl.u32 %v8529, 7
    %v8531 = vsub.s32 %v8528, %v8530
    %v8532 = vrot.slane %v8518, %v8531
    %v8533 = vcombine.high %v8525, %v8525
    %v8534 = vcombine.high %v8532, %v8532
    %v8535 = vcombine.high %v7749, %v7749
    %v8537 = vunpack.c.l.s4 1983009808
    %v8538 = vunpack.c.0.s8 %v8537
    %v8539 = vlaneseq
    %v8540 = vshrl.u32 %v8539, 7
    %v8541 = vsub.s32 %v8538, %v8540
    %v8542 = vrot.slane %v7749, %v8541
    %v8544 = vunpack.c.l.s4 1983009808
    %v8545 = vunpack.c.0.s8 %v8544
    %v8546 = vlaneseq
    %v8547 = vshrl.u32 %v8546, 7
    %v8548 = vsub.s32 %v8545, %v8547
    %v8549 = vrot.slane %v8535, %v8548
    %v8550 = vcombine.high %v8542, %v8542
    %v8551 = vcombine.high %v8549, %v8549
    %v8552 = vcombine.high %v7750, %v7750
    %v8554 = vunpack.c.l.s4 1983009808
    %v8555 = vunpack.c.0.s8 %v8554
    %v8556 = vlaneseq
    %v8557 = vshrl.u32 %v8556, 7
    %v8558 = vsub.s32 %v8555, %v8557
    %v8559 = vrot.slane %v7750, %v8558
    %v8561 = vunpack.c.l.s4 1983009808
    %v8562 = vunpack.c.0.s8 %v8561
    %v8563 = vlaneseq
    %v8564 = vshrl.u32 %v8563, 7
    %v8565 = vsub.s32 %v8562, %v8564
    %v8566 = vrot.slane %v8552, %v8565
    %v8567 = vcombine.high %v8559, %v8559
    %v8568 = vcombine.high %v8566, %v8566
    %v8569 = vcombine.high %v7751, %v7751
    %v8571 = vunpack.c.l.s4 1983009808
    %v8572 = vunpack.c.0.s8 %v8571
    %v8573 = vlaneseq
    %v8574 = vshrl.u32 %v8573, 7
    %v8575 = vsub.s32 %v8572, %v8574
    %v8576 = vrot.slane %v7751, %v8575
    %v8578 = vunpack.c.l.s4 1983009808
    %v8579 = vunpack.c.0.s8 %v8578
    %v8580 = vlaneseq
    %v8581 = vshrl.u32 %v8580, 7
    %v8582 = vsub.s32 %v8579, %v8581
    %v8583 = vrot.slane %v8569, %v8582
    %v8584 = vcombine.high %v8576, %v8576
    %v8585 = vcombine.high %v8583, %v8583
    %v8586 = vcombine.high %v7752, %v7752
    %v8588 = vunpack.c.l.s4 1983009808
    %v8589 = vunpack.c.0.s8 %v8588
    %v8590 = vlaneseq
    %v8591 = vshrl.u32 %v8590, 7
    %v8592 = vsub.s32 %v8589, %v8591
    %v8593 = vrot.slane %v7752, %v8592
    %v8595 = vunpack.c.l.s4 1983009808
    %v8596 = vunpack.c.0.s8 %v8595
    %v8597 = vlaneseq
    %v8598 = vshrl.u32 %v8597, 7
    %v8599 = vsub.s32 %v8596, %v8598
    %v8600 = vrot.slane %v8586, %v8599
    %v8601 = vcombine.high %v8593, %v8593
    %v8602 = vcombine.high %v8600, %v8600
    %v8603 = vcombine.high %v7753, %v7753
    %v8605 = vunpack.c.l.s4 1983009808
    %v8606 = vunpack.c.0.s8 %v8605
    %v8607 = vlaneseq
    %v8608 = vshrl.u32 %v8607, 7
    %v8609 = vsub.s32 %v8606, %v8608
    %v8610 = vrot.slane %v7753, %v8609
    %v8612 = vunpack.c.l.s4 1983009808
    %v8613 = vunpack.c.0.s8 %v8612
    %v8614 = vlaneseq
    %v8615 = vshrl.u32 %v8614, 7
    %v8616 = vsub.s32 %v8613, %v8615
    %v8617 = vrot.slane %v8603, %v8616
    %v8618 = vcombine.high %v8610, %v8610
    %v8619 = vcombine.high %v8617, %v8617
    %v8620 = vcombine.high %v7754, %v7754
    %v8622 = vunpack.c.l.s4 1983009808
    %v8623 = vunpack.c.0.s8 %v8622
    %v8624 = vlaneseq
    %v8625 = vshrl.u32 %v8624, 7
    %v8626 = vsub.s32 %v8623, %v8625
    %v8627 = vrot.slane %v7754, %v8626
    %v8629 = vunpack.c.l.s4 1983009808
    %v8630 = vunpack.c.0.s8 %v8629
    %v8631 = vlaneseq
    %v8632 = vshrl.u32 %v8631, 7
    %v8633 = vsub.s32 %v8630, %v8632
    %v8634 = vrot.slane %v8620, %v8633
    %v8635 = vcombine.high %v8627, %v8627
    %v8636 = vcombine.high %v8634, %v8634
    %v8637 = vcombine.high %v7755, %v7755
    %v8639 = vunpack.c.l.s4 1983009808
    %v8640 = vunpack.c.0.s8 %v8639
    %v8641 = vlaneseq
    %v8642 = vshrl.u32 %v8641, 7
    %v8643 = vsub.s32 %v8640, %v8642
    %v8644 = vrot.slane %v7755, %v8643
    %v8646 = vunpack.c.l.s4 1983009808
    %v8647 = vunpack.c.0.s8 %v8646
    %v8648 = vlaneseq
    %v8649 = vshrl.u32 %v8648, 7
    %v8650 = vsub.s32 %v8647, %v8649
    %v8651 = vrot.slane %v8637, %v8650
    %v8652 = vcombine.high %v8644, %v8644
    %v8653 = vcombine.high %v8651, %v8651
    %v8654 = vcombine.high %v7756, %v7756
    %v8656 = vunpack.c.l.s4 1983009808
    %v8657 = vunpack.c.0.s8 %v8656
    %v8658 = vlaneseq
    %v8659 = vshrl.u32 %v8658, 7
    %v8660 = vsub.s32 %v8657, %v8659
    %v8661 = vrot.slane %v7756, %v8660
    %v8663 = vunpack.c.l.s4 1983009808
    %v8664 = vunpack.c.0.s8 %v8663
    %v8665 = vlaneseq
    %v8666 = vshrl.u32 %v8665, 7
    %v8667 = vsub.s32 %v8664, %v8666
    %v8668 = vrot.slane %v8654, %v8667
    %v8669 = vcombine.high %v8661, %v8661
    %v8670 = vcombine.high %v8668, %v8668
    %v8671 = vcombine.high %v7757, %v7757
    %v8673 = vunpack.c.l.s4 1983009808
    %v8674 = vunpack.c.0.s8 %v8673
    %v8675 = vlaneseq
    %v8676 = vshrl.u32 %v8675, 7
    %v8677 = vsub.s32 %v8674, %v8676
    %v8678 = vrot.slane %v7757, %v8677
    %v8680 = vunpack.c.l.s4 1983009808
    %v8681 = vunpack.c.0.s8 %v8680
    %v8682 = vlaneseq
    %v8683 = vshrl.u32 %v8682, 7
    %v8684 = vsub.s32 %v8681, %v8683
    %v8685 = vrot.slane %v8671, %v8684
    %v8686 = vcombine.high %v8678, %v8678
    %v8687 = vcombine.high %v8685, %v8685
    %v8688 = vcombine.high %v7758, %v7758
    %v8690 = vunpack.c.l.s4 1983009808
    %v8691 = vunpack.c.0.s8 %v8690
    %v8692 = vlaneseq
    %v8693 = vshrl.u32 %v8692, 7
    %v8694 = vsub.s32 %v8691, %v8693
    %v8695 = vrot.slane %v7758, %v8694
    %v8697 = vunpack.c.l.s4 1983009808
    %v8698 = vunpack.c.0.s8 %v8697
    %v8699 = vlaneseq
    %v8700 = vshrl.u32 %v8699, 7
    %v8701 = vsub.s32 %v8698, %v8700
    %v8702 = vrot.slane %v8688, %v8701
    %v8703 = vcombine.high %v8695, %v8695
    %v8704 = vcombine.high %v8702, %v8702
    %v8705 = vcombine.high %v7759, %v7759
    %v8707 = vunpack.c.l.s4 1983009808
    %v8708 = vunpack.c.0.s8 %v8707
    %v8709 = vlaneseq
    %v8710 = vshrl.u32 %v8709, 7
    %v8711 = vsub.s32 %v8708, %v8710
    %v8712 = vrot.slane %v7759, %v8711
    %v8714 = vunpack.c.l.s4 1983009808
    %v8715 = vunpack.c.0.s8 %v8714
    %v8716 = vlaneseq
    %v8717 = vshrl.u32 %v8716, 7
    %v8718 = vsub.s32 %v8715, %v8717
    %v8719 = vrot.slane %v8705, %v8718
    %v8720 = vcombine.high %v8712, %v8712
    %v8721 = vcombine.high %v8719, %v8719
    %v8722 = vcombine.high %v7760, %v7760
    %v8724 = vunpack.c.l.s4 1983009808
    %v8725 = vunpack.c.0.s8 %v8724
    %v8726 = vlaneseq
    %v8727 = vshrl.u32 %v8726, 7
    %v8728 = vsub.s32 %v8725, %v8727
    %v8729 = vrot.slane %v7760, %v8728
    %v8731 = vunpack.c.l.s4 1983009808
    %v8732 = vunpack.c.0.s8 %v8731
    %v8733 = vlaneseq
    %v8734 = vshrl.u32 %v8733, 7
    %v8735 = vsub.s32 %v8732, %v8734
    %v8736 = vrot.slane %v8722, %v8735
    %v8737 = vcombine.high %v8729, %v8729
    %v8738 = vcombine.high %v8736, %v8736
    %v8739 = vcombine.high %v7761, %v7761
    %v8741 = vunpack.c.l.s4 1983009808
    %v8742 = vunpack.c.0.s8 %v8741
    %v8743 = vlaneseq
    %v8744 = vshrl.u32 %v8743, 7
    %v8745 = vsub.s32 %v8742, %v8744
    %v8746 = vrot.slane %v7761, %v8745
    %v8748 = vunpack.c.l.s4 1983009808
    %v8749 = vunpack.c.0.s8 %v8748
    %v8750 = vlaneseq
    %v8751 = vshrl.u32 %v8750, 7
    %v8752 = vsub.s32 %v8749, %v8751
    %v8753 = vrot.slane %v8739, %v8752
    %v8754 = vcombine.high %v8746, %v8746
    %v8755 = vcombine.high %v8753, %v8753
    %v8756 = vcombine.high %v7762, %v7762
    %v8758 = vunpack.c.l.s4 1983009808
    %v8759 = vunpack.c.0.s8 %v8758
    %v8760 = vlaneseq
    %v8761 = vshrl.u32 %v8760, 7
    %v8762 = vsub.s32 %v8759, %v8761
    %v8763 = vrot.slane %v7762, %v8762
    %v8765 = vunpack.c.l.s4 1983009808
    %v8766 = vunpack.c.0.s8 %v8765
    %v8767 = vlaneseq
    %v8768 = vshrl.u32 %v8767, 7
    %v8769 = vsub.s32 %v8766, %v8768
    %v8770 = vrot.slane %v8756, %v8769
    %v8771 = vcombine.high %v8763, %v8763
    %v8772 = vcombine.high %v8770, %v8770
    %v8773 = vcombine.high %v7763, %v7763
    %v8775 = vunpack.c.l.s4 1983009808
    %v8776 = vunpack.c.0.s8 %v8775
    %v8777 = vlaneseq
    %v8778 = vshrl.u32 %v8777, 7
    %v8779 = vsub.s32 %v8776, %v8778
    %v8780 = vrot.slane %v7763, %v8779
    %v8782 = vunpack.c.l.s4 1983009808
    %v8783 = vunpack.c.0.s8 %v8782
    %v8784 = vlaneseq
    %v8785 = vshrl.u32 %v8784, 7
    %v8786 = vsub.s32 %v8783, %v8785
    %v8787 = vrot.slane %v8773, %v8786
    %v8788 = vcombine.high %v8780, %v8780
    %v8789 = vcombine.high %v8787, %v8787
    %v8790 = vcombine.high %v7764, %v7764
    %v8792 = vunpack.c.l.s4 1983009808
    %v8793 = vunpack.c.0.s8 %v8792
    %v8794 = vlaneseq
    %v8795 = vshrl.u32 %v8794, 7
    %v8796 = vsub.s32 %v8793, %v8795
    %v8797 = vrot.slane %v7764, %v8796
    %v8799 = vunpack.c.l.s4 1983009808
    %v8800 = vunpack.c.0.s8 %v8799
    %v8801 = vlaneseq
    %v8802 = vshrl.u32 %v8801, 7
    %v8803 = vsub.s32 %v8800, %v8802
    %v8804 = vrot.slane %v8790, %v8803
    %v8805 = vcombine.high %v8797, %v8797
    %v8806 = vcombine.high %v8804, %v8804
    %v8807 = vcombine.high %v7765, %v7765
    %v8809 = vunpack.c.l.s4 1983009808
    %v8810 = vunpack.c.0.s8 %v8809
    %v8811 = vlaneseq
    %v8812 = vshrl.u32 %v8811, 7
    %v8813 = vsub.s32 %v8810, %v8812
    %v8814 = vrot.slane %v7765, %v8813
    %v8816 = vunpack.c.l.s4 1983009808
    %v8817 = vunpack.c.0.s8 %v8816
    %v8818 = vlaneseq
    %v8819 = vshrl.u32 %v8818, 7
    %v8820 = vsub.s32 %v8817, %v8819
    %v8821 = vrot.slane %v8807, %v8820
    %v8822 = vcombine.high %v8814, %v8814
    %v8823 = vcombine.high %v8821, %v8821
    %v8824 = vcombine.high %v7766, %v7766
    %v8826 = vunpack.c.l.s4 1983009808
    %v8827 = vunpack.c.0.s8 %v8826
    %v8828 = vlaneseq
    %v8829 = vshrl.u32 %v8828, 7
    %v8830 = vsub.s32 %v8827, %v8829
    %v8831 = vrot.slane %v7766, %v8830
    %v8833 = vunpack.c.l.s4 1983009808
    %v8834 = vunpack.c.0.s8 %v8833
    %v8835 = vlaneseq
    %v8836 = vshrl.u32 %v8835, 7
    %v8837 = vsub.s32 %v8834, %v8836
    %v8838 = vrot.slane %v8824, %v8837
    %v8839 = vcombine.high %v8831, %v8831
    %v8840 = vcombine.high %v8838, %v8838
    %v8841 = vcombine.high %v7767, %v7767
    %v8843 = vunpack.c.l.s4 1983009808
    %v8844 = vunpack.c.0.s8 %v8843
    %v8845 = vlaneseq
    %v8846 = vshrl.u32 %v8845, 7
    %v8847 = vsub.s32 %v8844, %v8846
    %v8848 = vrot.slane %v7767, %v8847
    %v8850 = vunpack.c.l.s4 1983009808
    %v8851 = vunpack.c.0.s8 %v8850
    %v8852 = vlaneseq
    %v8853 = vshrl.u32 %v8852, 7
    %v8854 = vsub.s32 %v8851, %v8853
    %v8855 = vrot.slane %v8841, %v8854
    %v8856 = vcombine.high %v8848, %v8848
    %v8857 = vcombine.high %v8855, %v8855
    %v8858 = vcombine.high %v7768, %v7768
    %v8860 = vunpack.c.l.s4 1983009808
    %v8861 = vunpack.c.0.s8 %v8860
    %v8862 = vlaneseq
    %v8863 = vshrl.u32 %v8862, 7
    %v8864 = vsub.s32 %v8861, %v8863
    %v8865 = vrot.slane %v7768, %v8864
    %v8867 = vunpack.c.l.s4 1983009808
    %v8868 = vunpack.c.0.s8 %v8867
    %v8869 = vlaneseq
    %v8870 = vshrl.u32 %v8869, 7
    %v8871 = vsub.s32 %v8868, %v8870
    %v8872 = vrot.slane %v8858, %v8871
    %v8873 = vcombine.high %v8865, %v8865
    %v8874 = vcombine.high %v8872, %v8872
    %v8875 = vcombine.high %v7769, %v7769
    %v8877 = vunpack.c.l.s4 1983009808
    %v8878 = vunpack.c.0.s8 %v8877
    %v8879 = vlaneseq
    %v8880 = vshrl.u32 %v8879, 7
    %v8881 = vsub.s32 %v8878, %v8880
    %v8882 = vrot.slane %v7769, %v8881
    %v8884 = vunpack.c.l.s4 1983009808
    %v8885 = vunpack.c.0.s8 %v8884
    %v8886 = vlaneseq
    %v8887 = vshrl.u32 %v8886, 7
    %v8888 = vsub.s32 %v8885, %v8887
    %v8889 = vrot.slane %v8875, %v8888
    %v8890 = vcombine.high %v8882, %v8882
    %v8891 = vcombine.high %v8889, %v8889
    %v8892 = vcombine.high %v7770, %v7770
    %v8894 = vunpack.c.l.s4 1983009808
    %v8895 = vunpack.c.0.s8 %v8894
    %v8896 = vlaneseq
    %v8897 = vshrl.u32 %v8896, 7
    %v8898 = vsub.s32 %v8895, %v8897
    %v8899 = vrot.slane %v7770, %v8898
    %v8901 = vunpack.c.l.s4 1983009808
    %v8902 = vunpack.c.0.s8 %v8901
    %v8903 = vlaneseq
    %v8904 = vshrl.u32 %v8903, 7
    %v8905 = vsub.s32 %v8902, %v8904
    %v8906 = vrot.slane %v8892, %v8905
    %v8907 = vcombine.high %v8899, %v8899
    %v8908 = vcombine.high %v8906, %v8906
    %v8909 = vcombine.high %v7771, %v7771
    %v8911 = vunpack.c.l.s4 1983009808
    %v8912 = vunpack.c.0.s8 %v8911
    %v8913 = vlaneseq
    %v8914 = vshrl.u32 %v8913, 7
    %v8915 = vsub.s32 %v8912, %v8914
    %v8916 = vrot.slane %v7771, %v8915
    %v8918 = vunpack.c.l.s4 1983009808
    %v8919 = vunpack.c.0.s8 %v8918
    %v8920 = vlaneseq
    %v8921 = vshrl.u32 %v8920, 7
    %v8922 = vsub.s32 %v8919, %v8921
    %v8923 = vrot.slane %v8909, %v8922
    %v8924 = vcombine.high %v8916, %v8916
    %v8925 = vcombine.high %v8923, %v8923
    %v8926 = vcombine.high %v7772, %v7772
    %v8928 = vunpack.c.l.s4 1983009808
    %v8929 = vunpack.c.0.s8 %v8928
    %v8930 = vlaneseq
    %v8931 = vshrl.u32 %v8930, 7
    %v8932 = vsub.s32 %v8929, %v8931
    %v8933 = vrot.slane %v7772, %v8932
    %v8935 = vunpack.c.l.s4 1983009808
    %v8936 = vunpack.c.0.s8 %v8935
    %v8937 = vlaneseq
    %v8938 = vshrl.u32 %v8937, 7
    %v8939 = vsub.s32 %v8936, %v8938
    %v8940 = vrot.slane %v8926, %v8939
    %v8941 = vcombine.high %v8933, %v8933
    %v8942 = vcombine.high %v8940, %v8940
    %v8943 = vcombine.high %v7773, %v7773
    %v8945 = vunpack.c.l.s4 1983009808
    %v8946 = vunpack.c.0.s8 %v8945
    %v8947 = vlaneseq
    %v8948 = vshrl.u32 %v8947, 7
    %v8949 = vsub.s32 %v8946, %v8948
    %v8950 = vrot.slane %v7773, %v8949
    %v8952 = vunpack.c.l.s4 1983009808
    %v8953 = vunpack.c.0.s8 %v8952
    %v8954 = vlaneseq
    %v8955 = vshrl.u32 %v8954, 7
    %v8956 = vsub.s32 %v8953, %v8955
    %v8957 = vrot.slane %v8943, %v8956
    %v8958 = vcombine.high %v8950, %v8950
    %v8959 = vcombine.high %v8957, %v8957
    %v8960 = vcombine.high %v7774, %v7774
    %v8962 = vunpack.c.l.s4 1983009808
    %v8963 = vunpack.c.0.s8 %v8962
    %v8964 = vlaneseq
    %v8965 = vshrl.u32 %v8964, 7
    %v8966 = vsub.s32 %v8963, %v8965
    %v8967 = vrot.slane %v7774, %v8966
    %v8969 = vunpack.c.l.s4 1983009808
    %v8970 = vunpack.c.0.s8 %v8969
    %v8971 = vlaneseq
    %v8972 = vshrl.u32 %v8971, 7
    %v8973 = vsub.s32 %v8970, %v8972
    %v8974 = vrot.slane %v8960, %v8973
    %v8975 = vcombine.high %v8967, %v8967
    %v8976 = vcombine.high %v8974, %v8974
    %v8977 = vcombine.high %v7775, %v7775
    %v8979 = vunpack.c.l.s4 1983009808
    %v8980 = vunpack.c.0.s8 %v8979
    %v8981 = vlaneseq
    %v8982 = vshrl.u32 %v8981, 7
    %v8983 = vsub.s32 %v8980, %v8982
    %v8984 = vrot.slane %v7775, %v8983
    %v8986 = vunpack.c.l.s4 1983009808
    %v8987 = vunpack.c.0.s8 %v8986
    %v8988 = vlaneseq
    %v8989 = vshrl.u32 %v8988, 7
    %v8990 = vsub.s32 %v8987, %v8989
    %v8991 = vrot.slane %v8977, %v8990
    %v8992 = vcombine.high %v8984, %v8984
    %v8993 = vcombine.high %v8991, %v8991
    %v8994 = vcombine.high %v7776, %v7776
    %v8996 = vunpack.c.l.s4 1983009808
    %v8997 = vunpack.c.0.s8 %v8996
    %v8998 = vlaneseq
    %v8999 = vshrl.u32 %v8998, 7
    %v9000 = vsub.s32 %v8997, %v8999
    %v9001 = vrot.slane %v7776, %v9000
    %v9003 = vunpack.c.l.s4 1983009808
    %v9004 = vunpack.c.0.s8 %v9003
    %v9005 = vlaneseq
    %v9006 = vshrl.u32 %v9005, 7
    %v9007 = vsub.s32 %v9004, %v9006
    %v9008 = vrot.slane %v8994, %v9007
    %v9009 = vcombine.high %v9001, %v9001
    %v9010 = vcombine.high %v9008, %v9008
    %v9011 = vcombine.high %v7777, %v7777
    %v9013 = vunpack.c.l.s4 1983009808
    %v9014 = vunpack.c.0.s8 %v9013
    %v9015 = vlaneseq
    %v9016 = vshrl.u32 %v9015, 7
    %v9017 = vsub.s32 %v9014, %v9016
    %v9018 = vrot.slane %v7777, %v9017
    %v9020 = vunpack.c.l.s4 1983009808
    %v9021 = vunpack.c.0.s8 %v9020
    %v9022 = vlaneseq
    %v9023 = vshrl.u32 %v9022, 7
    %v9024 = vsub.s32 %v9021, %v9023
    %v9025 = vrot.slane %v9011, %v9024
    %v9026 = vcombine.high %v9018, %v9018
    %v9027 = vcombine.high %v9025, %v9025
    %v9028 = vcombine.high %v7778, %v7778
    %v9030 = vunpack.c.l.s4 1983009808
    %v9031 = vunpack.c.0.s8 %v9030
    %v9032 = vlaneseq
    %v9033 = vshrl.u32 %v9032, 7
    %v9034 = vsub.s32 %v9031, %v9033
    %v9035 = vrot.slane %v7778, %v9034
    %v9037 = vunpack.c.l.s4 1983009808
    %v9038 = vunpack.c.0.s8 %v9037
    %v9039 = vlaneseq
    %v9040 = vshrl.u32 %v9039, 7
    %v9041 = vsub.s32 %v9038, %v9040
    %v9042 = vrot.slane %v9028, %v9041
    %v9043 = vcombine.high %v9035, %v9035
    %v9044 = vcombine.high %v9042, %v9042
    %v9045 = vcombine.high %v7779, %v7779
    %v9047 = vunpack.c.l.s4 1983009808
    %v9048 = vunpack.c.0.s8 %v9047
    %v9049 = vlaneseq
    %v9050 = vshrl.u32 %v9049, 7
    %v9051 = vsub.s32 %v9048, %v9050
    %v9052 = vrot.slane %v7779, %v9051
    %v9054 = vunpack.c.l.s4 1983009808
    %v9055 = vunpack.c.0.s8 %v9054
    %v9056 = vlaneseq
    %v9057 = vshrl.u32 %v9056, 7
    %v9058 = vsub.s32 %v9055, %v9057
    %v9059 = vrot.slane %v9045, %v9058
    %v9060 = vcombine.high %v9052, %v9052
    %v9061 = vcombine.high %v9059, %v9059
    %v9062 = vcombine.high %v7780, %v7780
    %v9064 = vunpack.c.l.s4 1983009808
    %v9065 = vunpack.c.0.s8 %v9064
    %v9066 = vlaneseq
    %v9067 = vshrl.u32 %v9066, 7
    %v9068 = vsub.s32 %v9065, %v9067
    %v9069 = vrot.slane %v7780, %v9068
    %v9071 = vunpack.c.l.s4 1983009808
    %v9072 = vunpack.c.0.s8 %v9071
    %v9073 = vlaneseq
    %v9074 = vshrl.u32 %v9073, 7
    %v9075 = vsub.s32 %v9072, %v9074
    %v9076 = vrot.slane %v9062, %v9075
    %v9077 = vcombine.high %v9069, %v9069
    %v9078 = vcombine.high %v9076, %v9076
    %v9079 = vcombine.high %v7781, %v7781
    %v9081 = vunpack.c.l.s4 1983009808
    %v9082 = vunpack.c.0.s8 %v9081
    %v9083 = vlaneseq
    %v9084 = vshrl.u32 %v9083, 7
    %v9085 = vsub.s32 %v9082, %v9084
    %v9086 = vrot.slane %v7781, %v9085
    %v9088 = vunpack.c.l.s4 1983009808
    %v9089 = vunpack.c.0.s8 %v9088
    %v9090 = vlaneseq
    %v9091 = vshrl.u32 %v9090, 7
    %v9092 = vsub.s32 %v9089, %v9091
    %v9093 = vrot.slane %v9079, %v9092
    %v9094 = vcombine.high %v9086, %v9086
    %v9095 = vcombine.high %v9093, %v9093
    %v9096 = vcombine.high %v7782, %v7782
    %v9098 = vunpack.c.l.s4 1983009808
    %v9099 = vunpack.c.0.s8 %v9098
    %v9100 = vlaneseq
    %v9101 = vshrl.u32 %v9100, 7
    %v9102 = vsub.s32 %v9099, %v9101
    %v9103 = vrot.slane %v7782, %v9102
    %v9105 = vunpack.c.l.s4 1983009808
    %v9106 = vunpack.c.0.s8 %v9105
    %v9107 = vlaneseq
    %v9108 = vshrl.u32 %v9107, 7
    %v9109 = vsub.s32 %v9106, %v9108
    %v9110 = vrot.slane %v9096, %v9109
    %v9111 = vcombine.high %v9103, %v9103
    %v9112 = vcombine.high %v9110, %v9110
    %v9113 = vcombine.high %v7783, %v7783
    %v9115 = vunpack.c.l.s4 1983009808
    %v9116 = vunpack.c.0.s8 %v9115
    %v9117 = vlaneseq
    %v9118 = vshrl.u32 %v9117, 7
    %v9119 = vsub.s32 %v9116, %v9118
    %v9120 = vrot.slane %v7783, %v9119
    %v9122 = vunpack.c.l.s4 1983009808
    %v9123 = vunpack.c.0.s8 %v9122
    %v9124 = vlaneseq
    %v9125 = vshrl.u32 %v9124, 7
    %v9126 = vsub.s32 %v9123, %v9125
    %v9127 = vrot.slane %v9113, %v9126
    %v9128 = vcombine.high %v9120, %v9120
    %v9129 = vcombine.high %v9127, %v9127
    %v9130 = vcombine.high %v7784, %v7784
    %v9132 = vunpack.c.l.s4 1983009808
    %v9133 = vunpack.c.0.s8 %v9132
    %v9134 = vlaneseq
    %v9135 = vshrl.u32 %v9134, 7
    %v9136 = vsub.s32 %v9133, %v9135
    %v9137 = vrot.slane %v7784, %v9136
    %v9139 = vunpack.c.l.s4 1983009808
    %v9140 = vunpack.c.0.s8 %v9139
    %v9141 = vlaneseq
    %v9142 = vshrl.u32 %v9141, 7
    %v9143 = vsub.s32 %v9140, %v9142
    %v9144 = vrot.slane %v9130, %v9143
    %v9145 = vcombine.high %v9137, %v9137
    %v9146 = vcombine.high %v9144, %v9144
    %v9147 = vcombine.high %v7785, %v7785
    %v9149 = vunpack.c.l.s4 1983009808
    %v9150 = vunpack.c.0.s8 %v9149
    %v9151 = vlaneseq
    %v9152 = vshrl.u32 %v9151, 7
    %v9153 = vsub.s32 %v9150, %v9152
    %v9154 = vrot.slane %v7785, %v9153
    %v9156 = vunpack.c.l.s4 1983009808
    %v9157 = vunpack.c.0.s8 %v9156
    %v9158 = vlaneseq
    %v9159 = vshrl.u32 %v9158, 7
    %v9160 = vsub.s32 %v9157, %v9159
    %v9161 = vrot.slane %v9147, %v9160
    %v9162 = vcombine.high %v9154, %v9154
    %v9163 = vcombine.high %v9161, %v9161
    %v9164 = vcombine.high %v7786, %v7786
    %v9166 = vunpack.c.l.s4 1983009808
    %v9167 = vunpack.c.0.s8 %v9166
    %v9168 = vlaneseq
    %v9169 = vshrl.u32 %v9168, 7
    %v9170 = vsub.s32 %v9167, %v9169
    %v9171 = vrot.slane %v7786, %v9170
    %v9173 = vunpack.c.l.s4 1983009808
    %v9174 = vunpack.c.0.s8 %v9173
    %v9175 = vlaneseq
    %v9176 = vshrl.u32 %v9175, 7
    %v9177 = vsub.s32 %v9174, %v9176
    %v9178 = vrot.slane %v9164, %v9177
    %v9179 = vcombine.high %v9171, %v9171
    %v9180 = vcombine.high %v9178, %v9178
    %v9181 = vcombine.high %v7787, %v7787
    %v9183 = vunpack.c.l.s4 1983009808
    %v9184 = vunpack.c.0.s8 %v9183
    %v9185 = vlaneseq
    %v9186 = vshrl.u32 %v9185, 7
    %v9187 = vsub.s32 %v9184, %v9186
    %v9188 = vrot.slane %v7787, %v9187
    %v9190 = vunpack.c.l.s4 1983009808
    %v9191 = vunpack.c.0.s8 %v9190
    %v9192 = vlaneseq
    %v9193 = vshrl.u32 %v9192, 7
    %v9194 = vsub.s32 %v9191, %v9193
    %v9195 = vrot.slane %v9181, %v9194
    %v9196 = vcombine.high %v9188, %v9188
    %v9197 = vcombine.high %v9195, %v9195
    %v9198 = vcombine.high %v7788, %v7788
    %v9200 = vunpack.c.l.s4 1983009808
    %v9201 = vunpack.c.0.s8 %v9200
    %v9202 = vlaneseq
    %v9203 = vshrl.u32 %v9202, 7
    %v9204 = vsub.s32 %v9201, %v9203
    %v9205 = vrot.slane %v7788, %v9204
    %v9207 = vunpack.c.l.s4 1983009808
    %v9208 = vunpack.c.0.s8 %v9207
    %v9209 = vlaneseq
    %v9210 = vshrl.u32 %v9209, 7
    %v9211 = vsub.s32 %v9208, %v9210
    %v9212 = vrot.slane %v9198, %v9211
    %v9213 = vcombine.high %v9205, %v9205
    %v9214 = vcombine.high %v9212, %v9212
    %v9215 = vcombine.high %v7789, %v7789
    %v9217 = vunpack.c.l.s4 1983009808
    %v9218 = vunpack.c.0.s8 %v9217
    %v9219 = vlaneseq
    %v9220 = vshrl.u32 %v9219, 7
    %v9221 = vsub.s32 %v9218, %v9220
    %v9222 = vrot.slane %v7789, %v9221
    %v9224 = vunpack.c.l.s4 1983009808
    %v9225 = vunpack.c.0.s8 %v9224
    %v9226 = vlaneseq
    %v9227 = vshrl.u32 %v9226, 7
    %v9228 = vsub.s32 %v9225, %v9227
    %v9229 = vrot.slane %v9215, %v9228
    %v9230 = vcombine.high %v9222, %v9222
    %v9231 = vcombine.high %v9229, %v9229
    %v9232 = vcombine.high %v7790, %v7790
    %v9234 = vunpack.c.l.s4 1983009808
    %v9235 = vunpack.c.0.s8 %v9234
    %v9236 = vlaneseq
    %v9237 = vshrl.u32 %v9236, 7
    %v9238 = vsub.s32 %v9235, %v9237
    %v9239 = vrot.slane %v7790, %v9238
    %v9241 = vunpack.c.l.s4 1983009808
    %v9242 = vunpack.c.0.s8 %v9241
    %v9243 = vlaneseq
    %v9244 = vshrl.u32 %v9243, 7
    %v9245 = vsub.s32 %v9242, %v9244
    %v9246 = vrot.slane %v9232, %v9245
    %v9247 = vcombine.high %v9239, %v9239
    %v9248 = vcombine.high %v9246, %v9246
    %v9249 = vcombine.low %v7879, %v7887
    %v9250 = vcombine.low %v7886, %v7888
    %v9252 = vunpack.c.l.s4 1983009808
    %v9253 = vunpack.c.0.s8 %v9252
    %v9254 = vlaneseq
    %v9255 = vshrl.u32 %v9254, 7
    %v9256 = vsub.s32 %v9253, %v9255
    %v9257 = vrot.slane %v9249, %v9256
    %v9259 = vunpack.c.l.s4 1983009808
    %v9260 = vunpack.c.0.s8 %v9259
    %v9261 = vlaneseq
    %v9262 = vshrl.u32 %v9261, 7
    %v9263 = vsub.s32 %v9260, %v9262
    %v9264 = vrot.slane %v9250, %v9263
    %v9265 = vcombine.low %v9257, %v9264
    %v9266 = vcombine.low %v7896, %v7904
    %v9267 = vcombine.low %v7903, %v7905
    %v9269 = vunpack.c.l.s4 1983009808
    %v9270 = vunpack.c.0.s8 %v9269
    %v9271 = vlaneseq
    %v9272 = vshrl.u32 %v9271, 7
    %v9273 = vsub.s32 %v9270, %v9272
    %v9274 = vrot.slane %v9266, %v9273
    %v9276 = vunpack.c.l.s4 1983009808
    %v9277 = vunpack.c.0.s8 %v9276
    %v9278 = vlaneseq
    %v9279 = vshrl.u32 %v9278, 7
    %v9280 = vsub.s32 %v9277, %v9279
    %v9281 = vrot.slane %v9267, %v9280
    %v9282 = vcombine.low %v9274, %v9281
    %v9284 = vunpack.c.l.s4 1983009808
    %v9285 = vunpack.c.0.s8 %v9284
    %v9286 = vlaneseq
    %v9287 = vshrl.u32 %v9286, 7
    %v9288 = vsub.s32 %v9285, %v9287
    %v9289 = vrot.slane %v7913, %v9288
    %v9290 = vcombine.low %v7921, %v7920
    %v9291 = vcombine.low %v7922, %v7930
    %v9293 = vunpack.c.l.s4 1983009808
    %v9294 = vunpack.c.0.s8 %v9293
    %v9295 = vlaneseq
    %v9296 = vshrl.u32 %v9295, 7
    %v9297 = vsub.s32 %v9294, %v9296
    %v9298 = vrot.slane %v9290, %v9297
    %v9300 = vunpack.c.l.s4 1983009808
    %v9301 = vunpack.c.0.s8 %v9300
    %v9302 = vlaneseq
    %v9303 = vshrl.u32 %v9302, 7
    %v9304 = vsub.s32 %v9301, %v9303
    %v9305 = vrot.slane %v9291, %v9304
    %v9306 = vcombine.low %v9298, %v9305
    %v9307 = vcombine.low %v7938, %v7937
    %v9308 = vcombine.low %v7939, %v7947
    %v9310 = vunpack.c.l.s4 1983009808
    %v9311 = vunpack.c.0.s8 %v9310
    %v9312 = vlaneseq
    %v9313 = vshrl.u32 %v9312, 7
    %v9314 = vsub.s32 %v9311, %v9313
    %v9315 = vrot.slane %v9307, %v9314
    %v9317 = vunpack.c.l.s4 1983009808
    %v9318 = vunpack.c.0.s8 %v9317
    %v9319 = vlaneseq
    %v9320 = vshrl.u32 %v9319, 7
    %v9321 = vsub.s32 %v9318, %v9320
    %v9322 = vrot.slane %v9308, %v9321
    %v9323 = vcombine.low %v9315, %v9322
    %v9325 = vunpack.c.l.s4 1983009808
    %v9326 = vunpack.c.0.s8 %v9325
    %v9327 = vlaneseq
    %v9328 = vshrl.u32 %v9327, 7
    %v9329 = vsub.s32 %v9326, %v9328
    %v9330 = vrot.slane %v7955, %v9329
    %v9331 = vcombine.low %v7954, %v7956
    %v9332 = vcombine.low %v7964, %v7972
    %v9334 = vunpack.c.l.s4 1983009808
    %v9335 = vunpack.c.0.s8 %v9334
    %v9336 = vlaneseq
    %v9337 = vshrl.u32 %v9336, 7
    %v9338 = vsub.s32 %v9335, %v9337
    %v9339 = vrot.slane %v9331, %v9338
    %v9341 = vunpack.c.l.s4 1983009808
    %v9342 = vunpack.c.0.s8 %v9341
    %v9343 = vlaneseq
    %v9344 = vshrl.u32 %v9343, 7
    %v9345 = vsub.s32 %v9342, %v9344
    %v9346 = vrot.slane %v9332, %v9345
    %v9347 = vcombine.low %v9339, %v9346
    %v9348 = vcombine.low %v7971, %v7973
    %v9349 = vcombine.low %v7981, %v7989
    %v9351 = vunpack.c.l.s4 1983009808
    %v9352 = vunpack.c.0.s8 %v9351
    %v9353 = vlaneseq
    %v9354 = vshrl.u32 %v9353, 7
    %v9355 = vsub.s32 %v9352, %v9354
    %v9356 = vrot.slane %v9348, %v9355
    %v9358 = vunpack.c.l.s4 1983009808
    %v9359 = vunpack.c.0.s8 %v9358
    %v9360 = vlaneseq
    %v9361 = vshrl.u32 %v9360, 7
    %v9362 = vsub.s32 %v9359, %v9361
    %v9363 = vrot.slane %v9349, %v9362
    %v9364 = vcombine.low %v9356, %v9363
    %v9366 = vunpack.c.l.s4 1983009808
    %v9367 = vunpack.c.0.s8 %v9366
    %v9368 = vlaneseq
    %v9369 = vshrl.u32 %v9368, 7
    %v9370 = vsub.s32 %v9367, %v9369
    %v9371 = vrot.slane %v7988, %v9370
    %v9372 = vcombine.low %v7990, %v7998
    %v9373 = vcombine.low %v8006, %v8005
    %v9375 = vunpack.c.l.s4 1983009808
    %v9376 = vunpack.c.0.s8 %v9375
    %v9377 = vlaneseq
    %v9378 = vshrl.u32 %v9377, 7
    %v9379 = vsub.s32 %v9376, %v9378
    %v9380 = vrot.slane %v9372, %v9379
    %v9382 = vunpack.c.l.s4 1983009808
    %v9383 = vunpack.c.0.s8 %v9382
    %v9384 = vlaneseq
    %v9385 = vshrl.u32 %v9384, 7
    %v9386 = vsub.s32 %v9383, %v9385
    %v9387 = vrot.slane %v9373, %v9386
    %v9388 = vcombine.low %v9380, %v9387
    %v9389 = vcombine.low %v8007, %v8015
    %v9390 = vcombine.low %v8023, %v8022
    %v9392 = vunpack.c.l.s4 1983009808
    %v9393 = vunpack.c.0.s8 %v9392
    %v9394 = vlaneseq
    %v9395 = vshrl.u32 %v9394, 7
    %v9396 = vsub.s32 %v9393, %v9395
    %v9397 = vrot.slane %v9389, %v9396
    %v9399 = vunpack.c.l.s4 1983009808
    %v9400 = vunpack.c.0.s8 %v9399
    %v9401 = vlaneseq
    %v9402 = vshrl.u32 %v9401, 7
    %v9403 = vsub.s32 %v9400, %v9402
    %v9404 = vrot.slane %v9390, %v9403
    %v9405 = vcombine.low %v9397, %v9404
    %v9407 = vunpack.c.l.s4 1983009808
    %v9408 = vunpack.c.0.s8 %v9407
    %v9409 = vlaneseq
    %v9410 = vshrl.u32 %v9409, 7
    %v9411 = vsub.s32 %v9408, %v9410
    %v9412 = vrot.slane %v8024, %v9411
    %v9413 = vcombine.low %v8032, %v8040
    %v9414 = vcombine.low %v8039, %v8041
    %v9416 = vunpack.c.l.s4 1983009808
    %v9417 = vunpack.c.0.s8 %v9416
    %v9418 = vlaneseq
    %v9419 = vshrl.u32 %v9418, 7
    %v9420 = vsub.s32 %v9417, %v9419
    %v9421 = vrot.slane %v9413, %v9420
    %v9423 = vunpack.c.l.s4 1983009808
    %v9424 = vunpack.c.0.s8 %v9423
    %v9425 = vlaneseq
    %v9426 = vshrl.u32 %v9425, 7
    %v9427 = vsub.s32 %v9424, %v9426
    %v9428 = vrot.slane %v9414, %v9427
    %v9429 = vcombine.low %v9421, %v9428
    %v9430 = vcombine.low %v8049, %v8057
    %v9431 = vcombine.low %v8056, %v8058
    %v9433 = vunpack.c.l.s4 1983009808
    %v9434 = vunpack.c.0.s8 %v9433
    %v9435 = vlaneseq
    %v9436 = vshrl.u32 %v9435, 7
    %v9437 = vsub.s32 %v9434, %v9436
    %v9438 = vrot.slane %v9430, %v9437
    %v9440 = vunpack.c.l.s4 1983009808
    %v9441 = vunpack.c.0.s8 %v9440
    %v9442 = vlaneseq
    %v9443 = vshrl.u32 %v9442, 7
    %v9444 = vsub.s32 %v9441, %v9443
    %v9445 = vrot.slane %v9431, %v9444
    %v9446 = vcombine.low %v9438, %v9445
    %v9448 = vunpack.c.l.s4 1983009808
    %v9449 = vunpack.c.0.s8 %v9448
    %v9450 = vlaneseq
    %v9451 = vshrl.u32 %v9450, 7
    %v9452 = vsub.s32 %v9449, %v9451
    %v9453 = vrot.slane %v8066, %v9452
    %v9454 = vcombine.low %v8074, %v8073
    %v9455 = vcombine.low %v8075, %v8083
    %v9457 = vunpack.c.l.s4 1983009808
    %v9458 = vunpack.c.0.s8 %v9457
    %v9459 = vlaneseq
    %v9460 = vshrl.u32 %v9459, 7
    %v9461 = vsub.s32 %v9458, %v9460
    %v9462 = vrot.slane %v9454, %v9461
    %v9464 = vunpack.c.l.s4 1983009808
    %v9465 = vunpack.c.0.s8 %v9464
    %v9466 = vlaneseq
    %v9467 = vshrl.u32 %v9466, 7
    %v9468 = vsub.s32 %v9465, %v9467
    %v9469 = vrot.slane %v9455, %v9468
    %v9470 = vcombine.low %v9462, %v9469
    %v9471 = vcombine.low %v8091, %v8090
    %v9472 = vcombine.low %v8092, %v8100
    %v9474 = vunpack.c.l.s4 1983009808
    %v9475 = vunpack.c.0.s8 %v9474
    %v9476 = vlaneseq
    %v9477 = vshrl.u32 %v9476, 7
    %v9478 = vsub.s32 %v9475, %v9477
    %v9479 = vrot.slane %v9471, %v9478
    %v9481 = vunpack.c.l.s4 1983009808
    %v9482 = vunpack.c.0.s8 %v9481
    %v9483 = vlaneseq
    %v9484 = vshrl.u32 %v9483, 7
    %v9485 = vsub.s32 %v9482, %v9484
    %v9486 = vrot.slane %v9472, %v9485
    %v9487 = vcombine.low %v9479, %v9486
    %v9489 = vunpack.c.l.s4 1983009808
    %v9490 = vunpack.c.0.s8 %v9489
    %v9491 = vlaneseq
    %v9492 = vshrl.u32 %v9491, 7
    %v9493 = vsub.s32 %v9490, %v9492
    %v9494 = vrot.slane %v8108, %v9493
    %v9495 = vcombine.low %v8107, %v8109
    %v9496 = vcombine.low %v8117, %v8125
    %v9498 = vunpack.c.l.s4 1983009808
    %v9499 = vunpack.c.0.s8 %v9498
    %v9500 = vlaneseq
    %v9501 = vshrl.u32 %v9500, 7
    %v9502 = vsub.s32 %v9499, %v9501
    %v9503 = vrot.slane %v9495, %v9502
    %v9505 = vunpack.c.l.s4 1983009808
    %v9506 = vunpack.c.0.s8 %v9505
    %v9507 = vlaneseq
    %v9508 = vshrl.u32 %v9507, 7
    %v9509 = vsub.s32 %v9506, %v9508
    %v9510 = vrot.slane %v9496, %v9509
    %v9511 = vcombine.low %v9503, %v9510
    %v9512 = vcombine.low %v8124, %v8126
    %v9513 = vcombine.low %v8134, %v8142
    %v9515 = vunpack.c.l.s4 1983009808
    %v9516 = vunpack.c.0.s8 %v9515
    %v9517 = vlaneseq
    %v9518 = vshrl.u32 %v9517, 7
    %v9519 = vsub.s32 %v9516, %v9518
    %v9520 = vrot.slane %v9512, %v9519
    %v9522 = vunpack.c.l.s4 1983009808
    %v9523 = vunpack.c.0.s8 %v9522
    %v9524 = vlaneseq
    %v9525 = vshrl.u32 %v9524, 7
    %v9526 = vsub.s32 %v9523, %v9525
    %v9527 = vrot.slane %v9513, %v9526
    %v9528 = vcombine.low %v9520, %v9527
    %v9530 = vunpack.c.l.s4 1983009808
    %v9531 = vunpack.c.0.s8 %v9530
    %v9532 = vlaneseq
    %v9533 = vshrl.u32 %v9532, 7
    %v9534 = vsub.s32 %v9531, %v9533
    %v9535 = vrot.slane %v8141, %v9534
    %v9536 = vcombine.low %v8143, %v8151
    %v9537 = vcombine.low %v8159, %v8158
    %v9539 = vunpack.c.l.s4 1983009808
    %v9540 = vunpack.c.0.s8 %v9539
    %v9541 = vlaneseq
    %v9542 = vshrl.u32 %v9541, 7
    %v9543 = vsub.s32 %v9540, %v9542
    %v9544 = vrot.slane %v9536, %v9543
    %v9546 = vunpack.c.l.s4 1983009808
    %v9547 = vunpack.c.0.s8 %v9546
    %v9548 = vlaneseq
    %v9549 = vshrl.u32 %v9548, 7
    %v9550 = vsub.s32 %v9547, %v9549
    %v9551 = vrot.slane %v9537, %v9550
    %v9552 = vcombine.low %v9544, %v9551
    %v9553 = vcombine.low %v8160, %v8168
    %v9554 = vcombine.low %v8176, %v8175
    %v9556 = vunpack.c.l.s4 1983009808
    %v9557 = vunpack.c.0.s8 %v9556
    %v9558 = vlaneseq
    %v9559 = vshrl.u32 %v9558, 7
    %v9560 = vsub.s32 %v9557, %v9559
    %v9561 = vrot.slane %v9553, %v9560
    %v9563 = vunpack.c.l.s4 1983009808
    %v9564 = vunpack.c.0.s8 %v9563
    %v9565 = vlaneseq
    %v9566 = vshrl.u32 %v9565, 7
    %v9567 = vsub.s32 %v9564, %v9566
    %v9568 = vrot.slane %v9554, %v9567
    %v9569 = vcombine.low %v9561, %v9568
    %v9571 = vunpack.c.l.s4 1983009808
    %v9572 = vunpack.c.0.s8 %v9571
    %v9573 = vlaneseq
    %v9574 = vshrl.u32 %v9573, 7
    %v9575 = vsub.s32 %v9572, %v9574
    %v9576 = vrot.slane %v8177, %v9575
    %v9577 = vcombine.low %v8185, %v8193
    %v9578 = vcombine.low %v8192, %v8194
    %v9580 = vunpack.c.l.s4 1983009808
    %v9581 = vunpack.c.0.s8 %v9580
    %v9582 = vlaneseq
    %v9583 = vshrl.u32 %v9582, 7
    %v9584 = vsub.s32 %v9581, %v9583
    %v9585 = vrot.slane %v9577, %v9584
    %v9587 = vunpack.c.l.s4 1983009808
    %v9588 = vunpack.c.0.s8 %v9587
    %v9589 = vlaneseq
    %v9590 = vshrl.u32 %v9589, 7
    %v9591 = vsub.s32 %v9588, %v9590
    %v9592 = vrot.slane %v9578, %v9591
    %v9593 = vcombine.low %v9585, %v9592
    %v9594 = vcombine.low %v8202, %v8210
    %v9595 = vcombine.low %v8209, %v8211
    %v9597 = vunpack.c.l.s4 1983009808
    %v9598 = vunpack.c.0.s8 %v9597
    %v9599 = vlaneseq
    %v9600 = vshrl.u32 %v9599, 7
    %v9601 = vsub.s32 %v9598, %v9600
    %v9602 = vrot.slane %v9594, %v9601
    %v9604 = vunpack.c.l.s4 1983009808
    %v9605 = vunpack.c.0.s8 %v9604
    %v9606 = vlaneseq
    %v9607 = vshrl.u32 %v9606, 7
    %v9608 = vsub.s32 %v9605, %v9607
    %v9609 = vrot.slane %v9595, %v9608
    %v9610 = vcombine.low %v9602, %v9609
    %v9612 = vunpack.c.l.s4 1983009808
    %v9613 = vunpack.c.0.s8 %v9612
    %v9614 = vlaneseq
    %v9615 = vshrl.u32 %v9614, 7
    %v9616 = vsub.s32 %v9613, %v9615
    %v9617 = vrot.slane %v8219, %v9616
    %v9618 = vcombine.low %v8227, %v8226
    %v9619 = vcombine.low %v8228, %v8236
    %v9621 = vunpack.c.l.s4 1983009808
    %v9622 = vunpack.c.0.s8 %v9621
    %v9623 = vlaneseq
    %v9624 = vshrl.u32 %v9623, 7
    %v9625 = vsub.s32 %v9622, %v9624
    %v9626 = vrot.slane %v9618, %v9625
    %v9628 = vunpack.c.l.s4 1983009808
    %v9629 = vunpack.c.0.s8 %v9628
    %v9630 = vlaneseq
    %v9631 = vshrl.u32 %v9630, 7
    %v9632 = vsub.s32 %v9629, %v9631
    %v9633 = vrot.slane %v9619, %v9632
    %v9634 = vcombine.low %v9626, %v9633
    %v9635 = vcombine.low %v8244, %v8243
    %v9636 = vcombine.low %v8245, %v8253
    %v9638 = vunpack.c.l.s4 1983009808
    %v9639 = vunpack.c.0.s8 %v9638
    %v9640 = vlaneseq
    %v9641 = vshrl.u32 %v9640, 7
    %v9642 = vsub.s32 %v9639, %v9641
    %v9643 = vrot.slane %v9635, %v9642
    %v9645 = vunpack.c.l.s4 1983009808
    %v9646 = vunpack.c.0.s8 %v9645
    %v9647 = vlaneseq
    %v9648 = vshrl.u32 %v9647, 7
    %v9649 = vsub.s32 %v9646, %v9648
    %v9650 = vrot.slane %v9636, %v9649
    %v9651 = vcombine.low %v9643, %v9650
    %v9653 = vunpack.c.l.s4 1983009808
    %v9654 = vunpack.c.0.s8 %v9653
    %v9655 = vlaneseq
    %v9656 = vshrl.u32 %v9655, 7
    %v9657 = vsub.s32 %v9654, %v9656
    %v9658 = vrot.slane %v8261, %v9657
    %v9659 = vcombine.low %v8260, %v8262
    %v9660 = vcombine.low %v8270, %v8278
    %v9662 = vunpack.c.l.s4 1983009808
    %v9663 = vunpack.c.0.s8 %v9662
    %v9664 = vlaneseq
    %v9665 = vshrl.u32 %v9664, 7
    %v9666 = vsub.s32 %v9663, %v9665
    %v9667 = vrot.slane %v9659, %v9666
    %v9669 = vunpack.c.l.s4 1983009808
    %v9670 = vunpack.c.0.s8 %v9669
    %v9671 = vlaneseq
    %v9672 = vshrl.u32 %v9671, 7
    %v9673 = vsub.s32 %v9670, %v9672
    %v9674 = vrot.slane %v9660, %v9673
    %v9675 = vcombine.low %v9667, %v9674
    %v9676 = vcombine.low %v8277, %v8279
    %v9677 = vcombine.low %v8287, %v8295
    %v9679 = vunpack.c.l.s4 1983009808
    %v9680 = vunpack.c.0.s8 %v9679
    %v9681 = vlaneseq
    %v9682 = vshrl.u32 %v9681, 7
    %v9683 = vsub.s32 %v9680, %v9682
    %v9684 = vrot.slane %v9676, %v9683
    %v9686 = vunpack.c.l.s4 1983009808
    %v9687 = vunpack.c.0.s8 %v9686
    %v9688 = vlaneseq
    %v9689 = vshrl.u32 %v9688, 7
    %v9690 = vsub.s32 %v9687, %v9689
    %v9691 = vrot.slane %v9677, %v9690
    %v9692 = vcombine.low %v9684, %v9691
    %v9694 = vunpack.c.l.s4 1983009808
    %v9695 = vunpack.c.0.s8 %v9694
    %v9696 = vlaneseq
    %v9697 = vshrl.u32 %v9696, 7
    %v9698 = vsub.s32 %v9695, %v9697
    %v9699 = vrot.slane %v8294, %v9698
    %v9700 = vcombine.low %v8296, %v8304
    %v9701 = vcombine.low %v8312, %v8311
    %v9703 = vunpack.c.l.s4 1983009808
    %v9704 = vunpack.c.0.s8 %v9703
    %v9705 = vlaneseq
    %v9706 = vshrl.u32 %v9705, 7
    %v9707 = vsub.s32 %v9704, %v9706
    %v9708 = vrot.slane %v9700, %v9707
    %v9710 = vunpack.c.l.s4 1983009808
    %v9711 = vunpack.c.0.s8 %v9710
    %v9712 = vlaneseq
    %v9713 = vshrl.u32 %v9712, 7
    %v9714 = vsub.s32 %v9711, %v9713
    %v9715 = vrot.slane %v9701, %v9714
    %v9716 = vcombine.low %v9708, %v9715
    %v9717 = vcombine.low %v8313, %v8321
    %v9718 = vcombine.low %v8329, %v8328
    %v9720 = vunpack.c.l.s4 1983009808
    %v9721 = vunpack.c.0.s8 %v9720
    %v9722 = vlaneseq
    %v9723 = vshrl.u32 %v9722, 7
    %v9724 = vsub.s32 %v9721, %v9723
    %v9725 = vrot.slane %v9717, %v9724
    %v9727 = vunpack.c.l.s4 1983009808
    %v9728 = vunpack.c.0.s8 %v9727
    %v9729 = vlaneseq
    %v9730 = vshrl.u32 %v9729, 7
    %v9731 = vsub.s32 %v9728, %v9730
    %v9732 = vrot.slane %v9718, %v9731
    %v9733 = vcombine.low %v9725, %v9732
    %v9735 = vunpack.c.l.s4 1983009808
    %v9736 = vunpack.c.0.s8 %v9735
    %v9737 = vlaneseq
    %v9738 = vshrl.u32 %v9737, 7
    %v9739 = vsub.s32 %v9736, %v9738
    %v9740 = vrot.slane %v8330, %v9739
    %v9741 = vcombine.low %v8338, %v8346
    %v9742 = vcombine.low %v8345, %v8347
    %v9744 = vunpack.c.l.s4 1983009808
    %v9745 = vunpack.c.0.s8 %v9744
    %v9746 = vlaneseq
    %v9747 = vshrl.u32 %v9746, 7
    %v9748 = vsub.s32 %v9745, %v9747
    %v9749 = vrot.slane %v9741, %v9748
    %v9751 = vunpack.c.l.s4 1983009808
    %v9752 = vunpack.c.0.s8 %v9751
    %v9753 = vlaneseq
    %v9754 = vshrl.u32 %v9753, 7
    %v9755 = vsub.s32 %v9752, %v9754
    %v9756 = vrot.slane %v9742, %v9755
    %v9757 = vcombine.low %v9749, %v9756
    %v9758 = vcombine.low %v8355, %v8363
    %v9759 = vcombine.low %v8362, %v8364
    %v9761 = vunpack.c.l.s4 1983009808
    %v9762 = vunpack.c.0.s8 %v9761
    %v9763 = vlaneseq
    %v9764 = vshrl.u32 %v9763, 7
    %v9765 = vsub.s32 %v9762, %v9764
    %v9766 = vrot.slane %v9758, %v9765
    %v9768 = vunpack.c.l.s4 1983009808
    %v9769 = vunpack.c.0.s8 %v9768
    %v9770 = vlaneseq
    %v9771 = vshrl.u32 %v9770, 7
    %v9772 = vsub.s32 %v9769, %v9771
    %v9773 = vrot.slane %v9759, %v9772
    %v9774 = vcombine.low %v9766, %v9773
    %v9776 = vunpack.c.l.s4 1983009808
    %v9777 = vunpack.c.0.s8 %v9776
    %v9778 = vlaneseq
    %v9779 = vshrl.u32 %v9778, 7
    %v9780 = vsub.s32 %v9777, %v9779
    %v9781 = vrot.slane %v8372, %v9780
    %v9782 = vcombine.low %v8380, %v8379
    %v9783 = vcombine.low %v8381, %v8389
    %v9785 = vunpack.c.l.s4 1983009808
    %v9786 = vunpack.c.0.s8 %v9785
    %v9787 = vlaneseq
    %v9788 = vshrl.u32 %v9787, 7
    %v9789 = vsub.s32 %v9786, %v9788
    %v9790 = vrot.slane %v9782, %v9789
    %v9792 = vunpack.c.l.s4 1983009808
    %v9793 = vunpack.c.0.s8 %v9792
    %v9794 = vlaneseq
    %v9795 = vshrl.u32 %v9794, 7
    %v9796 = vsub.s32 %v9793, %v9795
    %v9797 = vrot.slane %v9783, %v9796
    %v9798 = vcombine.low %v9790, %v9797
    %v9799 = vcombine.low %v8397, %v8396
    %v9800 = vcombine.low %v8398, %v8406
    %v9802 = vunpack.c.l.s4 1983009808
    %v9803 = vunpack.c.0.s8 %v9802
    %v9804 = vlaneseq
    %v9805 = vshrl.u32 %v9804, 7
    %v9806 = vsub.s32 %v9803, %v9805
    %v9807 = vrot.slane %v9799, %v9806
    %v9809 = vunpack.c.l.s4 1983009808
    %v9810 = vunpack.c.0.s8 %v9809
    %v9811 = vlaneseq
    %v9812 = vshrl.u32 %v9811, 7
    %v9813 = vsub.s32 %v9810, %v9812
    %v9814 = vrot.slane %v9800, %v9813
    %v9815 = vcombine.low %v9807, %v9814
    %v9817 = vunpack.c.l.s4 1983009808
    %v9818 = vunpack.c.0.s8 %v9817
    %v9819 = vlaneseq
    %v9820 = vshrl.u32 %v9819, 7
    %v9821 = vsub.s32 %v9818, %v9820
    %v9822 = vrot.slane %v8414, %v9821
    %v9823 = vcombine.low %v8413, %v8415
    %v9824 = vcombine.low %v8423, %v8431
    %v9826 = vunpack.c.l.s4 1983009808
    %v9827 = vunpack.c.0.s8 %v9826
    %v9828 = vlaneseq
    %v9829 = vshrl.u32 %v9828, 7
    %v9830 = vsub.s32 %v9827, %v9829
    %v9831 = vrot.slane %v9823, %v9830
    %v9833 = vunpack.c.l.s4 1983009808
    %v9834 = vunpack.c.0.s8 %v9833
    %v9835 = vlaneseq
    %v9836 = vshrl.u32 %v9835, 7
    %v9837 = vsub.s32 %v9834, %v9836
    %v9838 = vrot.slane %v9824, %v9837
    %v9839 = vcombine.low %v9831, %v9838
    %v9840 = vcombine.low %v8430, %v8432
    %v9841 = vcombine.low %v8440, %v8448
    %v9843 = vunpack.c.l.s4 1983009808
    %v9844 = vunpack.c.0.s8 %v9843
    %v9845 = vlaneseq
    %v9846 = vshrl.u32 %v9845, 7
    %v9847 = vsub.s32 %v9844, %v9846
    %v9848 = vrot.slane %v9840, %v9847
    %v9850 = vunpack.c.l.s4 1983009808
    %v9851 = vunpack.c.0.s8 %v9850
    %v9852 = vlaneseq
    %v9853 = vshrl.u32 %v9852, 7
    %v9854 = vsub.s32 %v9851, %v9853
    %v9855 = vrot.slane %v9841, %v9854
    %v9856 = vcombine.low %v9848, %v9855
    %v9858 = vunpack.c.l.s4 1983009808
    %v9859 = vunpack.c.0.s8 %v9858
    %v9860 = vlaneseq
    %v9861 = vshrl.u32 %v9860, 7
    %v9862 = vsub.s32 %v9859, %v9861
    %v9863 = vrot.slane %v8447, %v9862
    %v9864 = vcombine.low %v8449, %v8457
    %v9865 = vcombine.low %v8465, %v8464
    %v9867 = vunpack.c.l.s4 1983009808
    %v9868 = vunpack.c.0.s8 %v9867
    %v9869 = vlaneseq
    %v9870 = vshrl.u32 %v9869, 7
    %v9871 = vsub.s32 %v9868, %v9870
    %v9872 = vrot.slane %v9864, %v9871
    %v9874 = vunpack.c.l.s4 1983009808
    %v9875 = vunpack.c.0.s8 %v9874
    %v9876 = vlaneseq
    %v9877 = vshrl.u32 %v9876, 7
    %v9878 = vsub.s32 %v9875, %v9877
    %v9879 = vrot.slane %v9865, %v9878
    %v9880 = vcombine.low %v9872, %v9879
    %v9881 = vcombine.low %v8466, %v8474
    %v9882 = vcombine.low %v8482, %v8481
    %v9884 = vunpack.c.l.s4 1983009808
    %v9885 = vunpack.c.0.s8 %v9884
    %v9886 = vlaneseq
    %v9887 = vshrl.u32 %v9886, 7
    %v9888 = vsub.s32 %v9885, %v9887
    %v9889 = vrot.slane %v9881, %v9888
    %v9891 = vunpack.c.l.s4 1983009808
    %v9892 = vunpack.c.0.s8 %v9891
    %v9893 = vlaneseq
    %v9894 = vshrl.u32 %v9893, 7
    %v9895 = vsub.s32 %v9892, %v9894
    %v9896 = vrot.slane %v9882, %v9895
    %v9897 = vcombine.low %v9889, %v9896
    %v9899 = vunpack.c.l.s4 1983009808
    %v9900 = vunpack.c.0.s8 %v9899
    %v9901 = vlaneseq
    %v9902 = vshrl.u32 %v9901, 7
    %v9903 = vsub.s32 %v9900, %v9902
    %v9904 = vrot.slane %v8483, %v9903
    %v9905 = vcombine.low %v8566, %v8568
    %v9906 = vcombine.low %v8576, %v8584
    %v9908 = vunpack.c.l.s4 1983009808
    %v9909 = vunpack.c.0.s8 %v9908
    %v9910 = vlaneseq
    %v9911 = vshrl.u32 %v9910, 7
    %v9912 = vsub.s32 %v9909, %v9911
    %v9913 = vrot.slane %v9905, %v9912
    %v9915 = vunpack.c.l.s4 1983009808
    %v9916 = vunpack.c.0.s8 %v9915
    %v9917 = vlaneseq
    %v9918 = vshrl.u32 %v9917, 7
    %v9919 = vsub.s32 %v9916, %v9918
    %v9920 = vrot.slane %v9906, %v9919
    %v9921 = vcombine.low %v9913, %v9920
    %v9922 = vcombine.low %v8583, %v8585
    %v9923 = vcombine.low %v8593, %v8601
    %v9925 = vunpack.c.l.s4 1983009808
    %v9926 = vunpack.c.0.s8 %v9925
    %v9927 = vlaneseq
    %v9928 = vshrl.u32 %v9927, 7
    %v9929 = vsub.s32 %v9926, %v9928
    %v9930 = vrot.slane %v9922, %v9929
    %v9932 = vunpack.c.l.s4 1983009808
    %v9933 = vunpack.c.0.s8 %v9932
    %v9934 = vlaneseq
    %v9935 = vshrl.u32 %v9934, 7
    %v9936 = vsub.s32 %v9933, %v9935
    %v9937 = vrot.slane %v9923, %v9936
    %v9938 = vcombine.low %v9930, %v9937
    %v9940 = vunpack.c.l.s4 1983009808
    %v9941 = vunpack.c.0.s8 %v9940
    %v9942 = vlaneseq
    %v9943 = vshrl.u32 %v9942, 7
    %v9944 = vsub.s32 %v9941, %v9943
    %v9945 = vrot.slane %v8600, %v9944
    %v9946 = vcombine.low %v8602, %v8610
    %v9947 = vcombine.low %v8618, %v8617
    %v9949 = vunpack.c.l.s4 1983009808
    %v9950 = vunpack.c.0.s8 %v9949
    %v9951 = vlaneseq
    %v9952 = vshrl.u32 %v9951, 7
    %v9953 = vsub.s32 %v9950, %v9952
    %v9954 = vrot.slane %v9946, %v9953
    %v9956 = vunpack.c.l.s4 1983009808
    %v9957 = vunpack.c.0.s8 %v9956
    %v9958 = vlaneseq
    %v9959 = vshrl.u32 %v9958, 7
    %v9960 = vsub.s32 %v9957, %v9959
    %v9961 = vrot.slane %v9947, %v9960
    %v9962 = vcombine.low %v9954, %v9961
    %v9963 = vcombine.low %v8619, %v8627
    %v9964 = vcombine.low %v8635, %v8634
    %v9966 = vunpack.c.l.s4 1983009808
    %v9967 = vunpack.c.0.s8 %v9966
    %v9968 = vlaneseq
    %v9969 = vshrl.u32 %v9968, 7
    %v9970 = vsub.s32 %v9967, %v9969
    %v9971 = vrot.slane %v9963, %v9970
    %v9973 = vunpack.c.l.s4 1983009808
    %v9974 = vunpack.c.0.s8 %v9973
    %v9975 = vlaneseq
    %v9976 = vshrl.u32 %v9975, 7
    %v9977 = vsub.s32 %v9974, %v9976
    %v9978 = vrot.slane %v9964, %v9977
    %v9979 = vcombine.low %v9971, %v9978
    %v9981 = vunpack.c.l.s4 1983009808
    %v9982 = vunpack.c.0.s8 %v9981
    %v9983 = vlaneseq
    %v9984 = vshrl.u32 %v9983, 7
    %v9985 = vsub.s32 %v9982, %v9984
    %v9986 = vrot.slane %v8636, %v9985
    %v9987 = vcombine.low %v8644, %v8652
    %v9988 = vcombine.low %v8651, %v8653
    %v9990 = vunpack.c.l.s4 1983009808
    %v9991 = vunpack.c.0.s8 %v9990
    %v9992 = vlaneseq
    %v9993 = vshrl.u32 %v9992, 7
    %v9994 = vsub.s32 %v9991, %v9993
    %v9995 = vrot.slane %v9987, %v9994
    %v9997 = vunpack.c.l.s4 1983009808
    %v9998 = vunpack.c.0.s8 %v9997
    %v9999 = vlaneseq
    %v10000 = vshrl.u32 %v9999, 7
    %v10001 = vsub.s32 %v9998, %v10000
    %v10002 = vrot.slane %v9988, %v10001
    %v10003 = vcombine.low %v9995, %v10002
    %v10004 = vcombine.low %v8661, %v8669
    %v10005 = vcombine.low %v8668, %v8670
    %v10007 = vunpack.c.l.s4 1983009808
    %v10008 = vunpack.c.0.s8 %v10007
    %v10009 = vlaneseq
    %v10010 = vshrl.u32 %v10009, 7
    %v10011 = vsub.s32 %v10008, %v10010
    %v10012 = vrot.slane %v10004, %v10011
    %v10014 = vunpack.c.l.s4 1983009808
    %v10015 = vunpack.c.0.s8 %v10014
    %v10016 = vlaneseq
    %v10017 = vshrl.u32 %v10016, 7
    %v10018 = vsub.s32 %v10015, %v10017
    %v10019 = vrot.slane %v10005, %v10018
    %v10020 = vcombine.low %v10012, %v10019
    %v10022 = vunpack.c.l.s4 1983009808
    %v10023 = vunpack.c.0.s8 %v10022
    %v10024 = vlaneseq
    %v10025 = vshrl.u32 %v10024, 7
    %v10026 = vsub.s32 %v10023, %v10025
    %v10027 = vrot.slane %v8678, %v10026
    %v10028 = vcombine.low %v8686, %v8685
    %v10029 = vcombine.low %v8687, %v8695
    %v10031 = vunpack.c.l.s4 1983009808
    %v10032 = vunpack.c.0.s8 %v10031
    %v10033 = vlaneseq
    %v10034 = vshrl.u32 %v10033, 7
    %v10035 = vsub.s32 %v10032, %v10034
    %v10036 = vrot.slane %v10028, %v10035
    %v10038 = vunpack.c.l.s4 1983009808
    %v10039 = vunpack.c.0.s8 %v10038
    %v10040 = vlaneseq
    %v10041 = vshrl.u32 %v10040, 7
    %v10042 = vsub.s32 %v10039, %v10041
    %v10043 = vrot.slane %v10029, %v10042
    %v10044 = vcombine.low %v10036, %v10043
    %v10045 = vcombine.low %v8703, %v8702
    %v10046 = vcombine.low %v8704, %v8712
    %v10048 = vunpack.c.l.s4 1983009808
    %v10049 = vunpack.c.0.s8 %v10048
    %v10050 = vlaneseq
    %v10051 = vshrl.u32 %v10050, 7
    %v10052 = vsub.s32 %v10049, %v10051
    %v10053 = vrot.slane %v10045, %v10052
    %v10055 = vunpack.c.l.s4 1983009808
    %v10056 = vunpack.c.0.s8 %v10055
    %v10057 = vlaneseq
    %v10058 = vshrl.u32 %v10057, 7
    %v10059 = vsub.s32 %v10056, %v10058
    %v10060 = vrot.slane %v10046, %v10059
    %v10061 = vcombine.low %v10053, %v10060
    %v10063 = vunpack.c.l.s4 1983009808
    %v10064 = vunpack.c.0.s8 %v10063
    %v10065 = vlaneseq
    %v10066 = vshrl.u32 %v10065, 7
    %v10067 = vsub.s32 %v10064, %v10066
    %v10068 = vrot.slane %v8720, %v10067
    %v10069 = vcombine.low %v8719, %v8721
    %v10070 = vcombine.low %v8729, %v8737
    %v10072 = vunpack.c.l.s4 1983009808
    %v10073 = vunpack.c.0.s8 %v10072
    %v10074 = vlaneseq
    %v10075 = vshrl.u32 %v10074, 7
    %v10076 = vsub.s32 %v10073, %v10075
    %v10077 = vrot.slane %v10069, %v10076
    %v10079 = vunpack.c.l.s4 1983009808
    %v10080 = vunpack.c.0.s8 %v10079
    %v10081 = vlaneseq
    %v10082 = vshrl.u32 %v10081, 7
    %v10083 = vsub.s32 %v10080, %v10082
    %v10084 = vrot.slane %v10070, %v10083
    %v10085 = vcombine.low %v10077, %v10084
    %v10086 = vcombine.low %v8736, %v8738
    %v10087 = vcombine.low %v8746, %v8754
    %v10089 = vunpack.c.l.s4 1983009808
    %v10090 = vunpack.c.0.s8 %v10089
    %v10091 = vlaneseq
    %v10092 = vshrl.u32 %v10091, 7
    %v10093 = vsub.s32 %v10090, %v10092
    %v10094 = vrot.slane %v10086, %v10093
    %v10096 = vunpack.c.l.s4 1983009808
    %v10097 = vunpack.c.0.s8 %v10096
    %v10098 = vlaneseq
    %v10099 = vshrl.u32 %v10098, 7
    %v10100 = vsub.s32 %v10097, %v10099
    %v10101 = vrot.slane %v10087, %v10100
    %v10102 = vcombine.low %v10094, %v10101
    %v10104 = vunpack.c.l.s4 1983009808
    %v10105 = vunpack.c.0.s8 %v10104
    %v10106 = vlaneseq
    %v10107 = vshrl.u32 %v10106, 7
    %v10108 = vsub.s32 %v10105, %v10107
    %v10109 = vrot.slane %v8753, %v10108
    %v10110 = vcombine.low %v8755, %v8763
    %v10111 = vcombine.low %v8771, %v8770
    %v10113 = vunpack.c.l.s4 1983009808
    %v10114 = vunpack.c.0.s8 %v10113
    %v10115 = vlaneseq
    %v10116 = vshrl.u32 %v10115, 7
    %v10117 = vsub.s32 %v10114, %v10116
    %v10118 = vrot.slane %v10110, %v10117
    %v10120 = vunpack.c.l.s4 1983009808
    %v10121 = vunpack.c.0.s8 %v10120
    %v10122 = vlaneseq
    %v10123 = vshrl.u32 %v10122, 7
    %v10124 = vsub.s32 %v10121, %v10123
    %v10125 = vrot.slane %v10111, %v10124
    %v10126 = vcombine.low %v10118, %v10125
    %v10127 = vcombine.low %v8772, %v8780
    %v10128 = vcombine.low %v8788, %v8787
    %v10130 = vunpack.c.l.s4 1983009808
    %v10131 = vunpack.c.0.s8 %v10130
    %v10132 = vlaneseq
    %v10133 = vshrl.u32 %v10132, 7
    %v10134 = vsub.s32 %v10131, %v10133
    %v10135 = vrot.slane %v10127, %v10134
    %v10137 = vunpack.c.l.s4 1983009808
    %v10138 = vunpack.c.0.s8 %v10137
    %v10139 = vlaneseq
    %v10140 = vshrl.u32 %v10139, 7
    %v10141 = vsub.s32 %v10138, %v10140
    %v10142 = vrot.slane %v10128, %v10141
    %v10143 = vcombine.low %v10135, %v10142
    %v10145 = vunpack.c.l.s4 1983009808
    %v10146 = vunpack.c.0.s8 %v10145
    %v10147 = vlaneseq
    %v10148 = vshrl.u32 %v10147, 7
    %v10149 = vsub.s32 %v10146, %v10148
    %v10150 = vrot.slane %v8789, %v10149
    %v10151 = vcombine.low %v8797, %v8805
    %v10152 = vcombine.low %v8804, %v8806
    %v10154 = vunpack.c.l.s4 1983009808
    %v10155 = vunpack.c.0.s8 %v10154
    %v10156 = vlaneseq
    %v10157 = vshrl.u32 %v10156, 7
    %v10158 = vsub.s32 %v10155, %v10157
    %v10159 = vrot.slane %v10151, %v10158
    %v10161 = vunpack.c.l.s4 1983009808
    %v10162 = vunpack.c.0.s8 %v10161
    %v10163 = vlaneseq
    %v10164 = vshrl.u32 %v10163, 7
    %v10165 = vsub.s32 %v10162, %v10164
    %v10166 = vrot.slane %v10152, %v10165
    %v10167 = vcombine.low %v10159, %v10166
    %v10168 = vcombine.low %v8814, %v8822
    %v10169 = vcombine.low %v8821, %v8823
    %v10171 = vunpack.c.l.s4 1983009808
    %v10172 = vunpack.c.0.s8 %v10171
    %v10173 = vlaneseq
    %v10174 = vshrl.u32 %v10173, 7
    %v10175 = vsub.s32 %v10172, %v10174
    %v10176 = vrot.slane %v10168, %v10175
    %v10178 = vunpack.c.l.s4 1983009808
    %v10179 = vunpack.c.0.s8 %v10178
    %v10180 = vlaneseq
    %v10181 = vshrl.u32 %v10180, 7
    %v10182 = vsub.s32 %v10179, %v10181
    %v10183 = vrot.slane %v10169, %v10182
    %v10184 = vcombine.low %v10176, %v10183
    %v10186 = vunpack.c.l.s4 1983009808
    %v10187 = vunpack.c.0.s8 %v10186
    %v10188 = vlaneseq
    %v10189 = vshrl.u32 %v10188, 7
    %v10190 = vsub.s32 %v10187, %v10189
    %v10191 = vrot.slane %v8831, %v10190
    %v10192 = vcombine.low %v8839, %v8838
    %v10193 = vcombine.low %v8840, %v8848
    %v10195 = vunpack.c.l.s4 1983009808
    %v10196 = vunpack.c.0.s8 %v10195
    %v10197 = vlaneseq
    %v10198 = vshrl.u32 %v10197, 7
    %v10199 = vsub.s32 %v10196, %v10198
    %v10200 = vrot.slane %v10192, %v10199
    %v10202 = vunpack.c.l.s4 1983009808
    %v10203 = vunpack.c.0.s8 %v10202
    %v10204 = vlaneseq
    %v10205 = vshrl.u32 %v10204, 7
    %v10206 = vsub.s32 %v10203, %v10205
    %v10207 = vrot.slane %v10193, %v10206
    %v10208 = vcombine.low %v10200, %v10207
    %v10209 = vcombine.low %v8856, %v8855
    %v10210 = vcombine.low %v8857, %v8865
    %v10212 = vunpack.c.l.s4 1983009808
    %v10213 = vunpack.c.0.s8 %v10212
    %v10214 = vlaneseq
    %v10215 = vshrl.u32 %v10214, 7
    %v10216 = vsub.s32 %v10213, %v10215
    %v10217 = vrot.slane %v10209, %v10216
    %v10219 = vunpack.c.l.s4 1983009808
    %v10220 = vunpack.c.0.s8 %v10219
    %v10221 = vlaneseq
    %v10222 = vshrl.u32 %v10221, 7
    %v10223 = vsub.s32 %v10220, %v10222
    %v10224 = vrot.slane %v10210, %v10223
    %v10225 = vcombine.low %v10217, %v10224
    %v10227 = vunpack.c.l.s4 1983009808
    %v10228 = vunpack.c.0.s8 %v10227
    %v10229 = vlaneseq
    %v10230 = vshrl.u32 %v10229, 7
    %v10231 = vsub.s32 %v10228, %v10230
    %v10232 = vrot.slane %v8873, %v10231
    %v10233 = vcombine.low %v8872, %v8874
    %v10234 = vcombine.low %v8882, %v8890
    %v10236 = vunpack.c.l.s4 1983009808
    %v10237 = vunpack.c.0.s8 %v10236
    %v10238 = vlaneseq
    %v10239 = vshrl.u32 %v10238, 7
    %v10240 = vsub.s32 %v10237, %v10239
    %v10241 = vrot.slane %v10233, %v10240
    %v10243 = vunpack.c.l.s4 1983009808
    %v10244 = vunpack.c.0.s8 %v10243
    %v10245 = vlaneseq
    %v10246 = vshrl.u32 %v10245, 7
    %v10247 = vsub.s32 %v10244, %v10246
    %v10248 = vrot.slane %v10234, %v10247
    %v10249 = vcombine.low %v10241, %v10248
    %v10250 = vcombine.low %v8889, %v8891
    %v10251 = vcombine.low %v8899, %v8907
    %v10253 = vunpack.c.l.s4 1983009808
    %v10254 = vunpack.c.0.s8 %v10253
    %v10255 = vlaneseq
    %v10256 = vshrl.u32 %v10255, 7
    %v10257 = vsub.s32 %v10254, %v10256
    %v10258 = vrot.slane %v10250, %v10257
    %v10260 = vunpack.c.l.s4 1983009808
    %v10261 = vunpack.c.0.s8 %v10260
    %v10262 = vlaneseq
    %v10263 = vshrl.u32 %v10262, 7
    %v10264 = vsub.s32 %v10261, %v10263
    %v10265 = vrot.slane %v10251, %v10264
    %v10266 = vcombine.low %v10258, %v10265
    %v10268 = vunpack.c.l.s4 1983009808
    %v10269 = vunpack.c.0.s8 %v10268
    %v10270 = vlaneseq
    %v10271 = vshrl.u32 %v10270, 7
    %v10272 = vsub.s32 %v10269, %v10271
    %v10273 = vrot.slane %v8906, %v10272
    %v10274 = vcombine.low %v8908, %v8916
    %v10275 = vcombine.low %v8924, %v8923
    %v10277 = vunpack.c.l.s4 1983009808
    %v10278 = vunpack.c.0.s8 %v10277
    %v10279 = vlaneseq
    %v10280 = vshrl.u32 %v10279, 7
    %v10281 = vsub.s32 %v10278, %v10280
    %v10282 = vrot.slane %v10274, %v10281
    %v10284 = vunpack.c.l.s4 1983009808
    %v10285 = vunpack.c.0.s8 %v10284
    %v10286 = vlaneseq
    %v10287 = vshrl.u32 %v10286, 7
    %v10288 = vsub.s32 %v10285, %v10287
    %v10289 = vrot.slane %v10275, %v10288
    %v10290 = vcombine.low %v10282, %v10289
    %v10291 = vcombine.low %v8925, %v8933
    %v10292 = vcombine.low %v8941, %v8940
    %v10294 = vunpack.c.l.s4 1983009808
    %v10295 = vunpack.c.0.s8 %v10294
    %v10296 = vlaneseq
    %v10297 = vshrl.u32 %v10296, 7
    %v10298 = vsub.s32 %v10295, %v10297
    %v10299 = vrot.slane %v10291, %v10298
    %v10301 = vunpack.c.l.s4 1983009808
    %v10302 = vunpack.c.0.s8 %v10301
    %v10303 = vlaneseq
    %v10304 = vshrl.u32 %v10303, 7
    %v10305 = vsub.s32 %v10302, %v10304
    %v10306 = vrot.slane %v10292, %v10305
    %v10307 = vcombine.low %v10299, %v10306
    %v10309 = vunpack.c.l.s4 1983009808
    %v10310 = vunpack.c.0.s8 %v10309
    %v10311 = vlaneseq
    %v10312 = vshrl.u32 %v10311, 7
    %v10313 = vsub.s32 %v10310, %v10312
    %v10314 = vrot.slane %v8942, %v10313
    %v10315 = vcombine.low %v8950, %v8958
    %v10316 = vcombine.low %v8957, %v8959
    %v10318 = vunpack.c.l.s4 1983009808
    %v10319 = vunpack.c.0.s8 %v10318
    %v10320 = vlaneseq
    %v10321 = vshrl.u32 %v10320, 7
    %v10322 = vsub.s32 %v10319, %v10321
    %v10323 = vrot.slane %v10315, %v10322
    %v10325 = vunpack.c.l.s4 1983009808
    %v10326 = vunpack.c.0.s8 %v10325
    %v10327 = vlaneseq
    %v10328 = vshrl.u32 %v10327, 7
    %v10329 = vsub.s32 %v10326, %v10328
    %v10330 = vrot.slane %v10316, %v10329
    %v10331 = vcombine.low %v10323, %v10330
    %v10332 = vcombine.low %v8967, %v8975
    %v10333 = vcombine.low %v8974, %v8976
    %v10335 = vunpack.c.l.s4 1983009808
    %v10336 = vunpack.c.0.s8 %v10335
    %v10337 = vlaneseq
    %v10338 = vshrl.u32 %v10337, 7
    %v10339 = vsub.s32 %v10336, %v10338
    %v10340 = vrot.slane %v10332, %v10339
    %v10342 = vunpack.c.l.s4 1983009808
    %v10343 = vunpack.c.0.s8 %v10342
    %v10344 = vlaneseq
    %v10345 = vshrl.u32 %v10344, 7
    %v10346 = vsub.s32 %v10343, %v10345
    %v10347 = vrot.slane %v10333, %v10346
    %v10348 = vcombine.low %v10340, %v10347
    %v10350 = vunpack.c.l.s4 1983009808
    %v10351 = vunpack.c.0.s8 %v10350
    %v10352 = vlaneseq
    %v10353 = vshrl.u32 %v10352, 7
    %v10354 = vsub.s32 %v10351, %v10353
    %v10355 = vrot.slane %v8984, %v10354
    %v10356 = vcombine.low %v8992, %v8991
    %v10357 = vcombine.low %v8993, %v9001
    %v10359 = vunpack.c.l.s4 1983009808
    %v10360 = vunpack.c.0.s8 %v10359
    %v10361 = vlaneseq
    %v10362 = vshrl.u32 %v10361, 7
    %v10363 = vsub.s32 %v10360, %v10362
    %v10364 = vrot.slane %v10356, %v10363
    %v10366 = vunpack.c.l.s4 1983009808
    %v10367 = vunpack.c.0.s8 %v10366
    %v10368 = vlaneseq
    %v10369 = vshrl.u32 %v10368, 7
    %v10370 = vsub.s32 %v10367, %v10369
    %v10371 = vrot.slane %v10357, %v10370
    %v10372 = vcombine.low %v10364, %v10371
    %v10373 = vcombine.low %v9009, %v9008
    %v10374 = vcombine.low %v9010, %v9018
    %v10376 = vunpack.c.l.s4 1983009808
    %v10377 = vunpack.c.0.s8 %v10376
    %v10378 = vlaneseq
    %v10379 = vshrl.u32 %v10378, 7
    %v10380 = vsub.s32 %v10377, %v10379
    %v10381 = vrot.slane %v10373, %v10380
    %v10383 = vunpack.c.l.s4 1983009808
    %v10384 = vunpack.c.0.s8 %v10383
    %v10385 = vlaneseq
    %v10386 = vshrl.u32 %v10385, 7
    %v10387 = vsub.s32 %v10384, %v10386
    %v10388 = vrot.slane %v10374, %v10387
    %v10389 = vcombine.low %v10381, %v10388
    %v10391 = vunpack.c.l.s4 1983009808
    %v10392 = vunpack.c.0.s8 %v10391
    %v10393 = vlaneseq
    %v10394 = vshrl.u32 %v10393, 7
    %v10395 = vsub.s32 %v10392, %v10394
    %v10396 = vrot.slane %v9026, %v10395
    %v10397 = vcombine.low %v9025, %v9027
    %v10398 = vcombine.low %v9035, %v9043
    %v10400 = vunpack.c.l.s4 1983009808
    %v10401 = vunpack.c.0.s8 %v10400
    %v10402 = vlaneseq
    %v10403 = vshrl.u32 %v10402, 7
    %v10404 = vsub.s32 %v10401, %v10403
    %v10405 = vrot.slane %v10397, %v10404
    %v10407 = vunpack.c.l.s4 1983009808
    %v10408 = vunpack.c.0.s8 %v10407
    %v10409 = vlaneseq
    %v10410 = vshrl.u32 %v10409, 7
    %v10411 = vsub.s32 %v10408, %v10410
    %v10412 = vrot.slane %v10398, %v10411
    %v10413 = vcombine.low %v10405, %v10412
    %v10414 = vcombine.low %v9042, %v9044
    %v10415 = vcombine.low %v9052, %v9060
    %v10417 = vunpack.c.l.s4 1983009808
    %v10418 = vunpack.c.0.s8 %v10417
    %v10419 = vlaneseq
    %v10420 = vshrl.u32 %v10419, 7
    %v10421 = vsub.s32 %v10418, %v10420
    %v10422 = vrot.slane %v10414, %v10421
    %v10424 = vunpack.c.l.s4 1983009808
    %v10425 = vunpack.c.0.s8 %v10424
    %v10426 = vlaneseq
    %v10427 = vshrl.u32 %v10426, 7
    %v10428 = vsub.s32 %v10425, %v10427
    %v10429 = vrot.slane %v10415, %v10428
    %v10430 = vcombine.low %v10422, %v10429
    %v10432 = vunpack.c.l.s4 1983009808
    %v10433 = vunpack.c.0.s8 %v10432
    %v10434 = vlaneseq
    %v10435 = vshrl.u32 %v10434, 7
    %v10436 = vsub.s32 %v10433, %v10435
    %v10437 = vrot.slane %v9059, %v10436
    %v10438 = vcombine.low %v9061, %v9069
    %v10439 = vcombine.low %v9077, %v9076
    %v10441 = vunpack.c.l.s4 1983009808
    %v10442 = vunpack.c.0.s8 %v10441
    %v10443 = vlaneseq
    %v10444 = vshrl.u32 %v10443, 7
    %v10445 = vsub.s32 %v10442, %v10444
    %v10446 = vrot.slane %v10438, %v10445
    %v10448 = vunpack.c.l.s4 1983009808
    %v10449 = vunpack.c.0.s8 %v10448
    %v10450 = vlaneseq
    %v10451 = vshrl.u32 %v10450, 7
    %v10452 = vsub.s32 %v10449, %v10451
    %v10453 = vrot.slane %v10439, %v10452
    %v10454 = vcombine.low %v10446, %v10453
    %v10455 = vcombine.low %v9078, %v9086
    %v10456 = vcombine.low %v9094, %v9093
    %v10458 = vunpack.c.l.s4 1983009808
    %v10459 = vunpack.c.0.s8 %v10458
    %v10460 = vlaneseq
    %v10461 = vshrl.u32 %v10460, 7
    %v10462 = vsub.s32 %v10459, %v10461
    %v10463 = vrot.slane %v10455, %v10462
    %v10465 = vunpack.c.l.s4 1983009808
    %v10466 = vunpack.c.0.s8 %v10465
    %v10467 = vlaneseq
    %v10468 = vshrl.u32 %v10467, 7
    %v10469 = vsub.s32 %v10466, %v10468
    %v10470 = vrot.slane %v10456, %v10469
    %v10471 = vcombine.low %v10463, %v10470
    %v10473 = vunpack.c.l.s4 1983009808
    %v10474 = vunpack.c.0.s8 %v10473
    %v10475 = vlaneseq
    %v10476 = vshrl.u32 %v10475, 7
    %v10477 = vsub.s32 %v10474, %v10476
    %v10478 = vrot.slane %v9095, %v10477
    %v10479 = vcombine.low %v9103, %v9111
    %v10480 = vcombine.low %v9110, %v9112
    %v10482 = vunpack.c.l.s4 1983009808
    %v10483 = vunpack.c.0.s8 %v10482
    %v10484 = vlaneseq
    %v10485 = vshrl.u32 %v10484, 7
    %v10486 = vsub.s32 %v10483, %v10485
    %v10487 = vrot.slane %v10479, %v10486
    %v10489 = vunpack.c.l.s4 1983009808
    %v10490 = vunpack.c.0.s8 %v10489
    %v10491 = vlaneseq
    %v10492 = vshrl.u32 %v10491, 7
    %v10493 = vsub.s32 %v10490, %v10492
    %v10494 = vrot.slane %v10480, %v10493
    %v10495 = vcombine.low %v10487, %v10494
    %v10496 = vcombine.low %v9120, %v9128
    %v10497 = vcombine.low %v9127, %v9129
    %v10499 = vunpack.c.l.s4 1983009808
    %v10500 = vunpack.c.0.s8 %v10499
    %v10501 = vlaneseq
    %v10502 = vshrl.u32 %v10501, 7
    %v10503 = vsub.s32 %v10500, %v10502
    %v10504 = vrot.slane %v10496, %v10503
    %v10506 = vunpack.c.l.s4 1983009808
    %v10507 = vunpack.c.0.s8 %v10506
    %v10508 = vlaneseq
    %v10509 = vshrl.u32 %v10508, 7
    %v10510 = vsub.s32 %v10507, %v10509
    %v10511 = vrot.slane %v10497, %v10510
    %v10512 = vcombine.low %v10504, %v10511
    %v10514 = vunpack.c.l.s4 1983009808
    %v10515 = vunpack.c.0.s8 %v10514
    %v10516 = vlaneseq
    %v10517 = vshrl.u32 %v10516, 7
    %v10518 = vsub.s32 %v10515, %v10517
    %v10519 = vrot.slane %v9137, %v10518
    %v10520 = vcombine.low %v9145, %v9144
    %v10521 = vcombine.low %v9146, %v9154
    %v10523 = vunpack.c.l.s4 1983009808
    %v10524 = vunpack.c.0.s8 %v10523
    %v10525 = vlaneseq
    %v10526 = vshrl.u32 %v10525, 7
    %v10527 = vsub.s32 %v10524, %v10526
    %v10528 = vrot.slane %v10520, %v10527
    %v10530 = vunpack.c.l.s4 1983009808
    %v10531 = vunpack.c.0.s8 %v10530
    %v10532 = vlaneseq
    %v10533 = vshrl.u32 %v10532, 7
    %v10534 = vsub.s32 %v10531, %v10533
    %v10535 = vrot.slane %v10521, %v10534
    %v10536 = vcombine.low %v10528, %v10535
    %v10537 = vcombine.low %v9162, %v9161
    %v10538 = vcombine.low %v9163, %v9171
    %v10540 = vunpack.c.l.s4 1983009808
    %v10541 = vunpack.c.0.s8 %v10540
    %v10542 = vlaneseq
    %v10543 = vshrl.u32 %v10542, 7
    %v10544 = vsub.s32 %v10541, %v10543
    %v10545 = vrot.slane %v10537, %v10544
    %v10547 = vunpack.c.l.s4 1983009808
    %v10548 = vunpack.c.0.s8 %v10547
    %v10549 = vlaneseq
    %v10550 = vshrl.u32 %v10549, 7
    %v10551 = vsub.s32 %v10548, %v10550
    %v10552 = vrot.slane %v10538, %v10551
    %v10553 = vcombine.low %v10545, %v10552
    %v10555 = vunpack.c.l.s4 1983009808
    %v10556 = vunpack.c.0.s8 %v10555
    %v10557 = vlaneseq
    %v10558 = vshrl.u32 %v10557, 7
    %v10559 = vsub.s32 %v10556, %v10558
    %v10560 = vrot.slane %v9179, %v10559
    %v10657 = vcombine.low %v8491, %v8499
    %v10658 = vcombine.low %v8498, %v8500
    %v10660 = vunpack.c.l.s4 1983009808
    %v10661 = vunpack.c.0.s8 %v10660
    %v10662 = vlaneseq
    %v10663 = vshrl.u32 %v10662, 7
    %v10664 = vsub.s32 %v10661, %v10663
    %v10665 = vrot.slane %v10657, %v10664
    %v10667 = vunpack.c.l.s4 1983009808
    %v10668 = vunpack.c.0.s8 %v10667
    %v10669 = vlaneseq
    %v10670 = vshrl.u32 %v10669, 7
    %v10671 = vsub.s32 %v10668, %v10670
    %v10672 = vrot.slane %v10658, %v10671
    %v10673 = vcombine.low %v10665, %v10672
    %v10674 = vcombine.low %v8508, %v8516
    %v10675 = vcombine.low %v8515, %v8517
    %v10677 = vunpack.c.l.s4 1983009808
    %v10678 = vunpack.c.0.s8 %v10677
    %v10679 = vlaneseq
    %v10680 = vshrl.u32 %v10679, 7
    %v10681 = vsub.s32 %v10678, %v10680
    %v10682 = vrot.slane %v10674, %v10681
    %v10684 = vunpack.c.l.s4 1983009808
    %v10685 = vunpack.c.0.s8 %v10684
    %v10686 = vlaneseq
    %v10687 = vshrl.u32 %v10686, 7
    %v10688 = vsub.s32 %v10685, %v10687
    %v10689 = vrot.slane %v10675, %v10688
    %v10690 = vcombine.low %v10682, %v10689
    %v10692 = vunpack.c.l.s4 1983009808
    %v10693 = vunpack.c.0.s8 %v10692
    %v10694 = vlaneseq
    %v10695 = vshrl.u32 %v10694, 7
    %v10696 = vsub.s32 %v10693, %v10695
    %v10697 = vrot.slane %v8525, %v10696
    %v10698 = vcombine.low %v9178, %v9180
    %v10699 = vcombine.low %v9188, %v9196
    %v10701 = vunpack.c.l.s4 1983009808
    %v10702 = vunpack.c.0.s8 %v10701
    %v10703 = vlaneseq
    %v10704 = vshrl.u32 %v10703, 7
    %v10705 = vsub.s32 %v10702, %v10704
    %v10706 = vrot.slane %v10698, %v10705
    %v10708 = vunpack.c.l.s4 1983009808
    %v10709 = vunpack.c.0.s8 %v10708
    %v10710 = vlaneseq
    %v10711 = vshrl.u32 %v10710, 7
    %v10712 = vsub.s32 %v10709, %v10711
    %v10713 = vrot.slane %v10699, %v10712
    %v10714 = vcombine.low %v10706, %v10713
    %v10715 = vcombine.low %v9195, %v9197
    %v10716 = vcombine.low %v9205, %v9213
    %v10718 = vunpack.c.l.s4 1983009808
    %v10719 = vunpack.c.0.s8 %v10718
    %v10720 = vlaneseq
    %v10721 = vshrl.u32 %v10720, 7
    %v10722 = vsub.s32 %v10719, %v10721
    %v10723 = vrot.slane %v10715, %v10722
    %v10725 = vunpack.c.l.s4 1983009808
    %v10726 = vunpack.c.0.s8 %v10725
    %v10727 = vlaneseq
    %v10728 = vshrl.u32 %v10727, 7
    %v10729 = vsub.s32 %v10726, %v10728
    %v10730 = vrot.slane %v10716, %v10729
    %v10731 = vcombine.low %v10723, %v10730
    %v10733 = vunpack.c.l.s4 1983009808
    %v10734 = vunpack.c.0.s8 %v10733
    %v10735 = vlaneseq
    %v10736 = vshrl.u32 %v10735, 7
    %v10737 = vsub.s32 %v10734, %v10736
    %v10738 = vrot.slane %v9212, %v10737
    %10739 = vrot.lane.b32.xlu0 %v9306, 4
    %v10740 = vpop.permute.xlu0 %10739
    %10741 = vrot.lane.b32.xlu0 %v9323, 4
    %v10742 = vpop.permute.xlu0 %10741
    %10743 = vrot.lane.b32.xlu0 %v9330, 4
    %v10744 = vpop.permute.xlu0 %10743
    %10745 = vrot.lane.b32.xlu0 %v9347, 4
    %v10746 = vpop.permute.xlu0 %10745
    %10747 = vrot.lane.b32.xlu0 %v9364, 4
    %v10748 = vpop.permute.xlu0 %10747
    %10749 = vrot.lane.b32.xlu0 %v9371, 4
    %v10750 = vpop.permute.xlu0 %10749
    %10751 = vrot.lane.b32.xlu0 %v9388, 4
    %v10752 = vpop.permute.xlu0 %10751
    %10753 = vrot.lane.b32.xlu0 %v9405, 4
    %v10754 = vpop.permute.xlu0 %10753
    %10755 = vrot.lane.b32.xlu0 %v9412, 4
    %v10756 = vpop.permute.xlu0 %10755
    %10757 = vrot.lane.b32.xlu0 %v9429, 4
    %v10758 = vpop.permute.xlu0 %10757
    %10759 = vrot.lane.b32.xlu0 %v9446, 4
    %v10760 = vpop.permute.xlu0 %10759
    %10761 = vrot.lane.b32.xlu0 %v9453, 4
    %v10762 = vpop.permute.xlu0 %10761
    %10763 = vrot.lane.b32.xlu0 %v9470, 4
    %v10764 = vpop.permute.xlu0 %10763
    %10765 = vrot.lane.b32.xlu0 %v9487, 4
    %v10766 = vpop.permute.xlu0 %10765
    %10767 = vrot.lane.b32.xlu0 %v9494, 4
    %v10768 = vpop.permute.xlu0 %10767
    %10769 = vrot.lane.b32.xlu0 %v9511, 4
    %v10770 = vpop.permute.xlu0 %10769
    %10771 = vrot.lane.b32.xlu0 %v9528, 4
    %v10772 = vpop.permute.xlu0 %10771
    %10773 = vrot.lane.b32.xlu0 %v9535, 4
    %v10774 = vpop.permute.xlu0 %10773
    %10775 = vrot.lane.b32.xlu0 %v9552, 4
    %v10776 = vpop.permute.xlu0 %10775
    %10777 = vrot.lane.b32.xlu0 %v9569, 4
    %v10778 = vpop.permute.xlu0 %10777
    %10779 = vrot.lane.b32.xlu0 %v9576, 4
    %v10780 = vpop.permute.xlu0 %10779
    %10781 = vrot.lane.b32.xlu0 %v9593, 4
    %v10782 = vpop.permute.xlu0 %10781
    %10783 = vrot.lane.b32.xlu0 %v9610, 4
    %v10784 = vpop.permute.xlu0 %10783
    %10785 = vrot.lane.b32.xlu0 %v9617, 4
    %v10786 = vpop.permute.xlu0 %10785
    %10787 = vrot.lane.b32.xlu0 %v9634, 4
    %v10788 = vpop.permute.xlu0 %10787
    %10789 = vrot.lane.b32.xlu0 %v9651, 4
    %v10790 = vpop.permute.xlu0 %10789
    %10791 = vrot.lane.b32.xlu0 %v9658, 4
    %v10792 = vpop.permute.xlu0 %10791
    %10793 = vrot.lane.b32.xlu0 %v9675, 4
    %v10794 = vpop.permute.xlu0 %10793
    %10795 = vrot.lane.b32.xlu0 %v9692, 4
    %v10796 = vpop.permute.xlu0 %10795
    %10797 = vrot.lane.b32.xlu0 %v9699, 4
    %v10798 = vpop.permute.xlu0 %10797
    %10799 = vrot.lane.b32.xlu0 %v9716, 4
    %v10800 = vpop.permute.xlu0 %10799
    %10801 = vrot.lane.b32.xlu0 %v9733, 4
    %v10802 = vpop.permute.xlu0 %10801
    %10803 = vrot.lane.b32.xlu0 %v9740, 4
    %v10804 = vpop.permute.xlu0 %10803
    %10805 = vrot.lane.b32.xlu0 %v9757, 4
    %v10806 = vpop.permute.xlu0 %10805
    %10807 = vrot.lane.b32.xlu0 %v9774, 4
    %v10808 = vpop.permute.xlu0 %10807
    %10809 = vrot.lane.b32.xlu0 %v9781, 4
    %v10810 = vpop.permute.xlu0 %10809
    %10811 = vrot.lane.b32.xlu0 %v9798, 4
    %v10812 = vpop.permute.xlu0 %10811
    %10813 = vrot.lane.b32.xlu0 %v9815, 4
    %v10814 = vpop.permute.xlu0 %10813
    %10815 = vrot.lane.b32.xlu0 %v9822, 4
    %v10816 = vpop.permute.xlu0 %10815
    %10817 = vrot.lane.b32.xlu0 %v9839, 4
    %v10818 = vpop.permute.xlu0 %10817
    %10819 = vrot.lane.b32.xlu0 %v9856, 4
    %v10820 = vpop.permute.xlu0 %10819
    %10821 = vrot.lane.b32.xlu0 %v9863, 4
    %v10822 = vpop.permute.xlu0 %10821
    %10823 = vrot.lane.b32.xlu0 %v9880, 4
    %v10824 = vpop.permute.xlu0 %10823
    %10825 = vrot.lane.b32.xlu0 %v9897, 4
    %v10826 = vpop.permute.xlu0 %10825
    %10827 = vrot.lane.b32.xlu0 %v9904, 4
    %v10828 = vpop.permute.xlu0 %10827
    %10829 = vrot.lane.b32.xlu0 %v10673, 4
    %v10830 = vpop.permute.xlu0 %10829
    %10831 = vrot.lane.b32.xlu0 %v10690, 4
    %v10832 = vpop.permute.xlu0 %10831
    %10833 = vrot.lane.b32.xlu0 %v10697, 4
    %v10834 = vpop.permute.xlu0 %10833
    %10835 = vrot.lane.b32.xlu0 %v9962, 4
    %v10836 = vpop.permute.xlu0 %10835
    %10837 = vrot.lane.b32.xlu0 %v9979, 4
    %v10838 = vpop.permute.xlu0 %10837
    %10839 = vrot.lane.b32.xlu0 %v9986, 4
    %v10840 = vpop.permute.xlu0 %10839
    %10841 = vrot.lane.b32.xlu0 %v10003, 4
    %v10842 = vpop.permute.xlu0 %10841
    %10843 = vrot.lane.b32.xlu0 %v10020, 4
    %v10844 = vpop.permute.xlu0 %10843
    %10845 = vrot.lane.b32.xlu0 %v10027, 4
    %v10846 = vpop.permute.xlu0 %10845
    %10847 = vrot.lane.b32.xlu0 %v10044, 4
    %v10848 = vpop.permute.xlu0 %10847
    %10849 = vrot.lane.b32.xlu0 %v10061, 4
    %v10850 = vpop.permute.xlu0 %10849
    %10851 = vrot.lane.b32.xlu0 %v10068, 4
    %v10852 = vpop.permute.xlu0 %10851
    %10853 = vrot.lane.b32.xlu0 %v10085, 4
    %v10854 = vpop.permute.xlu0 %10853
    %10855 = vrot.lane.b32.xlu0 %v10102, 4
    %v10856 = vpop.permute.xlu0 %10855
    %10857 = vrot.lane.b32.xlu0 %v10109, 4
    %v10858 = vpop.permute.xlu0 %10857
    %10859 = vrot.lane.b32.xlu0 %v10126, 4
    %v10860 = vpop.permute.xlu0 %10859
    %10861 = vrot.lane.b32.xlu0 %v10143, 4
    %v10862 = vpop.permute.xlu0 %10861
    %10863 = vrot.lane.b32.xlu0 %v10150, 4
    %v10864 = vpop.permute.xlu0 %10863
    %10865 = vrot.lane.b32.xlu0 %v10167, 4
    %v10866 = vpop.permute.xlu0 %10865
    %10867 = vrot.lane.b32.xlu0 %v10184, 4
    %v10868 = vpop.permute.xlu0 %10867
    %10869 = vrot.lane.b32.xlu0 %v10191, 4
    %v10870 = vpop.permute.xlu0 %10869
    %10871 = vrot.lane.b32.xlu0 %v10208, 4
    %v10872 = vpop.permute.xlu0 %10871
    %10873 = vrot.lane.b32.xlu0 %v10225, 4
    %v10874 = vpop.permute.xlu0 %10873
    %10875 = vrot.lane.b32.xlu0 %v10232, 4
    %v10876 = vpop.permute.xlu0 %10875
    %10877 = vrot.lane.b32.xlu0 %v10249, 4
    %v10878 = vpop.permute.xlu0 %10877
    %10879 = vrot.lane.b32.xlu0 %v10266, 4
    %v10880 = vpop.permute.xlu0 %10879
    %10881 = vrot.lane.b32.xlu0 %v10273, 4
    %v10882 = vpop.permute.xlu0 %10881
    %10883 = vrot.lane.b32.xlu0 %v10290, 4
    %v10884 = vpop.permute.xlu0 %10883
    %10885 = vrot.lane.b32.xlu0 %v10307, 4
    %v10886 = vpop.permute.xlu0 %10885
    %10887 = vrot.lane.b32.xlu0 %v10314, 4
    %v10888 = vpop.permute.xlu0 %10887
    %10889 = vrot.lane.b32.xlu0 %v10331, 4
    %v10890 = vpop.permute.xlu0 %10889
    %10891 = vrot.lane.b32.xlu0 %v10348, 4
    %v10892 = vpop.permute.xlu0 %10891
    %10893 = vrot.lane.b32.xlu0 %v10355, 4
    %v10894 = vpop.permute.xlu0 %10893
    %10895 = vrot.lane.b32.xlu0 %v10372, 4
    %v10896 = vpop.permute.xlu0 %10895
    %10897 = vrot.lane.b32.xlu0 %v10389, 4
    %v10898 = vpop.permute.xlu0 %10897
    %10899 = vrot.lane.b32.xlu0 %v10396, 4
    %v10900 = vpop.permute.xlu0 %10899
    %10901 = vrot.lane.b32.xlu0 %v10413, 4
    %v10902 = vpop.permute.xlu0 %10901
    %10903 = vrot.lane.b32.xlu0 %v10430, 4
    %v10904 = vpop.permute.xlu0 %10903
    %10905 = vrot.lane.b32.xlu0 %v10437, 4
    %v10906 = vpop.permute.xlu0 %10905
    %10907 = vrot.lane.b32.xlu0 %v10454, 4
    %v10908 = vpop.permute.xlu0 %10907
    %10909 = vrot.lane.b32.xlu0 %v10471, 4
    %v10910 = vpop.permute.xlu0 %10909
    %10911 = vrot.lane.b32.xlu0 %v10478, 4
    %v10912 = vpop.permute.xlu0 %10911
    %10913 = vrot.lane.b32.xlu0 %v10495, 4
    %v10914 = vpop.permute.xlu0 %10913
    %10915 = vrot.lane.b32.xlu0 %v10512, 4
    %v10916 = vpop.permute.xlu0 %10915
    %10917 = vrot.lane.b32.xlu0 %v10519, 4
    %v10918 = vpop.permute.xlu0 %10917
    %10919 = vrot.lane.b32.xlu0 %v10536, 4
    %v10920 = vpop.permute.xlu0 %10919
    %10921 = vrot.lane.b32.xlu0 %v10553, 4
    %v10922 = vpop.permute.xlu0 %10921
    %10923 = vrot.lane.b32.xlu0 %v10560, 4
    %v10924 = vpop.permute.xlu0 %10923
    %10925 = vrot.lane.b32.xlu0 %v10714, 4
    %v10926 = vpop.permute.xlu0 %10925
    %10927 = vrot.lane.b32.xlu0 %v10731, 4
    %v10928 = vpop.permute.xlu0 %10927
    %10929 = vrot.lane.b32.xlu0 %v10738, 4
    %v10930 = vpop.permute.xlu0 %10929
    %v11027 = vcombine.low %v8533, %v8532
    %v11028 = vcombine.low %v8534, %v8542
    %v11030 = vunpack.c.l.s4 1983009808
    %v11031 = vunpack.c.0.s8 %v11030
    %v11032 = vlaneseq
    %v11033 = vshrl.u32 %v11032, 7
    %v11034 = vsub.s32 %v11031, %v11033
    %v11035 = vrot.slane %v11027, %v11034
    %v11037 = vunpack.c.l.s4 1983009808
    %v11038 = vunpack.c.0.s8 %v11037
    %v11039 = vlaneseq
    %v11040 = vshrl.u32 %v11039, 7
    %v11041 = vsub.s32 %v11038, %v11040
    %v11042 = vrot.slane %v11028, %v11041
    %v11043 = vcombine.low %v11035, %v11042
    %v11044 = vcombine.low %v8550, %v8549
    %v11045 = vcombine.low %v8551, %v8559
    %v11047 = vunpack.c.l.s4 1983009808
    %v11048 = vunpack.c.0.s8 %v11047
    %v11049 = vlaneseq
    %v11050 = vshrl.u32 %v11049, 7
    %v11051 = vsub.s32 %v11048, %v11050
    %v11052 = vrot.slane %v11044, %v11051
    %v11054 = vunpack.c.l.s4 1983009808
    %v11055 = vunpack.c.0.s8 %v11054
    %v11056 = vlaneseq
    %v11057 = vshrl.u32 %v11056, 7
    %v11058 = vsub.s32 %v11055, %v11057
    %v11059 = vrot.slane %v11045, %v11058
    %v11060 = vcombine.low %v11052, %v11059
    %v11062 = vunpack.c.l.s4 1983009808
    %v11063 = vunpack.c.0.s8 %v11062
    %v11064 = vlaneseq
    %v11065 = vshrl.u32 %v11064, 7
    %v11066 = vsub.s32 %v11063, %v11065
    %v11067 = vrot.slane %v8567, %v11066
    %v11068 = vcombine.low %v9214, %v9222
    %v11069 = vcombine.low %v9230, %v9229
    %v11071 = vunpack.c.l.s4 1983009808
    %v11072 = vunpack.c.0.s8 %v11071
    %v11073 = vlaneseq
    %v11074 = vshrl.u32 %v11073, 7
    %v11075 = vsub.s32 %v11072, %v11074
    %v11076 = vrot.slane %v11068, %v11075
    %v11078 = vunpack.c.l.s4 1983009808
    %v11079 = vunpack.c.0.s8 %v11078
    %v11080 = vlaneseq
    %v11081 = vshrl.u32 %v11080, 7
    %v11082 = vsub.s32 %v11079, %v11081
    %v11083 = vrot.slane %v11069, %v11082
    %v11084 = vcombine.low %v11076, %v11083
    %v11085 = vcombine.low %v9231, %v9239
    %v11086 = vcombine.low %v9247, %v9246
    %v11088 = vunpack.c.l.s4 1983009808
    %v11089 = vunpack.c.0.s8 %v11088
    %v11090 = vlaneseq
    %v11091 = vshrl.u32 %v11090, 7
    %v11092 = vsub.s32 %v11089, %v11091
    %v11093 = vrot.slane %v11085, %v11092
    %v11095 = vunpack.c.l.s4 1983009808
    %v11096 = vunpack.c.0.s8 %v11095
    %v11097 = vlaneseq
    %v11098 = vshrl.u32 %v11097, 7
    %v11099 = vsub.s32 %v11096, %v11098
    %v11100 = vrot.slane %v11086, %v11099
    %v11101 = vcombine.low %v11093, %v11100
    %v11103 = vunpack.c.l.s4 1983009808
    %v11104 = vunpack.c.0.s8 %v11103
    %v11105 = vlaneseq
    %v11106 = vshrl.u32 %v11105, 7
    %v11107 = vsub.s32 %v11104, %v11106
    %v11108 = vrot.slane %v9248, %v11107
    %11109 = vrot.lane.b32.xlu0 %v9347, 8
    %v11110 = vpop.permute.xlu0 %11109
    %11111 = vrot.lane.b32.xlu0 %v9364, 8
    %v11112 = vpop.permute.xlu0 %11111
    %11113 = vrot.lane.b32.xlu0 %v9371, 8
    %v11114 = vpop.permute.xlu0 %11113
    %11115 = vrot.lane.b32.xlu0 %v9388, 8
    %v11116 = vpop.permute.xlu0 %11115
    %11117 = vrot.lane.b32.xlu0 %v9405, 8
    %v11118 = vpop.permute.xlu0 %11117
    %11119 = vrot.lane.b32.xlu0 %v9412, 8
    %v11120 = vpop.permute.xlu0 %11119
    %11121 = vrot.lane.b32.xlu0 %v9429, 8
    %v11122 = vpop.permute.xlu0 %11121
    %11123 = vrot.lane.b32.xlu0 %v9446, 8
    %v11124 = vpop.permute.xlu0 %11123
    %11125 = vrot.lane.b32.xlu0 %v9453, 8
    %v11126 = vpop.permute.xlu0 %11125
    %11127 = vrot.lane.b32.xlu0 %v9470, 8
    %v11128 = vpop.permute.xlu0 %11127
    %11129 = vrot.lane.b32.xlu0 %v9487, 8
    %v11130 = vpop.permute.xlu0 %11129
    %11131 = vrot.lane.b32.xlu0 %v9494, 8
    %v11132 = vpop.permute.xlu0 %11131
    %11133 = vrot.lane.b32.xlu0 %v9511, 8
    %v11134 = vpop.permute.xlu0 %11133
    %11135 = vrot.lane.b32.xlu0 %v9528, 8
    %v11136 = vpop.permute.xlu0 %11135
    %11137 = vrot.lane.b32.xlu0 %v9535, 8
    %v11138 = vpop.permute.xlu0 %11137
    %11139 = vrot.lane.b32.xlu0 %v9552, 8
    %v11140 = vpop.permute.xlu0 %11139
    %11141 = vrot.lane.b32.xlu0 %v9569, 8
    %v11142 = vpop.permute.xlu0 %11141
    %11143 = vrot.lane.b32.xlu0 %v9576, 8
    %v11144 = vpop.permute.xlu0 %11143
    %11145 = vrot.lane.b32.xlu0 %v9593, 8
    %v11146 = vpop.permute.xlu0 %11145
    %11147 = vrot.lane.b32.xlu0 %v9610, 8
    %v11148 = vpop.permute.xlu0 %11147
    %11149 = vrot.lane.b32.xlu0 %v9617, 8
    %v11150 = vpop.permute.xlu0 %11149
    %11151 = vrot.lane.b32.xlu0 %v9634, 8
    %v11152 = vpop.permute.xlu0 %11151
    %11153 = vrot.lane.b32.xlu0 %v9651, 8
    %v11154 = vpop.permute.xlu0 %11153
    %11155 = vrot.lane.b32.xlu0 %v9658, 8
    %v11156 = vpop.permute.xlu0 %11155
    %11157 = vrot.lane.b32.xlu0 %v9675, 8
    %v11158 = vpop.permute.xlu0 %11157
    %11159 = vrot.lane.b32.xlu0 %v9692, 8
    %v11160 = vpop.permute.xlu0 %11159
    %11161 = vrot.lane.b32.xlu0 %v9699, 8
    %v11162 = vpop.permute.xlu0 %11161
    %11163 = vrot.lane.b32.xlu0 %v9716, 8
    %v11164 = vpop.permute.xlu0 %11163
    %11165 = vrot.lane.b32.xlu0 %v9733, 8
    %v11166 = vpop.permute.xlu0 %11165
    %11167 = vrot.lane.b32.xlu0 %v9740, 8
    %v11168 = vpop.permute.xlu0 %11167
    %11169 = vrot.lane.b32.xlu0 %v9757, 8
    %v11170 = vpop.permute.xlu0 %11169
    %11171 = vrot.lane.b32.xlu0 %v9774, 8
    %v11172 = vpop.permute.xlu0 %11171
    %11173 = vrot.lane.b32.xlu0 %v9781, 8
    %v11174 = vpop.permute.xlu0 %11173
    %11175 = vrot.lane.b32.xlu0 %v9798, 8
    %v11176 = vpop.permute.xlu0 %11175
    %11177 = vrot.lane.b32.xlu0 %v9815, 8
    %v11178 = vpop.permute.xlu0 %11177
    %11179 = vrot.lane.b32.xlu0 %v9822, 8
    %v11180 = vpop.permute.xlu0 %11179
    %11181 = vrot.lane.b32.xlu0 %v9839, 8
    %v11182 = vpop.permute.xlu0 %11181
    %11183 = vrot.lane.b32.xlu0 %v9856, 8
    %v11184 = vpop.permute.xlu0 %11183
    %11185 = vrot.lane.b32.xlu0 %v9863, 8
    %v11186 = vpop.permute.xlu0 %11185
    %11187 = vrot.lane.b32.xlu0 %v9880, 8
    %v11188 = vpop.permute.xlu0 %11187
    %11189 = vrot.lane.b32.xlu0 %v9897, 8
    %v11190 = vpop.permute.xlu0 %11189
    %11191 = vrot.lane.b32.xlu0 %v9904, 8
    %v11192 = vpop.permute.xlu0 %11191
    %11193 = vrot.lane.b32.xlu0 %v10673, 8
    %v11194 = vpop.permute.xlu0 %11193
    %11195 = vrot.lane.b32.xlu0 %v10690, 8
    %v11196 = vpop.permute.xlu0 %11195
    %11197 = vrot.lane.b32.xlu0 %v10697, 8
    %v11198 = vpop.permute.xlu0 %11197
    %11199 = vrot.lane.b32.xlu0 %v11043, 8
    %v11200 = vpop.permute.xlu0 %11199
    %11201 = vrot.lane.b32.xlu0 %v11060, 8
    %v11202 = vpop.permute.xlu0 %11201
    %11203 = vrot.lane.b32.xlu0 %v11067, 8
    %v11204 = vpop.permute.xlu0 %11203
    %11205 = vrot.lane.b32.xlu0 %v10003, 8
    %v11206 = vpop.permute.xlu0 %11205
    %11207 = vrot.lane.b32.xlu0 %v10020, 8
    %v11208 = vpop.permute.xlu0 %11207
    %11209 = vrot.lane.b32.xlu0 %v10027, 8
    %v11210 = vpop.permute.xlu0 %11209
    %11211 = vrot.lane.b32.xlu0 %v10044, 8
    %v11212 = vpop.permute.xlu0 %11211
    %11213 = vrot.lane.b32.xlu0 %v10061, 8
    %v11214 = vpop.permute.xlu0 %11213
    %11215 = vrot.lane.b32.xlu0 %v10068, 8
    %v11216 = vpop.permute.xlu0 %11215
    %11217 = vrot.lane.b32.xlu0 %v10085, 8
    %v11218 = vpop.permute.xlu0 %11217
    %11219 = vrot.lane.b32.xlu0 %v10102, 8
    %v11220 = vpop.permute.xlu0 %11219
    %11221 = vrot.lane.b32.xlu0 %v10109, 8
    %v11222 = vpop.permute.xlu0 %11221
    %11223 = vrot.lane.b32.xlu0 %v10126, 8
    %v11224 = vpop.permute.xlu0 %11223
    %11225 = vrot.lane.b32.xlu0 %v10143, 8
    %v11226 = vpop.permute.xlu0 %11225
    %11227 = vrot.lane.b32.xlu0 %v10150, 8
    %v11228 = vpop.permute.xlu0 %11227
    %11229 = vrot.lane.b32.xlu0 %v10167, 8
    %v11230 = vpop.permute.xlu0 %11229
    %11231 = vrot.lane.b32.xlu0 %v10184, 8
    %v11232 = vpop.permute.xlu0 %11231
    %11233 = vrot.lane.b32.xlu0 %v10191, 8
    %v11234 = vpop.permute.xlu0 %11233
    %11235 = vrot.lane.b32.xlu0 %v10208, 8
    %v11236 = vpop.permute.xlu0 %11235
    %11237 = vrot.lane.b32.xlu0 %v10225, 8
    %v11238 = vpop.permute.xlu0 %11237
    %11239 = vrot.lane.b32.xlu0 %v10232, 8
    %v11240 = vpop.permute.xlu0 %11239
    %11241 = vrot.lane.b32.xlu0 %v10249, 8
    %v11242 = vpop.permute.xlu0 %11241
    %11243 = vrot.lane.b32.xlu0 %v10266, 8
    %v11244 = vpop.permute.xlu0 %11243
    %11245 = vrot.lane.b32.xlu0 %v10273, 8
    %v11246 = vpop.permute.xlu0 %11245
    %11247 = vrot.lane.b32.xlu0 %v10290, 8
    %v11248 = vpop.permute.xlu0 %11247
    %11249 = vrot.lane.b32.xlu0 %v10307, 8
    %v11250 = vpop.permute.xlu0 %11249
    %11251 = vrot.lane.b32.xlu0 %v10314, 8
    %v11252 = vpop.permute.xlu0 %11251
    %11253 = vrot.lane.b32.xlu0 %v10331, 8
    %v11254 = vpop.permute.xlu0 %11253
    %11255 = vrot.lane.b32.xlu0 %v10348, 8
    %v11256 = vpop.permute.xlu0 %11255
    %11257 = vrot.lane.b32.xlu0 %v10355, 8
    %v11258 = vpop.permute.xlu0 %11257
    %11259 = vrot.lane.b32.xlu0 %v10372, 8
    %v11260 = vpop.permute.xlu0 %11259
    %11261 = vrot.lane.b32.xlu0 %v10389, 8
    %v11262 = vpop.permute.xlu0 %11261
    %11263 = vrot.lane.b32.xlu0 %v10396, 8
    %v11264 = vpop.permute.xlu0 %11263
    %11265 = vrot.lane.b32.xlu0 %v10413, 8
    %v11266 = vpop.permute.xlu0 %11265
    %11267 = vrot.lane.b32.xlu0 %v10430, 8
    %v11268 = vpop.permute.xlu0 %11267
    %11269 = vrot.lane.b32.xlu0 %v10437, 8
    %v11270 = vpop.permute.xlu0 %11269
    %11271 = vrot.lane.b32.xlu0 %v10454, 8
    %v11272 = vpop.permute.xlu0 %11271
    %11273 = vrot.lane.b32.xlu0 %v10471, 8
    %v11274 = vpop.permute.xlu0 %11273
    %11275 = vrot.lane.b32.xlu0 %v10478, 8
    %v11276 = vpop.permute.xlu0 %11275
    %11277 = vrot.lane.b32.xlu0 %v10495, 8
    %v11278 = vpop.permute.xlu0 %11277
    %11279 = vrot.lane.b32.xlu0 %v10512, 8
    %v11280 = vpop.permute.xlu0 %11279
    %11281 = vrot.lane.b32.xlu0 %v10519, 8
    %v11282 = vpop.permute.xlu0 %11281
    %11283 = vrot.lane.b32.xlu0 %v10536, 8
    %v11284 = vpop.permute.xlu0 %11283
    %11285 = vrot.lane.b32.xlu0 %v10553, 8
    %v11286 = vpop.permute.xlu0 %11285
    %11287 = vrot.lane.b32.xlu0 %v10560, 8
    %v11288 = vpop.permute.xlu0 %11287
    %11289 = vrot.lane.b32.xlu0 %v10714, 8
    %v11290 = vpop.permute.xlu0 %11289
    %11291 = vrot.lane.b32.xlu0 %v10731, 8
    %v11292 = vpop.permute.xlu0 %11291
    %11293 = vrot.lane.b32.xlu0 %v10738, 8
    %v11294 = vpop.permute.xlu0 %11293
    %11295 = vrot.lane.b32.xlu0 %v11084, 8
    %v11296 = vpop.permute.xlu0 %11295
    %11297 = vrot.lane.b32.xlu0 %v11101, 8
    %v11298 = vpop.permute.xlu0 %11297
    %11299 = vrot.lane.b32.xlu0 %v11108, 8
    %v11300 = vpop.permute.xlu0 %11299
    %v11397 = vsel %vm916, %v9265, %v10740
    %v11398 = vsel %vm916, %v9282, %v10742
    %v11399 = vsel %vm916, %v9289, %v10744
    %v11400 = vsel %vm916, %v9306, %v10746
    %v11401 = vsel %vm916, %v9323, %v10748
    %v11402 = vsel %vm916, %v9330, %v10750
    %v11403 = vsel %vm916, %v9347, %v10752
    %v11404 = vsel %vm916, %v9364, %v10754
    %v11405 = vsel %vm916, %v9371, %v10756
    %v11406 = vsel %vm916, %v9388, %v10758
    %v11407 = vsel %vm916, %v9405, %v10760
    %v11408 = vsel %vm916, %v9412, %v10762
    %v11409 = vsel %vm916, %v9429, %v10764
    %v11410 = vsel %vm916, %v9446, %v10766
    %v11411 = vsel %vm916, %v9453, %v10768
    %v11412 = vsel %vm916, %v9470, %v10770
    %v11413 = vsel %vm916, %v9487, %v10772
    %v11414 = vsel %vm916, %v9494, %v10774
    %v11415 = vsel %vm916, %v9511, %v10776
    %v11416 = vsel %vm916, %v9528, %v10778
    %v11417 = vsel %vm916, %v9535, %v10780
    %v11418 = vsel %vm916, %v9552, %v10782
    %v11419 = vsel %vm916, %v9569, %v10784
    %v11420 = vsel %vm916, %v9576, %v10786
    %v11421 = vsel %vm916, %v9593, %v10788
    %v11422 = vsel %vm916, %v9610, %v10790
    %v11423 = vsel %vm916, %v9617, %v10792
    %v11424 = vsel %vm916, %v9634, %v10794
    %v11425 = vsel %vm916, %v9651, %v10796
    %v11426 = vsel %vm916, %v9658, %v10798
    %v11427 = vsel %vm916, %v9675, %v10800
    %v11428 = vsel %vm916, %v9692, %v10802
    %v11429 = vsel %vm916, %v9699, %v10804
    %v11430 = vsel %vm916, %v9716, %v10806
    %v11431 = vsel %vm916, %v9733, %v10808
    %v11432 = vsel %vm916, %v9740, %v10810
    %v11433 = vsel %vm916, %v9757, %v10812
    %v11434 = vsel %vm916, %v9774, %v10814
    %v11435 = vsel %vm916, %v9781, %v10816
    %v11436 = vsel %vm916, %v9798, %v10818
    %v11437 = vsel %vm916, %v9815, %v10820
    %v11438 = vsel %vm916, %v9822, %v10822
    %v11439 = vsel %vm916, %v9839, %v10824
    %v11440 = vsel %vm916, %v9856, %v10826
    %v11441 = vsel %vm916, %v9863, %v10828
    %v11442 = vsel %vm916, %v9880, %v10830
    %v11443 = vsel %vm916, %v9897, %v10832
    %v11444 = vsel %vm916, %v9904, %v10834
    %v11445 = vsel %vm916, %v9921, %v10836
    %v11446 = vsel %vm916, %v9938, %v10838
    %v11447 = vsel %vm916, %v9945, %v10840
    %v11448 = vsel %vm916, %v9962, %v10842
    %v11449 = vsel %vm916, %v9979, %v10844
    %v11450 = vsel %vm916, %v9986, %v10846
    %v11451 = vsel %vm916, %v10003, %v10848
    %v11452 = vsel %vm916, %v10020, %v10850
    %v11453 = vsel %vm916, %v10027, %v10852
    %v11454 = vsel %vm916, %v10044, %v10854
    %v11455 = vsel %vm916, %v10061, %v10856
    %v11456 = vsel %vm916, %v10068, %v10858
    %v11457 = vsel %vm916, %v10085, %v10860
    %v11458 = vsel %vm916, %v10102, %v10862
    %v11459 = vsel %vm916, %v10109, %v10864
    %v11460 = vsel %vm916, %v10126, %v10866
    %v11461 = vsel %vm916, %v10143, %v10868
    %v11462 = vsel %vm916, %v10150, %v10870
    %v11463 = vsel %vm916, %v10167, %v10872
    %v11464 = vsel %vm916, %v10184, %v10874
    %v11465 = vsel %vm916, %v10191, %v10876
    %v11466 = vsel %vm916, %v10208, %v10878
    %v11467 = vsel %vm916, %v10225, %v10880
    %v11468 = vsel %vm916, %v10232, %v10882
    %v11469 = vsel %vm916, %v10249, %v10884
    %v11470 = vsel %vm916, %v10266, %v10886
    %v11471 = vsel %vm916, %v10273, %v10888
    %v11472 = vsel %vm916, %v10290, %v10890
    %v11473 = vsel %vm916, %v10307, %v10892
    %v11474 = vsel %vm916, %v10314, %v10894
    %v11475 = vsel %vm916, %v10331, %v10896
    %v11476 = vsel %vm916, %v10348, %v10898
    %v11477 = vsel %vm916, %v10355, %v10900
    %v11478 = vsel %vm916, %v10372, %v10902
    %v11479 = vsel %vm916, %v10389, %v10904
    %v11480 = vsel %vm916, %v10396, %v10906
    %v11481 = vsel %vm916, %v10413, %v10908
    %v11482 = vsel %vm916, %v10430, %v10910
    %v11483 = vsel %vm916, %v10437, %v10912
    %v11484 = vsel %vm916, %v10454, %v10914
    %v11485 = vsel %vm916, %v10471, %v10916
    %v11486 = vsel %vm916, %v10478, %v10918
    %v11487 = vsel %vm916, %v10495, %v10920
    %v11488 = vsel %vm916, %v10512, %v10922
    %v11489 = vsel %vm916, %v10519, %v10924
    %v11490 = vsel %vm916, %v10536, %v10926
    %v11491 = vsel %vm916, %v10553, %v10928
    %v11492 = vsel %vm916, %v10560, %v10930
    %v11493 = vsel %vm1025, %v11397, %v11110
    %v11494 = vsel %vm1025, %v11398, %v11112
    %v11495 = vsel %vm1025, %v11399, %v11114
    %v11496 = vsel %vm1025, %v11400, %v11116
    %v11497 = vsel %vm1025, %v11401, %v11118
    %v11498 = vsel %vm1025, %v11402, %v11120
    %v11499 = vsel %vm1025, %v11403, %v11122
    %v11500 = vsel %vm1025, %v11404, %v11124
    %v11501 = vsel %vm1025, %v11405, %v11126
    %v11502 = vsel %vm1025, %v11406, %v11128
    %v11503 = vsel %vm1025, %v11407, %v11130
    %v11504 = vsel %vm1025, %v11408, %v11132
    %v11505 = vsel %vm1025, %v11409, %v11134
    %v11506 = vsel %vm1025, %v11410, %v11136
    %v11507 = vsel %vm1025, %v11411, %v11138
    %v11508 = vsel %vm1025, %v11412, %v11140
    %v11509 = vsel %vm1025, %v11413, %v11142
    %v11510 = vsel %vm1025, %v11414, %v11144
    %v11511 = vsel %vm1025, %v11415, %v11146
    %v11512 = vsel %vm1025, %v11416, %v11148
    %v11513 = vsel %vm1025, %v11417, %v11150
    %v11514 = vsel %vm1025, %v11418, %v11152
    %v11515 = vsel %vm1025, %v11419, %v11154
    %v11516 = vsel %vm1025, %v11420, %v11156
    %v11517 = vsel %vm1025, %v11421, %v11158
    %v11518 = vsel %vm1025, %v11422, %v11160
    %v11519 = vsel %vm1025, %v11423, %v11162
    %v11520 = vsel %vm1025, %v11424, %v11164
    %v11521 = vsel %vm1025, %v11425, %v11166
    %v11522 = vsel %vm1025, %v11426, %v11168
    %v11523 = vsel %vm1025, %v11427, %v11170
    %v11524 = vsel %vm1025, %v11428, %v11172
    %v11525 = vsel %vm1025, %v11429, %v11174
    %v11526 = vsel %vm1025, %v11430, %v11176
    %v11527 = vsel %vm1025, %v11431, %v11178
    %v11528 = vsel %vm1025, %v11432, %v11180
    %v11529 = vsel %vm1025, %v11433, %v11182
    %v11530 = vsel %vm1025, %v11434, %v11184
    %v11531 = vsel %vm1025, %v11435, %v11186
    %v11532 = vsel %vm1025, %v11436, %v11188
    %v11533 = vsel %vm1025, %v11437, %v11190
    %v11534 = vsel %vm1025, %v11438, %v11192
    %v11535 = vsel %vm1025, %v11439, %v11194
    %v11536 = vsel %vm1025, %v11440, %v11196
    %v11537 = vsel %vm1025, %v11441, %v11198
    %v11538 = vsel %vm1025, %v11442, %v11200
    %v11539 = vsel %vm1025, %v11443, %v11202
    %v11540 = vsel %vm1025, %v11444, %v11204
    %v11541 = vsel %vm1025, %v11445, %v11206
    %v11542 = vsel %vm1025, %v11446, %v11208
    %v11543 = vsel %vm1025, %v11447, %v11210
    %v11544 = vsel %vm1025, %v11448, %v11212
    %v11545 = vsel %vm1025, %v11449, %v11214
    %v11546 = vsel %vm1025, %v11450, %v11216
    %v11547 = vsel %vm1025, %v11451, %v11218
    %v11548 = vsel %vm1025, %v11452, %v11220
    %v11549 = vsel %vm1025, %v11453, %v11222
    %v11550 = vsel %vm1025, %v11454, %v11224
    %v11551 = vsel %vm1025, %v11455, %v11226
    %v11552 = vsel %vm1025, %v11456, %v11228
    %v11553 = vsel %vm1025, %v11457, %v11230
    %v11554 = vsel %vm1025, %v11458, %v11232
    %v11555 = vsel %vm1025, %v11459, %v11234
    %v11556 = vsel %vm1025, %v11460, %v11236
    %v11557 = vsel %vm1025, %v11461, %v11238
    %v11558 = vsel %vm1025, %v11462, %v11240
    %v11559 = vsel %vm1025, %v11463, %v11242
    %v11560 = vsel %vm1025, %v11464, %v11244
    %v11561 = vsel %vm1025, %v11465, %v11246
    %v11562 = vsel %vm1025, %v11466, %v11248
    %v11563 = vsel %vm1025, %v11467, %v11250
    %v11564 = vsel %vm1025, %v11468, %v11252
    %v11565 = vsel %vm1025, %v11469, %v11254
    %v11566 = vsel %vm1025, %v11470, %v11256
    %v11567 = vsel %vm1025, %v11471, %v11258
    %v11568 = vsel %vm1025, %v11472, %v11260
    %v11569 = vsel %vm1025, %v11473, %v11262
    %v11570 = vsel %vm1025, %v11474, %v11264
    %v11571 = vsel %vm1025, %v11475, %v11266
    %v11572 = vsel %vm1025, %v11476, %v11268
    %v11573 = vsel %vm1025, %v11477, %v11270
    %v11574 = vsel %vm1025, %v11478, %v11272
    %v11575 = vsel %vm1025, %v11479, %v11274
    %v11576 = vsel %vm1025, %v11480, %v11276
    %v11577 = vsel %vm1025, %v11481, %v11278
    %v11578 = vsel %vm1025, %v11482, %v11280
    %v11579 = vsel %vm1025, %v11483, %v11282
    %v11580 = vsel %vm1025, %v11484, %v11284
    %v11581 = vsel %vm1025, %v11485, %v11286
    %v11582 = vsel %vm1025, %v11486, %v11288
    %v11583 = vsel %vm1025, %v11487, %v11290
    %v11584 = vsel %vm1025, %v11488, %v11292
    %v11585 = vsel %vm1025, %v11489, %v11294
    %v11586 = vsel %vm1025, %v11490, %v11296
    %v11587 = vsel %vm1025, %v11491, %v11298
    %v11588 = vsel %vm1025, %v11492, %v11300
    %v11685 = vrot.slane %v11493, 1
    %v11686 = vrot.slane %v11494, 1
    %v11687 = vsel %vm1242, %v11685, %v11686
    %v11688 = vrot.slane %v11495, 1
    %v11689 = vsel %vm1242, %v11686, %v11688
    %v11690 = vrot.slane %v11496, 1
    %v11691 = vrot.slane %v11497, 1
    %v11692 = vsel %vm1242, %v11690, %v11691
    %v11693 = vrot.slane %v11498, 1
    %v11694 = vsel %vm1242, %v11691, %v11693
    %v11695 = vrot.slane %v11499, 1
    %v11696 = vrot.slane %v11500, 1
    %v11697 = vsel %vm1242, %v11695, %v11696
    %v11698 = vrot.slane %v11501, 1
    %v11699 = vsel %vm1242, %v11696, %v11698
    %v11700 = vrot.slane %v11502, 1
    %v11701 = vrot.slane %v11503, 1
    %v11702 = vsel %vm1242, %v11700, %v11701
    %v11703 = vrot.slane %v11504, 1
    %v11704 = vsel %vm1242, %v11701, %v11703
    %v11705 = vrot.slane %v11505, 1
    %v11706 = vrot.slane %v11506, 1
    %v11707 = vsel %vm1242, %v11705, %v11706
    %v11708 = vrot.slane %v11507, 1
    %v11709 = vsel %vm1242, %v11706, %v11708
    %v11710 = vrot.slane %v11508, 1
    %v11711 = vrot.slane %v11509, 1
    %v11712 = vsel %vm1242, %v11710, %v11711
    %v11713 = vrot.slane %v11510, 1
    %v11714 = vsel %vm1242, %v11711, %v11713
    %v11715 = vrot.slane %v11511, 1
    %v11716 = vrot.slane %v11512, 1
    %v11717 = vsel %vm1242, %v11715, %v11716
    %v11718 = vrot.slane %v11513, 1
    %v11719 = vsel %vm1242, %v11716, %v11718
    %v11720 = vrot.slane %v11514, 1
    %v11721 = vrot.slane %v11515, 1
    %v11722 = vsel %vm1242, %v11720, %v11721
    %v11723 = vrot.slane %v11516, 1
    %v11724 = vsel %vm1242, %v11721, %v11723
    %v11725 = vrot.slane %v11517, 1
    %v11726 = vrot.slane %v11518, 1
    %v11727 = vsel %vm1242, %v11725, %v11726
    %v11728 = vrot.slane %v11519, 1
    %v11729 = vsel %vm1242, %v11726, %v11728
    %v11730 = vrot.slane %v11520, 1
    %v11731 = vrot.slane %v11521, 1
    %v11732 = vsel %vm1242, %v11730, %v11731
    %v11733 = vrot.slane %v11522, 1
    %v11734 = vsel %vm1242, %v11731, %v11733
    %v11735 = vrot.slane %v11523, 1
    %v11736 = vrot.slane %v11524, 1
    %v11737 = vsel %vm1242, %v11735, %v11736
    %v11738 = vrot.slane %v11525, 1
    %v11739 = vsel %vm1242, %v11736, %v11738
    %v11740 = vrot.slane %v11526, 1
    %v11741 = vrot.slane %v11527, 1
    %v11742 = vsel %vm1242, %v11740, %v11741
    %v11743 = vrot.slane %v11528, 1
    %v11744 = vsel %vm1242, %v11741, %v11743
    %v11745 = vrot.slane %v11529, 1
    %v11746 = vrot.slane %v11530, 1
    %v11747 = vsel %vm1242, %v11745, %v11746
    %v11748 = vrot.slane %v11531, 1
    %v11749 = vsel %vm1242, %v11746, %v11748
    %v11750 = vrot.slane %v11532, 1
    %v11751 = vrot.slane %v11533, 1
    %v11752 = vsel %vm1242, %v11750, %v11751
    %v11753 = vrot.slane %v11534, 1
    %v11754 = vsel %vm1242, %v11751, %v11753
    %v11755 = vrot.slane %v11535, 1
    %v11756 = vrot.slane %v11536, 1
    %v11757 = vsel %vm1242, %v11755, %v11756
    %v11758 = vrot.slane %v11537, 1
    %v11759 = vsel %vm1242, %v11756, %v11758
    %v11760 = vrot.slane %v11538, 1
    %v11761 = vrot.slane %v11539, 1
    %v11762 = vsel %vm1242, %v11760, %v11761
    %v11763 = vrot.slane %v11540, 1
    %v11764 = vsel %vm1242, %v11761, %v11763
    %v11765 = vrot.slane %v11541, 1
    %v11766 = vrot.slane %v11542, 1
    %v11767 = vsel %vm1242, %v11765, %v11766
    %v11768 = vrot.slane %v11543, 1
    %v11769 = vsel %vm1242, %v11766, %v11768
    %v11770 = vrot.slane %v11544, 1
    %v11771 = vrot.slane %v11545, 1
    %v11772 = vsel %vm1242, %v11770, %v11771
    %v11773 = vrot.slane %v11546, 1
    %v11774 = vsel %vm1242, %v11771, %v11773
    %v11775 = vrot.slane %v11547, 1
    %v11776 = vrot.slane %v11548, 1
    %v11777 = vsel %vm1242, %v11775, %v11776
    %v11778 = vrot.slane %v11549, 1
    %v11779 = vsel %vm1242, %v11776, %v11778
    %v11780 = vrot.slane %v11550, 1
    %v11781 = vrot.slane %v11551, 1
    %v11782 = vsel %vm1242, %v11780, %v11781
    %v11783 = vrot.slane %v11552, 1
    %v11784 = vsel %vm1242, %v11781, %v11783
    %v11785 = vrot.slane %v11553, 1
    %v11786 = vrot.slane %v11554, 1
    %v11787 = vsel %vm1242, %v11785, %v11786
    %v11788 = vrot.slane %v11555, 1
    %v11789 = vsel %vm1242, %v11786, %v11788
    %v11790 = vrot.slane %v11556, 1
    %v11791 = vrot.slane %v11557, 1
    %v11792 = vsel %vm1242, %v11790, %v11791
    %v11793 = vrot.slane %v11558, 1
    %v11794 = vsel %vm1242, %v11791, %v11793
    %v11795 = vrot.slane %v11559, 1
    %v11796 = vrot.slane %v11560, 1
    %v11797 = vsel %vm1242, %v11795, %v11796
    %v11798 = vrot.slane %v11561, 1
    %v11799 = vsel %vm1242, %v11796, %v11798
    %v11800 = vrot.slane %v11562, 1
    %v11801 = vrot.slane %v11563, 1
    %v11802 = vsel %vm1242, %v11800, %v11801
    %v11803 = vrot.slane %v11564, 1
    %v11804 = vsel %vm1242, %v11801, %v11803
    %v11805 = vrot.slane %v11565, 1
    %v11806 = vrot.slane %v11566, 1
    %v11807 = vsel %vm1242, %v11805, %v11806
    %v11808 = vrot.slane %v11567, 1
    %v11809 = vsel %vm1242, %v11806, %v11808
    %v11810 = vrot.slane %v11568, 1
    %v11811 = vrot.slane %v11569, 1
    %v11812 = vsel %vm1242, %v11810, %v11811
    %v11813 = vrot.slane %v11570, 1
    %v11814 = vsel %vm1242, %v11811, %v11813
    %v11815 = vrot.slane %v11571, 1
    %v11816 = vrot.slane %v11572, 1
    %v11817 = vsel %vm1242, %v11815, %v11816
    %v11818 = vrot.slane %v11573, 1
    %v11819 = vsel %vm1242, %v11816, %v11818
    %v11820 = vrot.slane %v11574, 1
    %v11821 = vrot.slane %v11575, 1
    %v11822 = vsel %vm1242, %v11820, %v11821
    %v11823 = vrot.slane %v11576, 1
    %v11824 = vsel %vm1242, %v11821, %v11823
    %v11825 = vrot.slane %v11577, 1
    %v11826 = vrot.slane %v11578, 1
    %v11827 = vsel %vm1242, %v11825, %v11826
    %v11828 = vrot.slane %v11579, 1
    %v11829 = vsel %vm1242, %v11826, %v11828
    %v11830 = vrot.slane %v11580, 1
    %v11831 = vrot.slane %v11581, 1
    %v11832 = vsel %vm1242, %v11830, %v11831
    %v11833 = vrot.slane %v11582, 1
    %v11834 = vsel %vm1242, %v11831, %v11833
    %v11835 = vrot.slane %v11583, 1
    %v11836 = vrot.slane %v11584, 1
    %v11837 = vsel %vm1242, %v11835, %v11836
    %v11838 = vrot.slane %v11585, 1
    %v11839 = vsel %vm1242, %v11836, %v11838
    %v11840 = vrot.slane %v11586, 1
    %v11841 = vrot.slane %v11587, 1
    %v11842 = vsel %vm1242, %v11840, %v11841
    %v11843 = vrot.slane %v11588, 1
    %v11844 = vsel %vm1242, %v11841, %v11843
    %11845 = vrot.lane.b32.xlu0 %v11687, 12
    %v11846 = vpop.permute.xlu0 %11845
    %11847 = vrot.lane.b32.xlu0 %v11689, 12
    %v11848 = vpop.permute.xlu0 %11847
    %11849 = vrot.lane.b32.xlu0 %v11692, 12
    %v11850 = vpop.permute.xlu0 %11849
    %11851 = vrot.lane.b32.xlu0 %v11694, 12
    %v11852 = vpop.permute.xlu0 %11851
    %11853 = vrot.lane.b32.xlu0 %v11697, 12
    %v11854 = vpop.permute.xlu0 %11853
    %11855 = vrot.lane.b32.xlu0 %v11699, 12
    %v11856 = vpop.permute.xlu0 %11855
    %11857 = vrot.lane.b32.xlu0 %v11702, 12
    %v11858 = vpop.permute.xlu0 %11857
    %11859 = vrot.lane.b32.xlu0 %v11704, 12
    %v11860 = vpop.permute.xlu0 %11859
    %11861 = vrot.lane.b32.xlu0 %v11707, 12
    %v11862 = vpop.permute.xlu0 %11861
    %11863 = vrot.lane.b32.xlu0 %v11709, 12
    %v11864 = vpop.permute.xlu0 %11863
    %11865 = vrot.lane.b32.xlu0 %v11712, 12
    %v11866 = vpop.permute.xlu0 %11865
    %11867 = vrot.lane.b32.xlu0 %v11714, 12
    %v11868 = vpop.permute.xlu0 %11867
    %11869 = vrot.lane.b32.xlu0 %v11717, 12
    %v11870 = vpop.permute.xlu0 %11869
    %11871 = vrot.lane.b32.xlu0 %v11719, 12
    %v11872 = vpop.permute.xlu0 %11871
    %11873 = vrot.lane.b32.xlu0 %v11722, 12
    %v11874 = vpop.permute.xlu0 %11873
    %11875 = vrot.lane.b32.xlu0 %v11724, 12
    %v11876 = vpop.permute.xlu0 %11875
    %11877 = vrot.lane.b32.xlu0 %v11727, 12
    %v11878 = vpop.permute.xlu0 %11877
    %11879 = vrot.lane.b32.xlu0 %v11729, 12
    %v11880 = vpop.permute.xlu0 %11879
    %11881 = vrot.lane.b32.xlu0 %v11732, 12
    %v11882 = vpop.permute.xlu0 %11881
    %11883 = vrot.lane.b32.xlu0 %v11734, 12
    %v11884 = vpop.permute.xlu0 %11883
    %11885 = vrot.lane.b32.xlu0 %v11737, 12
    %v11886 = vpop.permute.xlu0 %11885
    %11887 = vrot.lane.b32.xlu0 %v11739, 12
    %v11888 = vpop.permute.xlu0 %11887
    %11889 = vrot.lane.b32.xlu0 %v11742, 12
    %v11890 = vpop.permute.xlu0 %11889
    %11891 = vrot.lane.b32.xlu0 %v11744, 12
    %v11892 = vpop.permute.xlu0 %11891
    %11893 = vrot.lane.b32.xlu0 %v11747, 12
    %v11894 = vpop.permute.xlu0 %11893
    %11895 = vrot.lane.b32.xlu0 %v11749, 12
    %v11896 = vpop.permute.xlu0 %11895
    %11897 = vrot.lane.b32.xlu0 %v11752, 12
    %v11898 = vpop.permute.xlu0 %11897
    %11899 = vrot.lane.b32.xlu0 %v11754, 12
    %v11900 = vpop.permute.xlu0 %11899
    %11901 = vrot.lane.b32.xlu0 %v11757, 12
    %v11902 = vpop.permute.xlu0 %11901
    %11903 = vrot.lane.b32.xlu0 %v11759, 12
    %v11904 = vpop.permute.xlu0 %11903
    %11905 = vrot.lane.b32.xlu0 %v11762, 12
    %v11906 = vpop.permute.xlu0 %11905
    %11907 = vrot.lane.b32.xlu0 %v11764, 12
    %v11908 = vpop.permute.xlu0 %11907
    %11909 = vrot.lane.b32.xlu0 %v11767, 12
    %v11910 = vpop.permute.xlu0 %11909
    %11911 = vrot.lane.b32.xlu0 %v11769, 12
    %v11912 = vpop.permute.xlu0 %11911
    %11913 = vrot.lane.b32.xlu0 %v11772, 12
    %v11914 = vpop.permute.xlu0 %11913
    %11915 = vrot.lane.b32.xlu0 %v11774, 12
    %v11916 = vpop.permute.xlu0 %11915
    %11917 = vrot.lane.b32.xlu0 %v11777, 12
    %v11918 = vpop.permute.xlu0 %11917
    %11919 = vrot.lane.b32.xlu0 %v11779, 12
    %v11920 = vpop.permute.xlu0 %11919
    %11921 = vrot.lane.b32.xlu0 %v11782, 12
    %v11922 = vpop.permute.xlu0 %11921
    %11923 = vrot.lane.b32.xlu0 %v11784, 12
    %v11924 = vpop.permute.xlu0 %11923
    %11925 = vrot.lane.b32.xlu0 %v11787, 12
    %v11926 = vpop.permute.xlu0 %11925
    %11927 = vrot.lane.b32.xlu0 %v11789, 12
    %v11928 = vpop.permute.xlu0 %11927
    %11929 = vrot.lane.b32.xlu0 %v11792, 12
    %v11930 = vpop.permute.xlu0 %11929
    %11931 = vrot.lane.b32.xlu0 %v11794, 12
    %v11932 = vpop.permute.xlu0 %11931
    %11933 = vrot.lane.b32.xlu0 %v11797, 12
    %v11934 = vpop.permute.xlu0 %11933
    %11935 = vrot.lane.b32.xlu0 %v11799, 12
    %v11936 = vpop.permute.xlu0 %11935
    %11937 = vrot.lane.b32.xlu0 %v11802, 12
    %v11938 = vpop.permute.xlu0 %11937
    %11939 = vrot.lane.b32.xlu0 %v11804, 12
    %v11940 = vpop.permute.xlu0 %11939
    %11941 = vrot.lane.b32.xlu0 %v11807, 12
    %v11942 = vpop.permute.xlu0 %11941
    %11943 = vrot.lane.b32.xlu0 %v11809, 12
    %v11944 = vpop.permute.xlu0 %11943
    %11945 = vrot.lane.b32.xlu0 %v11812, 12
    %v11946 = vpop.permute.xlu0 %11945
    %11947 = vrot.lane.b32.xlu0 %v11814, 12
    %v11948 = vpop.permute.xlu0 %11947
    %11949 = vrot.lane.b32.xlu0 %v11817, 12
    %v11950 = vpop.permute.xlu0 %11949
    %11951 = vrot.lane.b32.xlu0 %v11819, 12
    %v11952 = vpop.permute.xlu0 %11951
    %11953 = vrot.lane.b32.xlu0 %v11822, 12
    %v11954 = vpop.permute.xlu0 %11953
    %11955 = vrot.lane.b32.xlu0 %v11824, 12
    %v11956 = vpop.permute.xlu0 %11955
    %11957 = vrot.lane.b32.xlu0 %v11827, 12
    %v11958 = vpop.permute.xlu0 %11957
    %11959 = vrot.lane.b32.xlu0 %v11829, 12
    %v11960 = vpop.permute.xlu0 %11959
    %11961 = vrot.lane.b32.xlu0 %v11832, 12
    %v11962 = vpop.permute.xlu0 %11961
    %11963 = vrot.lane.b32.xlu0 %v11834, 12
    %v11964 = vpop.permute.xlu0 %11963
    %11965 = vrot.lane.b32.xlu0 %v11837, 12
    %v11966 = vpop.permute.xlu0 %11965
    %11967 = vrot.lane.b32.xlu0 %v11839, 12
    %v11968 = vpop.permute.xlu0 %11967
    %11969 = vrot.lane.b32.xlu0 %v11842, 12
    %v11970 = vpop.permute.xlu0 %11969
    %11971 = vrot.lane.b32.xlu0 %v11844, 12
    %v11972 = vpop.permute.xlu0 %11971
    %v12037 = vrot.slane %v11493, 2
    %v12038 = vrot.slane %v11494, 2
    %v12039 = vsel %vm1747, %v12037, %v12038
    %v12040 = vrot.slane %v11495, 2
    %v12041 = vsel %vm1747, %v12038, %v12040
    %v12042 = vrot.slane %v11496, 2
    %v12043 = vrot.slane %v11497, 2
    %v12044 = vsel %vm1747, %v12042, %v12043
    %v12045 = vrot.slane %v11498, 2
    %v12046 = vsel %vm1747, %v12043, %v12045
    %v12047 = vrot.slane %v11499, 2
    %v12048 = vrot.slane %v11500, 2
    %v12049 = vsel %vm1747, %v12047, %v12048
    %v12050 = vrot.slane %v11501, 2
    %v12051 = vsel %vm1747, %v12048, %v12050
    %v12052 = vrot.slane %v11502, 2
    %v12053 = vrot.slane %v11503, 2
    %v12054 = vsel %vm1747, %v12052, %v12053
    %v12055 = vrot.slane %v11504, 2
    %v12056 = vsel %vm1747, %v12053, %v12055
    %v12057 = vrot.slane %v11505, 2
    %v12058 = vrot.slane %v11506, 2
    %v12059 = vsel %vm1747, %v12057, %v12058
    %v12060 = vrot.slane %v11507, 2
    %v12061 = vsel %vm1747, %v12058, %v12060
    %v12062 = vrot.slane %v11508, 2
    %v12063 = vrot.slane %v11509, 2
    %v12064 = vsel %vm1747, %v12062, %v12063
    %v12065 = vrot.slane %v11510, 2
    %v12066 = vsel %vm1747, %v12063, %v12065
    %v12067 = vrot.slane %v11511, 2
    %v12068 = vrot.slane %v11512, 2
    %v12069 = vsel %vm1747, %v12067, %v12068
    %v12070 = vrot.slane %v11513, 2
    %v12071 = vsel %vm1747, %v12068, %v12070
    %v12072 = vrot.slane %v11514, 2
    %v12073 = vrot.slane %v11515, 2
    %v12074 = vsel %vm1747, %v12072, %v12073
    %v12075 = vrot.slane %v11516, 2
    %v12076 = vsel %vm1747, %v12073, %v12075
    %v12077 = vrot.slane %v11517, 2
    %v12078 = vrot.slane %v11518, 2
    %v12079 = vsel %vm1747, %v12077, %v12078
    %v12080 = vrot.slane %v11519, 2
    %v12081 = vsel %vm1747, %v12078, %v12080
    %v12082 = vrot.slane %v11520, 2
    %v12083 = vrot.slane %v11521, 2
    %v12084 = vsel %vm1747, %v12082, %v12083
    %v12085 = vrot.slane %v11522, 2
    %v12086 = vsel %vm1747, %v12083, %v12085
    %v12087 = vrot.slane %v11523, 2
    %v12088 = vrot.slane %v11524, 2
    %v12089 = vsel %vm1747, %v12087, %v12088
    %v12090 = vrot.slane %v11525, 2
    %v12091 = vsel %vm1747, %v12088, %v12090
    %v12092 = vrot.slane %v11526, 2
    %v12093 = vrot.slane %v11527, 2
    %v12094 = vsel %vm1747, %v12092, %v12093
    %v12095 = vrot.slane %v11528, 2
    %v12096 = vsel %vm1747, %v12093, %v12095
    %v12097 = vrot.slane %v11529, 2
    %v12098 = vrot.slane %v11530, 2
    %v12099 = vsel %vm1747, %v12097, %v12098
    %v12100 = vrot.slane %v11531, 2
    %v12101 = vsel %vm1747, %v12098, %v12100
    %v12102 = vrot.slane %v11532, 2
    %v12103 = vrot.slane %v11533, 2
    %v12104 = vsel %vm1747, %v12102, %v12103
    %v12105 = vrot.slane %v11534, 2
    %v12106 = vsel %vm1747, %v12103, %v12105
    %v12107 = vrot.slane %v11535, 2
    %v12108 = vrot.slane %v11536, 2
    %v12109 = vsel %vm1747, %v12107, %v12108
    %v12110 = vrot.slane %v11537, 2
    %v12111 = vsel %vm1747, %v12108, %v12110
    %v12112 = vrot.slane %v11538, 2
    %v12113 = vrot.slane %v11539, 2
    %v12114 = vsel %vm1747, %v12112, %v12113
    %v12115 = vrot.slane %v11540, 2
    %v12116 = vsel %vm1747, %v12113, %v12115
    %v12117 = vrot.slane %v11541, 2
    %v12118 = vrot.slane %v11542, 2
    %v12119 = vsel %vm1747, %v12117, %v12118
    %v12120 = vrot.slane %v11543, 2
    %v12121 = vsel %vm1747, %v12118, %v12120
    %v12122 = vrot.slane %v11544, 2
    %v12123 = vrot.slane %v11545, 2
    %v12124 = vsel %vm1747, %v12122, %v12123
    %v12125 = vrot.slane %v11546, 2
    %v12126 = vsel %vm1747, %v12123, %v12125
    %v12127 = vrot.slane %v11547, 2
    %v12128 = vrot.slane %v11548, 2
    %v12129 = vsel %vm1747, %v12127, %v12128
    %v12130 = vrot.slane %v11549, 2
    %v12131 = vsel %vm1747, %v12128, %v12130
    %v12132 = vrot.slane %v11550, 2
    %v12133 = vrot.slane %v11551, 2
    %v12134 = vsel %vm1747, %v12132, %v12133
    %v12135 = vrot.slane %v11552, 2
    %v12136 = vsel %vm1747, %v12133, %v12135
    %v12137 = vrot.slane %v11553, 2
    %v12138 = vrot.slane %v11554, 2
    %v12139 = vsel %vm1747, %v12137, %v12138
    %v12140 = vrot.slane %v11555, 2
    %v12141 = vsel %vm1747, %v12138, %v12140
    %v12142 = vrot.slane %v11556, 2
    %v12143 = vrot.slane %v11557, 2
    %v12144 = vsel %vm1747, %v12142, %v12143
    %v12145 = vrot.slane %v11558, 2
    %v12146 = vsel %vm1747, %v12143, %v12145
    %v12147 = vrot.slane %v11559, 2
    %v12148 = vrot.slane %v11560, 2
    %v12149 = vsel %vm1747, %v12147, %v12148
    %v12150 = vrot.slane %v11561, 2
    %v12151 = vsel %vm1747, %v12148, %v12150
    %v12152 = vrot.slane %v11562, 2
    %v12153 = vrot.slane %v11563, 2
    %v12154 = vsel %vm1747, %v12152, %v12153
    %v12155 = vrot.slane %v11564, 2
    %v12156 = vsel %vm1747, %v12153, %v12155
    %v12157 = vrot.slane %v11565, 2
    %v12158 = vrot.slane %v11566, 2
    %v12159 = vsel %vm1747, %v12157, %v12158
    %v12160 = vrot.slane %v11567, 2
    %v12161 = vsel %vm1747, %v12158, %v12160
    %v12162 = vrot.slane %v11568, 2
    %v12163 = vrot.slane %v11569, 2
    %v12164 = vsel %vm1747, %v12162, %v12163
    %v12165 = vrot.slane %v11570, 2
    %v12166 = vsel %vm1747, %v12163, %v12165
    %v12167 = vrot.slane %v11571, 2
    %v12168 = vrot.slane %v11572, 2
    %v12169 = vsel %vm1747, %v12167, %v12168
    %v12170 = vrot.slane %v11573, 2
    %v12171 = vsel %vm1747, %v12168, %v12170
    %v12172 = vrot.slane %v11574, 2
    %v12173 = vrot.slane %v11575, 2
    %v12174 = vsel %vm1747, %v12172, %v12173
    %v12175 = vrot.slane %v11576, 2
    %v12176 = vsel %vm1747, %v12173, %v12175
    %v12177 = vrot.slane %v11577, 2
    %v12178 = vrot.slane %v11578, 2
    %v12179 = vsel %vm1747, %v12177, %v12178
    %v12180 = vrot.slane %v11579, 2
    %v12181 = vsel %vm1747, %v12178, %v12180
    %v12182 = vrot.slane %v11580, 2
    %v12183 = vrot.slane %v11581, 2
    %v12184 = vsel %vm1747, %v12182, %v12183
    %v12185 = vrot.slane %v11582, 2
    %v12186 = vsel %vm1747, %v12183, %v12185
    %v12187 = vrot.slane %v11583, 2
    %v12188 = vrot.slane %v11584, 2
    %v12189 = vsel %vm1747, %v12187, %v12188
    %v12190 = vrot.slane %v11585, 2
    %v12191 = vsel %vm1747, %v12188, %v12190
    %v12192 = vrot.slane %v11586, 2
    %v12193 = vrot.slane %v11587, 2
    %v12194 = vsel %vm1747, %v12192, %v12193
    %v12195 = vrot.slane %v11588, 2
    %v12196 = vsel %vm1747, %v12193, %v12195
    %12197 = vrot.lane.b32.xlu0 %v12039, 24
    %v12198 = vpop.permute.xlu0 %12197
    %12199 = vrot.lane.b32.xlu0 %v12041, 24
    %v12200 = vpop.permute.xlu0 %12199
    %12201 = vrot.lane.b32.xlu0 %v12044, 24
    %v12202 = vpop.permute.xlu0 %12201
    %12203 = vrot.lane.b32.xlu0 %v12046, 24
    %v12204 = vpop.permute.xlu0 %12203
    %12205 = vrot.lane.b32.xlu0 %v12049, 24
    %v12206 = vpop.permute.xlu0 %12205
    %12207 = vrot.lane.b32.xlu0 %v12051, 24
    %v12208 = vpop.permute.xlu0 %12207
    %12209 = vrot.lane.b32.xlu0 %v12054, 24
    %v12210 = vpop.permute.xlu0 %12209
    %12211 = vrot.lane.b32.xlu0 %v12056, 24
    %v12212 = vpop.permute.xlu0 %12211
    %12213 = vrot.lane.b32.xlu0 %v12059, 24
    %v12214 = vpop.permute.xlu0 %12213
    %12215 = vrot.lane.b32.xlu0 %v12061, 24
    %v12216 = vpop.permute.xlu0 %12215
    %12217 = vrot.lane.b32.xlu0 %v12064, 24
    %v12218 = vpop.permute.xlu0 %12217
    %12219 = vrot.lane.b32.xlu0 %v12066, 24
    %v12220 = vpop.permute.xlu0 %12219
    %12221 = vrot.lane.b32.xlu0 %v12069, 24
    %v12222 = vpop.permute.xlu0 %12221
    %12223 = vrot.lane.b32.xlu0 %v12071, 24
    %v12224 = vpop.permute.xlu0 %12223
    %12225 = vrot.lane.b32.xlu0 %v12074, 24
    %v12226 = vpop.permute.xlu0 %12225
    %12227 = vrot.lane.b32.xlu0 %v12076, 24
    %v12228 = vpop.permute.xlu0 %12227
    %12229 = vrot.lane.b32.xlu0 %v12079, 24
    %v12230 = vpop.permute.xlu0 %12229
    %12231 = vrot.lane.b32.xlu0 %v12081, 24
    %v12232 = vpop.permute.xlu0 %12231
    %12233 = vrot.lane.b32.xlu0 %v12084, 24
    %v12234 = vpop.permute.xlu0 %12233
    %12235 = vrot.lane.b32.xlu0 %v12086, 24
    %v12236 = vpop.permute.xlu0 %12235
    %12237 = vrot.lane.b32.xlu0 %v12089, 24
    %v12238 = vpop.permute.xlu0 %12237
    %12239 = vrot.lane.b32.xlu0 %v12091, 24
    %v12240 = vpop.permute.xlu0 %12239
    %12241 = vrot.lane.b32.xlu0 %v12094, 24
    %v12242 = vpop.permute.xlu0 %12241
    %12243 = vrot.lane.b32.xlu0 %v12096, 24
    %v12244 = vpop.permute.xlu0 %12243
    %12245 = vrot.lane.b32.xlu0 %v12099, 24
    %v12246 = vpop.permute.xlu0 %12245
    %12247 = vrot.lane.b32.xlu0 %v12101, 24
    %v12248 = vpop.permute.xlu0 %12247
    %12249 = vrot.lane.b32.xlu0 %v12104, 24
    %v12250 = vpop.permute.xlu0 %12249
    %12251 = vrot.lane.b32.xlu0 %v12106, 24
    %v12252 = vpop.permute.xlu0 %12251
    %12253 = vrot.lane.b32.xlu0 %v12109, 24
    %v12254 = vpop.permute.xlu0 %12253
    %12255 = vrot.lane.b32.xlu0 %v12111, 24
    %v12256 = vpop.permute.xlu0 %12255
    %12257 = vrot.lane.b32.xlu0 %v12114, 24
    %v12258 = vpop.permute.xlu0 %12257
    %12259 = vrot.lane.b32.xlu0 %v12116, 24
    %v12260 = vpop.permute.xlu0 %12259
    %12261 = vrot.lane.b32.xlu0 %v12119, 24
    %v12262 = vpop.permute.xlu0 %12261
    %12263 = vrot.lane.b32.xlu0 %v12121, 24
    %v12264 = vpop.permute.xlu0 %12263
    %12265 = vrot.lane.b32.xlu0 %v12124, 24
    %v12266 = vpop.permute.xlu0 %12265
    %12267 = vrot.lane.b32.xlu0 %v12126, 24
    %v12268 = vpop.permute.xlu0 %12267
    %12269 = vrot.lane.b32.xlu0 %v12129, 24
    %v12270 = vpop.permute.xlu0 %12269
    %12271 = vrot.lane.b32.xlu0 %v12131, 24
    %v12272 = vpop.permute.xlu0 %12271
    %12273 = vrot.lane.b32.xlu0 %v12134, 24
    %v12274 = vpop.permute.xlu0 %12273
    %12275 = vrot.lane.b32.xlu0 %v12136, 24
    %v12276 = vpop.permute.xlu0 %12275
    %12277 = vrot.lane.b32.xlu0 %v12139, 24
    %v12278 = vpop.permute.xlu0 %12277
    %12279 = vrot.lane.b32.xlu0 %v12141, 24
    %v12280 = vpop.permute.xlu0 %12279
    %12281 = vrot.lane.b32.xlu0 %v12144, 24
    %v12282 = vpop.permute.xlu0 %12281
    %12283 = vrot.lane.b32.xlu0 %v12146, 24
    %v12284 = vpop.permute.xlu0 %12283
    %12285 = vrot.lane.b32.xlu0 %v12149, 24
    %v12286 = vpop.permute.xlu0 %12285
    %12287 = vrot.lane.b32.xlu0 %v12151, 24
    %v12288 = vpop.permute.xlu0 %12287
    %12289 = vrot.lane.b32.xlu0 %v12154, 24
    %v12290 = vpop.permute.xlu0 %12289
    %12291 = vrot.lane.b32.xlu0 %v12156, 24
    %v12292 = vpop.permute.xlu0 %12291
    %12293 = vrot.lane.b32.xlu0 %v12159, 24
    %v12294 = vpop.permute.xlu0 %12293
    %12295 = vrot.lane.b32.xlu0 %v12161, 24
    %v12296 = vpop.permute.xlu0 %12295
    %12297 = vrot.lane.b32.xlu0 %v12164, 24
    %v12298 = vpop.permute.xlu0 %12297
    %12299 = vrot.lane.b32.xlu0 %v12166, 24
    %v12300 = vpop.permute.xlu0 %12299
    %12301 = vrot.lane.b32.xlu0 %v12169, 24
    %v12302 = vpop.permute.xlu0 %12301
    %12303 = vrot.lane.b32.xlu0 %v12171, 24
    %v12304 = vpop.permute.xlu0 %12303
    %12305 = vrot.lane.b32.xlu0 %v12174, 24
    %v12306 = vpop.permute.xlu0 %12305
    %12307 = vrot.lane.b32.xlu0 %v12176, 24
    %v12308 = vpop.permute.xlu0 %12307
    %12309 = vrot.lane.b32.xlu0 %v12179, 24
    %v12310 = vpop.permute.xlu0 %12309
    %12311 = vrot.lane.b32.xlu0 %v12181, 24
    %v12312 = vpop.permute.xlu0 %12311
    %12313 = vrot.lane.b32.xlu0 %v12184, 24
    %v12314 = vpop.permute.xlu0 %12313
    %12315 = vrot.lane.b32.xlu0 %v12186, 24
    %v12316 = vpop.permute.xlu0 %12315
    %12317 = vrot.lane.b32.xlu0 %v12189, 24
    %v12318 = vpop.permute.xlu0 %12317
    %12319 = vrot.lane.b32.xlu0 %v12191, 24
    %v12320 = vpop.permute.xlu0 %12319
    %12321 = vrot.lane.b32.xlu0 %v12194, 24
    %v12322 = vpop.permute.xlu0 %12321
    %12323 = vrot.lane.b32.xlu0 %v12196, 24
    %v12324 = vpop.permute.xlu0 %12323
    %v12389 = vsel %vm2252, %v11493, %v11846
    %v12390 = vsel %vm2252, %v11494, %v11848
    %v12391 = vsel %vm2252, %v11496, %v11850
    %v12392 = vsel %vm2252, %v11497, %v11852
    %v12393 = vsel %vm2252, %v11499, %v11854
    %v12394 = vsel %vm2252, %v11500, %v11856
    %v12395 = vsel %vm2252, %v11502, %v11858
    %v12396 = vsel %vm2252, %v11503, %v11860
    %v12397 = vsel %vm2252, %v11505, %v11862
    %v12398 = vsel %vm2252, %v11506, %v11864
    %v12399 = vsel %vm2252, %v11508, %v11866
    %v12400 = vsel %vm2252, %v11509, %v11868
    %v12401 = vsel %vm2252, %v11511, %v11870
    %v12402 = vsel %vm2252, %v11512, %v11872
    %v12403 = vsel %vm2252, %v11514, %v11874
    %v12404 = vsel %vm2252, %v11515, %v11876
    %v12405 = vsel %vm2252, %v11517, %v11878
    %v12406 = vsel %vm2252, %v11518, %v11880
    %v12407 = vsel %vm2252, %v11520, %v11882
    %v12408 = vsel %vm2252, %v11521, %v11884
    %v12409 = vsel %vm2252, %v11523, %v11886
    %v12410 = vsel %vm2252, %v11524, %v11888
    %v12411 = vsel %vm2252, %v11526, %v11890
    %v12412 = vsel %vm2252, %v11527, %v11892
    %v12413 = vsel %vm2252, %v11529, %v11894
    %v12414 = vsel %vm2252, %v11530, %v11896
    %v12415 = vsel %vm2252, %v11532, %v11898
    %v12416 = vsel %vm2252, %v11533, %v11900
    %v12417 = vsel %vm2252, %v11535, %v11902
    %v12418 = vsel %vm2252, %v11536, %v11904
    %v12419 = vsel %vm2252, %v11538, %v11906
    %v12420 = vsel %vm2252, %v11539, %v11908
    %v12421 = vsel %vm2252, %v11541, %v11910
    %v12422 = vsel %vm2252, %v11542, %v11912
    %v12423 = vsel %vm2252, %v11544, %v11914
    %v12424 = vsel %vm2252, %v11545, %v11916
    %v12425 = vsel %vm2252, %v11547, %v11918
    %v12426 = vsel %vm2252, %v11548, %v11920
    %v12427 = vsel %vm2252, %v11550, %v11922
    %v12428 = vsel %vm2252, %v11551, %v11924
    %v12429 = vsel %vm2252, %v11553, %v11926
    %v12430 = vsel %vm2252, %v11554, %v11928
    %v12431 = vsel %vm2252, %v11556, %v11930
    %v12432 = vsel %vm2252, %v11557, %v11932
    %v12433 = vsel %vm2252, %v11559, %v11934
    %v12434 = vsel %vm2252, %v11560, %v11936
    %v12435 = vsel %vm2252, %v11562, %v11938
    %v12436 = vsel %vm2252, %v11563, %v11940
    %v12437 = vsel %vm2252, %v11565, %v11942
    %v12438 = vsel %vm2252, %v11566, %v11944
    %v12439 = vsel %vm2252, %v11568, %v11946
    %v12440 = vsel %vm2252, %v11569, %v11948
    %v12441 = vsel %vm2252, %v11571, %v11950
    %v12442 = vsel %vm2252, %v11572, %v11952
    %v12443 = vsel %vm2252, %v11574, %v11954
    %v12444 = vsel %vm2252, %v11575, %v11956
    %v12445 = vsel %vm2252, %v11577, %v11958
    %v12446 = vsel %vm2252, %v11578, %v11960
    %v12447 = vsel %vm2252, %v11580, %v11962
    %v12448 = vsel %vm2252, %v11581, %v11964
    %v12449 = vsel %vm2252, %v11583, %v11966
    %v12450 = vsel %vm2252, %v11584, %v11968
    %v12451 = vsel %vm2252, %v11586, %v11970
    %v12452 = vsel %vm2252, %v11587, %v11972
    %v12453 = vsel %vm2361, %v12389, %v12198
    %v12454 = vsel %vm2361, %v12390, %v12200
    %v12455 = vsel %vm2361, %v12391, %v12202
    %v12456 = vsel %vm2361, %v12392, %v12204
    %v12457 = vsel %vm2361, %v12393, %v12206
    %v12458 = vsel %vm2361, %v12394, %v12208
    %v12459 = vsel %vm2361, %v12395, %v12210
    %v12460 = vsel %vm2361, %v12396, %v12212
    %v12461 = vsel %vm2361, %v12397, %v12214
    %v12462 = vsel %vm2361, %v12398, %v12216
    %v12463 = vsel %vm2361, %v12399, %v12218
    %v12464 = vsel %vm2361, %v12400, %v12220
    %v12465 = vsel %vm2361, %v12401, %v12222
    %v12466 = vsel %vm2361, %v12402, %v12224
    %v12467 = vsel %vm2361, %v12403, %v12226
    %v12468 = vsel %vm2361, %v12404, %v12228
    %v12469 = vsel %vm2361, %v12405, %v12230
    %v12470 = vsel %vm2361, %v12406, %v12232
    %v12471 = vsel %vm2361, %v12407, %v12234
    %v12472 = vsel %vm2361, %v12408, %v12236
    %v12473 = vsel %vm2361, %v12409, %v12238
    %v12474 = vsel %vm2361, %v12410, %v12240
    %v12475 = vsel %vm2361, %v12411, %v12242
    %v12476 = vsel %vm2361, %v12412, %v12244
    %v12477 = vsel %vm2361, %v12413, %v12246
    %v12478 = vsel %vm2361, %v12414, %v12248
    %v12479 = vsel %vm2361, %v12415, %v12250
    %v12480 = vsel %vm2361, %v12416, %v12252
    %v12481 = vsel %vm2361, %v12417, %v12254
    %v12482 = vsel %vm2361, %v12418, %v12256
    %v12483 = vsel %vm2361, %v12419, %v12258
    %v12484 = vsel %vm2361, %v12420, %v12260
    %v12485 = vsel %vm2361, %v12421, %v12262
    %v12486 = vsel %vm2361, %v12422, %v12264
    %v12487 = vsel %vm2361, %v12423, %v12266
    %v12488 = vsel %vm2361, %v12424, %v12268
    %v12489 = vsel %vm2361, %v12425, %v12270
    %v12490 = vsel %vm2361, %v12426, %v12272
    %v12491 = vsel %vm2361, %v12427, %v12274
    %v12492 = vsel %vm2361, %v12428, %v12276
    %v12493 = vsel %vm2361, %v12429, %v12278
    %v12494 = vsel %vm2361, %v12430, %v12280
    %v12495 = vsel %vm2361, %v12431, %v12282
    %v12496 = vsel %vm2361, %v12432, %v12284
    %v12497 = vsel %vm2361, %v12433, %v12286
    %v12498 = vsel %vm2361, %v12434, %v12288
    %v12499 = vsel %vm2361, %v12435, %v12290
    %v12500 = vsel %vm2361, %v12436, %v12292
    %v12501 = vsel %vm2361, %v12437, %v12294
    %v12502 = vsel %vm2361, %v12438, %v12296
    %v12503 = vsel %vm2361, %v12439, %v12298
    %v12504 = vsel %vm2361, %v12440, %v12300
    %v12505 = vsel %vm2361, %v12441, %v12302
    %v12506 = vsel %vm2361, %v12442, %v12304
    %v12507 = vsel %vm2361, %v12443, %v12306
    %v12508 = vsel %vm2361, %v12444, %v12308
    %v12509 = vsel %vm2361, %v12445, %v12310
    %v12510 = vsel %vm2361, %v12446, %v12312
    %v12511 = vsel %vm2361, %v12447, %v12314
    %v12512 = vsel %vm2361, %v12448, %v12316
    %v12513 = vsel %vm2361, %v12449, %v12318
    %v12514 = vsel %vm2361, %v12450, %v12320
    %v12515 = vsel %vm2361, %v12451, %v12322
    %v12516 = vsel %vm2361, %v12452, %v12324
    %v12517 = vpack.c.bf16 %v12454, %v12453
    %v12518 = vpack.c.bf16 %v12456, %v12455
    %v12519 = vpack.c.bf16 %v12458, %v12457
    %v12520 = vpack.c.bf16 %v12460, %v12459
    %v12521 = vpack.c.bf16 %v12462, %v12461
    %v12522 = vpack.c.bf16 %v12464, %v12463
    %v12523 = vpack.c.bf16 %v12466, %v12465
    %v12524 = vpack.c.bf16 %v12468, %v12467
    %v12525 = vpack.c.bf16 %v12470, %v12469
    %v12526 = vpack.c.bf16 %v12472, %v12471
    %v12527 = vpack.c.bf16 %v12474, %v12473
    %v12528 = vpack.c.bf16 %v12476, %v12475
    %v12529 = vpack.c.bf16 %v12478, %v12477
    %v12530 = vpack.c.bf16 %v12480, %v12479
    %v12531 = vpack.c.bf16 %v12482, %v12481
    %v12532 = vpack.c.bf16 %v12484, %v12483
    %v12533 = vpack.c.bf16 %v12486, %v12485
    %v12534 = vpack.c.bf16 %v12488, %v12487
    %v12535 = vpack.c.bf16 %v12490, %v12489
    %v12536 = vpack.c.bf16 %v12492, %v12491
    %v12537 = vpack.c.bf16 %v12494, %v12493
    %v12538 = vpack.c.bf16 %v12496, %v12495
    %v12539 = vpack.c.bf16 %v12498, %v12497
    %v12540 = vpack.c.bf16 %v12500, %v12499
    %v12541 = vpack.c.bf16 %v12502, %v12501
    %v12542 = vpack.c.bf16 %v12504, %v12503
    %v12543 = vpack.c.bf16 %v12506, %v12505
    %v12544 = vpack.c.bf16 %v12508, %v12507
    %v12545 = vpack.c.bf16 %v12510, %v12509
    %v12546 = vpack.c.bf16 %v12512, %v12511
    %v12547 = vpack.c.bf16 %v12514, %v12513
    %v12548 = vpack.c.bf16 %v12516, %v12515
    %v12549 = vld [vmem:[%s6] sm:$0x3]
    %v12551 = vsel %vm5573, %v12549, 0
    %v12554 = vsel %vm5573, %v12517, 0
    %v12557 = vsel %vm5573, %v12518, 0
    %v12560 = vsel %vm5573, %v12519, 0
    %v12563 = vsel %vm5573, %v12520, 0
    %v12566 = vsel %vm5573, %v12521, 0
    %v12569 = vsel %vm5573, %v12522, 0
    %v12572 = vsel %vm5573, %v12523, 0
    %v12575 = vsel %vm5573, %v12524, 0
    %v12578 = vsel %vm5573, %v12525, 0
    %v12581 = vsel %vm5573, %v12526, 0
    %v12584 = vsel %vm5573, %v12527, 0
    %v12587 = vsel %vm5573, %v12528, 0
    %v12590 = vsel %vm5573, %v12529, 0
    %v12593 = vsel %vm5573, %v12530, 0
    %v12596 = vsel %vm5573, %v12531, 0
    %v12599 = vsel %vm5573, %v12532, 0
    %v12602 = vsel %vm5573, %v12533, 0
    %v12605 = vsel %vm5573, %v12534, 0
    %v12608 = vsel %vm5573, %v12535, 0
    %v12611 = vsel %vm5573, %v12536, 0
    %v12614 = vsel %vm5573, %v12537, 0
    %v12617 = vsel %vm5573, %v12538, 0
    %v12620 = vsel %vm5573, %v12539, 0
    %v12623 = vsel %vm5573, %v12540, 0
    %v12626 = vsel %vm5573, %v12541, 0
    %v12629 = vsel %vm5573, %v12542, 0
    %v12632 = vsel %vm5573, %v12543, 0
    %v12635 = vsel %vm5573, %v12544, 0
    %v12638 = vsel %vm5573, %v12545, 0
    %v12641 = vsel %vm5573, %v12546, 0
    %v12644 = vsel %vm5573, %v12547, 0
    %v12647 = vsel %vm5573, %v12548, 0
    %12649 = vmatprep.subr.bf16.mxu0 0
    %12650 = vmatpush1.bf16.xpose.msra.mxu0 %v12575
    %12651 = vmatprep.subr.bf16.mxu0 0
    %12652 = vmatpush1.bf16.xpose.msra.mxu0 %v12572
    %12653 = vmatprep.subr.bf16.mxu0 0
    %12654 = vmatpush1.bf16.xpose.msra.mxu0 %v12569
    %12655 = vmatprep.subr.bf16.mxu0 0
    %12656 = vmatpush1.bf16.xpose.msra.mxu0 %v12566
    %12657 = vmatprep.subr.bf16.mxu0 0
    %12658 = vmatpush1.bf16.xpose.msra.mxu0 %v12563
    %12659 = vmatprep.subr.bf16.mxu0 0
    %12660 = vmatpush1.bf16.xpose.msra.mxu0 %v12560
    %12661 = vmatprep.subr.bf16.mxu0 0
    %12662 = vmatpush1.bf16.xpose.msra.mxu0 %v12557
    %12663 = vmatprep.subr.bf16.mxu0 0
    %12664 = vmatpush1.bf16.xpose.msra.mxu0 %v12554
    %12665 = vmatprep.subr.bf16.mxu0 0
    %12666 = vmatpush2.bf16.xpose.msra.mxu0 %v12599
    %12667 = vmatprep.subr.bf16.mxu0 0
    %12668 = vmatpush2.bf16.xpose.msra.mxu0 %v12596
    %12669 = vmatprep.subr.bf16.mxu0 0
    %12670 = vmatpush2.bf16.xpose.msra.mxu0 %v12593
    %12671 = vmatprep.subr.bf16.mxu0 0
    %12672 = vmatpush2.bf16.xpose.msra.mxu0 %v12590
    %12673 = vmatprep.subr.bf16.mxu0 0
    %12674 = vmatpush2.bf16.xpose.msra.mxu0 %v12587
    %12675 = vmatprep.subr.bf16.mxu0 0
    %12676 = vmatpush2.bf16.xpose.msra.mxu0 %v12584
    %12677 = vmatprep.subr.bf16.mxu0 0
    %12678 = vmatpush2.bf16.xpose.msra.mxu0 %v12581
    %12679 = vmatprep.subr.bf16.mxu0 0
    %12680 = vmatpush2.bf16.xpose.msra.mxu0 %v12578
    %12681 = vmatprep.mubr.bf16.mxu0 0
    %12682 = vmatmul.mubr.bf16.gmra.mxu0 %v12551
    %v12683 = vpop.f32.mrf.mxu0
    %v12684 = vadd.f32 0.0, %v12683
    %v12685 = vpop.f32.mrf.mxu0
    %v12686 = vadd.f32 0.0, %v12685
    %v12687 = vpop.f32.mrf.mxu0
    %v12688 = vpop.f32.mrf.mxu0
    %12689 = vdwg.mxu0
    %12690 = vmatprep.subr.bf16.mxu0 0
    %12691 = vmatpush1.bf16.xpose.msra.mxu0 %v12623
    %12692 = vmatprep.subr.bf16.mxu0 0
    %12693 = vmatpush1.bf16.xpose.msra.mxu0 %v12620
    %12694 = vmatprep.subr.bf16.mxu0 0
    %12695 = vmatpush1.bf16.xpose.msra.mxu0 %v12617
    %12696 = vmatprep.subr.bf16.mxu0 0
    %12697 = vmatpush1.bf16.xpose.msra.mxu0 %v12614
    %12698 = vmatprep.subr.bf16.mxu0 0
    %12699 = vmatpush1.bf16.xpose.msra.mxu0 %v12611
    %12700 = vmatprep.subr.bf16.mxu0 0
    %12701 = vmatpush1.bf16.xpose.msra.mxu0 %v12608
    %12702 = vmatprep.subr.bf16.mxu0 0
    %12703 = vmatpush1.bf16.xpose.msra.mxu0 %v12605
    %12704 = vmatprep.subr.bf16.mxu0 0
    %12705 = vmatpush1.bf16.xpose.msra.mxu0 %v12602
    %12706 = vmatprep.subr.bf16.mxu0 0
    %12707 = vmatpush2.bf16.xpose.msra.mxu0 %v12647
    %12708 = vmatprep.subr.bf16.mxu0 0
    %12709 = vmatpush2.bf16.xpose.msra.mxu0 %v12644
    %12710 = vmatprep.subr.bf16.mxu0 0
    %12711 = vmatpush2.bf16.xpose.msra.mxu0 %v12641
    %12712 = vmatprep.subr.bf16.mxu0 0
    %12713 = vmatpush2.bf16.xpose.msra.mxu0 %v12638
    %12714 = vmatprep.subr.bf16.mxu0 0
    %12715 = vmatpush2.bf16.xpose.msra.mxu0 %v12635
    %12716 = vmatprep.subr.bf16.mxu0 0
    %12717 = vmatpush2.bf16.xpose.msra.mxu0 %v12632
    %12718 = vmatprep.subr.bf16.mxu0 0
    %12719 = vmatpush2.bf16.xpose.msra.mxu0 %v12629
    %12720 = vmatprep.subr.bf16.mxu0 0
    %12721 = vmatpush2.bf16.xpose.msra.mxu0 %v12626
    %12722 = vmatprep.mubr.bf16.mxu0 0
    %12723 = vmatmul.mubr.bf16.gmra.mxu0 %v12551
    %v12724 = vpop.f32.mrf.mxu0
    %v12725 = vadd.f32 0.0, %v12724
    %v12726 = vpop.f32.mrf.mxu0
    %v12727 = vadd.f32 0.0, %v12726
    %v12728 = vpop.f32.mrf.mxu0
    %v12729 = vpop.f32.mrf.mxu0
    %12730 = vdwg.mxu0
    %vm12731 = vcmask 1043456
    %v12732 = vsel %vm12731, %v12684, 0.0
    %v12733 = vsel %vm12731, %v12686, 0.0
    %v12734 = vadd.f32 %v12732, %v12733
    %v12735 = vsel %vm12731, %v12725, 0.0
    %v12736 = vadd.f32 %v12734, %v12735
    %v12737 = vsel %vm12731, %v12727, 0.0
    %v12738 = vadd.f32 %v12736, %v12737
    %12739 = vadd.xlane.f32.xlu0 %v12738
    %v12740 = vpop.xlane.xlu0 %12739
    %v12741 = vmul.f32 %v12740, %v6795
    %v12742 = vsub.f32 %v12684, %v12741
    %v12743 = vsub.f32 %v12686, %v12741
    %v12744 = vsub.f32 %v12725, %v12741
    %v12745 = vsub.f32 %v12727, %v12741
    %v12746 = vmul.f32 %v12742, %v12742
    %v12747 = vmul.f32 %v12743, %v12743
    %v12748 = vmul.f32 %v12744, %v12744
    %v12749 = vmul.f32 %v12745, %v12745
    %v12750 = vsel %vm12731, %v12746, 0.0
    %v12751 = vsel %vm12731, %v12747, 0.0
    %v12752 = vadd.f32 %v12750, %v12751
    %v12753 = vsel %vm12731, %v12748, 0.0
    %v12754 = vadd.f32 %v12752, %v12753
    %v12755 = vsel %vm12731, %v12749, 0.0
    %v12756 = vadd.f32 %v12754, %v12755
    %12757 = vadd.xlane.f32.xlu0 %v12756
    %v12758 = vpop.xlane.xlu0 %12757
    %v12759 = vmul.f32 %v12758, %v6795
    %v12760 = vadd.f32 %v12759, 1e-05
    %v12761 = vrsqrt.pop %v12760
    %v12762 = vmul.f32 %v12742, %v12761
    %v12763 = vmul.f32 %v12743, %v12761
    %v12764 = vmul.f32 %v12744, %v12761
    %v12765 = vmul.f32 %v12745, %v12761
    %v12766 = vld [vmem:[%s7] sm:$0xf]
    %12768 = vset.pattern.permute.xlu0 0
    %12769 = vperm.xlu0 %12768, %v12766
    %v12770 = vpop.permute.xlu0 %12769
    %v12772 = vmul.f32 %v12762, %v12770
    %v12773 = vmul.f32 %v12763, %v12770
    %v12774 = vmul.f32 %v12764, %v12770
    %v12775 = vmul.f32 %v12765, %v12770
    %v12776 = vld [vmem:[%s8] sm:$0xf]
    %12778 = vset.pattern.permute.xlu0 0
    %12779 = vperm.xlu0 %12778, %v12776
    %v12780 = vpop.permute.xlu0 %12779
    %v12782 = vadd.f32 %v12772, %v12780
    %v12783 = vadd.f32 %v12773, %v12780
    %v12784 = vadd.f32 %v12774, %v12780
    %v12785 = vadd.f32 %v12775, %v12780
    %v12786 = vld [vmem:[%s1] sm:$0xff]
    %v12787 = vld [vmem:[%s1 + $0x8] sm:$0xff]
    %v12790 = vcombine.high %v12786, %v12786
    %v12791 = vcombine.high %v12787, %v12787
    %v12794 = vadd.f32 %v12782, %v12786
    %v12795 = vadd.f32 %v12783, %v12790
    %v12796 = vadd.f32 %v12784, %v12787
    %v12797 = vadd.f32 %v12785, %v12791
    %vm12798 = vcmp.gt.f32.partialorder %v12794, 0.0
    %vm12799 = vcmp.gt.f32.partialorder %v12795, 0.0
    %vm12800 = vcmp.gt.f32.partialorder %v12796, 0.0
    %vm12801 = vcmp.gt.f32.partialorder %v12797, 0.0
    %v12802 = vmul.f32 %v12794, 0.2
    %v12803 = vmul.f32 %v12795, 0.2
    %v12804 = vmul.f32 %v12796, 0.2
    %v12805 = vmul.f32 %v12797, 0.2
    %v12806 = vsel %vm12798, %v12794, %v12802
    %v12807 = vsel %vm12799, %v12795, %v12803
    %v12808 = vsel %vm12800, %v12796, %v12804
    %v12809 = vsel %vm12801, %v12797, %v12805
    %v12814 = vcombine.low %v12806, %v12807
    %v12815 = vcombine.low %v12808, %v12809
    %12818 = vst [vmem:[#allocation2] sm:$0xff] %v12814
    %12819 = vst [vmem:[#allocation2 + $0x8] sm:$0xff] %v12815
    // Predicated region
    $region38: #{tpu_custom_call.1} parent=1 // pred_check
      _
    $region39: #{tpu_custom_call.1} parent=1 // pred_check_branch
      %12821 = sbr.rel (0) target = $region41
    $region40: #{tpu_custom_call.1} parent=1 // pred_region
      %s12823 = ssub.s32 256, 256
      %12824 = vsyncadd [#allocation3], %s12823
      %s12826 = sshll.u32 [#allocation2], 4
      %s12827 = int_to_ptr.vmem [resolvable:$true] %s12826
      %12829 = dma.vmem_to_hbm [thread:$0]  %s12827, 256, %s9, [#allocation3]
    $region41: #{tpu_custom_call.1} parent=1 // pred_fallthru
      _
    // Predicated region
    $region42: #{tpu_custom_call.1} parent=1 // pred_check
      _
    $region43: #{tpu_custom_call.1} parent=1 // pred_check_branch
      %12831 = sbr.rel (0) target = $region45
    $region44: #{tpu_custom_call.1} parent=1 // pred_region
      %12832 = dma.done [#allocation3], 256
    $region45: #{tpu_custom_call.1} parent=1 // pred_fallthru
      _
    %12833 = vsyncpa [#allocation3], 1

</llo_original>
